<compile_context>
chip_gen: v7x
topology: tpu7x:2x2x1
jax: 0.10.0
libtpu: 0.0.40
codegen_flags: <defaults>
</compile_context>

<pallas_src>
import functools

import jax
import jax.numpy as jnp
from jax.experimental import pallas as pl
from jax.experimental.pallas import tpu as pltpu

_MXU_DTYPE = jnp.bfloat16   # matmul operand dtype; accumulation stays f32


def _mm(a, w):
    """MXU matmul with bf16 operands and f32 accumulation."""
    return jnp.dot(a.astype(_MXU_DTYPE), w.astype(_MXU_DTYPE),
                   preferred_element_type=jnp.float32)


def _eq_layer(t, w_ref, b_ref):
    """Linear equivariant 3->3 layer, channels last, low-rank formulation.

    t: (k, k, k, C_in) f32; w_ref: (8, C_in, C_out); b_ref: (1, C_out).
    Equivalent to  sum_r broadcast(pool_r(t)) @ w[r] + b  with pools
    [id, mean(0), mean(1), mean(2), mean(0,1), mean(0,2), mean(1,2),
     mean(0,1,2)], but the pools are computed once (hoisted) and the matmuls
    run on the pooled (low-rank) tensors; results are broadcast-added, so no
    (k^3, C_in) broadcast basis tensors are ever materialized.
    """
    k = t.shape[0]
    c_in = t.shape[3]
    c_out = w_ref.shape[2]
    w = w_ref[...]

    # Pooled features, computed once.
    p0 = jnp.mean(t, axis=0)                        # (k, k, C)  over i -> (j, l)
    p1 = jnp.mean(t, axis=1)                        # (k, k, C)  over j -> (i, l)
    p2 = jnp.mean(t, axis=2)                        # (k, k, C)  over l -> (i, j)
    p01 = jnp.mean(p0, axis=0)                      # (k, C)     over i,j -> l
    p02 = jnp.mean(p0, axis=1)                      # (k, C)     over i,l -> j
    p12 = jnp.mean(p1, axis=1)                      # (k, C)     over j,l -> i
    p012 = jnp.mean(p01, axis=0, keepdims=True)     # (1, C)

    acc = _mm(t.reshape(k * k * k, c_in), w[0]).reshape(k, k, k, c_out)
    acc = acc + _mm(p0.reshape(k * k, c_in), w[1]).reshape(1, k, k, c_out)
    acc = acc + _mm(p1.reshape(k * k, c_in), w[2]).reshape(k, 1, k, c_out)
    acc = acc + _mm(p2.reshape(k * k, c_in), w[3]).reshape(k, k, 1, c_out)
    acc = acc + _mm(p01, w[4]).reshape(1, 1, k, c_out)
    acc = acc + _mm(p02, w[5]).reshape(1, k, 1, c_out)
    acc = acc + _mm(p12, w[6]).reshape(k, 1, 1, c_out)
    acc = acc + _mm(p012, w[7]).reshape(1, 1, 1, c_out)
    return acc + b_ref[...].reshape(1, 1, 1, c_out)


def fused_kernel(patch_ref, wconvT_ref, bconv_ref, wfc_ref, bfc_ref,
                 w1_ref, b1_ref, w2_ref, b2_ref, woutT_ref, bout_ref,
                 out_ref, *, k, hw):
    hid = wconvT_ref.shape[0]

    # ---- embed (BasicConvNet) for all k images of this batch element ----
    p = patch_ref[0]                                        # (9, k*hw), lane-dense
    # conv-as-matmul, transposed orientation -> lane-dense (hid, k*hw) result
    h1t = jnp.dot(wconvT_ref[...], p, preferred_element_type=jnp.float32)
    h1t = jnp.maximum(h1t + bconv_ref[...], 0.0)            # (hid, k*hw)
    # global average pool per image, then batched FC over all k images
    pooled = jnp.mean(h1t.reshape(hid, k, hw), axis=-1)     # (hid, k)
    x4 = pooled.T                                           # (k, hid) channels-last
    x4 = jnp.maximum(_mm(x4, wfc_ref[...]) + bfc_ref[...], 0.0)   # (k, hid)

    # ---- x5 = einsum('bid,bjd,bkd->bdijk'), channels-last (k, k, k, hid) ----
    t = x4[:, None, None, :] * x4[None, :, None, :] * x4[None, None, :, :]

    # ---- eq_net: hidden equivariant layer + ReLU, final layer -> out_dim ----
    h = jnp.maximum(_eq_layer(t, w1_ref, b1_ref), 0.0)      # (k, k, k, hid)
    y = _eq_layer(h, w2_ref, b2_ref)                        # (k, k, k, out_dim)

    # ---- relu -> mean over the three set axes -> linear head ----
    x7 = jnp.maximum(y, 0.0)
    x8 = jnp.mean(x7.reshape(k * k * k, -1), axis=0, keepdims=True)   # (1, out)
    # relu(x8) is a no-op (mean of non-negative values) and dropout(p=0) is
    # the identity -> both omitted.
    out = jnp.sum(x8 * woutT_ref[...], axis=-1, keepdims=True) + bout_ref[...]
    out_ref[0] = out                                        # (1, 1)


# ----------------------------------------------------------------------------
# JAX glue
# ----------------------------------------------------------------------------
def _extract_patches_3x3_lanedense(x, b, k, h, w):
    """x: (B*k, h, w) -> (B, 9, k*h*w) zero-padded 3x3 patches (lane-dense)."""
    hw = h * w
    xp = jnp.pad(x, ((0, 0), (1, 1), (1, 1)))
    cols = [xp[:, di:di + h, dj:dj + w] for di in range(3) for dj in range(3)]
    pat = jnp.stack(cols, axis=1)                           # (B*k, 9, h, w)
    pat = pat.reshape(b, k, 9, hw).transpose(0, 2, 1, 3)    # (B, 9, k, h*w)
    return pat.reshape(b, 9, k * hw)


def init_params(key, hid_dim, out_dim):
    ks = jax.random.split(key, 10)
    s = 0.1
    rnd = lambda kk, shp: (s * jax.random.normal(kk, shp)).astype(jnp.float32)
    return dict(
        wconv=rnd(ks[0], (9, hid_dim)),       bconv=rnd(ks[1], (1, hid_dim)),
        wfc=rnd(ks[2], (hid_dim, hid_dim)),   bfc=rnd(ks[3], (1, hid_dim)),
        w1=rnd(ks[4], (8, hid_dim, hid_dim)), b1=rnd(ks[5], (1, hid_dim)),
        w2=rnd(ks[6], (8, hid_dim, out_dim)), b2=rnd(ks[7], (1, out_dim)),
        wout=rnd(ks[8], (out_dim, 1)),        bout=rnd(ks[9], (1, 1)),
    )


@functools.partial(jax.jit, static_argnames=("hid_dim", "out_dim"))
def unique_eq3_net_forward(x, params, *, hid_dim, out_dim):
    b, k, h, w = x.shape
    hw = h * w
    x1 = x.reshape(b * k, h, w).astype(jnp.float32)         # in_dim == 1 channel
    patches = _extract_patches_3x3_lanedense(x1, b, k, h, w)  # (B, 9, k*hw)

    wconv_t = params["wconv"].T                             # (hid, 9)
    bconv_c = params["bconv"].T                             # (hid, 1)
    wout_t = params["wout"].T                               # (1, out_dim)

    kernel = functools.partial(fused_kernel, k=k, hw=hw)
    out = pl.pallas_call(
        kernel,
        grid=(b,),
        in_specs=[
            pl.BlockSpec((1, 9, k * hw), lambda i: (i, 0, 0)),
            pl.BlockSpec((hid_dim, 9), lambda i: (0, 0)),
            pl.BlockSpec((hid_dim, 1), lambda i: (0, 0)),
            pl.BlockSpec((hid_dim, hid_dim), lambda i: (0, 0)),
            pl.BlockSpec((1, hid_dim), lambda i: (0, 0)),
            pl.BlockSpec((8, hid_dim, hid_dim), lambda i: (0, 0, 0)),
            pl.BlockSpec((1, hid_dim), lambda i: (0, 0)),
            pl.BlockSpec((8, hid_dim, out_dim), lambda i: (0, 0, 0)),
            pl.BlockSpec((1, out_dim), lambda i: (0, 0)),
            pl.BlockSpec((1, out_dim), lambda i: (0, 0)),
            pl.BlockSpec((1, 1), lambda i: (0, 0)),
        ],
        out_specs=pl.BlockSpec((1, 1, 1), lambda i: (i, 0, 0)),
        out_shape=jax.ShapeDtypeStruct((b, 1, 1), jnp.float32),
        compiler_params=pltpu.CompilerParams(
            dimension_semantics=("parallel",)),
    )(patches, wconv_t, bconv_c, params["wfc"], params["bfc"],
      params["w1"], params["b1"], params["w2"], params["b2"],
      wout_t, params["bout"])

    return out.reshape(b, 1)                                # matches Linear(out_dim, 1)


if __name__ == "__main__":
    B, K, H, W = 2, 8, 16, 16
    HID, OUT = 32, 16

    x = jax.random.normal(jax.random.PRNGKey(0), (B, K, H, W), jnp.float32)
    params = init_params(jax.random.PRNGKey(42), HID, OUT)

    y = unique_eq3_net_forward(x, params, hid_dim=HID, out_dim=OUT)
    y = jax.block_until_ready(y)

    assert y.shape == (B, 1), y.shape
    assert bool(jnp.all(jnp.isfinite(y)))
    print("KERNEL_OK")
</pallas_src>

<mosaic_0001>
module attributes {stable_mosaic.version = 11 : i64} {
  func.func @fused_kernel(%arg0: i32, %arg1: memref<1x9x2048xf32, #tpu.memory_space<vmem>>, %arg2: memref<32x9xf32, #tpu.memory_space<vmem>>, %arg3: memref<32x1xf32, #tpu.memory_space<vmem>>, %arg4: memref<32x32xf32, #tpu.memory_space<vmem>>, %arg5: memref<1x32xf32, #tpu.memory_space<vmem>>, %arg6: memref<8x32x32xf32, #tpu.memory_space<vmem>>, %arg7: memref<1x32xf32, #tpu.memory_space<vmem>>, %arg8: memref<8x32x16xf32, #tpu.memory_space<vmem>>, %arg9: memref<1x16xf32, #tpu.memory_space<vmem>>, %arg10: memref<1x16xf32, #tpu.memory_space<vmem>>, %arg11: memref<1x1xf32, #tpu.memory_space<vmem>>, %arg12: memref<1x1x1xf32, #tpu.memory_space<vmem>>) attributes {dimension_semantics = [#tpu.dimension_semantics<parallel>], iteration_bounds = array<i64: 2>, scalar_prefetch = 0 : i64, scratch_operands = 0 : i64, tpu.core_type = #tpu.core_type<tc>, window_params = [{transform_indices = @transform_0, window_bounds = array<i64: 1, 9, 2048>}, {pipeline_mode = #tpu.pipeline_mode<synchronous>, transform_indices = @transform_1, window_bounds = array<i64: 32, 9>}, {pipeline_mode = #tpu.pipeline_mode<synchronous>, transform_indices = @transform_2, window_bounds = array<i64: 32, 1>}, {pipeline_mode = #tpu.pipeline_mode<synchronous>, transform_indices = @transform_3, window_bounds = array<i64: 32, 32>}, {pipeline_mode = #tpu.pipeline_mode<synchronous>, transform_indices = @transform_4, window_bounds = array<i64: 1, 32>}, {pipeline_mode = #tpu.pipeline_mode<synchronous>, transform_indices = @transform_5, window_bounds = array<i64: 8, 32, 32>}, {pipeline_mode = #tpu.pipeline_mode<synchronous>, transform_indices = @transform_6, window_bounds = array<i64: 1, 32>}, {pipeline_mode = #tpu.pipeline_mode<synchronous>, transform_indices = @transform_7, window_bounds = array<i64: 8, 32, 16>}, {pipeline_mode = #tpu.pipeline_mode<synchronous>, transform_indices = @transform_8, window_bounds = array<i64: 1, 16>}, {pipeline_mode = #tpu.pipeline_mode<synchronous>, transform_indices = @transform_9, window_bounds = array<i64: 1, 16>}, {pipeline_mode = #tpu.pipeline_mode<synchronous>, transform_indices = @transform_10, window_bounds = array<i64: 1, 1>}, {transform_indices = @transform_11, window_bounds = array<i64: 1, 1, 1>}]} {
    %c0 = arith.constant 0 : index
    %c0_0 = arith.constant 0 : index
    %c0_1 = arith.constant 0 : index
    %0 = vector.load %arg1[%c0, %c0_0, %c0_1] : memref<1x9x2048xf32, #tpu.memory_space<vmem>>, vector<1x9x2048xf32>
    %1 = vector.shape_cast %0 : vector<1x9x2048xf32> to vector<9x2048xf32>
    %c0_2 = arith.constant 0 : index
    %c0_3 = arith.constant 0 : index
    %2 = vector.load %arg2[%c0_2, %c0_3] : memref<32x9xf32, #tpu.memory_space<vmem>>, vector<32x9xf32>
    %cst = arith.constant dense<0.000000e+00> : vector<32x2048xf32>
    %3 = tpu.matmul %2, %1, %cst {dimension_numbers = #tpu.dot_dimension_numbers<[1], [0], [0], [1], [0, 0, 1, 1], [], []>} : vector<32x9xf32>, vector<9x2048xf32>, vector<32x2048xf32> -> vector<32x2048xf32>
    %c0_4 = arith.constant 0 : index
    %c0_5 = arith.constant 0 : index
    %4 = vector.load %arg3[%c0_4, %c0_5] : memref<32x1xf32, #tpu.memory_space<vmem>>, vector<32x1xf32>
    %5 = vector.broadcast %4 : vector<32x1xf32> to vector<32x2048xf32>
    %6 = arith.addf %3, %5 : vector<32x2048xf32>
    %cst_6 = arith.constant 0.000000e+00 : f32
    %7 = vector.broadcast %cst_6 : f32 to vector<32x2048xf32>
    %8 = arith.maximumf %6, %7 : vector<32x2048xf32>
    %9 = vector.shape_cast %8 : vector<32x2048xf32> to vector<32x8x256xf32>
    %cst_7 = arith.constant dense<0.000000e+00> : vector<32x8xf32>
    %10 = vector.multi_reduction <add>, %9, %cst_7 [2] : vector<32x8x256xf32> to vector<32x8xf32>
    %cst_8 = arith.constant 2.560000e+02 : f32
    %11 = vector.broadcast %cst_8 : f32 to vector<32x8xf32>
    %12 = arith.divf %10, %11 : vector<32x8xf32>
    %13 = tpu.transpose %12, [1, 0] : vector<32x8xf32> -> vector<8x32xf32>
    %c0_9 = arith.constant 0 : index
    %c0_10 = arith.constant 0 : index
    %14 = vector.load %arg4[%c0_9, %c0_10] : memref<32x32xf32, #tpu.memory_space<vmem>>, vector<32x32xf32>
    %15 = arith.truncf %13 : vector<8x32xf32> to vector<8x32xbf16>
    %16 = arith.truncf %14 : vector<32x32xf32> to vector<32x32xbf16>
    %cst_11 = arith.constant dense<0.000000e+00> : vector<8x32xf32>
    %17 = tpu.matmul %15, %16, %cst_11 {dimension_numbers = #tpu.dot_dimension_numbers<[1], [0], [0], [1], [0, 0, 1, 1], [], []>} : vector<8x32xbf16>, vector<32x32xbf16>, vector<8x32xf32> -> vector<8x32xf32>
    %c0_12 = arith.constant 0 : index
    %c0_13 = arith.constant 0 : index
    %18 = vector.load %arg5[%c0_12, %c0_13] : memref<1x32xf32, #tpu.memory_space<vmem>>, vector<1x32xf32>
    %19 = vector.broadcast %18 : vector<1x32xf32> to vector<8x32xf32>
    %20 = arith.addf %17, %19 : vector<8x32xf32>
    %cst_14 = arith.constant 0.000000e+00 : f32
    %21 = vector.broadcast %cst_14 : f32 to vector<8x32xf32>
    %22 = arith.maximumf %20, %21 : vector<8x32xf32>
    %23 = vector.shape_cast %22 : vector<8x32xf32> to vector<8x1x1x32xf32>
    %24 = vector.shape_cast %22 : vector<8x32xf32> to vector<1x8x1x32xf32>
    %25 = vector.broadcast %23 : vector<8x1x1x32xf32> to vector<8x8x1x32xf32>
    %26 = vector.broadcast %24 : vector<1x8x1x32xf32> to vector<8x8x1x32xf32>
    %27 = arith.mulf %25, %26 : vector<8x8x1x32xf32>
    %28 = vector.shape_cast %22 : vector<8x32xf32> to vector<1x1x8x32xf32>
    %29 = vector.broadcast %27 : vector<8x8x1x32xf32> to vector<8x8x8x32xf32>
    %30 = vector.broadcast %28 : vector<1x1x8x32xf32> to vector<8x8x8x32xf32>
    %31 = arith.mulf %29, %30 : vector<8x8x8x32xf32>
    %c0_15 = arith.constant 0 : index
    %c0_16 = arith.constant 0 : index
    %c0_17 = arith.constant 0 : index
    %32 = vector.load %arg6[%c0_15, %c0_16, %c0_17] : memref<8x32x32xf32, #tpu.memory_space<vmem>>, vector<8x32x32xf32>
    %cst_18 = arith.constant dense<0.000000e+00> : vector<8x8x32xf32>
    %33 = vector.multi_reduction <add>, %31, %cst_18 [0] : vector<8x8x8x32xf32> to vector<8x8x32xf32>
    %cst_19 = arith.constant 8.000000e+00 : f32
    %34 = vector.broadcast %cst_19 : f32 to vector<8x8x32xf32>
    %35 = arith.divf %33, %34 : vector<8x8x32xf32>
    %cst_20 = arith.constant dense<0.000000e+00> : vector<8x8x32xf32>
    %36 = vector.multi_reduction <add>, %31, %cst_20 [1] : vector<8x8x8x32xf32> to vector<8x8x32xf32>
    %cst_21 = arith.constant 8.000000e+00 : f32
    %37 = vector.broadcast %cst_21 : f32 to vector<8x8x32xf32>
    %38 = arith.divf %36, %37 : vector<8x8x32xf32>
    %cst_22 = arith.constant dense<0.000000e+00> : vector<8x8x32xf32>
    %39 = vector.multi_reduction <add>, %31, %cst_22 [2] : vector<8x8x8x32xf32> to vector<8x8x32xf32>
    %cst_23 = arith.constant 8.000000e+00 : f32
    %40 = vector.broadcast %cst_23 : f32 to vector<8x8x32xf32>
    %41 = arith.divf %39, %40 : vector<8x8x32xf32>
    %cst_24 = arith.constant dense<0.000000e+00> : vector<8x32xf32>
    %42 = vector.multi_reduction <add>, %35, %cst_24 [0] : vector<8x8x32xf32> to vector<8x32xf32>
    %cst_25 = arith.constant 8.000000e+00 : f32
    %43 = vector.broadcast %cst_25 : f32 to vector<8x32xf32>
    %44 = arith.divf %42, %43 : vector<8x32xf32>
    %cst_26 = arith.constant dense<0.000000e+00> : vector<8x32xf32>
    %45 = vector.multi_reduction <add>, %35, %cst_26 [1] : vector<8x8x32xf32> to vector<8x32xf32>
    %cst_27 = arith.constant 8.000000e+00 : f32
    %46 = vector.broadcast %cst_27 : f32 to vector<8x32xf32>
    %47 = arith.divf %45, %46 : vector<8x32xf32>
    %cst_28 = arith.constant dense<0.000000e+00> : vector<8x32xf32>
    %48 = vector.multi_reduction <add>, %38, %cst_28 [1] : vector<8x8x32xf32> to vector<8x32xf32>
    %cst_29 = arith.constant 8.000000e+00 : f32
    %49 = vector.broadcast %cst_29 : f32 to vector<8x32xf32>
    %50 = arith.divf %48, %49 : vector<8x32xf32>
    %cst_30 = arith.constant dense<0.000000e+00> : vector<32xf32>
    %51 = vector.multi_reduction <add>, %44, %cst_30 [0] : vector<8x32xf32> to vector<32xf32>
    %52 = vector.shape_cast %51 : vector<32xf32> to vector<1x32xf32>
    %cst_31 = arith.constant 8.000000e+00 : f32
    %53 = vector.broadcast %cst_31 : f32 to vector<1x32xf32>
    %54 = arith.divf %52, %53 : vector<1x32xf32>
    %55 = vector.shape_cast %31 : vector<8x8x8x32xf32> to vector<512x32xf32>
    %56 = vector.extract_strided_slice %32 {offsets = [0, 0, 0], sizes = [1, 32, 32], strides = [1, 1, 1]} : vector<8x32x32xf32> to vector<1x32x32xf32>
    %57 = vector.shape_cast %56 : vector<1x32x32xf32> to vector<32x32xf32>
    %58 = arith.truncf %55 : vector<512x32xf32> to vector<512x32xbf16>
    %59 = arith.truncf %57 : vector<32x32xf32> to vector<32x32xbf16>
    %cst_32 = arith.constant dense<0.000000e+00> : vector<512x32xf32>
    %60 = tpu.matmul %58, %59, %cst_32 {dimension_numbers = #tpu.dot_dimension_numbers<[1], [0], [0], [1], [0, 0, 1, 1], [], []>} : vector<512x32xbf16>, vector<32x32xbf16>, vector<512x32xf32> -> vector<512x32xf32>
    %61 = vector.shape_cast %60 : vector<512x32xf32> to vector<8x8x8x32xf32>
    %62 = vector.shape_cast %35 : vector<8x8x32xf32> to vector<64x32xf32>
    %63 = vector.extract_strided_slice %32 {offsets = [1, 0, 0], sizes = [1, 32, 32], strides = [1, 1, 1]} : vector<8x32x32xf32> to vector<1x32x32xf32>
    %64 = vector.shape_cast %63 : vector<1x32x32xf32> to vector<32x32xf32>
    %65 = arith.truncf %62 : vector<64x32xf32> to vector<64x32xbf16>
    %66 = arith.truncf %64 : vector<32x32xf32> to vector<32x32xbf16>
    %cst_33 = arith.constant dense<0.000000e+00> : vector<64x32xf32>
    %67 = tpu.matmul %65, %66, %cst_33 {dimension_numbers = #tpu.dot_dimension_numbers<[1], [0], [0], [1], [0, 0, 1, 1], [], []>} : vector<64x32xbf16>, vector<32x32xbf16>, vector<64x32xf32> -> vector<64x32xf32>
    %68 = vector.shape_cast %67 : vector<64x32xf32> to vector<1x8x8x32xf32>
    %69 = vector.broadcast %68 : vector<1x8x8x32xf32> to vector<8x8x8x32xf32>
    %70 = arith.addf %61, %69 : vector<8x8x8x32xf32>
    %71 = vector.shape_cast %38 : vector<8x8x32xf32> to vector<64x32xf32>
    %72 = vector.extract_strided_slice %32 {offsets = [2, 0, 0], sizes = [1, 32, 32], strides = [1, 1, 1]} : vector<8x32x32xf32> to vector<1x32x32xf32>
    %73 = vector.shape_cast %72 : vector<1x32x32xf32> to vector<32x32xf32>
    %74 = arith.truncf %71 : vector<64x32xf32> to vector<64x32xbf16>
    %75 = arith.truncf %73 : vector<32x32xf32> to vector<32x32xbf16>
    %cst_34 = arith.constant dense<0.000000e+00> : vector<64x32xf32>
    %76 = tpu.matmul %74, %75, %cst_34 {dimension_numbers = #tpu.dot_dimension_numbers<[1], [0], [0], [1], [0, 0, 1, 1], [], []>} : vector<64x32xbf16>, vector<32x32xbf16>, vector<64x32xf32> -> vector<64x32xf32>
    %77 = vector.shape_cast %76 : vector<64x32xf32> to vector<8x1x8x32xf32>
    %78 = vector.broadcast %77 : vector<8x1x8x32xf32> to vector<8x8x8x32xf32>
    %79 = arith.addf %70, %78 : vector<8x8x8x32xf32>
    %80 = vector.shape_cast %41 : vector<8x8x32xf32> to vector<64x32xf32>
    %81 = vector.extract_strided_slice %32 {offsets = [3, 0, 0], sizes = [1, 32, 32], strides = [1, 1, 1]} : vector<8x32x32xf32> to vector<1x32x32xf32>
    %82 = vector.shape_cast %81 : vector<1x32x32xf32> to vector<32x32xf32>
    %83 = arith.truncf %80 : vector<64x32xf32> to vector<64x32xbf16>
    %84 = arith.truncf %82 : vector<32x32xf32> to vector<32x32xbf16>
    %cst_35 = arith.constant dense<0.000000e+00> : vector<64x32xf32>
    %85 = tpu.matmul %83, %84, %cst_35 {dimension_numbers = #tpu.dot_dimension_numbers<[1], [0], [0], [1], [0, 0, 1, 1], [], []>} : vector<64x32xbf16>, vector<32x32xbf16>, vector<64x32xf32> -> vector<64x32xf32>
    %86 = vector.shape_cast %85 : vector<64x32xf32> to vector<8x8x1x32xf32>
    %87 = vector.broadcast %86 : vector<8x8x1x32xf32> to vector<8x8x8x32xf32>
    %88 = arith.addf %79, %87 : vector<8x8x8x32xf32>
    %89 = vector.extract_strided_slice %32 {offsets = [4, 0, 0], sizes = [1, 32, 32], strides = [1, 1, 1]} : vector<8x32x32xf32> to vector<1x32x32xf32>
    %90 = vector.shape_cast %89 : vector<1x32x32xf32> to vector<32x32xf32>
    %91 = arith.truncf %44 : vector<8x32xf32> to vector<8x32xbf16>
    %92 = arith.truncf %90 : vector<32x32xf32> to vector<32x32xbf16>
    %cst_36 = arith.constant dense<0.000000e+00> : vector<8x32xf32>
    %93 = tpu.matmul %91, %92, %cst_36 {dimension_numbers = #tpu.dot_dimension_numbers<[1], [0], [0], [1], [0, 0, 1, 1], [], []>} : vector<8x32xbf16>, vector<32x32xbf16>, vector<8x32xf32> -> vector<8x32xf32>
    %94 = vector.shape_cast %93 : vector<8x32xf32> to vector<1x1x8x32xf32>
    %95 = vector.broadcast %94 : vector<1x1x8x32xf32> to vector<8x8x8x32xf32>
    %96 = arith.addf %88, %95 : vector<8x8x8x32xf32>
    %97 = vector.extract_strided_slice %32 {offsets = [5, 0, 0], sizes = [1, 32, 32], strides = [1, 1, 1]} : vector<8x32x32xf32> to vector<1x32x32xf32>
    %98 = vector.shape_cast %97 : vector<1x32x32xf32> to vector<32x32xf32>
    %99 = arith.truncf %47 : vector<8x32xf32> to vector<8x32xbf16>
    %100 = arith.truncf %98 : vector<32x32xf32> to vector<32x32xbf16>
    %cst_37 = arith.constant dense<0.000000e+00> : vector<8x32xf32>
    %101 = tpu.matmul %99, %100, %cst_37 {dimension_numbers = #tpu.dot_dimension_numbers<[1], [0], [0], [1], [0, 0, 1, 1], [], []>} : vector<8x32xbf16>, vector<32x32xbf16>, vector<8x32xf32> -> vector<8x32xf32>
    %102 = vector.shape_cast %101 : vector<8x32xf32> to vector<1x8x1x32xf32>
    %103 = vector.broadcast %102 : vector<1x8x1x32xf32> to vector<8x8x8x32xf32>
    %104 = arith.addf %96, %103 : vector<8x8x8x32xf32>
    %105 = vector.extract_strided_slice %32 {offsets = [6, 0, 0], sizes = [1, 32, 32], strides = [1, 1, 1]} : vector<8x32x32xf32> to vector<1x32x32xf32>
    %106 = vector.shape_cast %105 : vector<1x32x32xf32> to vector<32x32xf32>
    %107 = arith.truncf %50 : vector<8x32xf32> to vector<8x32xbf16>
    %108 = arith.truncf %106 : vector<32x32xf32> to vector<32x32xbf16>
    %cst_38 = arith.constant dense<0.000000e+00> : vector<8x32xf32>
    %109 = tpu.matmul %107, %108, %cst_38 {dimension_numbers = #tpu.dot_dimension_numbers<[1], [0], [0], [1], [0, 0, 1, 1], [], []>} : vector<8x32xbf16>, vector<32x32xbf16>, vector<8x32xf32> -> vector<8x32xf32>
    %110 = vector.shape_cast %109 : vector<8x32xf32> to vector<8x1x1x32xf32>
    %111 = vector.broadcast %110 : vector<8x1x1x32xf32> to vector<8x8x8x32xf32>
    %112 = arith.addf %104, %111 : vector<8x8x8x32xf32>
    %113 = vector.extract_strided_slice %32 {offsets = [7, 0, 0], sizes = [1, 32, 32], strides = [1, 1, 1]} : vector<8x32x32xf32> to vector<1x32x32xf32>
    %114 = vector.shape_cast %113 : vector<1x32x32xf32> to vector<32x32xf32>
    %115 = arith.truncf %54 : vector<1x32xf32> to vector<1x32xbf16>
    %116 = arith.truncf %114 : vector<32x32xf32> to vector<32x32xbf16>
    %cst_39 = arith.constant dense<0.000000e+00> : vector<1x32xf32>
    %117 = tpu.matmul %115, %116, %cst_39 {dimension_numbers = #tpu.dot_dimension_numbers<[1], [0], [0], [1], [0, 0, 1, 1], [], []>} : vector<1x32xbf16>, vector<32x32xbf16>, vector<1x32xf32> -> vector<1x32xf32>
    %118 = vector.shape_cast %117 : vector<1x32xf32> to vector<1x1x1x32xf32>
    %119 = vector.broadcast %118 : vector<1x1x1x32xf32> to vector<8x8x8x32xf32>
    %120 = arith.addf %112, %119 : vector<8x8x8x32xf32>
    %c0_40 = arith.constant 0 : index
    %c0_41 = arith.constant 0 : index
    %121 = vector.load %arg7[%c0_40, %c0_41] : memref<1x32xf32, #tpu.memory_space<vmem>>, vector<1x32xf32>
    %122 = vector.shape_cast %121 : vector<1x32xf32> to vector<1x1x1x32xf32>
    %123 = vector.broadcast %122 : vector<1x1x1x32xf32> to vector<8x8x8x32xf32>
    %124 = arith.addf %120, %123 : vector<8x8x8x32xf32>
    %cst_42 = arith.constant 0.000000e+00 : f32
    %125 = vector.broadcast %cst_42 : f32 to vector<8x8x8x32xf32>
    %126 = arith.maximumf %124, %125 : vector<8x8x8x32xf32>
    %c0_43 = arith.constant 0 : index
    %c0_44 = arith.constant 0 : index
    %c0_45 = arith.constant 0 : index
    %127 = vector.load %arg8[%c0_43, %c0_44, %c0_45] : memref<8x32x16xf32, #tpu.memory_space<vmem>>, vector<8x32x16xf32>
    %cst_46 = arith.constant dense<0.000000e+00> : vector<8x8x32xf32>
    %128 = vector.multi_reduction <add>, %126, %cst_46 [0] : vector<8x8x8x32xf32> to vector<8x8x32xf32>
    %cst_47 = arith.constant 8.000000e+00 : f32
    %129 = vector.broadcast %cst_47 : f32 to vector<8x8x32xf32>
    %130 = arith.divf %128, %129 : vector<8x8x32xf32>
    %cst_48 = arith.constant dense<0.000000e+00> : vector<8x8x32xf32>
    %131 = vector.multi_reduction <add>, %126, %cst_48 [1] : vector<8x8x8x32xf32> to vector<8x8x32xf32>
    %cst_49 = arith.constant 8.000000e+00 : f32
    %132 = vector.broadcast %cst_49 : f32 to vector<8x8x32xf32>
    %133 = arith.divf %131, %132 : vector<8x8x32xf32>
    %cst_50 = arith.constant dense<0.000000e+00> : vector<8x8x32xf32>
    %134 = vector.multi_reduction <add>, %126, %cst_50 [2] : vector<8x8x8x32xf32> to vector<8x8x32xf32>
    %cst_51 = arith.constant 8.000000e+00 : f32
    %135 = vector.broadcast %cst_51 : f32 to vector<8x8x32xf32>
    %136 = arith.divf %134, %135 : vector<8x8x32xf32>
    %cst_52 = arith.constant dense<0.000000e+00> : vector<8x32xf32>
    %137 = vector.multi_reduction <add>, %130, %cst_52 [0] : vector<8x8x32xf32> to vector<8x32xf32>
    %cst_53 = arith.constant 8.000000e+00 : f32
    %138 = vector.broadcast %cst_53 : f32 to vector<8x32xf32>
    %139 = arith.divf %137, %138 : vector<8x32xf32>
    %cst_54 = arith.constant dense<0.000000e+00> : vector<8x32xf32>
    %140 = vector.multi_reduction <add>, %130, %cst_54 [1] : vector<8x8x32xf32> to vector<8x32xf32>
    %cst_55 = arith.constant 8.000000e+00 : f32
    %141 = vector.broadcast %cst_55 : f32 to vector<8x32xf32>
    %142 = arith.divf %140, %141 : vector<8x32xf32>
    %cst_56 = arith.constant dense<0.000000e+00> : vector<8x32xf32>
    %143 = vector.multi_reduction <add>, %133, %cst_56 [1] : vector<8x8x32xf32> to vector<8x32xf32>
    %cst_57 = arith.constant 8.000000e+00 : f32
    %144 = vector.broadcast %cst_57 : f32 to vector<8x32xf32>
    %145 = arith.divf %143, %144 : vector<8x32xf32>
    %cst_58 = arith.constant dense<0.000000e+00> : vector<32xf32>
    %146 = vector.multi_reduction <add>, %139, %cst_58 [0] : vector<8x32xf32> to vector<32xf32>
    %147 = vector.shape_cast %146 : vector<32xf32> to vector<1x32xf32>
    %cst_59 = arith.constant 8.000000e+00 : f32
    %148 = vector.broadcast %cst_59 : f32 to vector<1x32xf32>
    %149 = arith.divf %147, %148 : vector<1x32xf32>
    %150 = vector.shape_cast %126 : vector<8x8x8x32xf32> to vector<512x32xf32>
    %151 = vector.extract_strided_slice %127 {offsets = [0, 0, 0], sizes = [1, 32, 16], strides = [1, 1, 1]} : vector<8x32x16xf32> to vector<1x32x16xf32>
    %152 = vector.shape_cast %151 : vector<1x32x16xf32> to vector<32x16xf32>
    %153 = arith.truncf %150 : vector<512x32xf32> to vector<512x32xbf16>
    %154 = arith.truncf %152 : vector<32x16xf32> to vector<32x16xbf16>
    %cst_60 = arith.constant dense<0.000000e+00> : vector<512x16xf32>
    %155 = tpu.matmul %153, %154, %cst_60 {dimension_numbers = #tpu.dot_dimension_numbers<[1], [0], [0], [1], [0, 0, 1, 1], [], []>} : vector<512x32xbf16>, vector<32x16xbf16>, vector<512x16xf32> -> vector<512x16xf32>
    %156 = vector.shape_cast %155 : vector<512x16xf32> to vector<8x8x8x16xf32>
    %157 = vector.shape_cast %130 : vector<8x8x32xf32> to vector<64x32xf32>
    %158 = vector.extract_strided_slice %127 {offsets = [1, 0, 0], sizes = [1, 32, 16], strides = [1, 1, 1]} : vector<8x32x16xf32> to vector<1x32x16xf32>
    %159 = vector.shape_cast %158 : vector<1x32x16xf32> to vector<32x16xf32>
    %160 = arith.truncf %157 : vector<64x32xf32> to vector<64x32xbf16>
    %161 = arith.truncf %159 : vector<32x16xf32> to vector<32x16xbf16>
    %cst_61 = arith.constant dense<0.000000e+00> : vector<64x16xf32>
    %162 = tpu.matmul %160, %161, %cst_61 {dimension_numbers = #tpu.dot_dimension_numbers<[1], [0], [0], [1], [0, 0, 1, 1], [], []>} : vector<64x32xbf16>, vector<32x16xbf16>, vector<64x16xf32> -> vector<64x16xf32>
    %163 = vector.shape_cast %162 : vector<64x16xf32> to vector<1x8x8x16xf32>
    %164 = vector.broadcast %163 : vector<1x8x8x16xf32> to vector<8x8x8x16xf32>
    %165 = arith.addf %156, %164 : vector<8x8x8x16xf32>
    %166 = vector.shape_cast %133 : vector<8x8x32xf32> to vector<64x32xf32>
    %167 = vector.extract_strided_slice %127 {offsets = [2, 0, 0], sizes = [1, 32, 16], strides = [1, 1, 1]} : vector<8x32x16xf32> to vector<1x32x16xf32>
    %168 = vector.shape_cast %167 : vector<1x32x16xf32> to vector<32x16xf32>
    %169 = arith.truncf %166 : vector<64x32xf32> to vector<64x32xbf16>
    %170 = arith.truncf %168 : vector<32x16xf32> to vector<32x16xbf16>
    %cst_62 = arith.constant dense<0.000000e+00> : vector<64x16xf32>
    %171 = tpu.matmul %169, %170, %cst_62 {dimension_numbers = #tpu.dot_dimension_numbers<[1], [0], [0], [1], [0, 0, 1, 1], [], []>} : vector<64x32xbf16>, vector<32x16xbf16>, vector<64x16xf32> -> vector<64x16xf32>
    %172 = vector.shape_cast %171 : vector<64x16xf32> to vector<8x1x8x16xf32>
    %173 = vector.broadcast %172 : vector<8x1x8x16xf32> to vector<8x8x8x16xf32>
    %174 = arith.addf %165, %173 : vector<8x8x8x16xf32>
    %175 = vector.shape_cast %136 : vector<8x8x32xf32> to vector<64x32xf32>
    %176 = vector.extract_strided_slice %127 {offsets = [3, 0, 0], sizes = [1, 32, 16], strides = [1, 1, 1]} : vector<8x32x16xf32> to vector<1x32x16xf32>
    %177 = vector.shape_cast %176 : vector<1x32x16xf32> to vector<32x16xf32>
    %178 = arith.truncf %175 : vector<64x32xf32> to vector<64x32xbf16>
    %179 = arith.truncf %177 : vector<32x16xf32> to vector<32x16xbf16>
    %cst_63 = arith.constant dense<0.000000e+00> : vector<64x16xf32>
    %180 = tpu.matmul %178, %179, %cst_63 {dimension_numbers = #tpu.dot_dimension_numbers<[1], [0], [0], [1], [0, 0, 1, 1], [], []>} : vector<64x32xbf16>, vector<32x16xbf16>, vector<64x16xf32> -> vector<64x16xf32>
    %181 = vector.shape_cast %180 : vector<64x16xf32> to vector<8x8x1x16xf32>
    %182 = vector.broadcast %181 : vector<8x8x1x16xf32> to vector<8x8x8x16xf32>
    %183 = arith.addf %174, %182 : vector<8x8x8x16xf32>
    %184 = vector.extract_strided_slice %127 {offsets = [4, 0, 0], sizes = [1, 32, 16], strides = [1, 1, 1]} : vector<8x32x16xf32> to vector<1x32x16xf32>
    %185 = vector.shape_cast %184 : vector<1x32x16xf32> to vector<32x16xf32>
    %186 = arith.truncf %139 : vector<8x32xf32> to vector<8x32xbf16>
    %187 = arith.truncf %185 : vector<32x16xf32> to vector<32x16xbf16>
    %cst_64 = arith.constant dense<0.000000e+00> : vector<8x16xf32>
    %188 = tpu.matmul %186, %187, %cst_64 {dimension_numbers = #tpu.dot_dimension_numbers<[1], [0], [0], [1], [0, 0, 1, 1], [], []>} : vector<8x32xbf16>, vector<32x16xbf16>, vector<8x16xf32> -> vector<8x16xf32>
    %189 = vector.shape_cast %188 : vector<8x16xf32> to vector<1x1x8x16xf32>
    %190 = vector.broadcast %189 : vector<1x1x8x16xf32> to vector<8x8x8x16xf32>
    %191 = arith.addf %183, %190 : vector<8x8x8x16xf32>
    %192 = vector.extract_strided_slice %127 {offsets = [5, 0, 0], sizes = [1, 32, 16], strides = [1, 1, 1]} : vector<8x32x16xf32> to vector<1x32x16xf32>
    %193 = vector.shape_cast %192 : vector<1x32x16xf32> to vector<32x16xf32>
    %194 = arith.truncf %142 : vector<8x32xf32> to vector<8x32xbf16>
    %195 = arith.truncf %193 : vector<32x16xf32> to vector<32x16xbf16>
    %cst_65 = arith.constant dense<0.000000e+00> : vector<8x16xf32>
    %196 = tpu.matmul %194, %195, %cst_65 {dimension_numbers = #tpu.dot_dimension_numbers<[1], [0], [0], [1], [0, 0, 1, 1], [], []>} : vector<8x32xbf16>, vector<32x16xbf16>, vector<8x16xf32> -> vector<8x16xf32>
    %197 = vector.shape_cast %196 : vector<8x16xf32> to vector<1x8x1x16xf32>
    %198 = vector.broadcast %197 : vector<1x8x1x16xf32> to vector<8x8x8x16xf32>
    %199 = arith.addf %191, %198 : vector<8x8x8x16xf32>
    %200 = vector.extract_strided_slice %127 {offsets = [6, 0, 0], sizes = [1, 32, 16], strides = [1, 1, 1]} : vector<8x32x16xf32> to vector<1x32x16xf32>
    %201 = vector.shape_cast %200 : vector<1x32x16xf32> to vector<32x16xf32>
    %202 = arith.truncf %145 : vector<8x32xf32> to vector<8x32xbf16>
    %203 = arith.truncf %201 : vector<32x16xf32> to vector<32x16xbf16>
    %cst_66 = arith.constant dense<0.000000e+00> : vector<8x16xf32>
    %204 = tpu.matmul %202, %203, %cst_66 {dimension_numbers = #tpu.dot_dimension_numbers<[1], [0], [0], [1], [0, 0, 1, 1], [], []>} : vector<8x32xbf16>, vector<32x16xbf16>, vector<8x16xf32> -> vector<8x16xf32>
    %205 = vector.shape_cast %204 : vector<8x16xf32> to vector<8x1x1x16xf32>
    %206 = vector.broadcast %205 : vector<8x1x1x16xf32> to vector<8x8x8x16xf32>
    %207 = arith.addf %199, %206 : vector<8x8x8x16xf32>
    %208 = vector.extract_strided_slice %127 {offsets = [7, 0, 0], sizes = [1, 32, 16], strides = [1, 1, 1]} : vector<8x32x16xf32> to vector<1x32x16xf32>
    %209 = vector.shape_cast %208 : vector<1x32x16xf32> to vector<32x16xf32>
    %210 = arith.truncf %149 : vector<1x32xf32> to vector<1x32xbf16>
    %211 = arith.truncf %209 : vector<32x16xf32> to vector<32x16xbf16>
    %cst_67 = arith.constant dense<0.000000e+00> : vector<1x16xf32>
    %212 = tpu.matmul %210, %211, %cst_67 {dimension_numbers = #tpu.dot_dimension_numbers<[1], [0], [0], [1], [0, 0, 1, 1], [], []>} : vector<1x32xbf16>, vector<32x16xbf16>, vector<1x16xf32> -> vector<1x16xf32>
    %213 = vector.shape_cast %212 : vector<1x16xf32> to vector<1x1x1x16xf32>
    %214 = vector.broadcast %213 : vector<1x1x1x16xf32> to vector<8x8x8x16xf32>
    %215 = arith.addf %207, %214 : vector<8x8x8x16xf32>
    %c0_68 = arith.constant 0 : index
    %c0_69 = arith.constant 0 : index
    %216 = vector.load %arg9[%c0_68, %c0_69] : memref<1x16xf32, #tpu.memory_space<vmem>>, vector<1x16xf32>
    %217 = vector.shape_cast %216 : vector<1x16xf32> to vector<1x1x1x16xf32>
    %218 = vector.broadcast %217 : vector<1x1x1x16xf32> to vector<8x8x8x16xf32>
    %219 = arith.addf %215, %218 : vector<8x8x8x16xf32>
    %cst_70 = arith.constant 0.000000e+00 : f32
    %220 = vector.broadcast %cst_70 : f32 to vector<8x8x8x16xf32>
    %221 = arith.maximumf %219, %220 : vector<8x8x8x16xf32>
    %222 = vector.shape_cast %221 : vector<8x8x8x16xf32> to vector<512x16xf32>
    %cst_71 = arith.constant dense<0.000000e+00> : vector<16xf32>
    %223 = vector.multi_reduction <add>, %222, %cst_71 [0] : vector<512x16xf32> to vector<16xf32>
    %224 = vector.shape_cast %223 : vector<16xf32> to vector<1x16xf32>
    %cst_72 = arith.constant 5.120000e+02 : f32
    %225 = vector.broadcast %cst_72 : f32 to vector<1x16xf32>
    %226 = arith.divf %224, %225 : vector<1x16xf32>
    %c0_73 = arith.constant 0 : index
    %c0_74 = arith.constant 0 : index
    %227 = vector.load %arg10[%c0_73, %c0_74] : memref<1x16xf32, #tpu.memory_space<vmem>>, vector<1x16xf32>
    %228 = arith.mulf %226, %227 : vector<1x16xf32>
    %cst_75 = arith.constant dense<0.000000e+00> : vector<1xf32>
    %229 = vector.multi_reduction <add>, %228, %cst_75 [1] : vector<1x16xf32> to vector<1xf32>
    %230 = vector.shape_cast %229 : vector<1xf32> to vector<1x1xf32>
    %c0_76 = arith.constant 0 : index
    %c0_77 = arith.constant 0 : index
    %231 = vector.load %arg11[%c0_76, %c0_77] : memref<1x1xf32, #tpu.memory_space<vmem>>, vector<1x1xf32>
    %232 = arith.addf %230, %231 : vector<1x1xf32>
    %c0_78 = arith.constant 0 : index
    %c0_79 = arith.constant 0 : index
    %c0_80 = arith.constant 0 : index
    %233 = vector.load %arg12[%c0_78, %c0_79, %c0_80] : memref<1x1x1xf32, #tpu.memory_space<vmem>>, vector<1x1x1xf32>
    %234 = vector.shape_cast %233 : vector<1x1x1xf32> to vector<1x1xf32>
    %235 = vector.shape_cast %232 : vector<1x1xf32> to vector<1x1x1xf32>
    tpu.vector_store %arg12[%c0_78, %c0_79, %c0_80], %235 {strides = array<i32>} : memref<1x1x1xf32, #tpu.memory_space<vmem>>, vector<1x1x1xf32>,
    return
  }
  func.func @transform_0(%arg0: i32) -> (i32, i32, i32) {
    %c0_i32 = arith.constant 0 : i32
    %c0_i32_0 = arith.constant 0 : i32
    %c0_i32_1 = arith.constant 0 : i32
    return %arg0, %c0_i32, %c0_i32_0 : i32, i32, i32
  }
  func.func @transform_1(%arg0: i32) -> (i32, i32) {
    %c0_i32 = arith.constant 0 : i32
    %c0_i32_0 = arith.constant 0 : i32
    %c0_i32_1 = arith.constant 0 : i32
    return %c0_i32, %c0_i32_0 : i32, i32
  }
  func.func @transform_2(%arg0: i32) -> (i32, i32) {
    %c0_i32 = arith.constant 0 : i32
    %c0_i32_0 = arith.constant 0 : i32
    %c0_i32_1 = arith.constant 0 : i32
    return %c0_i32, %c0_i32_0 : i32, i32
  }
  func.func @transform_3(%arg0: i32) -> (i32, i32) {
    %c0_i32 = arith.constant 0 : i32
    %c0_i32_0 = arith.constant 0 : i32
    %c0_i32_1 = arith.constant 0 : i32
    return %c0_i32, %c0_i32_0 : i32, i32
  }
  func.func @transform_4(%arg0: i32) -> (i32, i32) {
    %c0_i32 = arith.constant 0 : i32
    %c0_i32_0 = arith.constant 0 : i32
    %c0_i32_1 = arith.constant 0 : i32
    return %c0_i32, %c0_i32_0 : i32, i32
  }
  func.func @transform_5(%arg0: i32) -> (i32, i32, i32) {
    %c0_i32 = arith.constant 0 : i32
    %c0_i32_0 = arith.constant 0 : i32
    %c0_i32_1 = arith.constant 0 : i32
    %c0_i32_2 = arith.constant 0 : i32
    return %c0_i32, %c0_i32_0, %c0_i32_1 : i32, i32, i32
  }
  func.func @transform_6(%arg0: i32) -> (i32, i32) {
    %c0_i32 = arith.constant 0 : i32
    %c0_i32_0 = arith.constant 0 : i32
    %c0_i32_1 = arith.constant 0 : i32
    return %c0_i32, %c0_i32_0 : i32, i32
  }
  func.func @transform_7(%arg0: i32) -> (i32, i32, i32) {
    %c0_i32 = arith.constant 0 : i32
    %c0_i32_0 = arith.constant 0 : i32
    %c0_i32_1 = arith.constant 0 : i32
    %c0_i32_2 = arith.constant 0 : i32
    return %c0_i32, %c0_i32_0, %c0_i32_1 : i32, i32, i32
  }
  func.func @transform_8(%arg0: i32) -> (i32, i32) {
    %c0_i32 = arith.constant 0 : i32
    %c0_i32_0 = arith.constant 0 : i32
    %c0_i32_1 = arith.constant 0 : i32
    return %c0_i32, %c0_i32_0 : i32, i32
  }
  func.func @transform_9(%arg0: i32) -> (i32, i32) {
    %c0_i32 = arith.constant 0 : i32
    %c0_i32_0 = arith.constant 0 : i32
    %c0_i32_1 = arith.constant 0 : i32
    return %c0_i32, %c0_i32_0 : i32, i32
  }
  func.func @transform_10(%arg0: i32) -> (i32, i32) {
    %c0_i32 = arith.constant 0 : i32
    %c0_i32_0 = arith.constant 0 : i32
    %c0_i32_1 = arith.constant 0 : i32
    return %c0_i32, %c0_i32_0 : i32, i32
  }
  func.func @transform_11(%arg0: i32) -> (i32, i32, i32) {
    %c0_i32 = arith.constant 0 : i32
    %c0_i32_0 = arith.constant 0 : i32
    %c0_i32_1 = arith.constant 0 : i32
    return %arg0, %c0_i32, %c0_i32_0 : i32, i32, i32
  }
}

</mosaic_0001>

<llo_original>
// kernel: unique_eq3_net_forward.1
$region0: #{unique_eq3_net_forward.1}
  #allocation0 [shape = 'u32[]', space=smem, size = 0x4, offset = 0x4, fixed_abs, tag = 'smem constant byte address 0x4 - core index']
  #allocation1 [shape = 'u32[144,128]{1,0:T(1,128)}', space=vmem, size = 0x12000, scoped, tag = 'internal scratch']
  #allocation2 [shape = 'f32[1,1]{1,0:T(1,128)S(1)}', space=vmem, size = 0x200, scoped, tag = 'scoped memory for unique_eq3_net_forward.1']
  %s0 = inlined_call_operand.vmem [shape: f32[2,9,2048], index: 0, kind: input, shape index: {}]
  %s1 = inlined_call_operand.vmem [shape: f32[32,9], index: 1, kind: input, shape index: {}]
  %s2 = inlined_call_operand.vmem [shape: f32[32,1], index: 2, kind: input, shape index: {}]
  %s3 = inlined_call_operand.vmem [shape: f32[32,32], index: 3, kind: input, shape index: {}]
  %s4 = inlined_call_operand.vmem [shape: f32[1,32], index: 4, kind: input, shape index: {}]
  %s5 = inlined_call_operand.vmem [shape: f32[8,32,32], index: 5, kind: input, shape index: {}]
  %s6 = inlined_call_operand.vmem [shape: f32[1,32], index: 6, kind: input, shape index: {}]
  %s7 = inlined_call_operand.vmem [shape: f32[8,32,16], index: 7, kind: input, shape index: {}]
  %s8 = inlined_call_operand.vmem [shape: f32[1,16], index: 8, kind: input, shape index: {}]
  %s9 = inlined_call_operand.vmem [shape: f32[1,16], index: 9, kind: input, shape index: {}]
  %s10 = inlined_call_operand.<no memory space> [shape: f32[1,1], index: 10, kind: input, shape index: {}]
  %s11 = inlined_call_operand.vmem [shape: f32[2,1,1], index: 11, kind: output, shape index: {}]
  %s12 = sld [smem:[#allocation0]]
  $region77: #{unique_eq3_net_forward.1} parent=0
    _
  %s14 = ssub.s32 1, %s12
  %s15 = scalar_select 0, %s14, %s12
  %v16 = vstv %s10
  %17 = vst [vmem:[#allocation2] sm:$0x1] %v16
  loop: start=0, step=1, limit=4
  $region2: #{unique_eq3_net_forward.1} parent=0 // loop_pre_header
    _
  $region3: #{unique_eq3_net_forward.1} parent=0 // loop_header
    %s19 = sphi 0, %s23
    %p20 = scmp.ge.s32.totalorder %s19, 4
    %s29 = sphi 0, %s31
    %s32 = sphi 0, %s29
    %s33 = sphi 0, %s32
    %s49 = sphi 0, %s33
    %s53 = sphi 0, %s53
    %s55 = sphi 0, %s53
    %s56 = sphi 0, %s55
    %s70 = sphi 0, %s56
    %s74 = sphi 0, %s74
    %s76 = sphi 0, %s74
    %s77 = sphi 0, %s76
    %s91 = sphi 0, %s77
    %s95 = sphi 0, %s95
    %s97 = sphi 0, %s95
    %s98 = sphi 0, %s97
    %s112 = sphi 0, %s98
    %s116 = sphi 0, %s116
    %s118 = sphi 0, %s116
    %s119 = sphi 0, %s118
    %s133 = sphi 0, %s119
    %s137 = sphi 0, %s137
    %s139 = sphi 0, %s137
    %s140 = sphi 0, %s139
    %s154 = sphi 0, %s140
    %s158 = sphi 0, %s158
    %s160 = sphi 0, %s158
    %s161 = sphi 0, %s160
    %s175 = sphi 0, %s161
    %s179 = sphi 0, %s179
    %s181 = sphi 0, %s179
    %s182 = sphi 0, %s181
    %s196 = sphi 0, %s182
    %s200 = sphi 0, %s200
    %s202 = sphi 0, %s200
    %s203 = sphi 0, %s202
    %s217 = sphi 0, %s203
    %s221 = sphi 0, %s221
    %s223 = sphi 0, %s221
    %s224 = sphi 0, %s223
    %s238 = sphi 0, %s224
    %s242 = sphi 0, %s242
    %s244 = sphi 0, %s242
    %s245 = sphi 0, %s244
    %s259 = sphi 0, %s245
    %s265 = sphi 0, %s267
    %s268 = sphi 0, %s265
    %s269 = sphi 0, %s268
    %s285 = sphi 0, %s269
  $region4: #{unique_eq3_net_forward.1} parent=0 // loop_header_branch
    %22 = sbr.rel (%p20) target = $region8
  $region5: #{unique_eq3_net_forward.1} parent=0 // loop_body
    %s24 = ssub.s32 %s19, 1
    %s25 = ssub.s32 %s19, 2
    %s26 = sadd.s32 %s19, 1
    %s27 = ssub.s32 %s19, %s26
    %p28 = scmp.eq.s32.totalorder %s27, 0
    %s30 = sadd.s32 %s29, 1
    %s31 = scalar_select %p28, %s29, %s30
    %p34 = pneg %p28
    %p35 = scmp.eq.s32.totalorder %s19, 1
    %p36 = por %p34, %p35
    %p37 = scmp.ne.s32.totalorder %s29, %s32
    %p38 = scmp.eq.s32.totalorder %s19, 0
    %p39 = por %p37, %p38
    %p40 = scmp.ne.s32.totalorder %s29, %s32
    %p41 = scmp.eq.s32.totalorder %s24, 1
    %p42 = por %p40, %p41
    %p43 = scmp.ne.s32.totalorder %s32, %s33
    %p44 = scmp.eq.s32.totalorder %s24, 0
    %p45 = por %p43, %p44
    %p46 = scmp.ne.s32.totalorder %s32, %s33
    %p47 = scmp.eq.s32.totalorder %s25, 1
    %p48 = por %p46, %p47
    %p50 = scmp.ne.s32.totalorder %s33, %s49
    %p51 = scmp.eq.s32.totalorder %s25, 0
    %p52 = por %p50, %p51
    %s54 = sadd.s32 %s53, 1
    %p57 = scmp.eq.s32.totalorder %s19, 1
    %p58 = scmp.ne.s32.totalorder %s53, %s55
    %p59 = scmp.eq.s32.totalorder %s19, 0
    %p60 = por %p58, %p59
    %p61 = scmp.ne.s32.totalorder %s53, %s55
    %p62 = scmp.eq.s32.totalorder %s24, 1
    %p63 = por %p61, %p62
    %p64 = scmp.ne.s32.totalorder %s55, %s56
    %p65 = scmp.eq.s32.totalorder %s24, 0
    %p66 = por %p64, %p65
    %p67 = scmp.ne.s32.totalorder %s55, %s56
    %p68 = scmp.eq.s32.totalorder %s25, 1
    %p69 = por %p67, %p68
    %p71 = scmp.ne.s32.totalorder %s56, %s70
    %p72 = scmp.eq.s32.totalorder %s25, 0
    %p73 = por %p71, %p72
    %s75 = sadd.s32 %s74, 1
    %p78 = scmp.eq.s32.totalorder %s19, 1
    %p79 = scmp.ne.s32.totalorder %s74, %s76
    %p80 = scmp.eq.s32.totalorder %s19, 0
    %p81 = por %p79, %p80
    %p82 = scmp.ne.s32.totalorder %s74, %s76
    %p83 = scmp.eq.s32.totalorder %s24, 1
    %p84 = por %p82, %p83
    %p85 = scmp.ne.s32.totalorder %s76, %s77
    %p86 = scmp.eq.s32.totalorder %s24, 0
    %p87 = por %p85, %p86
    %p88 = scmp.ne.s32.totalorder %s76, %s77
    %p89 = scmp.eq.s32.totalorder %s25, 1
    %p90 = por %p88, %p89
    %p92 = scmp.ne.s32.totalorder %s77, %s91
    %p93 = scmp.eq.s32.totalorder %s25, 0
    %p94 = por %p92, %p93
    %s96 = sadd.s32 %s95, 1
    %p99 = scmp.eq.s32.totalorder %s19, 1
    %p100 = scmp.ne.s32.totalorder %s95, %s97
    %p101 = scmp.eq.s32.totalorder %s19, 0
    %p102 = por %p100, %p101
    %p103 = scmp.ne.s32.totalorder %s95, %s97
    %p104 = scmp.eq.s32.totalorder %s24, 1
    %p105 = por %p103, %p104
    %p106 = scmp.ne.s32.totalorder %s97, %s98
    %p107 = scmp.eq.s32.totalorder %s24, 0
    %p108 = por %p106, %p107
    %p109 = scmp.ne.s32.totalorder %s97, %s98
    %p110 = scmp.eq.s32.totalorder %s25, 1
    %p111 = por %p109, %p110
    %p113 = scmp.ne.s32.totalorder %s98, %s112
    %p114 = scmp.eq.s32.totalorder %s25, 0
    %p115 = por %p113, %p114
    %s117 = sadd.s32 %s116, 1
    %p120 = scmp.eq.s32.totalorder %s19, 1
    %p121 = scmp.ne.s32.totalorder %s116, %s118
    %p122 = scmp.eq.s32.totalorder %s19, 0
    %p123 = por %p121, %p122
    %p124 = scmp.ne.s32.totalorder %s116, %s118
    %p125 = scmp.eq.s32.totalorder %s24, 1
    %p126 = por %p124, %p125
    %p127 = scmp.ne.s32.totalorder %s118, %s119
    %p128 = scmp.eq.s32.totalorder %s24, 0
    %p129 = por %p127, %p128
    %p130 = scmp.ne.s32.totalorder %s118, %s119
    %p131 = scmp.eq.s32.totalorder %s25, 1
    %p132 = por %p130, %p131
    %p134 = scmp.ne.s32.totalorder %s119, %s133
    %p135 = scmp.eq.s32.totalorder %s25, 0
    %p136 = por %p134, %p135
    %s138 = sadd.s32 %s137, 1
    %p141 = scmp.eq.s32.totalorder %s19, 1
    %p142 = scmp.ne.s32.totalorder %s137, %s139
    %p143 = scmp.eq.s32.totalorder %s19, 0
    %p144 = por %p142, %p143
    %p145 = scmp.ne.s32.totalorder %s137, %s139
    %p146 = scmp.eq.s32.totalorder %s24, 1
    %p147 = por %p145, %p146
    %p148 = scmp.ne.s32.totalorder %s139, %s140
    %p149 = scmp.eq.s32.totalorder %s24, 0
    %p150 = por %p148, %p149
    %p151 = scmp.ne.s32.totalorder %s139, %s140
    %p152 = scmp.eq.s32.totalorder %s25, 1
    %p153 = por %p151, %p152
    %p155 = scmp.ne.s32.totalorder %s140, %s154
    %p156 = scmp.eq.s32.totalorder %s25, 0
    %p157 = por %p155, %p156
    %s159 = sadd.s32 %s158, 1
    %p162 = scmp.eq.s32.totalorder %s19, 1
    %p163 = scmp.ne.s32.totalorder %s158, %s160
    %p164 = scmp.eq.s32.totalorder %s19, 0
    %p165 = por %p163, %p164
    %p166 = scmp.ne.s32.totalorder %s158, %s160
    %p167 = scmp.eq.s32.totalorder %s24, 1
    %p168 = por %p166, %p167
    %p169 = scmp.ne.s32.totalorder %s160, %s161
    %p170 = scmp.eq.s32.totalorder %s24, 0
    %p171 = por %p169, %p170
    %p172 = scmp.ne.s32.totalorder %s160, %s161
    %p173 = scmp.eq.s32.totalorder %s25, 1
    %p174 = por %p172, %p173
    %p176 = scmp.ne.s32.totalorder %s161, %s175
    %p177 = scmp.eq.s32.totalorder %s25, 0
    %p178 = por %p176, %p177
    %s180 = sadd.s32 %s179, 1
    %p183 = scmp.eq.s32.totalorder %s19, 1
    %p184 = scmp.ne.s32.totalorder %s179, %s181
    %p185 = scmp.eq.s32.totalorder %s19, 0
    %p186 = por %p184, %p185
    %p187 = scmp.ne.s32.totalorder %s179, %s181
    %p188 = scmp.eq.s32.totalorder %s24, 1
    %p189 = por %p187, %p188
    %p190 = scmp.ne.s32.totalorder %s181, %s182
    %p191 = scmp.eq.s32.totalorder %s24, 0
    %p192 = por %p190, %p191
    %p193 = scmp.ne.s32.totalorder %s181, %s182
    %p194 = scmp.eq.s32.totalorder %s25, 1
    %p195 = por %p193, %p194
    %p197 = scmp.ne.s32.totalorder %s182, %s196
    %p198 = scmp.eq.s32.totalorder %s25, 0
    %p199 = por %p197, %p198
    %s201 = sadd.s32 %s200, 1
    %p204 = scmp.eq.s32.totalorder %s19, 1
    %p205 = scmp.ne.s32.totalorder %s200, %s202
    %p206 = scmp.eq.s32.totalorder %s19, 0
    %p207 = por %p205, %p206
    %p208 = scmp.ne.s32.totalorder %s200, %s202
    %p209 = scmp.eq.s32.totalorder %s24, 1
    %p210 = por %p208, %p209
    %p211 = scmp.ne.s32.totalorder %s202, %s203
    %p212 = scmp.eq.s32.totalorder %s24, 0
    %p213 = por %p211, %p212
    %p214 = scmp.ne.s32.totalorder %s202, %s203
    %p215 = scmp.eq.s32.totalorder %s25, 1
    %p216 = por %p214, %p215
    %p218 = scmp.ne.s32.totalorder %s203, %s217
    %p219 = scmp.eq.s32.totalorder %s25, 0
    %p220 = por %p218, %p219
    %s222 = sadd.s32 %s221, 1
    %p225 = scmp.eq.s32.totalorder %s19, 1
    %p226 = scmp.ne.s32.totalorder %s221, %s223
    %p227 = scmp.eq.s32.totalorder %s19, 0
    %p228 = por %p226, %p227
    %p229 = scmp.ne.s32.totalorder %s221, %s223
    %p230 = scmp.eq.s32.totalorder %s24, 1
    %p231 = por %p229, %p230
    %p232 = scmp.ne.s32.totalorder %s223, %s224
    %p233 = scmp.eq.s32.totalorder %s24, 0
    %p234 = por %p232, %p233
    %p235 = scmp.ne.s32.totalorder %s223, %s224
    %p236 = scmp.eq.s32.totalorder %s25, 1
    %p237 = por %p235, %p236
    %p239 = scmp.ne.s32.totalorder %s224, %s238
    %p240 = scmp.eq.s32.totalorder %s25, 0
    %p241 = por %p239, %p240
    %s243 = sadd.s32 %s242, 1
    %p246 = scmp.eq.s32.totalorder %s19, 1
    %p247 = scmp.ne.s32.totalorder %s242, %s244
    %p248 = scmp.eq.s32.totalorder %s19, 0
    %p249 = por %p247, %p248
    %p250 = scmp.ne.s32.totalorder %s242, %s244
    %p251 = scmp.eq.s32.totalorder %s24, 1
    %p252 = por %p250, %p251
    %p253 = scmp.ne.s32.totalorder %s244, %s245
    %p254 = scmp.eq.s32.totalorder %s24, 0
    %p255 = por %p253, %p254
    %p256 = scmp.ne.s32.totalorder %s244, %s245
    %p257 = scmp.eq.s32.totalorder %s25, 1
    %p258 = por %p256, %p257
    %p260 = scmp.ne.s32.totalorder %s245, %s259
    %p261 = scmp.eq.s32.totalorder %s25, 0
    %p262 = por %p260, %p261
    %s263 = ssub.s32 %s19, %s26
    %p264 = scmp.eq.s32.totalorder %s263, 0
    %s266 = sadd.s32 %s265, 1
    %s267 = scalar_select %p264, %s265, %s266
    %p270 = pneg %p264
    %p271 = scmp.eq.s32.totalorder %s19, 1
    %p272 = por %p270, %p271
    %p273 = scmp.ne.s32.totalorder %s265, %s268
    %p274 = scmp.eq.s32.totalorder %s19, 0
    %p275 = por %p273, %p274
    %p276 = scmp.ne.s32.totalorder %s265, %s268
    %p277 = scmp.eq.s32.totalorder %s24, 1
    %p278 = por %p276, %p277
    %p279 = scmp.ne.s32.totalorder %s268, %s269
    %p280 = scmp.eq.s32.totalorder %s24, 0
    %p281 = por %p279, %p280
    %p282 = scmp.ne.s32.totalorder %s268, %s269
    %p283 = scmp.eq.s32.totalorder %s25, 1
    %p284 = por %p282, %p283
    %p286 = scmp.ne.s32.totalorder %s269, %s285
    %p287 = scmp.eq.s32.totalorder %s25, 0
    %p288 = por %p286, %p287
    %p289 = scmp.le.s32.totalorder 1, %s19
    %p290 = scmp.lt.s32.totalorder %s19, 3
    %p291 = pnand %p289, %p290
    %p292 = pneg %p291
    // Predicated region
    $region9: #{unique_eq3_net_forward.1} parent=5 // pred_check
      _
    $region10: #{unique_eq3_net_forward.1} parent=5 // pred_check_branch
      %294 = sbr.rel (%p291) target = $region12
    $region11: #{unique_eq3_net_forward.1} parent=5 // pred_region
      %s295 = ssub.s32 %s19, 1
      // Predicated region
      $region13: #{unique_eq3_net_forward.1} parent=11 // pred_check
        %p296 = pneg %p66
      $region14: #{unique_eq3_net_forward.1} parent=11 // pred_check_branch
        %298 = sbr.rel (%p296) target = $region16
      $region15: #{unique_eq3_net_forward.1} parent=11 // pred_region
        _
      $region16: #{unique_eq3_net_forward.1} parent=11 // pred_fallthru
        _
      // Predicated region
      $region17: #{unique_eq3_net_forward.1} parent=11 // pred_check
        %p299 = pneg %p87
      $region18: #{unique_eq3_net_forward.1} parent=11 // pred_check_branch
        %301 = sbr.rel (%p299) target = $region20
      $region19: #{unique_eq3_net_forward.1} parent=11 // pred_region
        _
      $region20: #{unique_eq3_net_forward.1} parent=11 // pred_fallthru
        _
      // Predicated region
      $region21: #{unique_eq3_net_forward.1} parent=11 // pred_check
        %p302 = pneg %p108
      $region22: #{unique_eq3_net_forward.1} parent=11 // pred_check_branch
        %304 = sbr.rel (%p302) target = $region24
      $region23: #{unique_eq3_net_forward.1} parent=11 // pred_region
        _
      $region24: #{unique_eq3_net_forward.1} parent=11 // pred_fallthru
        _
      // Predicated region
      $region25: #{unique_eq3_net_forward.1} parent=11 // pred_check
        %p305 = pneg %p129
      $region26: #{unique_eq3_net_forward.1} parent=11 // pred_check_branch
        %307 = sbr.rel (%p305) target = $region28
      $region27: #{unique_eq3_net_forward.1} parent=11 // pred_region
        _
      $region28: #{unique_eq3_net_forward.1} parent=11 // pred_fallthru
        _
      // Predicated region
      $region29: #{unique_eq3_net_forward.1} parent=11 // pred_check
        %p308 = pneg %p150
      $region30: #{unique_eq3_net_forward.1} parent=11 // pred_check_branch
        %310 = sbr.rel (%p308) target = $region32
      $region31: #{unique_eq3_net_forward.1} parent=11 // pred_region
        _
      $region32: #{unique_eq3_net_forward.1} parent=11 // pred_fallthru
        _
      // Predicated region
      $region33: #{unique_eq3_net_forward.1} parent=11 // pred_check
        %p311 = pneg %p171
      $region34: #{unique_eq3_net_forward.1} parent=11 // pred_check_branch
        %313 = sbr.rel (%p311) target = $region36
      $region35: #{unique_eq3_net_forward.1} parent=11 // pred_region
        _
      $region36: #{unique_eq3_net_forward.1} parent=11 // pred_fallthru
        _
      // Predicated region
      $region37: #{unique_eq3_net_forward.1} parent=11 // pred_check
        %p314 = pneg %p192
      $region38: #{unique_eq3_net_forward.1} parent=11 // pred_check_branch
        %316 = sbr.rel (%p314) target = $region40
      $region39: #{unique_eq3_net_forward.1} parent=11 // pred_region
        _
      $region40: #{unique_eq3_net_forward.1} parent=11 // pred_fallthru
        _
      // Predicated region
      $region41: #{unique_eq3_net_forward.1} parent=11 // pred_check
        %p317 = pneg %p213
      $region42: #{unique_eq3_net_forward.1} parent=11 // pred_check_branch
        %319 = sbr.rel (%p317) target = $region44
      $region43: #{unique_eq3_net_forward.1} parent=11 // pred_region
        _
      $region44: #{unique_eq3_net_forward.1} parent=11 // pred_fallthru
        _
      // Predicated region
      $region45: #{unique_eq3_net_forward.1} parent=11 // pred_check
        %p320 = pneg %p234
      $region46: #{unique_eq3_net_forward.1} parent=11 // pred_check_branch
        %322 = sbr.rel (%p320) target = $region48
      $region47: #{unique_eq3_net_forward.1} parent=11 // pred_region
        _
      $region48: #{unique_eq3_net_forward.1} parent=11 // pred_fallthru
        _
      // Predicated region
      $region49: #{unique_eq3_net_forward.1} parent=11 // pred_check
        %p323 = pneg %p255
      $region50: #{unique_eq3_net_forward.1} parent=11 // pred_check_branch
        %325 = sbr.rel (%p323) target = $region52
      $region51: #{unique_eq3_net_forward.1} parent=11 // pred_region
        _
      $region52: #{unique_eq3_net_forward.1} parent=11 // pred_fallthru
        _
    $region12: #{unique_eq3_net_forward.1} parent=5 // pred_fallthru
      _
    %p326 = scmp.lt.s32.totalorder %s19, 2
    // Predicated region
    $region53: #{unique_eq3_net_forward.1} parent=5 // pred_check
      %p327 = pneg %p326
    $region54: #{unique_eq3_net_forward.1} parent=5 // pred_check_branch
      %329 = sbr.rel (%p327) target = $region56
    $region55: #{unique_eq3_net_forward.1} parent=5 // pred_region
      // Predicated region
      $region57: #{unique_eq3_net_forward.1} parent=55 // pred_check
        %p330 = pneg %p39
      $region58: #{unique_eq3_net_forward.1} parent=55 // pred_check_branch
        %332 = sbr.rel (%p330) target = $region60
      $region59: #{unique_eq3_net_forward.1} parent=55 // pred_region
        %p333 = scmp.lt.s32.totalorder %s19, 1
        %s334 = scalar_select %p333, %s19, 1
        %s335 = smul.addr %s334, 32
        %s336 = smul.addr %s335, 8
        %s337 = scalar_lea.vmem %s0, %s336
      $region60: #{unique_eq3_net_forward.1} parent=55 // pred_fallthru
        _
    $region56: #{unique_eq3_net_forward.1} parent=5 // pred_fallthru
      _
    %p338 = scmp.le.s32.totalorder 1, %s19
    %p339 = scmp.lt.s32.totalorder %s19, 3
    %p340 = pnand %p338, %p339
    %p341 = pneg %p340
    // Predicated region
    $region61: #{unique_eq3_net_forward.1} parent=5 // pred_check
      _
    $region62: #{unique_eq3_net_forward.1} parent=5 // pred_check_branch
      %343 = sbr.rel (%p340) target = $region64
    $region63: #{unique_eq3_net_forward.1} parent=5 // pred_region
      %s344 = ssub.s32 %s19, 1
      %p345 = scmp.lt.s32.totalorder %s24, 1
      %s346 = scalar_select %p345, %s24, 1
      %s347 = smul.addr %s346, 32
      %s348 = smul.addr %s347, 8
      %s349 = scalar_lea.vmem %s0, %s348
      %p350 = pneg %p45
      %p351 = pneg %p42
      %p352 = pneg %p66
      %p353 = pneg %p63
      %p354 = pneg %p87
      %p355 = pneg %p84
      %p356 = pneg %p108
      %p357 = pneg %p105
      %p358 = pneg %p129
      %p359 = pneg %p126
      %p360 = pneg %p150
      %p361 = pneg %p147
      %p362 = pneg %p171
      %p363 = pneg %p168
      %p364 = pneg %p192
      %p365 = pneg %p189
      %p366 = pneg %p213
      %p367 = pneg %p210
      %p368 = pneg %p234
      %p369 = pneg %p231
      %p370 = pneg %p255
      %p371 = pneg %p252
      %p372 = pneg %p281
      %p373 = pneg %p278
      %p374 = scmp.lt.s32.totalorder %s24, 1
      %s375 = scalar_select %p374, %s24, 1
      %s376 = scalar_lea.vmem %s11, %s375
      %p377 = scmp.lt.s32.totalorder %s24, 1
      %s378 = scalar_select %p377, %s24, 1
      %s379 = smul.addr %s378, 32
      %s380 = smul.addr %s379, 8
      %s381 = scalar_lea.vmem %s0, %s380
      %p382 = scmp.lt.s32.totalorder %s24, 1
      %s383 = scalar_select %p382, %s24, 1
      %s384 = scalar_lea.vmem %s11, %s383
      %v386 = vld [vmem:[%s381] sm:$0xff]
      %v387 = vld [vmem:[%s381 + $0x8] sm:$0xff]
      %v388 = vld [vmem:[%s381 + $0x10] sm:$0xff]
      %v389 = vld [vmem:[%s381 + $0x18] sm:$0xff]
      %v390 = vld [vmem:[%s381 + $0x20] sm:$0xff]
      %v391 = vld [vmem:[%s381 + $0x28] sm:$0xff]
      %v392 = vld [vmem:[%s381 + $0x30] sm:$0xff]
      %v393 = vld [vmem:[%s381 + $0x38] sm:$0xff]
      %v394 = vld [vmem:[%s381 + $0x40] sm:$0xff]
      %v395 = vld [vmem:[%s381 + $0x48] sm:$0xff]
      %v396 = vld [vmem:[%s381 + $0x50] sm:$0xff]
      %v397 = vld [vmem:[%s381 + $0x58] sm:$0xff]
      %v398 = vld [vmem:[%s381 + $0x60] sm:$0xff]
      %v399 = vld [vmem:[%s381 + $0x68] sm:$0xff]
      %v400 = vld [vmem:[%s381 + $0x70] sm:$0xff]
      %v401 = vld [vmem:[%s381 + $0x78] sm:$0xff]
      %v402 = vld [vmem:[%s381 + $0x80] sm:$0x1]
      %v403 = vld [vmem:[%s381 + $0x88] sm:$0x1]
      %v404 = vld [vmem:[%s381 + $0x90] sm:$0x1]
      %v405 = vld [vmem:[%s381 + $0x98] sm:$0x1]
      %v406 = vld [vmem:[%s381 + $0xa0] sm:$0x1]
      %v407 = vld [vmem:[%s381 + $0xa8] sm:$0x1]
      %v408 = vld [vmem:[%s381 + $0xb0] sm:$0x1]
      %v409 = vld [vmem:[%s381 + $0xb8] sm:$0x1]
      %v410 = vld [vmem:[%s381 + $0xc0] sm:$0x1]
      %v411 = vld [vmem:[%s381 + $0xc8] sm:$0x1]
      %v412 = vld [vmem:[%s381 + $0xd0] sm:$0x1]
      %v413 = vld [vmem:[%s381 + $0xd8] sm:$0x1]
      %v414 = vld [vmem:[%s381 + $0xe0] sm:$0x1]
      %v415 = vld [vmem:[%s381 + $0xe8] sm:$0x1]
      %v416 = vld [vmem:[%s381 + $0xf0] sm:$0x1]
      %v417 = vld [vmem:[%s381 + $0xf8] sm:$0x1]
      %v418 = vld [vmem:[%s1] sm:$0xff]
      %v419 = vld [vmem:[%s1 + $0x8] sm:$0xff]
      %v420 = vld [vmem:[%s1 + $0x10] sm:$0xff]
      %v421 = vld [vmem:[%s1 + $0x18] sm:$0xff]
      %v422 = vld [vmem:[%s2] sm:$0xff]
      %v423 = vld [vmem:[%s2 + $0x8] sm:$0xff]
      %v424 = vld [vmem:[%s2 + $0x10] sm:$0xff]
      %v425 = vld [vmem:[%s2 + $0x18] sm:$0xff]
      %427 = vset.pattern.permute.xlu0 0
      %428 = vperm.xlu0 %427, %v422
      %v429 = vpop.permute.xlu0 %428
      %432 = vset.pattern.permute.xlu0 0
      %433 = vperm.xlu0 %432, %v423
      %v434 = vpop.permute.xlu0 %433
      %437 = vset.pattern.permute.xlu0 0
      %438 = vperm.xlu0 %437, %v424
      %v439 = vpop.permute.xlu0 %438
      %442 = vset.pattern.permute.xlu0 0
      %443 = vperm.xlu0 %442, %v425
      %v444 = vpop.permute.xlu0 %443
      %vm446 = vcmask 72704
      %v448 = vsel %vm446, %v418, 0
      %v451 = vsel %vm446, %v419, 0
      %v454 = vsel %vm446, %v420, 0
      %v457 = vsel %vm446, %v421, 0
      %vm459 = vcmask 1040384
      %v461 = vsel %vm459, %v402, 0
      %v464 = vsel %vm459, %v403, 0
      %v467 = vsel %vm459, %v404, 0
      %v470 = vsel %vm459, %v405, 0
      %v473 = vsel %vm459, %v406, 0
      %v476 = vsel %vm459, %v407, 0
      %v479 = vsel %vm459, %v408, 0
      %v482 = vsel %vm459, %v409, 0
      %v485 = vsel %vm459, %v410, 0
      %v488 = vsel %vm459, %v411, 0
      %v491 = vsel %vm459, %v412, 0
      %v494 = vsel %vm459, %v413, 0
      %v497 = vsel %vm459, %v414, 0
      %v500 = vsel %vm459, %v415, 0
      %v503 = vsel %vm459, %v416, 0
      %v506 = vsel %vm459, %v417, 0
      %508 = vmatprep.subr.mxu0 %v387
      %509 = vmatpush1.msra.mxu0 %v386
      %510 = vmatprep.subr.mxu0 %v464
      %511 = vmatpush1.msra.mxu0 %v461
      %512 = vmatprep.subr.mxu0 0.0
      %513 = vmatpush1.msra.mxu0 0.0
      %514 = vmatprep.subr.mxu0 0.0
      %515 = vmatpush1.msra.mxu0 0.0
      %516 = vmatprep.subr.mxu0 0.0
      %517 = vmatpush1.msra.mxu0 0.0
      %518 = vmatprep.subr.mxu0 0.0
      %519 = vmatpush1.msra.mxu0 0.0
      %520 = vmatprep.subr.mxu0 0.0
      %521 = vmatpush1.msra.mxu0 0.0
      %522 = vmatprep.subr.mxu0 0.0
      %523 = vmatpush1.msra.mxu0 0.0
      %524 = vmatprep.subr.mxu0 0.0
      %525 = vmatpush1.msra.mxu0 0.0
      %526 = vmatprep.subr.mxu0 0.0
      %527 = vmatpush1.msra.mxu0 0.0
      %528 = vmatprep.subr.mxu0 0.0
      %529 = vmatpush1.msra.mxu0 0.0
      %530 = vmatprep.subr.mxu0 0.0
      %531 = vmatpush1.msra.mxu0 0.0
      %532 = vmatprep.subr.mxu0 0.0
      %533 = vmatpush1.msra.mxu0 0.0
      %534 = vmatprep.subr.mxu0 0.0
      %535 = vmatpush1.msra.mxu0 0.0
      %536 = vmatprep.subr.mxu0 0.0
      %537 = vmatpush1.msra.mxu0 0.0
      %538 = vmatprep.subr.mxu0 0.0
      %539 = vmatpush1.msra.mxu0 0.0
      %540 = vmatprep.subr.mxu0 0.0
      %541 = vmatpush1.msra.mxu0 0.0
      %542 = vmatprep.subr.mxu0 0.0
      %543 = vmatpush1.msra.mxu0 0.0
      %544 = vmatprep.subr.mxu0 0.0
      %545 = vmatpush1.msra.mxu0 0.0
      %546 = vmatprep.subr.mxu0 0.0
      %547 = vmatpush1.msra.mxu0 0.0
      %548 = vmatprep.subr.mxu0 0.0
      %549 = vmatpush1.msra.mxu0 0.0
      %550 = vmatprep.subr.mxu0 0.0
      %551 = vmatpush1.msra.mxu0 0.0
      %552 = vmatprep.subr.mxu0 0.0
      %553 = vmatpush1.msra.mxu0 0.0
      %554 = vmatprep.subr.mxu0 0.0
      %555 = vmatpush1.msra.mxu0 0.0
      %556 = vmatprep.subr.mxu0 0.0
      %557 = vmatpush1.msra.mxu0 0.0
      %558 = vmatprep.subr.mxu0 0.0
      %559 = vmatpush1.msra.mxu0 0.0
      %560 = vmatprep.subr.mxu0 0.0
      %561 = vmatpush1.msra.mxu0 0.0
      %562 = vmatprep.subr.mxu0 0.0
      %563 = vmatpush1.msra.mxu0 0.0
      %564 = vmatprep.subr.mxu0 0.0
      %565 = vmatpush1.msra.mxu0 0.0
      %566 = vmatprep.subr.mxu0 0.0
      %567 = vmatpush1.msra.mxu0 0.0
      %568 = vmatprep.subr.mxu0 0.0
      %569 = vmatpush1.msra.mxu0 0.0
      %570 = vmatprep.subr.mxu0 0.0
      %571 = vmatpush1.msra.mxu0 0.0
      %572 = vmatprep.mubr.f32.mxu0 0.0
      %573 = vmatmul.mubr.f32.gmra.mrb[0].mxu0 %v448
      %v574 = vpop.f32.mrb[0].mxu0
      %v575 = vadd.f32 %v429, %v574
      %v576 = vpop.f32.mrb[0].mxu0
      %v577 = vadd.f32 %v429, %v576
      %578 = vmatprep.mubr.f32.mxu0 0.0
      %579 = vmatmul.mubr.f32.gmra.mrb[0].mxu0 %v451
      %v580 = vpop.f32.mrb[0].mxu0
      %v581 = vadd.f32 %v434, %v580
      %v582 = vpop.f32.mrb[0].mxu0
      %v583 = vadd.f32 %v434, %v582
      %584 = vmatprep.mubr.f32.mxu0 0.0
      %585 = vmatmul.mubr.f32.gmra.mrb[0].mxu0 %v454
      %v586 = vpop.f32.mrb[0].mxu0
      %v587 = vadd.f32 %v439, %v586
      %v588 = vpop.f32.mrb[0].mxu0
      %v589 = vadd.f32 %v439, %v588
      %590 = vmatprep.mubr.f32.mxu0 0.0
      %591 = vmatmul.mubr.f32.gmra.mrb[0].mxu0 %v457
      %v592 = vpop.f32.mrb[0].mxu0
      %v593 = vadd.f32 %v444, %v592
      %v594 = vpop.f32.mrb[0].mxu0
      %v595 = vadd.f32 %v444, %v594
      %596 = vdwg.mxu0
      %597 = vmatprep.subr.mxu0 %v389
      %598 = vmatpush1.msra.mxu0 %v388
      %599 = vmatprep.subr.mxu0 %v470
      %600 = vmatpush1.msra.mxu0 %v467
      %601 = vmatprep.subr.mxu0 0.0
      %602 = vmatpush1.msra.mxu0 0.0
      %603 = vmatprep.subr.mxu0 0.0
      %604 = vmatpush1.msra.mxu0 0.0
      %605 = vmatprep.subr.mxu0 0.0
      %606 = vmatpush1.msra.mxu0 0.0
      %607 = vmatprep.subr.mxu0 0.0
      %608 = vmatpush1.msra.mxu0 0.0
      %609 = vmatprep.subr.mxu0 0.0
      %610 = vmatpush1.msra.mxu0 0.0
      %611 = vmatprep.subr.mxu0 0.0
      %612 = vmatpush1.msra.mxu0 0.0
      %613 = vmatprep.subr.mxu0 0.0
      %614 = vmatpush1.msra.mxu0 0.0
      %615 = vmatprep.subr.mxu0 0.0
      %616 = vmatpush1.msra.mxu0 0.0
      %617 = vmatprep.subr.mxu0 0.0
      %618 = vmatpush1.msra.mxu0 0.0
      %619 = vmatprep.subr.mxu0 0.0
      %620 = vmatpush1.msra.mxu0 0.0
      %621 = vmatprep.subr.mxu0 0.0
      %622 = vmatpush1.msra.mxu0 0.0
      %623 = vmatprep.subr.mxu0 0.0
      %624 = vmatpush1.msra.mxu0 0.0
      %625 = vmatprep.subr.mxu0 0.0
      %626 = vmatpush1.msra.mxu0 0.0
      %627 = vmatprep.subr.mxu0 0.0
      %628 = vmatpush1.msra.mxu0 0.0
      %629 = vmatprep.subr.mxu0 0.0
      %630 = vmatpush1.msra.mxu0 0.0
      %631 = vmatprep.subr.mxu0 0.0
      %632 = vmatpush1.msra.mxu0 0.0
      %633 = vmatprep.subr.mxu0 0.0
      %634 = vmatpush1.msra.mxu0 0.0
      %635 = vmatprep.subr.mxu0 0.0
      %636 = vmatpush1.msra.mxu0 0.0
      %637 = vmatprep.subr.mxu0 0.0
      %638 = vmatpush1.msra.mxu0 0.0
      %639 = vmatprep.subr.mxu0 0.0
      %640 = vmatpush1.msra.mxu0 0.0
      %641 = vmatprep.subr.mxu0 0.0
      %642 = vmatpush1.msra.mxu0 0.0
      %643 = vmatprep.subr.mxu0 0.0
      %644 = vmatpush1.msra.mxu0 0.0
      %645 = vmatprep.subr.mxu0 0.0
      %646 = vmatpush1.msra.mxu0 0.0
      %647 = vmatprep.subr.mxu0 0.0
      %648 = vmatpush1.msra.mxu0 0.0
      %649 = vmatprep.subr.mxu0 0.0
      %650 = vmatpush1.msra.mxu0 0.0
      %651 = vmatprep.subr.mxu0 0.0
      %652 = vmatpush1.msra.mxu0 0.0
      %653 = vmatprep.subr.mxu0 0.0
      %654 = vmatpush1.msra.mxu0 0.0
      %655 = vmatprep.subr.mxu0 0.0
      %656 = vmatpush1.msra.mxu0 0.0
      %657 = vmatprep.subr.mxu0 0.0
      %658 = vmatpush1.msra.mxu0 0.0
      %659 = vmatprep.subr.mxu0 0.0
      %660 = vmatpush1.msra.mxu0 0.0
      %661 = vmatprep.mubr.f32.mxu0 0.0
      %662 = vmatmul.mubr.f32.gmra.mrb[0].mxu0 %v448
      %v663 = vpop.f32.mrb[0].mxu0
      %v664 = vadd.f32 %v429, %v663
      %v665 = vpop.f32.mrb[0].mxu0
      %v666 = vadd.f32 %v429, %v665
      %667 = vmatprep.mubr.f32.mxu0 0.0
      %668 = vmatmul.mubr.f32.gmra.mrb[0].mxu0 %v451
      %v669 = vpop.f32.mrb[0].mxu0
      %v670 = vadd.f32 %v434, %v669
      %v671 = vpop.f32.mrb[0].mxu0
      %v672 = vadd.f32 %v434, %v671
      %673 = vmatprep.mubr.f32.mxu0 0.0
      %674 = vmatmul.mubr.f32.gmra.mrb[0].mxu0 %v454
      %v675 = vpop.f32.mrb[0].mxu0
      %v676 = vadd.f32 %v439, %v675
      %v677 = vpop.f32.mrb[0].mxu0
      %v678 = vadd.f32 %v439, %v677
      %679 = vmatprep.mubr.f32.mxu0 0.0
      %680 = vmatmul.mubr.f32.gmra.mrb[0].mxu0 %v457
      %v681 = vpop.f32.mrb[0].mxu0
      %v682 = vadd.f32 %v444, %v681
      %v683 = vpop.f32.mrb[0].mxu0
      %v684 = vadd.f32 %v444, %v683
      %685 = vdwg.mxu0
      %686 = vmatprep.subr.mxu0 %v391
      %687 = vmatpush1.msra.mxu0 %v390
      %688 = vmatprep.subr.mxu0 %v476
      %689 = vmatpush1.msra.mxu0 %v473
      %690 = vmatprep.subr.mxu0 0.0
      %691 = vmatpush1.msra.mxu0 0.0
      %692 = vmatprep.subr.mxu0 0.0
      %693 = vmatpush1.msra.mxu0 0.0
      %694 = vmatprep.subr.mxu0 0.0
      %695 = vmatpush1.msra.mxu0 0.0
      %696 = vmatprep.subr.mxu0 0.0
      %697 = vmatpush1.msra.mxu0 0.0
      %698 = vmatprep.subr.mxu0 0.0
      %699 = vmatpush1.msra.mxu0 0.0
      %700 = vmatprep.subr.mxu0 0.0
      %701 = vmatpush1.msra.mxu0 0.0
      %702 = vmatprep.subr.mxu0 0.0
      %703 = vmatpush1.msra.mxu0 0.0
      %704 = vmatprep.subr.mxu0 0.0
      %705 = vmatpush1.msra.mxu0 0.0
      %706 = vmatprep.subr.mxu0 0.0
      %707 = vmatpush1.msra.mxu0 0.0
      %708 = vmatprep.subr.mxu0 0.0
      %709 = vmatpush1.msra.mxu0 0.0
      %710 = vmatprep.subr.mxu0 0.0
      %711 = vmatpush1.msra.mxu0 0.0
      %712 = vmatprep.subr.mxu0 0.0
      %713 = vmatpush1.msra.mxu0 0.0
      %714 = vmatprep.subr.mxu0 0.0
      %715 = vmatpush1.msra.mxu0 0.0
      %716 = vmatprep.subr.mxu0 0.0
      %717 = vmatpush1.msra.mxu0 0.0
      %718 = vmatprep.subr.mxu0 0.0
      %719 = vmatpush1.msra.mxu0 0.0
      %720 = vmatprep.subr.mxu0 0.0
      %721 = vmatpush1.msra.mxu0 0.0
      %722 = vmatprep.subr.mxu0 0.0
      %723 = vmatpush1.msra.mxu0 0.0
      %724 = vmatprep.subr.mxu0 0.0
      %725 = vmatpush1.msra.mxu0 0.0
      %726 = vmatprep.subr.mxu0 0.0
      %727 = vmatpush1.msra.mxu0 0.0
      %728 = vmatprep.subr.mxu0 0.0
      %729 = vmatpush1.msra.mxu0 0.0
      %730 = vmatprep.subr.mxu0 0.0
      %731 = vmatpush1.msra.mxu0 0.0
      %732 = vmatprep.subr.mxu0 0.0
      %733 = vmatpush1.msra.mxu0 0.0
      %734 = vmatprep.subr.mxu0 0.0
      %735 = vmatpush1.msra.mxu0 0.0
      %736 = vmatprep.subr.mxu0 0.0
      %737 = vmatpush1.msra.mxu0 0.0
      %738 = vmatprep.subr.mxu0 0.0
      %739 = vmatpush1.msra.mxu0 0.0
      %740 = vmatprep.subr.mxu0 0.0
      %741 = vmatpush1.msra.mxu0 0.0
      %742 = vmatprep.subr.mxu0 0.0
      %743 = vmatpush1.msra.mxu0 0.0
      %744 = vmatprep.subr.mxu0 0.0
      %745 = vmatpush1.msra.mxu0 0.0
      %746 = vmatprep.subr.mxu0 0.0
      %747 = vmatpush1.msra.mxu0 0.0
      %748 = vmatprep.subr.mxu0 0.0
      %749 = vmatpush1.msra.mxu0 0.0
      %750 = vmatprep.mubr.f32.mxu0 0.0
      %751 = vmatmul.mubr.f32.gmra.mrb[0].mxu0 %v448
      %v752 = vpop.f32.mrb[0].mxu0
      %v753 = vadd.f32 %v429, %v752
      %v754 = vpop.f32.mrb[0].mxu0
      %v755 = vadd.f32 %v429, %v754
      %756 = vmatprep.mubr.f32.mxu0 0.0
      %757 = vmatmul.mubr.f32.gmra.mrb[0].mxu0 %v451
      %v758 = vpop.f32.mrb[0].mxu0
      %v759 = vadd.f32 %v434, %v758
      %v760 = vpop.f32.mrb[0].mxu0
      %v761 = vadd.f32 %v434, %v760
      %762 = vmatprep.mubr.f32.mxu0 0.0
      %763 = vmatmul.mubr.f32.gmra.mrb[0].mxu0 %v454
      %v764 = vpop.f32.mrb[0].mxu0
      %v765 = vadd.f32 %v439, %v764
      %v766 = vpop.f32.mrb[0].mxu0
      %v767 = vadd.f32 %v439, %v766
      %768 = vmatprep.mubr.f32.mxu0 0.0
      %769 = vmatmul.mubr.f32.gmra.mrb[0].mxu0 %v457
      %v770 = vpop.f32.mrb[0].mxu0
      %v771 = vadd.f32 %v444, %v770
      %v772 = vpop.f32.mrb[0].mxu0
      %v773 = vadd.f32 %v444, %v772
      %774 = vdwg.mxu0
      %775 = vmatprep.subr.mxu0 %v393
      %776 = vmatpush1.msra.mxu0 %v392
      %777 = vmatprep.subr.mxu0 %v482
      %778 = vmatpush1.msra.mxu0 %v479
      %779 = vmatprep.subr.mxu0 0.0
      %780 = vmatpush1.msra.mxu0 0.0
      %781 = vmatprep.subr.mxu0 0.0
      %782 = vmatpush1.msra.mxu0 0.0
      %783 = vmatprep.subr.mxu0 0.0
      %784 = vmatpush1.msra.mxu0 0.0
      %785 = vmatprep.subr.mxu0 0.0
      %786 = vmatpush1.msra.mxu0 0.0
      %787 = vmatprep.subr.mxu0 0.0
      %788 = vmatpush1.msra.mxu0 0.0
      %789 = vmatprep.subr.mxu0 0.0
      %790 = vmatpush1.msra.mxu0 0.0
      %791 = vmatprep.subr.mxu0 0.0
      %792 = vmatpush1.msra.mxu0 0.0
      %793 = vmatprep.subr.mxu0 0.0
      %794 = vmatpush1.msra.mxu0 0.0
      %795 = vmatprep.subr.mxu0 0.0
      %796 = vmatpush1.msra.mxu0 0.0
      %797 = vmatprep.subr.mxu0 0.0
      %798 = vmatpush1.msra.mxu0 0.0
      %799 = vmatprep.subr.mxu0 0.0
      %800 = vmatpush1.msra.mxu0 0.0
      %801 = vmatprep.subr.mxu0 0.0
      %802 = vmatpush1.msra.mxu0 0.0
      %803 = vmatprep.subr.mxu0 0.0
      %804 = vmatpush1.msra.mxu0 0.0
      %805 = vmatprep.subr.mxu0 0.0
      %806 = vmatpush1.msra.mxu0 0.0
      %807 = vmatprep.subr.mxu0 0.0
      %808 = vmatpush1.msra.mxu0 0.0
      %809 = vmatprep.subr.mxu0 0.0
      %810 = vmatpush1.msra.mxu0 0.0
      %811 = vmatprep.subr.mxu0 0.0
      %812 = vmatpush1.msra.mxu0 0.0
      %813 = vmatprep.subr.mxu0 0.0
      %814 = vmatpush1.msra.mxu0 0.0
      %815 = vmatprep.subr.mxu0 0.0
      %816 = vmatpush1.msra.mxu0 0.0
      %817 = vmatprep.subr.mxu0 0.0
      %818 = vmatpush1.msra.mxu0 0.0
      %819 = vmatprep.subr.mxu0 0.0
      %820 = vmatpush1.msra.mxu0 0.0
      %821 = vmatprep.subr.mxu0 0.0
      %822 = vmatpush1.msra.mxu0 0.0
      %823 = vmatprep.subr.mxu0 0.0
      %824 = vmatpush1.msra.mxu0 0.0
      %825 = vmatprep.subr.mxu0 0.0
      %826 = vmatpush1.msra.mxu0 0.0
      %827 = vmatprep.subr.mxu0 0.0
      %828 = vmatpush1.msra.mxu0 0.0
      %829 = vmatprep.subr.mxu0 0.0
      %830 = vmatpush1.msra.mxu0 0.0
      %831 = vmatprep.subr.mxu0 0.0
      %832 = vmatpush1.msra.mxu0 0.0
      %833 = vmatprep.subr.mxu0 0.0
      %834 = vmatpush1.msra.mxu0 0.0
      %835 = vmatprep.subr.mxu0 0.0
      %836 = vmatpush1.msra.mxu0 0.0
      %837 = vmatprep.subr.mxu0 0.0
      %838 = vmatpush1.msra.mxu0 0.0
      %839 = vmatprep.mubr.f32.mxu0 0.0
      %840 = vmatmul.mubr.f32.gmra.mrb[0].mxu0 %v448
      %v841 = vpop.f32.mrb[0].mxu0
      %v842 = vadd.f32 %v429, %v841
      %v843 = vpop.f32.mrb[0].mxu0
      %v844 = vadd.f32 %v429, %v843
      %845 = vmatprep.mubr.f32.mxu0 0.0
      %846 = vmatmul.mubr.f32.gmra.mrb[0].mxu0 %v451
      %v847 = vpop.f32.mrb[0].mxu0
      %v848 = vadd.f32 %v434, %v847
      %v849 = vpop.f32.mrb[0].mxu0
      %v850 = vadd.f32 %v434, %v849
      %851 = vmatprep.mubr.f32.mxu0 0.0
      %852 = vmatmul.mubr.f32.gmra.mrb[0].mxu0 %v454
      %v853 = vpop.f32.mrb[0].mxu0
      %v854 = vadd.f32 %v439, %v853
      %v855 = vpop.f32.mrb[0].mxu0
      %v856 = vadd.f32 %v439, %v855
      %857 = vmatprep.mubr.f32.mxu0 0.0
      %858 = vmatmul.mubr.f32.gmra.mrb[0].mxu0 %v457
      %v859 = vpop.f32.mrb[0].mxu0
      %v860 = vadd.f32 %v444, %v859
      %v861 = vpop.f32.mrb[0].mxu0
      %v862 = vadd.f32 %v444, %v861
      %863 = vdwg.mxu0
      %864 = vmatprep.subr.mxu0 %v395
      %865 = vmatpush1.msra.mxu0 %v394
      %866 = vmatprep.subr.mxu0 %v488
      %867 = vmatpush1.msra.mxu0 %v485
      %868 = vmatprep.subr.mxu0 0.0
      %869 = vmatpush1.msra.mxu0 0.0
      %870 = vmatprep.subr.mxu0 0.0
      %871 = vmatpush1.msra.mxu0 0.0
      %872 = vmatprep.subr.mxu0 0.0
      %873 = vmatpush1.msra.mxu0 0.0
      %874 = vmatprep.subr.mxu0 0.0
      %875 = vmatpush1.msra.mxu0 0.0
      %876 = vmatprep.subr.mxu0 0.0
      %877 = vmatpush1.msra.mxu0 0.0
      %878 = vmatprep.subr.mxu0 0.0
      %879 = vmatpush1.msra.mxu0 0.0
      %880 = vmatprep.subr.mxu0 0.0
      %881 = vmatpush1.msra.mxu0 0.0
      %882 = vmatprep.subr.mxu0 0.0
      %883 = vmatpush1.msra.mxu0 0.0
      %884 = vmatprep.subr.mxu0 0.0
      %885 = vmatpush1.msra.mxu0 0.0
      %886 = vmatprep.subr.mxu0 0.0
      %887 = vmatpush1.msra.mxu0 0.0
      %888 = vmatprep.subr.mxu0 0.0
      %889 = vmatpush1.msra.mxu0 0.0
      %890 = vmatprep.subr.mxu0 0.0
      %891 = vmatpush1.msra.mxu0 0.0
      %892 = vmatprep.subr.mxu0 0.0
      %893 = vmatpush1.msra.mxu0 0.0
      %894 = vmatprep.subr.mxu0 0.0
      %895 = vmatpush1.msra.mxu0 0.0
      %896 = vmatprep.subr.mxu0 0.0
      %897 = vmatpush1.msra.mxu0 0.0
      %898 = vmatprep.subr.mxu0 0.0
      %899 = vmatpush1.msra.mxu0 0.0
      %900 = vmatprep.subr.mxu0 0.0
      %901 = vmatpush1.msra.mxu0 0.0
      %902 = vmatprep.subr.mxu0 0.0
      %903 = vmatpush1.msra.mxu0 0.0
      %904 = vmatprep.subr.mxu0 0.0
      %905 = vmatpush1.msra.mxu0 0.0
      %906 = vmatprep.subr.mxu0 0.0
      %907 = vmatpush1.msra.mxu0 0.0
      %908 = vmatprep.subr.mxu0 0.0
      %909 = vmatpush1.msra.mxu0 0.0
      %910 = vmatprep.subr.mxu0 0.0
      %911 = vmatpush1.msra.mxu0 0.0
      %912 = vmatprep.subr.mxu0 0.0
      %913 = vmatpush1.msra.mxu0 0.0
      %914 = vmatprep.subr.mxu0 0.0
      %915 = vmatpush1.msra.mxu0 0.0
      %916 = vmatprep.subr.mxu0 0.0
      %917 = vmatpush1.msra.mxu0 0.0
      %918 = vmatprep.subr.mxu0 0.0
      %919 = vmatpush1.msra.mxu0 0.0
      %920 = vmatprep.subr.mxu0 0.0
      %921 = vmatpush1.msra.mxu0 0.0
      %922 = vmatprep.subr.mxu0 0.0
      %923 = vmatpush1.msra.mxu0 0.0
      %924 = vmatprep.subr.mxu0 0.0
      %925 = vmatpush1.msra.mxu0 0.0
      %926 = vmatprep.subr.mxu0 0.0
      %927 = vmatpush1.msra.mxu0 0.0
      %928 = vmatprep.mubr.f32.mxu0 0.0
      %929 = vmatmul.mubr.f32.gmra.mrb[0].mxu0 %v448
      %v930 = vpop.f32.mrb[0].mxu0
      %v931 = vadd.f32 %v429, %v930
      %v932 = vpop.f32.mrb[0].mxu0
      %v933 = vadd.f32 %v429, %v932
      %934 = vmatprep.mubr.f32.mxu0 0.0
      %935 = vmatmul.mubr.f32.gmra.mrb[0].mxu0 %v451
      %v936 = vpop.f32.mrb[0].mxu0
      %v937 = vadd.f32 %v434, %v936
      %v938 = vpop.f32.mrb[0].mxu0
      %v939 = vadd.f32 %v434, %v938
      %940 = vmatprep.mubr.f32.mxu0 0.0
      %941 = vmatmul.mubr.f32.gmra.mrb[0].mxu0 %v454
      %v942 = vpop.f32.mrb[0].mxu0
      %v943 = vadd.f32 %v439, %v942
      %v944 = vpop.f32.mrb[0].mxu0
      %v945 = vadd.f32 %v439, %v944
      %946 = vmatprep.mubr.f32.mxu0 0.0
      %947 = vmatmul.mubr.f32.gmra.mrb[0].mxu0 %v457
      %v948 = vpop.f32.mrb[0].mxu0
      %v949 = vadd.f32 %v444, %v948
      %v950 = vpop.f32.mrb[0].mxu0
      %v951 = vadd.f32 %v444, %v950
      %952 = vdwg.mxu0
      %953 = vmatprep.subr.mxu0 %v397
      %954 = vmatpush1.msra.mxu0 %v396
      %955 = vmatprep.subr.mxu0 %v494
      %956 = vmatpush1.msra.mxu0 %v491
      %957 = vmatprep.subr.mxu0 0.0
      %958 = vmatpush1.msra.mxu0 0.0
      %959 = vmatprep.subr.mxu0 0.0
      %960 = vmatpush1.msra.mxu0 0.0
      %961 = vmatprep.subr.mxu0 0.0
      %962 = vmatpush1.msra.mxu0 0.0
      %963 = vmatprep.subr.mxu0 0.0
      %964 = vmatpush1.msra.mxu0 0.0
      %965 = vmatprep.subr.mxu0 0.0
      %966 = vmatpush1.msra.mxu0 0.0
      %967 = vmatprep.subr.mxu0 0.0
      %968 = vmatpush1.msra.mxu0 0.0
      %969 = vmatprep.subr.mxu0 0.0
      %970 = vmatpush1.msra.mxu0 0.0
      %971 = vmatprep.subr.mxu0 0.0
      %972 = vmatpush1.msra.mxu0 0.0
      %973 = vmatprep.subr.mxu0 0.0
      %974 = vmatpush1.msra.mxu0 0.0
      %975 = vmatprep.subr.mxu0 0.0
      %976 = vmatpush1.msra.mxu0 0.0
      %977 = vmatprep.subr.mxu0 0.0
      %978 = vmatpush1.msra.mxu0 0.0
      %979 = vmatprep.subr.mxu0 0.0
      %980 = vmatpush1.msra.mxu0 0.0
      %981 = vmatprep.subr.mxu0 0.0
      %982 = vmatpush1.msra.mxu0 0.0
      %983 = vmatprep.subr.mxu0 0.0
      %984 = vmatpush1.msra.mxu0 0.0
      %985 = vmatprep.subr.mxu0 0.0
      %986 = vmatpush1.msra.mxu0 0.0
      %987 = vmatprep.subr.mxu0 0.0
      %988 = vmatpush1.msra.mxu0 0.0
      %989 = vmatprep.subr.mxu0 0.0
      %990 = vmatpush1.msra.mxu0 0.0
      %991 = vmatprep.subr.mxu0 0.0
      %992 = vmatpush1.msra.mxu0 0.0
      %993 = vmatprep.subr.mxu0 0.0
      %994 = vmatpush1.msra.mxu0 0.0
      %995 = vmatprep.subr.mxu0 0.0
      %996 = vmatpush1.msra.mxu0 0.0
      %997 = vmatprep.subr.mxu0 0.0
      %998 = vmatpush1.msra.mxu0 0.0
      %999 = vmatprep.subr.mxu0 0.0
      %1000 = vmatpush1.msra.mxu0 0.0
      %1001 = vmatprep.subr.mxu0 0.0
      %1002 = vmatpush1.msra.mxu0 0.0
      %1003 = vmatprep.subr.mxu0 0.0
      %1004 = vmatpush1.msra.mxu0 0.0
      %1005 = vmatprep.subr.mxu0 0.0
      %1006 = vmatpush1.msra.mxu0 0.0
      %1007 = vmatprep.subr.mxu0 0.0
      %1008 = vmatpush1.msra.mxu0 0.0
      %1009 = vmatprep.subr.mxu0 0.0
      %1010 = vmatpush1.msra.mxu0 0.0
      %1011 = vmatprep.subr.mxu0 0.0
      %1012 = vmatpush1.msra.mxu0 0.0
      %1013 = vmatprep.subr.mxu0 0.0
      %1014 = vmatpush1.msra.mxu0 0.0
      %1015 = vmatprep.subr.mxu0 0.0
      %1016 = vmatpush1.msra.mxu0 0.0
      %1017 = vmatprep.mubr.f32.mxu0 0.0
      %1018 = vmatmul.mubr.f32.gmra.mrb[0].mxu0 %v448
      %v1019 = vpop.f32.mrb[0].mxu0
      %v1020 = vadd.f32 %v429, %v1019
      %v1021 = vpop.f32.mrb[0].mxu0
      %v1022 = vadd.f32 %v429, %v1021
      %1023 = vmatprep.mubr.f32.mxu0 0.0
      %1024 = vmatmul.mubr.f32.gmra.mrb[0].mxu0 %v451
      %v1025 = vpop.f32.mrb[0].mxu0
      %v1026 = vadd.f32 %v434, %v1025
      %v1027 = vpop.f32.mrb[0].mxu0
      %v1028 = vadd.f32 %v434, %v1027
      %1029 = vmatprep.mubr.f32.mxu0 0.0
      %1030 = vmatmul.mubr.f32.gmra.mrb[0].mxu0 %v454
      %v1031 = vpop.f32.mrb[0].mxu0
      %v1032 = vadd.f32 %v439, %v1031
      %v1033 = vpop.f32.mrb[0].mxu0
      %v1034 = vadd.f32 %v439, %v1033
      %1035 = vmatprep.mubr.f32.mxu0 0.0
      %1036 = vmatmul.mubr.f32.gmra.mrb[0].mxu0 %v457
      %v1037 = vpop.f32.mrb[0].mxu0
      %v1038 = vadd.f32 %v444, %v1037
      %v1039 = vpop.f32.mrb[0].mxu0
      %v1040 = vadd.f32 %v444, %v1039
      %1041 = vdwg.mxu0
      %1042 = vmatprep.subr.mxu0 %v399
      %1043 = vmatpush1.msra.mxu0 %v398
      %1044 = vmatprep.subr.mxu0 %v500
      %1045 = vmatpush1.msra.mxu0 %v497
      %1046 = vmatprep.subr.mxu0 0.0
      %1047 = vmatpush1.msra.mxu0 0.0
      %1048 = vmatprep.subr.mxu0 0.0
      %1049 = vmatpush1.msra.mxu0 0.0
      %1050 = vmatprep.subr.mxu0 0.0
      %1051 = vmatpush1.msra.mxu0 0.0
      %1052 = vmatprep.subr.mxu0 0.0
      %1053 = vmatpush1.msra.mxu0 0.0
      %1054 = vmatprep.subr.mxu0 0.0
      %1055 = vmatpush1.msra.mxu0 0.0
      %1056 = vmatprep.subr.mxu0 0.0
      %1057 = vmatpush1.msra.mxu0 0.0
      %1058 = vmatprep.subr.mxu0 0.0
      %1059 = vmatpush1.msra.mxu0 0.0
      %1060 = vmatprep.subr.mxu0 0.0
      %1061 = vmatpush1.msra.mxu0 0.0
      %1062 = vmatprep.subr.mxu0 0.0
      %1063 = vmatpush1.msra.mxu0 0.0
      %1064 = vmatprep.subr.mxu0 0.0
      %1065 = vmatpush1.msra.mxu0 0.0
      %1066 = vmatprep.subr.mxu0 0.0
      %1067 = vmatpush1.msra.mxu0 0.0
      %1068 = vmatprep.subr.mxu0 0.0
      %1069 = vmatpush1.msra.mxu0 0.0
      %1070 = vmatprep.subr.mxu0 0.0
      %1071 = vmatpush1.msra.mxu0 0.0
      %1072 = vmatprep.subr.mxu0 0.0
      %1073 = vmatpush1.msra.mxu0 0.0
      %1074 = vmatprep.subr.mxu0 0.0
      %1075 = vmatpush1.msra.mxu0 0.0
      %1076 = vmatprep.subr.mxu0 0.0
      %1077 = vmatpush1.msra.mxu0 0.0
      %1078 = vmatprep.subr.mxu0 0.0
      %1079 = vmatpush1.msra.mxu0 0.0
      %1080 = vmatprep.subr.mxu0 0.0
      %1081 = vmatpush1.msra.mxu0 0.0
      %1082 = vmatprep.subr.mxu0 0.0
      %1083 = vmatpush1.msra.mxu0 0.0
      %1084 = vmatprep.subr.mxu0 0.0
      %1085 = vmatpush1.msra.mxu0 0.0
      %1086 = vmatprep.subr.mxu0 0.0
      %1087 = vmatpush1.msra.mxu0 0.0
      %1088 = vmatprep.subr.mxu0 0.0
      %1089 = vmatpush1.msra.mxu0 0.0
      %1090 = vmatprep.subr.mxu0 0.0
      %1091 = vmatpush1.msra.mxu0 0.0
      %1092 = vmatprep.subr.mxu0 0.0
      %1093 = vmatpush1.msra.mxu0 0.0
      %1094 = vmatprep.subr.mxu0 0.0
      %1095 = vmatpush1.msra.mxu0 0.0
      %1096 = vmatprep.subr.mxu0 0.0
      %1097 = vmatpush1.msra.mxu0 0.0
      %1098 = vmatprep.subr.mxu0 0.0
      %1099 = vmatpush1.msra.mxu0 0.0
      %1100 = vmatprep.subr.mxu0 0.0
      %1101 = vmatpush1.msra.mxu0 0.0
      %1102 = vmatprep.subr.mxu0 0.0
      %1103 = vmatpush1.msra.mxu0 0.0
      %1104 = vmatprep.subr.mxu0 0.0
      %1105 = vmatpush1.msra.mxu0 0.0
      %1106 = vmatprep.mubr.f32.mxu0 0.0
      %1107 = vmatmul.mubr.f32.gmra.mrb[0].mxu0 %v448
      %v1108 = vpop.f32.mrb[0].mxu0
      %v1109 = vadd.f32 %v429, %v1108
      %v1110 = vpop.f32.mrb[0].mxu0
      %v1111 = vadd.f32 %v429, %v1110
      %1112 = vmatprep.mubr.f32.mxu0 0.0
      %1113 = vmatmul.mubr.f32.gmra.mrb[0].mxu0 %v451
      %v1114 = vpop.f32.mrb[0].mxu0
      %v1115 = vadd.f32 %v434, %v1114
      %v1116 = vpop.f32.mrb[0].mxu0
      %v1117 = vadd.f32 %v434, %v1116
      %1118 = vmatprep.mubr.f32.mxu0 0.0
      %1119 = vmatmul.mubr.f32.gmra.mrb[0].mxu0 %v454
      %v1120 = vpop.f32.mrb[0].mxu0
      %v1121 = vadd.f32 %v439, %v1120
      %v1122 = vpop.f32.mrb[0].mxu0
      %v1123 = vadd.f32 %v439, %v1122
      %1124 = vmatprep.mubr.f32.mxu0 0.0
      %1125 = vmatmul.mubr.f32.gmra.mrb[0].mxu0 %v457
      %v1126 = vpop.f32.mrb[0].mxu0
      %v1127 = vadd.f32 %v444, %v1126
      %v1128 = vpop.f32.mrb[0].mxu0
      %v1129 = vadd.f32 %v444, %v1128
      %1130 = vdwg.mxu0
      %1131 = vmatprep.subr.mxu0 %v401
      %1132 = vmatpush1.msra.mxu0 %v400
      %1133 = vmatprep.subr.mxu0 %v506
      %1134 = vmatpush1.msra.mxu0 %v503
      %1135 = vmatprep.subr.mxu0 0.0
      %1136 = vmatpush1.msra.mxu0 0.0
      %1137 = vmatprep.subr.mxu0 0.0
      %1138 = vmatpush1.msra.mxu0 0.0
      %1139 = vmatprep.subr.mxu0 0.0
      %1140 = vmatpush1.msra.mxu0 0.0
      %1141 = vmatprep.subr.mxu0 0.0
      %1142 = vmatpush1.msra.mxu0 0.0
      %1143 = vmatprep.subr.mxu0 0.0
      %1144 = vmatpush1.msra.mxu0 0.0
      %1145 = vmatprep.subr.mxu0 0.0
      %1146 = vmatpush1.msra.mxu0 0.0
      %1147 = vmatprep.subr.mxu0 0.0
      %1148 = vmatpush1.msra.mxu0 0.0
      %1149 = vmatprep.subr.mxu0 0.0
      %1150 = vmatpush1.msra.mxu0 0.0
      %1151 = vmatprep.subr.mxu0 0.0
      %1152 = vmatpush1.msra.mxu0 0.0
      %1153 = vmatprep.subr.mxu0 0.0
      %1154 = vmatpush1.msra.mxu0 0.0
      %1155 = vmatprep.subr.mxu0 0.0
      %1156 = vmatpush1.msra.mxu0 0.0
      %1157 = vmatprep.subr.mxu0 0.0
      %1158 = vmatpush1.msra.mxu0 0.0
      %1159 = vmatprep.subr.mxu0 0.0
      %1160 = vmatpush1.msra.mxu0 0.0
      %1161 = vmatprep.subr.mxu0 0.0
      %1162 = vmatpush1.msra.mxu0 0.0
      %1163 = vmatprep.subr.mxu0 0.0
      %1164 = vmatpush1.msra.mxu0 0.0
      %1165 = vmatprep.subr.mxu0 0.0
      %1166 = vmatpush1.msra.mxu0 0.0
      %1167 = vmatprep.subr.mxu0 0.0
      %1168 = vmatpush1.msra.mxu0 0.0
      %1169 = vmatprep.subr.mxu0 0.0
      %1170 = vmatpush1.msra.mxu0 0.0
      %1171 = vmatprep.subr.mxu0 0.0
      %1172 = vmatpush1.msra.mxu0 0.0
      %1173 = vmatprep.subr.mxu0 0.0
      %1174 = vmatpush1.msra.mxu0 0.0
      %1175 = vmatprep.subr.mxu0 0.0
      %1176 = vmatpush1.msra.mxu0 0.0
      %1177 = vmatprep.subr.mxu0 0.0
      %1178 = vmatpush1.msra.mxu0 0.0
      %1179 = vmatprep.subr.mxu0 0.0
      %1180 = vmatpush1.msra.mxu0 0.0
      %1181 = vmatprep.subr.mxu0 0.0
      %1182 = vmatpush1.msra.mxu0 0.0
      %1183 = vmatprep.subr.mxu0 0.0
      %1184 = vmatpush1.msra.mxu0 0.0
      %1185 = vmatprep.subr.mxu0 0.0
      %1186 = vmatpush1.msra.mxu0 0.0
      %1187 = vmatprep.subr.mxu0 0.0
      %1188 = vmatpush1.msra.mxu0 0.0
      %1189 = vmatprep.subr.mxu0 0.0
      %1190 = vmatpush1.msra.mxu0 0.0
      %1191 = vmatprep.subr.mxu0 0.0
      %1192 = vmatpush1.msra.mxu0 0.0
      %1193 = vmatprep.subr.mxu0 0.0
      %1194 = vmatpush1.msra.mxu0 0.0
      %1195 = vmatprep.mubr.f32.mxu0 0.0
      %1196 = vmatmul.mubr.f32.gmra.mrb[0].mxu0 %v448
      %v1197 = vpop.f32.mrb[0].mxu0
      %v1198 = vadd.f32 %v429, %v1197
      %v1199 = vpop.f32.mrb[0].mxu0
      %v1200 = vadd.f32 %v429, %v1199
      %1201 = vmatprep.mubr.f32.mxu0 0.0
      %1202 = vmatmul.mubr.f32.gmra.mrb[0].mxu0 %v451
      %v1203 = vpop.f32.mrb[0].mxu0
      %v1204 = vadd.f32 %v434, %v1203
      %v1205 = vpop.f32.mrb[0].mxu0
      %v1206 = vadd.f32 %v434, %v1205
      %1207 = vmatprep.mubr.f32.mxu0 0.0
      %1208 = vmatmul.mubr.f32.gmra.mrb[0].mxu0 %v454
      %v1209 = vpop.f32.mrb[0].mxu0
      %v1210 = vadd.f32 %v439, %v1209
      %v1211 = vpop.f32.mrb[0].mxu0
      %v1212 = vadd.f32 %v439, %v1211
      %1213 = vmatprep.mubr.f32.mxu0 0.0
      %1214 = vmatmul.mubr.f32.gmra.mrb[0].mxu0 %v457
      %v1215 = vpop.f32.mrb[0].mxu0
      %v1216 = vadd.f32 %v444, %v1215
      %v1217 = vpop.f32.mrb[0].mxu0
      %v1218 = vadd.f32 %v444, %v1217
      %1219 = vdwg.mxu0
      %v1220 = vmax.f32 %v575, 0.0
      %v1221 = vmax.f32 %v577, 0.0
      %v1222 = vmax.f32 %v664, 0.0
      %v1223 = vmax.f32 %v666, 0.0
      %v1224 = vmax.f32 %v753, 0.0
      %v1225 = vmax.f32 %v755, 0.0
      %v1226 = vmax.f32 %v842, 0.0
      %v1227 = vmax.f32 %v844, 0.0
      %v1228 = vmax.f32 %v931, 0.0
      %v1229 = vmax.f32 %v933, 0.0
      %v1230 = vmax.f32 %v1020, 0.0
      %v1231 = vmax.f32 %v1022, 0.0
      %v1232 = vmax.f32 %v1109, 0.0
      %v1233 = vmax.f32 %v1111, 0.0
      %v1234 = vmax.f32 %v1198, 0.0
      %v1235 = vmax.f32 %v1200, 0.0
      %v1236 = vmax.f32 %v581, 0.0
      %v1237 = vmax.f32 %v583, 0.0
      %v1238 = vmax.f32 %v670, 0.0
      %v1239 = vmax.f32 %v672, 0.0
      %v1240 = vmax.f32 %v759, 0.0
      %v1241 = vmax.f32 %v761, 0.0
      %v1242 = vmax.f32 %v848, 0.0
      %v1243 = vmax.f32 %v850, 0.0
      %v1244 = vmax.f32 %v937, 0.0
      %v1245 = vmax.f32 %v939, 0.0
      %v1246 = vmax.f32 %v1026, 0.0
      %v1247 = vmax.f32 %v1028, 0.0
      %v1248 = vmax.f32 %v1115, 0.0
      %v1249 = vmax.f32 %v1117, 0.0
      %v1250 = vmax.f32 %v1204, 0.0
      %v1251 = vmax.f32 %v1206, 0.0
      %v1252 = vmax.f32 %v587, 0.0
      %v1253 = vmax.f32 %v589, 0.0
      %v1254 = vmax.f32 %v676, 0.0
      %v1255 = vmax.f32 %v678, 0.0
      %v1256 = vmax.f32 %v765, 0.0
      %v1257 = vmax.f32 %v767, 0.0
      %v1258 = vmax.f32 %v854, 0.0
      %v1259 = vmax.f32 %v856, 0.0
      %v1260 = vmax.f32 %v943, 0.0
      %v1261 = vmax.f32 %v945, 0.0
      %v1262 = vmax.f32 %v1032, 0.0
      %v1263 = vmax.f32 %v1034, 0.0
      %v1264 = vmax.f32 %v1121, 0.0
      %v1265 = vmax.f32 %v1123, 0.0
      %v1266 = vmax.f32 %v1210, 0.0
      %v1267 = vmax.f32 %v1212, 0.0
      %v1268 = vmax.f32 %v593, 0.0
      %v1269 = vmax.f32 %v595, 0.0
      %v1270 = vmax.f32 %v682, 0.0
      %v1271 = vmax.f32 %v684, 0.0
      %v1272 = vmax.f32 %v771, 0.0
      %v1273 = vmax.f32 %v773, 0.0
      %v1274 = vmax.f32 %v860, 0.0
      %v1275 = vmax.f32 %v862, 0.0
      %v1276 = vmax.f32 %v949, 0.0
      %v1277 = vmax.f32 %v951, 0.0
      %v1278 = vmax.f32 %v1038, 0.0
      %v1279 = vmax.f32 %v1040, 0.0
      %v1280 = vmax.f32 %v1127, 0.0
      %v1281 = vmax.f32 %v1129, 0.0
      %v1282 = vmax.f32 %v1216, 0.0
      %v1283 = vmax.f32 %v1218, 0.0
      %v1284 = vcombine.low %v1220, %v1224
      %v1285 = vcombine.high %v1220, %v1224
      %v1287 = vunpack.c.l.s4 1983009808
      %v1288 = vunpack.c.0.s8 %v1287
      %v1289 = vlaneseq
      %v1290 = vshrl.u32 %v1289, 7
      %v1291 = vsub.s32 %v1288, %v1290
      %v1292 = vrot.slane %v1284, %v1291
      %v1294 = vunpack.c.l.s4 1983009808
      %v1295 = vunpack.c.0.s8 %v1294
      %v1296 = vlaneseq
      %v1297 = vshrl.u32 %v1296, 7
      %v1298 = vsub.s32 %v1295, %v1297
      %v1299 = vrot.slane %v1285, %v1298
      %v1300 = vcombine.low %v1222, %v1226
      %v1301 = vcombine.high %v1222, %v1226
      %v1303 = vunpack.c.l.s4 1983009808
      %v1304 = vunpack.c.0.s8 %v1303
      %v1305 = vlaneseq
      %v1306 = vshrl.u32 %v1305, 7
      %v1307 = vsub.s32 %v1304, %v1306
      %v1308 = vrot.slane %v1300, %v1307
      %v1310 = vunpack.c.l.s4 1983009808
      %v1311 = vunpack.c.0.s8 %v1310
      %v1312 = vlaneseq
      %v1313 = vshrl.u32 %v1312, 7
      %v1314 = vsub.s32 %v1311, %v1313
      %v1315 = vrot.slane %v1301, %v1314
      %v1316 = vcombine.low %v1228, %v1232
      %v1317 = vcombine.high %v1228, %v1232
      %v1319 = vunpack.c.l.s4 1983009808
      %v1320 = vunpack.c.0.s8 %v1319
      %v1321 = vlaneseq
      %v1322 = vshrl.u32 %v1321, 7
      %v1323 = vsub.s32 %v1320, %v1322
      %v1324 = vrot.slane %v1316, %v1323
      %v1326 = vunpack.c.l.s4 1983009808
      %v1327 = vunpack.c.0.s8 %v1326
      %v1328 = vlaneseq
      %v1329 = vshrl.u32 %v1328, 7
      %v1330 = vsub.s32 %v1327, %v1329
      %v1331 = vrot.slane %v1317, %v1330
      %v1332 = vcombine.low %v1230, %v1234
      %v1333 = vcombine.high %v1230, %v1234
      %v1335 = vunpack.c.l.s4 1983009808
      %v1336 = vunpack.c.0.s8 %v1335
      %v1337 = vlaneseq
      %v1338 = vshrl.u32 %v1337, 7
      %v1339 = vsub.s32 %v1336, %v1338
      %v1340 = vrot.slane %v1332, %v1339
      %v1342 = vunpack.c.l.s4 1983009808
      %v1343 = vunpack.c.0.s8 %v1342
      %v1344 = vlaneseq
      %v1345 = vshrl.u32 %v1344, 7
      %v1346 = vsub.s32 %v1343, %v1345
      %v1347 = vrot.slane %v1333, %v1346
      %v1348 = vcombine.low %v1292, %v1308
      %v1349 = vcombine.high %v1292, %v1308
      %v1351 = vunpack.c.l.s4 1934713408
      %v1352 = vunpack.c.0.s8 %v1351
      %v1353 = vlaneseq
      %v1354 = vshrl.u32 %v1353, 7
      %v1355 = vsub.s32 %v1352, %v1354
      %v1356 = vrot.slane %v1348, %v1355
      %v1358 = vunpack.c.l.s4 1934713408
      %v1359 = vunpack.c.0.s8 %v1358
      %v1360 = vlaneseq
      %v1361 = vshrl.u32 %v1360, 7
      %v1362 = vsub.s32 %v1359, %v1361
      %v1363 = vrot.slane %v1349, %v1362
      %v1364 = vcombine.low %v1299, %v1315
      %v1365 = vcombine.high %v1299, %v1315
      %v1367 = vunpack.c.l.s4 1934713408
      %v1368 = vunpack.c.0.s8 %v1367
      %v1369 = vlaneseq
      %v1370 = vshrl.u32 %v1369, 7
      %v1371 = vsub.s32 %v1368, %v1370
      %v1372 = vrot.slane %v1364, %v1371
      %v1374 = vunpack.c.l.s4 1934713408
      %v1375 = vunpack.c.0.s8 %v1374
      %v1376 = vlaneseq
      %v1377 = vshrl.u32 %v1376, 7
      %v1378 = vsub.s32 %v1375, %v1377
      %v1379 = vrot.slane %v1365, %v1378
      %v1380 = vcombine.low %v1324, %v1340
      %v1381 = vcombine.high %v1324, %v1340
      %v1383 = vunpack.c.l.s4 1934713408
      %v1384 = vunpack.c.0.s8 %v1383
      %v1385 = vlaneseq
      %v1386 = vshrl.u32 %v1385, 7
      %v1387 = vsub.s32 %v1384, %v1386
      %v1388 = vrot.slane %v1380, %v1387
      %v1390 = vunpack.c.l.s4 1934713408
      %v1391 = vunpack.c.0.s8 %v1390
      %v1392 = vlaneseq
      %v1393 = vshrl.u32 %v1392, 7
      %v1394 = vsub.s32 %v1391, %v1393
      %v1395 = vrot.slane %v1381, %v1394
      %v1396 = vcombine.low %v1331, %v1347
      %v1397 = vcombine.high %v1331, %v1347
      %v1399 = vunpack.c.l.s4 1934713408
      %v1400 = vunpack.c.0.s8 %v1399
      %v1401 = vlaneseq
      %v1402 = vshrl.u32 %v1401, 7
      %v1403 = vsub.s32 %v1400, %v1402
      %v1404 = vrot.slane %v1396, %v1403
      %v1406 = vunpack.c.l.s4 1934713408
      %v1407 = vunpack.c.0.s8 %v1406
      %v1408 = vlaneseq
      %v1409 = vshrl.u32 %v1408, 7
      %v1410 = vsub.s32 %v1407, %v1409
      %v1411 = vrot.slane %v1397, %v1410
      %v1412 = vcombine.low %v1356, %v1388
      %v1413 = vcombine.high %v1356, %v1388
      %v1414 = vcombine.low %v1363, %v1395
      %v1415 = vcombine.high %v1363, %v1395
      %v1416 = vcombine.low %v1372, %v1404
      %v1417 = vcombine.high %v1372, %v1404
      %v1418 = vcombine.low %v1379, %v1411
      %v1419 = vcombine.high %v1379, %v1411
      %v1420 = vcombine.low %v1236, %v1240
      %v1421 = vcombine.high %v1236, %v1240
      %v1423 = vunpack.c.l.s4 1983009808
      %v1424 = vunpack.c.0.s8 %v1423
      %v1425 = vlaneseq
      %v1426 = vshrl.u32 %v1425, 7
      %v1427 = vsub.s32 %v1424, %v1426
      %v1428 = vrot.slane %v1420, %v1427
      %v1430 = vunpack.c.l.s4 1983009808
      %v1431 = vunpack.c.0.s8 %v1430
      %v1432 = vlaneseq
      %v1433 = vshrl.u32 %v1432, 7
      %v1434 = vsub.s32 %v1431, %v1433
      %v1435 = vrot.slane %v1421, %v1434
      %v1436 = vcombine.low %v1238, %v1242
      %v1437 = vcombine.high %v1238, %v1242
      %v1439 = vunpack.c.l.s4 1983009808
      %v1440 = vunpack.c.0.s8 %v1439
      %v1441 = vlaneseq
      %v1442 = vshrl.u32 %v1441, 7
      %v1443 = vsub.s32 %v1440, %v1442
      %v1444 = vrot.slane %v1436, %v1443
      %v1446 = vunpack.c.l.s4 1983009808
      %v1447 = vunpack.c.0.s8 %v1446
      %v1448 = vlaneseq
      %v1449 = vshrl.u32 %v1448, 7
      %v1450 = vsub.s32 %v1447, %v1449
      %v1451 = vrot.slane %v1437, %v1450
      %v1452 = vcombine.low %v1244, %v1248
      %v1453 = vcombine.high %v1244, %v1248
      %v1455 = vunpack.c.l.s4 1983009808
      %v1456 = vunpack.c.0.s8 %v1455
      %v1457 = vlaneseq
      %v1458 = vshrl.u32 %v1457, 7
      %v1459 = vsub.s32 %v1456, %v1458
      %v1460 = vrot.slane %v1452, %v1459
      %v1462 = vunpack.c.l.s4 1983009808
      %v1463 = vunpack.c.0.s8 %v1462
      %v1464 = vlaneseq
      %v1465 = vshrl.u32 %v1464, 7
      %v1466 = vsub.s32 %v1463, %v1465
      %v1467 = vrot.slane %v1453, %v1466
      %v1468 = vcombine.low %v1246, %v1250
      %v1469 = vcombine.high %v1246, %v1250
      %v1471 = vunpack.c.l.s4 1983009808
      %v1472 = vunpack.c.0.s8 %v1471
      %v1473 = vlaneseq
      %v1474 = vshrl.u32 %v1473, 7
      %v1475 = vsub.s32 %v1472, %v1474
      %v1476 = vrot.slane %v1468, %v1475
      %v1478 = vunpack.c.l.s4 1983009808
      %v1479 = vunpack.c.0.s8 %v1478
      %v1480 = vlaneseq
      %v1481 = vshrl.u32 %v1480, 7
      %v1482 = vsub.s32 %v1479, %v1481
      %v1483 = vrot.slane %v1469, %v1482
      %v1484 = vcombine.low %v1428, %v1444
      %v1485 = vcombine.high %v1428, %v1444
      %v1487 = vunpack.c.l.s4 1934713408
      %v1488 = vunpack.c.0.s8 %v1487
      %v1489 = vlaneseq
      %v1490 = vshrl.u32 %v1489, 7
      %v1491 = vsub.s32 %v1488, %v1490
      %v1492 = vrot.slane %v1484, %v1491
      %v1494 = vunpack.c.l.s4 1934713408
      %v1495 = vunpack.c.0.s8 %v1494
      %v1496 = vlaneseq
      %v1497 = vshrl.u32 %v1496, 7
      %v1498 = vsub.s32 %v1495, %v1497
      %v1499 = vrot.slane %v1485, %v1498
      %v1500 = vcombine.low %v1435, %v1451
      %v1501 = vcombine.high %v1435, %v1451
      %v1503 = vunpack.c.l.s4 1934713408
      %v1504 = vunpack.c.0.s8 %v1503
      %v1505 = vlaneseq
      %v1506 = vshrl.u32 %v1505, 7
      %v1507 = vsub.s32 %v1504, %v1506
      %v1508 = vrot.slane %v1500, %v1507
      %v1510 = vunpack.c.l.s4 1934713408
      %v1511 = vunpack.c.0.s8 %v1510
      %v1512 = vlaneseq
      %v1513 = vshrl.u32 %v1512, 7
      %v1514 = vsub.s32 %v1511, %v1513
      %v1515 = vrot.slane %v1501, %v1514
      %v1516 = vcombine.low %v1460, %v1476
      %v1517 = vcombine.high %v1460, %v1476
      %v1519 = vunpack.c.l.s4 1934713408
      %v1520 = vunpack.c.0.s8 %v1519
      %v1521 = vlaneseq
      %v1522 = vshrl.u32 %v1521, 7
      %v1523 = vsub.s32 %v1520, %v1522
      %v1524 = vrot.slane %v1516, %v1523
      %v1526 = vunpack.c.l.s4 1934713408
      %v1527 = vunpack.c.0.s8 %v1526
      %v1528 = vlaneseq
      %v1529 = vshrl.u32 %v1528, 7
      %v1530 = vsub.s32 %v1527, %v1529
      %v1531 = vrot.slane %v1517, %v1530
      %v1532 = vcombine.low %v1467, %v1483
      %v1533 = vcombine.high %v1467, %v1483
      %v1535 = vunpack.c.l.s4 1934713408
      %v1536 = vunpack.c.0.s8 %v1535
      %v1537 = vlaneseq
      %v1538 = vshrl.u32 %v1537, 7
      %v1539 = vsub.s32 %v1536, %v1538
      %v1540 = vrot.slane %v1532, %v1539
      %v1542 = vunpack.c.l.s4 1934713408
      %v1543 = vunpack.c.0.s8 %v1542
      %v1544 = vlaneseq
      %v1545 = vshrl.u32 %v1544, 7
      %v1546 = vsub.s32 %v1543, %v1545
      %v1547 = vrot.slane %v1533, %v1546
      %v1548 = vcombine.low %v1492, %v1524
      %v1549 = vcombine.high %v1492, %v1524
      %v1550 = vcombine.low %v1499, %v1531
      %v1551 = vcombine.high %v1499, %v1531
      %v1552 = vcombine.low %v1508, %v1540
      %v1553 = vcombine.high %v1508, %v1540
      %v1554 = vcombine.low %v1515, %v1547
      %v1555 = vcombine.high %v1515, %v1547
      %v1556 = vcombine.low %v1252, %v1256
      %v1557 = vcombine.high %v1252, %v1256
      %v1559 = vunpack.c.l.s4 1983009808
      %v1560 = vunpack.c.0.s8 %v1559
      %v1561 = vlaneseq
      %v1562 = vshrl.u32 %v1561, 7
      %v1563 = vsub.s32 %v1560, %v1562
      %v1564 = vrot.slane %v1556, %v1563
      %v1566 = vunpack.c.l.s4 1983009808
      %v1567 = vunpack.c.0.s8 %v1566
      %v1568 = vlaneseq
      %v1569 = vshrl.u32 %v1568, 7
      %v1570 = vsub.s32 %v1567, %v1569
      %v1571 = vrot.slane %v1557, %v1570
      %v1572 = vcombine.low %v1254, %v1258
      %v1573 = vcombine.high %v1254, %v1258
      %v1575 = vunpack.c.l.s4 1983009808
      %v1576 = vunpack.c.0.s8 %v1575
      %v1577 = vlaneseq
      %v1578 = vshrl.u32 %v1577, 7
      %v1579 = vsub.s32 %v1576, %v1578
      %v1580 = vrot.slane %v1572, %v1579
      %v1582 = vunpack.c.l.s4 1983009808
      %v1583 = vunpack.c.0.s8 %v1582
      %v1584 = vlaneseq
      %v1585 = vshrl.u32 %v1584, 7
      %v1586 = vsub.s32 %v1583, %v1585
      %v1587 = vrot.slane %v1573, %v1586
      %v1588 = vcombine.low %v1260, %v1264
      %v1589 = vcombine.high %v1260, %v1264
      %v1591 = vunpack.c.l.s4 1983009808
      %v1592 = vunpack.c.0.s8 %v1591
      %v1593 = vlaneseq
      %v1594 = vshrl.u32 %v1593, 7
      %v1595 = vsub.s32 %v1592, %v1594
      %v1596 = vrot.slane %v1588, %v1595
      %v1598 = vunpack.c.l.s4 1983009808
      %v1599 = vunpack.c.0.s8 %v1598
      %v1600 = vlaneseq
      %v1601 = vshrl.u32 %v1600, 7
      %v1602 = vsub.s32 %v1599, %v1601
      %v1603 = vrot.slane %v1589, %v1602
      %v1604 = vcombine.low %v1262, %v1266
      %v1605 = vcombine.high %v1262, %v1266
      %v1607 = vunpack.c.l.s4 1983009808
      %v1608 = vunpack.c.0.s8 %v1607
      %v1609 = vlaneseq
      %v1610 = vshrl.u32 %v1609, 7
      %v1611 = vsub.s32 %v1608, %v1610
      %v1612 = vrot.slane %v1604, %v1611
      %v1614 = vunpack.c.l.s4 1983009808
      %v1615 = vunpack.c.0.s8 %v1614
      %v1616 = vlaneseq
      %v1617 = vshrl.u32 %v1616, 7
      %v1618 = vsub.s32 %v1615, %v1617
      %v1619 = vrot.slane %v1605, %v1618
      %v1620 = vcombine.low %v1564, %v1580
      %v1621 = vcombine.high %v1564, %v1580
      %v1623 = vunpack.c.l.s4 1934713408
      %v1624 = vunpack.c.0.s8 %v1623
      %v1625 = vlaneseq
      %v1626 = vshrl.u32 %v1625, 7
      %v1627 = vsub.s32 %v1624, %v1626
      %v1628 = vrot.slane %v1620, %v1627
      %v1630 = vunpack.c.l.s4 1934713408
      %v1631 = vunpack.c.0.s8 %v1630
      %v1632 = vlaneseq
      %v1633 = vshrl.u32 %v1632, 7
      %v1634 = vsub.s32 %v1631, %v1633
      %v1635 = vrot.slane %v1621, %v1634
      %v1636 = vcombine.low %v1571, %v1587
      %v1637 = vcombine.high %v1571, %v1587
      %v1639 = vunpack.c.l.s4 1934713408
      %v1640 = vunpack.c.0.s8 %v1639
      %v1641 = vlaneseq
      %v1642 = vshrl.u32 %v1641, 7
      %v1643 = vsub.s32 %v1640, %v1642
      %v1644 = vrot.slane %v1636, %v1643
      %v1646 = vunpack.c.l.s4 1934713408
      %v1647 = vunpack.c.0.s8 %v1646
      %v1648 = vlaneseq
      %v1649 = vshrl.u32 %v1648, 7
      %v1650 = vsub.s32 %v1647, %v1649
      %v1651 = vrot.slane %v1637, %v1650
      %v1652 = vcombine.low %v1596, %v1612
      %v1653 = vcombine.high %v1596, %v1612
      %v1655 = vunpack.c.l.s4 1934713408
      %v1656 = vunpack.c.0.s8 %v1655
      %v1657 = vlaneseq
      %v1658 = vshrl.u32 %v1657, 7
      %v1659 = vsub.s32 %v1656, %v1658
      %v1660 = vrot.slane %v1652, %v1659
      %v1662 = vunpack.c.l.s4 1934713408
      %v1663 = vunpack.c.0.s8 %v1662
      %v1664 = vlaneseq
      %v1665 = vshrl.u32 %v1664, 7
      %v1666 = vsub.s32 %v1663, %v1665
      %v1667 = vrot.slane %v1653, %v1666
      %v1668 = vcombine.low %v1603, %v1619
      %v1669 = vcombine.high %v1603, %v1619
      %v1671 = vunpack.c.l.s4 1934713408
      %v1672 = vunpack.c.0.s8 %v1671
      %v1673 = vlaneseq
      %v1674 = vshrl.u32 %v1673, 7
      %v1675 = vsub.s32 %v1672, %v1674
      %v1676 = vrot.slane %v1668, %v1675
      %v1678 = vunpack.c.l.s4 1934713408
      %v1679 = vunpack.c.0.s8 %v1678
      %v1680 = vlaneseq
      %v1681 = vshrl.u32 %v1680, 7
      %v1682 = vsub.s32 %v1679, %v1681
      %v1683 = vrot.slane %v1669, %v1682
      %v1684 = vcombine.low %v1628, %v1660
      %v1685 = vcombine.high %v1628, %v1660
      %v1686 = vcombine.low %v1635, %v1667
      %v1687 = vcombine.high %v1635, %v1667
      %v1688 = vcombine.low %v1644, %v1676
      %v1689 = vcombine.high %v1644, %v1676
      %v1690 = vcombine.low %v1651, %v1683
      %v1691 = vcombine.high %v1651, %v1683
      %v1692 = vcombine.low %v1268, %v1272
      %v1693 = vcombine.high %v1268, %v1272
      %v1695 = vunpack.c.l.s4 1983009808
      %v1696 = vunpack.c.0.s8 %v1695
      %v1697 = vlaneseq
      %v1698 = vshrl.u32 %v1697, 7
      %v1699 = vsub.s32 %v1696, %v1698
      %v1700 = vrot.slane %v1692, %v1699
      %v1702 = vunpack.c.l.s4 1983009808
      %v1703 = vunpack.c.0.s8 %v1702
      %v1704 = vlaneseq
      %v1705 = vshrl.u32 %v1704, 7
      %v1706 = vsub.s32 %v1703, %v1705
      %v1707 = vrot.slane %v1693, %v1706
      %v1708 = vcombine.low %v1270, %v1274
      %v1709 = vcombine.high %v1270, %v1274
      %v1711 = vunpack.c.l.s4 1983009808
      %v1712 = vunpack.c.0.s8 %v1711
      %v1713 = vlaneseq
      %v1714 = vshrl.u32 %v1713, 7
      %v1715 = vsub.s32 %v1712, %v1714
      %v1716 = vrot.slane %v1708, %v1715
      %v1718 = vunpack.c.l.s4 1983009808
      %v1719 = vunpack.c.0.s8 %v1718
      %v1720 = vlaneseq
      %v1721 = vshrl.u32 %v1720, 7
      %v1722 = vsub.s32 %v1719, %v1721
      %v1723 = vrot.slane %v1709, %v1722
      %v1724 = vcombine.low %v1276, %v1280
      %v1725 = vcombine.high %v1276, %v1280
      %v1727 = vunpack.c.l.s4 1983009808
      %v1728 = vunpack.c.0.s8 %v1727
      %v1729 = vlaneseq
      %v1730 = vshrl.u32 %v1729, 7
      %v1731 = vsub.s32 %v1728, %v1730
      %v1732 = vrot.slane %v1724, %v1731
      %v1734 = vunpack.c.l.s4 1983009808
      %v1735 = vunpack.c.0.s8 %v1734
      %v1736 = vlaneseq
      %v1737 = vshrl.u32 %v1736, 7
      %v1738 = vsub.s32 %v1735, %v1737
      %v1739 = vrot.slane %v1725, %v1738
      %v1740 = vcombine.low %v1278, %v1282
      %v1741 = vcombine.high %v1278, %v1282
      %v1743 = vunpack.c.l.s4 1983009808
      %v1744 = vunpack.c.0.s8 %v1743
      %v1745 = vlaneseq
      %v1746 = vshrl.u32 %v1745, 7
      %v1747 = vsub.s32 %v1744, %v1746
      %v1748 = vrot.slane %v1740, %v1747
      %v1750 = vunpack.c.l.s4 1983009808
      %v1751 = vunpack.c.0.s8 %v1750
      %v1752 = vlaneseq
      %v1753 = vshrl.u32 %v1752, 7
      %v1754 = vsub.s32 %v1751, %v1753
      %v1755 = vrot.slane %v1741, %v1754
      %v1756 = vcombine.low %v1700, %v1716
      %v1757 = vcombine.high %v1700, %v1716
      %v1759 = vunpack.c.l.s4 1934713408
      %v1760 = vunpack.c.0.s8 %v1759
      %v1761 = vlaneseq
      %v1762 = vshrl.u32 %v1761, 7
      %v1763 = vsub.s32 %v1760, %v1762
      %v1764 = vrot.slane %v1756, %v1763
      %v1766 = vunpack.c.l.s4 1934713408
      %v1767 = vunpack.c.0.s8 %v1766
      %v1768 = vlaneseq
      %v1769 = vshrl.u32 %v1768, 7
      %v1770 = vsub.s32 %v1767, %v1769
      %v1771 = vrot.slane %v1757, %v1770
      %v1772 = vcombine.low %v1707, %v1723
      %v1773 = vcombine.high %v1707, %v1723
      %v1775 = vunpack.c.l.s4 1934713408
      %v1776 = vunpack.c.0.s8 %v1775
      %v1777 = vlaneseq
      %v1778 = vshrl.u32 %v1777, 7
      %v1779 = vsub.s32 %v1776, %v1778
      %v1780 = vrot.slane %v1772, %v1779
      %v1782 = vunpack.c.l.s4 1934713408
      %v1783 = vunpack.c.0.s8 %v1782
      %v1784 = vlaneseq
      %v1785 = vshrl.u32 %v1784, 7
      %v1786 = vsub.s32 %v1783, %v1785
      %v1787 = vrot.slane %v1773, %v1786
      %v1788 = vcombine.low %v1732, %v1748
      %v1789 = vcombine.high %v1732, %v1748
      %v1791 = vunpack.c.l.s4 1934713408
      %v1792 = vunpack.c.0.s8 %v1791
      %v1793 = vlaneseq
      %v1794 = vshrl.u32 %v1793, 7
      %v1795 = vsub.s32 %v1792, %v1794
      %v1796 = vrot.slane %v1788, %v1795
      %v1798 = vunpack.c.l.s4 1934713408
      %v1799 = vunpack.c.0.s8 %v1798
      %v1800 = vlaneseq
      %v1801 = vshrl.u32 %v1800, 7
      %v1802 = vsub.s32 %v1799, %v1801
      %v1803 = vrot.slane %v1789, %v1802
      %v1804 = vcombine.low %v1739, %v1755
      %v1805 = vcombine.high %v1739, %v1755
      %v1807 = vunpack.c.l.s4 1934713408
      %v1808 = vunpack.c.0.s8 %v1807
      %v1809 = vlaneseq
      %v1810 = vshrl.u32 %v1809, 7
      %v1811 = vsub.s32 %v1808, %v1810
      %v1812 = vrot.slane %v1804, %v1811
      %v1814 = vunpack.c.l.s4 1934713408
      %v1815 = vunpack.c.0.s8 %v1814
      %v1816 = vlaneseq
      %v1817 = vshrl.u32 %v1816, 7
      %v1818 = vsub.s32 %v1815, %v1817
      %v1819 = vrot.slane %v1805, %v1818
      %v1820 = vcombine.low %v1764, %v1796
      %v1821 = vcombine.high %v1764, %v1796
      %v1822 = vcombine.low %v1771, %v1803
      %v1823 = vcombine.high %v1771, %v1803
      %v1824 = vcombine.low %v1780, %v1812
      %v1825 = vcombine.high %v1780, %v1812
      %v1826 = vcombine.low %v1787, %v1819
      %v1827 = vcombine.high %v1787, %v1819
      %v1828 = vcombine.low %v1221, %v1225
      %v1829 = vcombine.high %v1221, %v1225
      %v1831 = vunpack.c.l.s4 1983009808
      %v1832 = vunpack.c.0.s8 %v1831
      %v1833 = vlaneseq
      %v1834 = vshrl.u32 %v1833, 7
      %v1835 = vsub.s32 %v1832, %v1834
      %v1836 = vrot.slane %v1828, %v1835
      %v1838 = vunpack.c.l.s4 1983009808
      %v1839 = vunpack.c.0.s8 %v1838
      %v1840 = vlaneseq
      %v1841 = vshrl.u32 %v1840, 7
      %v1842 = vsub.s32 %v1839, %v1841
      %v1843 = vrot.slane %v1829, %v1842
      %v1844 = vcombine.low %v1223, %v1227
      %v1845 = vcombine.high %v1223, %v1227
      %v1847 = vunpack.c.l.s4 1983009808
      %v1848 = vunpack.c.0.s8 %v1847
      %v1849 = vlaneseq
      %v1850 = vshrl.u32 %v1849, 7
      %v1851 = vsub.s32 %v1848, %v1850
      %v1852 = vrot.slane %v1844, %v1851
      %v1854 = vunpack.c.l.s4 1983009808
      %v1855 = vunpack.c.0.s8 %v1854
      %v1856 = vlaneseq
      %v1857 = vshrl.u32 %v1856, 7
      %v1858 = vsub.s32 %v1855, %v1857
      %v1859 = vrot.slane %v1845, %v1858
      %v1860 = vcombine.low %v1229, %v1233
      %v1861 = vcombine.high %v1229, %v1233
      %v1863 = vunpack.c.l.s4 1983009808
      %v1864 = vunpack.c.0.s8 %v1863
      %v1865 = vlaneseq
      %v1866 = vshrl.u32 %v1865, 7
      %v1867 = vsub.s32 %v1864, %v1866
      %v1868 = vrot.slane %v1860, %v1867
      %v1870 = vunpack.c.l.s4 1983009808
      %v1871 = vunpack.c.0.s8 %v1870
      %v1872 = vlaneseq
      %v1873 = vshrl.u32 %v1872, 7
      %v1874 = vsub.s32 %v1871, %v1873
      %v1875 = vrot.slane %v1861, %v1874
      %v1876 = vcombine.low %v1231, %v1235
      %v1877 = vcombine.high %v1231, %v1235
      %v1879 = vunpack.c.l.s4 1983009808
      %v1880 = vunpack.c.0.s8 %v1879
      %v1881 = vlaneseq
      %v1882 = vshrl.u32 %v1881, 7
      %v1883 = vsub.s32 %v1880, %v1882
      %v1884 = vrot.slane %v1876, %v1883
      %v1886 = vunpack.c.l.s4 1983009808
      %v1887 = vunpack.c.0.s8 %v1886
      %v1888 = vlaneseq
      %v1889 = vshrl.u32 %v1888, 7
      %v1890 = vsub.s32 %v1887, %v1889
      %v1891 = vrot.slane %v1877, %v1890
      %v1892 = vcombine.low %v1836, %v1852
      %v1893 = vcombine.high %v1836, %v1852
      %v1895 = vunpack.c.l.s4 1934713408
      %v1896 = vunpack.c.0.s8 %v1895
      %v1897 = vlaneseq
      %v1898 = vshrl.u32 %v1897, 7
      %v1899 = vsub.s32 %v1896, %v1898
      %v1900 = vrot.slane %v1892, %v1899
      %v1902 = vunpack.c.l.s4 1934713408
      %v1903 = vunpack.c.0.s8 %v1902
      %v1904 = vlaneseq
      %v1905 = vshrl.u32 %v1904, 7
      %v1906 = vsub.s32 %v1903, %v1905
      %v1907 = vrot.slane %v1893, %v1906
      %v1908 = vcombine.low %v1843, %v1859
      %v1909 = vcombine.high %v1843, %v1859
      %v1911 = vunpack.c.l.s4 1934713408
      %v1912 = vunpack.c.0.s8 %v1911
      %v1913 = vlaneseq
      %v1914 = vshrl.u32 %v1913, 7
      %v1915 = vsub.s32 %v1912, %v1914
      %v1916 = vrot.slane %v1908, %v1915
      %v1918 = vunpack.c.l.s4 1934713408
      %v1919 = vunpack.c.0.s8 %v1918
      %v1920 = vlaneseq
      %v1921 = vshrl.u32 %v1920, 7
      %v1922 = vsub.s32 %v1919, %v1921
      %v1923 = vrot.slane %v1909, %v1922
      %v1924 = vcombine.low %v1868, %v1884
      %v1925 = vcombine.high %v1868, %v1884
      %v1927 = vunpack.c.l.s4 1934713408
      %v1928 = vunpack.c.0.s8 %v1927
      %v1929 = vlaneseq
      %v1930 = vshrl.u32 %v1929, 7
      %v1931 = vsub.s32 %v1928, %v1930
      %v1932 = vrot.slane %v1924, %v1931
      %v1934 = vunpack.c.l.s4 1934713408
      %v1935 = vunpack.c.0.s8 %v1934
      %v1936 = vlaneseq
      %v1937 = vshrl.u32 %v1936, 7
      %v1938 = vsub.s32 %v1935, %v1937
      %v1939 = vrot.slane %v1925, %v1938
      %v1940 = vcombine.low %v1875, %v1891
      %v1941 = vcombine.high %v1875, %v1891
      %v1943 = vunpack.c.l.s4 1934713408
      %v1944 = vunpack.c.0.s8 %v1943
      %v1945 = vlaneseq
      %v1946 = vshrl.u32 %v1945, 7
      %v1947 = vsub.s32 %v1944, %v1946
      %v1948 = vrot.slane %v1940, %v1947
      %v1950 = vunpack.c.l.s4 1934713408
      %v1951 = vunpack.c.0.s8 %v1950
      %v1952 = vlaneseq
      %v1953 = vshrl.u32 %v1952, 7
      %v1954 = vsub.s32 %v1951, %v1953
      %v1955 = vrot.slane %v1941, %v1954
      %v1956 = vcombine.low %v1900, %v1932
      %v1957 = vcombine.high %v1900, %v1932
      %v1958 = vcombine.low %v1907, %v1939
      %v1959 = vcombine.high %v1907, %v1939
      %v1960 = vcombine.low %v1916, %v1948
      %v1961 = vcombine.high %v1916, %v1948
      %v1962 = vcombine.low %v1923, %v1955
      %v1963 = vcombine.high %v1923, %v1955
      %v1964 = vcombine.low %v1237, %v1241
      %v1965 = vcombine.high %v1237, %v1241
      %v1967 = vunpack.c.l.s4 1983009808
      %v1968 = vunpack.c.0.s8 %v1967
      %v1969 = vlaneseq
      %v1970 = vshrl.u32 %v1969, 7
      %v1971 = vsub.s32 %v1968, %v1970
      %v1972 = vrot.slane %v1964, %v1971
      %v1974 = vunpack.c.l.s4 1983009808
      %v1975 = vunpack.c.0.s8 %v1974
      %v1976 = vlaneseq
      %v1977 = vshrl.u32 %v1976, 7
      %v1978 = vsub.s32 %v1975, %v1977
      %v1979 = vrot.slane %v1965, %v1978
      %v1980 = vcombine.low %v1239, %v1243
      %v1981 = vcombine.high %v1239, %v1243
      %v1983 = vunpack.c.l.s4 1983009808
      %v1984 = vunpack.c.0.s8 %v1983
      %v1985 = vlaneseq
      %v1986 = vshrl.u32 %v1985, 7
      %v1987 = vsub.s32 %v1984, %v1986
      %v1988 = vrot.slane %v1980, %v1987
      %v1990 = vunpack.c.l.s4 1983009808
      %v1991 = vunpack.c.0.s8 %v1990
      %v1992 = vlaneseq
      %v1993 = vshrl.u32 %v1992, 7
      %v1994 = vsub.s32 %v1991, %v1993
      %v1995 = vrot.slane %v1981, %v1994
      %v1996 = vcombine.low %v1245, %v1249
      %v1997 = vcombine.high %v1245, %v1249
      %v1999 = vunpack.c.l.s4 1983009808
      %v2000 = vunpack.c.0.s8 %v1999
      %v2001 = vlaneseq
      %v2002 = vshrl.u32 %v2001, 7
      %v2003 = vsub.s32 %v2000, %v2002
      %v2004 = vrot.slane %v1996, %v2003
      %v2006 = vunpack.c.l.s4 1983009808
      %v2007 = vunpack.c.0.s8 %v2006
      %v2008 = vlaneseq
      %v2009 = vshrl.u32 %v2008, 7
      %v2010 = vsub.s32 %v2007, %v2009
      %v2011 = vrot.slane %v1997, %v2010
      %v2012 = vcombine.low %v1247, %v1251
      %v2013 = vcombine.high %v1247, %v1251
      %v2015 = vunpack.c.l.s4 1983009808
      %v2016 = vunpack.c.0.s8 %v2015
      %v2017 = vlaneseq
      %v2018 = vshrl.u32 %v2017, 7
      %v2019 = vsub.s32 %v2016, %v2018
      %v2020 = vrot.slane %v2012, %v2019
      %v2022 = vunpack.c.l.s4 1983009808
      %v2023 = vunpack.c.0.s8 %v2022
      %v2024 = vlaneseq
      %v2025 = vshrl.u32 %v2024, 7
      %v2026 = vsub.s32 %v2023, %v2025
      %v2027 = vrot.slane %v2013, %v2026
      %v2028 = vcombine.low %v1972, %v1988
      %v2029 = vcombine.high %v1972, %v1988
      %v2031 = vunpack.c.l.s4 1934713408
      %v2032 = vunpack.c.0.s8 %v2031
      %v2033 = vlaneseq
      %v2034 = vshrl.u32 %v2033, 7
      %v2035 = vsub.s32 %v2032, %v2034
      %v2036 = vrot.slane %v2028, %v2035
      %v2038 = vunpack.c.l.s4 1934713408
      %v2039 = vunpack.c.0.s8 %v2038
      %v2040 = vlaneseq
      %v2041 = vshrl.u32 %v2040, 7
      %v2042 = vsub.s32 %v2039, %v2041
      %v2043 = vrot.slane %v2029, %v2042
      %v2044 = vcombine.low %v1979, %v1995
      %v2045 = vcombine.high %v1979, %v1995
      %v2047 = vunpack.c.l.s4 1934713408
      %v2048 = vunpack.c.0.s8 %v2047
      %v2049 = vlaneseq
      %v2050 = vshrl.u32 %v2049, 7
      %v2051 = vsub.s32 %v2048, %v2050
      %v2052 = vrot.slane %v2044, %v2051
      %v2054 = vunpack.c.l.s4 1934713408
      %v2055 = vunpack.c.0.s8 %v2054
      %v2056 = vlaneseq
      %v2057 = vshrl.u32 %v2056, 7
      %v2058 = vsub.s32 %v2055, %v2057
      %v2059 = vrot.slane %v2045, %v2058
      %v2060 = vcombine.low %v2004, %v2020
      %v2061 = vcombine.high %v2004, %v2020
      %v2063 = vunpack.c.l.s4 1934713408
      %v2064 = vunpack.c.0.s8 %v2063
      %v2065 = vlaneseq
      %v2066 = vshrl.u32 %v2065, 7
      %v2067 = vsub.s32 %v2064, %v2066
      %v2068 = vrot.slane %v2060, %v2067
      %v2070 = vunpack.c.l.s4 1934713408
      %v2071 = vunpack.c.0.s8 %v2070
      %v2072 = vlaneseq
      %v2073 = vshrl.u32 %v2072, 7
      %v2074 = vsub.s32 %v2071, %v2073
      %v2075 = vrot.slane %v2061, %v2074
      %v2076 = vcombine.low %v2011, %v2027
      %v2077 = vcombine.high %v2011, %v2027
      %v2079 = vunpack.c.l.s4 1934713408
      %v2080 = vunpack.c.0.s8 %v2079
      %v2081 = vlaneseq
      %v2082 = vshrl.u32 %v2081, 7
      %v2083 = vsub.s32 %v2080, %v2082
      %v2084 = vrot.slane %v2076, %v2083
      %v2086 = vunpack.c.l.s4 1934713408
      %v2087 = vunpack.c.0.s8 %v2086
      %v2088 = vlaneseq
      %v2089 = vshrl.u32 %v2088, 7
      %v2090 = vsub.s32 %v2087, %v2089
      %v2091 = vrot.slane %v2077, %v2090
      %v2092 = vcombine.low %v2036, %v2068
      %v2093 = vcombine.high %v2036, %v2068
      %v2094 = vcombine.low %v2043, %v2075
      %v2095 = vcombine.high %v2043, %v2075
      %v2096 = vcombine.low %v2052, %v2084
      %v2097 = vcombine.high %v2052, %v2084
      %v2098 = vcombine.low %v2059, %v2091
      %v2099 = vcombine.high %v2059, %v2091
      %v2100 = vcombine.low %v1253, %v1257
      %v2101 = vcombine.high %v1253, %v1257
      %v2103 = vunpack.c.l.s4 1983009808
      %v2104 = vunpack.c.0.s8 %v2103
      %v2105 = vlaneseq
      %v2106 = vshrl.u32 %v2105, 7
      %v2107 = vsub.s32 %v2104, %v2106
      %v2108 = vrot.slane %v2100, %v2107
      %v2110 = vunpack.c.l.s4 1983009808
      %v2111 = vunpack.c.0.s8 %v2110
      %v2112 = vlaneseq
      %v2113 = vshrl.u32 %v2112, 7
      %v2114 = vsub.s32 %v2111, %v2113
      %v2115 = vrot.slane %v2101, %v2114
      %v2116 = vcombine.low %v1255, %v1259
      %v2117 = vcombine.high %v1255, %v1259
      %v2119 = vunpack.c.l.s4 1983009808
      %v2120 = vunpack.c.0.s8 %v2119
      %v2121 = vlaneseq
      %v2122 = vshrl.u32 %v2121, 7
      %v2123 = vsub.s32 %v2120, %v2122
      %v2124 = vrot.slane %v2116, %v2123
      %v2126 = vunpack.c.l.s4 1983009808
      %v2127 = vunpack.c.0.s8 %v2126
      %v2128 = vlaneseq
      %v2129 = vshrl.u32 %v2128, 7
      %v2130 = vsub.s32 %v2127, %v2129
      %v2131 = vrot.slane %v2117, %v2130
      %v2132 = vcombine.low %v1261, %v1265
      %v2133 = vcombine.high %v1261, %v1265
      %v2135 = vunpack.c.l.s4 1983009808
      %v2136 = vunpack.c.0.s8 %v2135
      %v2137 = vlaneseq
      %v2138 = vshrl.u32 %v2137, 7
      %v2139 = vsub.s32 %v2136, %v2138
      %v2140 = vrot.slane %v2132, %v2139
      %v2142 = vunpack.c.l.s4 1983009808
      %v2143 = vunpack.c.0.s8 %v2142
      %v2144 = vlaneseq
      %v2145 = vshrl.u32 %v2144, 7
      %v2146 = vsub.s32 %v2143, %v2145
      %v2147 = vrot.slane %v2133, %v2146
      %v2148 = vcombine.low %v1263, %v1267
      %v2149 = vcombine.high %v1263, %v1267
      %v2151 = vunpack.c.l.s4 1983009808
      %v2152 = vunpack.c.0.s8 %v2151
      %v2153 = vlaneseq
      %v2154 = vshrl.u32 %v2153, 7
      %v2155 = vsub.s32 %v2152, %v2154
      %v2156 = vrot.slane %v2148, %v2155
      %v2158 = vunpack.c.l.s4 1983009808
      %v2159 = vunpack.c.0.s8 %v2158
      %v2160 = vlaneseq
      %v2161 = vshrl.u32 %v2160, 7
      %v2162 = vsub.s32 %v2159, %v2161
      %v2163 = vrot.slane %v2149, %v2162
      %v2164 = vcombine.low %v2108, %v2124
      %v2165 = vcombine.high %v2108, %v2124
      %v2167 = vunpack.c.l.s4 1934713408
      %v2168 = vunpack.c.0.s8 %v2167
      %v2169 = vlaneseq
      %v2170 = vshrl.u32 %v2169, 7
      %v2171 = vsub.s32 %v2168, %v2170
      %v2172 = vrot.slane %v2164, %v2171
      %v2174 = vunpack.c.l.s4 1934713408
      %v2175 = vunpack.c.0.s8 %v2174
      %v2176 = vlaneseq
      %v2177 = vshrl.u32 %v2176, 7
      %v2178 = vsub.s32 %v2175, %v2177
      %v2179 = vrot.slane %v2165, %v2178
      %v2180 = vcombine.low %v2115, %v2131
      %v2181 = vcombine.high %v2115, %v2131
      %v2183 = vunpack.c.l.s4 1934713408
      %v2184 = vunpack.c.0.s8 %v2183
      %v2185 = vlaneseq
      %v2186 = vshrl.u32 %v2185, 7
      %v2187 = vsub.s32 %v2184, %v2186
      %v2188 = vrot.slane %v2180, %v2187
      %v2190 = vunpack.c.l.s4 1934713408
      %v2191 = vunpack.c.0.s8 %v2190
      %v2192 = vlaneseq
      %v2193 = vshrl.u32 %v2192, 7
      %v2194 = vsub.s32 %v2191, %v2193
      %v2195 = vrot.slane %v2181, %v2194
      %v2196 = vcombine.low %v2140, %v2156
      %v2197 = vcombine.high %v2140, %v2156
      %v2199 = vunpack.c.l.s4 1934713408
      %v2200 = vunpack.c.0.s8 %v2199
      %v2201 = vlaneseq
      %v2202 = vshrl.u32 %v2201, 7
      %v2203 = vsub.s32 %v2200, %v2202
      %v2204 = vrot.slane %v2196, %v2203
      %v2206 = vunpack.c.l.s4 1934713408
      %v2207 = vunpack.c.0.s8 %v2206
      %v2208 = vlaneseq
      %v2209 = vshrl.u32 %v2208, 7
      %v2210 = vsub.s32 %v2207, %v2209
      %v2211 = vrot.slane %v2197, %v2210
      %v2212 = vcombine.low %v2147, %v2163
      %v2213 = vcombine.high %v2147, %v2163
      %v2215 = vunpack.c.l.s4 1934713408
      %v2216 = vunpack.c.0.s8 %v2215
      %v2217 = vlaneseq
      %v2218 = vshrl.u32 %v2217, 7
      %v2219 = vsub.s32 %v2216, %v2218
      %v2220 = vrot.slane %v2212, %v2219
      %v2222 = vunpack.c.l.s4 1934713408
      %v2223 = vunpack.c.0.s8 %v2222
      %v2224 = vlaneseq
      %v2225 = vshrl.u32 %v2224, 7
      %v2226 = vsub.s32 %v2223, %v2225
      %v2227 = vrot.slane %v2213, %v2226
      %v2228 = vcombine.low %v2172, %v2204
      %v2229 = vcombine.high %v2172, %v2204
      %v2230 = vcombine.low %v2179, %v2211
      %v2231 = vcombine.high %v2179, %v2211
      %v2232 = vcombine.low %v2188, %v2220
      %v2233 = vcombine.high %v2188, %v2220
      %v2234 = vcombine.low %v2195, %v2227
      %v2235 = vcombine.high %v2195, %v2227
      %v2236 = vcombine.low %v1269, %v1273
      %v2237 = vcombine.high %v1269, %v1273
      %v2239 = vunpack.c.l.s4 1983009808
      %v2240 = vunpack.c.0.s8 %v2239
      %v2241 = vlaneseq
      %v2242 = vshrl.u32 %v2241, 7
      %v2243 = vsub.s32 %v2240, %v2242
      %v2244 = vrot.slane %v2236, %v2243
      %v2246 = vunpack.c.l.s4 1983009808
      %v2247 = vunpack.c.0.s8 %v2246
      %v2248 = vlaneseq
      %v2249 = vshrl.u32 %v2248, 7
      %v2250 = vsub.s32 %v2247, %v2249
      %v2251 = vrot.slane %v2237, %v2250
      %v2252 = vcombine.low %v1271, %v1275
      %v2253 = vcombine.high %v1271, %v1275
      %v2255 = vunpack.c.l.s4 1983009808
      %v2256 = vunpack.c.0.s8 %v2255
      %v2257 = vlaneseq
      %v2258 = vshrl.u32 %v2257, 7
      %v2259 = vsub.s32 %v2256, %v2258
      %v2260 = vrot.slane %v2252, %v2259
      %v2262 = vunpack.c.l.s4 1983009808
      %v2263 = vunpack.c.0.s8 %v2262
      %v2264 = vlaneseq
      %v2265 = vshrl.u32 %v2264, 7
      %v2266 = vsub.s32 %v2263, %v2265
      %v2267 = vrot.slane %v2253, %v2266
      %v2268 = vcombine.low %v1277, %v1281
      %v2269 = vcombine.high %v1277, %v1281
      %v2271 = vunpack.c.l.s4 1983009808
      %v2272 = vunpack.c.0.s8 %v2271
      %v2273 = vlaneseq
      %v2274 = vshrl.u32 %v2273, 7
      %v2275 = vsub.s32 %v2272, %v2274
      %v2276 = vrot.slane %v2268, %v2275
      %v2278 = vunpack.c.l.s4 1983009808
      %v2279 = vunpack.c.0.s8 %v2278
      %v2280 = vlaneseq
      %v2281 = vshrl.u32 %v2280, 7
      %v2282 = vsub.s32 %v2279, %v2281
      %v2283 = vrot.slane %v2269, %v2282
      %v2284 = vcombine.low %v1279, %v1283
      %v2285 = vcombine.high %v1279, %v1283
      %v2287 = vunpack.c.l.s4 1983009808
      %v2288 = vunpack.c.0.s8 %v2287
      %v2289 = vlaneseq
      %v2290 = vshrl.u32 %v2289, 7
      %v2291 = vsub.s32 %v2288, %v2290
      %v2292 = vrot.slane %v2284, %v2291
      %v2294 = vunpack.c.l.s4 1983009808
      %v2295 = vunpack.c.0.s8 %v2294
      %v2296 = vlaneseq
      %v2297 = vshrl.u32 %v2296, 7
      %v2298 = vsub.s32 %v2295, %v2297
      %v2299 = vrot.slane %v2285, %v2298
      %v2300 = vcombine.low %v2244, %v2260
      %v2301 = vcombine.high %v2244, %v2260
      %v2303 = vunpack.c.l.s4 1934713408
      %v2304 = vunpack.c.0.s8 %v2303
      %v2305 = vlaneseq
      %v2306 = vshrl.u32 %v2305, 7
      %v2307 = vsub.s32 %v2304, %v2306
      %v2308 = vrot.slane %v2300, %v2307
      %v2310 = vunpack.c.l.s4 1934713408
      %v2311 = vunpack.c.0.s8 %v2310
      %v2312 = vlaneseq
      %v2313 = vshrl.u32 %v2312, 7
      %v2314 = vsub.s32 %v2311, %v2313
      %v2315 = vrot.slane %v2301, %v2314
      %v2316 = vcombine.low %v2251, %v2267
      %v2317 = vcombine.high %v2251, %v2267
      %v2319 = vunpack.c.l.s4 1934713408
      %v2320 = vunpack.c.0.s8 %v2319
      %v2321 = vlaneseq
      %v2322 = vshrl.u32 %v2321, 7
      %v2323 = vsub.s32 %v2320, %v2322
      %v2324 = vrot.slane %v2316, %v2323
      %v2326 = vunpack.c.l.s4 1934713408
      %v2327 = vunpack.c.0.s8 %v2326
      %v2328 = vlaneseq
      %v2329 = vshrl.u32 %v2328, 7
      %v2330 = vsub.s32 %v2327, %v2329
      %v2331 = vrot.slane %v2317, %v2330
      %v2332 = vcombine.low %v2276, %v2292
      %v2333 = vcombine.high %v2276, %v2292
      %v2335 = vunpack.c.l.s4 1934713408
      %v2336 = vunpack.c.0.s8 %v2335
      %v2337 = vlaneseq
      %v2338 = vshrl.u32 %v2337, 7
      %v2339 = vsub.s32 %v2336, %v2338
      %v2340 = vrot.slane %v2332, %v2339
      %v2342 = vunpack.c.l.s4 1934713408
      %v2343 = vunpack.c.0.s8 %v2342
      %v2344 = vlaneseq
      %v2345 = vshrl.u32 %v2344, 7
      %v2346 = vsub.s32 %v2343, %v2345
      %v2347 = vrot.slane %v2333, %v2346
      %v2348 = vcombine.low %v2283, %v2299
      %v2349 = vcombine.high %v2283, %v2299
      %v2351 = vunpack.c.l.s4 1934713408
      %v2352 = vunpack.c.0.s8 %v2351
      %v2353 = vlaneseq
      %v2354 = vshrl.u32 %v2353, 7
      %v2355 = vsub.s32 %v2352, %v2354
      %v2356 = vrot.slane %v2348, %v2355
      %v2358 = vunpack.c.l.s4 1934713408
      %v2359 = vunpack.c.0.s8 %v2358
      %v2360 = vlaneseq
      %v2361 = vshrl.u32 %v2360, 7
      %v2362 = vsub.s32 %v2359, %v2361
      %v2363 = vrot.slane %v2349, %v2362
      %v2364 = vcombine.low %v2308, %v2340
      %v2365 = vcombine.high %v2308, %v2340
      %v2366 = vcombine.low %v2315, %v2347
      %v2367 = vcombine.high %v2315, %v2347
      %v2368 = vcombine.low %v2324, %v2356
      %v2369 = vcombine.high %v2324, %v2356
      %v2370 = vcombine.low %v2331, %v2363
      %v2371 = vcombine.high %v2331, %v2363
      %v2372 = vadd.f32 %v1412, %v1956
      %2373 = vadd.xlane.f32.xlu0 %v2372
      %v2374 = vpop.xlane.xlu0 %2373
      %v2375 = vadd.f32 %v1413, %v1957
      %2376 = vadd.xlane.f32.xlu0 %v2375
      %v2377 = vpop.xlane.xlu0 %2376
      %v2378 = vadd.f32 %v1414, %v1958
      %2379 = vadd.xlane.f32.xlu0 %v2378
      %v2380 = vpop.xlane.xlu0 %2379
      %v2381 = vadd.f32 %v1415, %v1959
      %2382 = vadd.xlane.f32.xlu0 %v2381
      %v2383 = vpop.xlane.xlu0 %2382
      %v2384 = vadd.f32 %v1416, %v1960
      %2385 = vadd.xlane.f32.xlu0 %v2384
      %v2386 = vpop.xlane.xlu0 %2385
      %v2387 = vadd.f32 %v1417, %v1961
      %2388 = vadd.xlane.f32.xlu0 %v2387
      %v2389 = vpop.xlane.xlu0 %2388
      %v2390 = vadd.f32 %v1418, %v1962
      %2391 = vadd.xlane.f32.xlu0 %v2390
      %v2392 = vpop.xlane.xlu0 %2391
      %v2393 = vadd.f32 %v1419, %v1963
      %2394 = vadd.xlane.f32.xlu0 %v2393
      %v2395 = vpop.xlane.xlu0 %2394
      %v2396 = vadd.f32 %v1548, %v2092
      %2397 = vadd.xlane.f32.xlu0 %v2396
      %v2398 = vpop.xlane.xlu0 %2397
      %v2399 = vadd.f32 %v1549, %v2093
      %2400 = vadd.xlane.f32.xlu0 %v2399
      %v2401 = vpop.xlane.xlu0 %2400
      %v2402 = vadd.f32 %v1550, %v2094
      %2403 = vadd.xlane.f32.xlu0 %v2402
      %v2404 = vpop.xlane.xlu0 %2403
      %v2405 = vadd.f32 %v1551, %v2095
      %2406 = vadd.xlane.f32.xlu0 %v2405
      %v2407 = vpop.xlane.xlu0 %2406
      %v2408 = vadd.f32 %v1552, %v2096
      %2409 = vadd.xlane.f32.xlu0 %v2408
      %v2410 = vpop.xlane.xlu0 %2409
      %v2411 = vadd.f32 %v1553, %v2097
      %2412 = vadd.xlane.f32.xlu0 %v2411
      %v2413 = vpop.xlane.xlu0 %2412
      %v2414 = vadd.f32 %v1554, %v2098
      %2415 = vadd.xlane.f32.xlu0 %v2414
      %v2416 = vpop.xlane.xlu0 %2415
      %v2417 = vadd.f32 %v1555, %v2099
      %2418 = vadd.xlane.f32.xlu0 %v2417
      %v2419 = vpop.xlane.xlu0 %2418
      %v2420 = vadd.f32 %v1684, %v2228
      %2421 = vadd.xlane.f32.xlu0 %v2420
      %v2422 = vpop.xlane.xlu0 %2421
      %v2423 = vadd.f32 %v1685, %v2229
      %2424 = vadd.xlane.f32.xlu0 %v2423
      %v2425 = vpop.xlane.xlu0 %2424
      %v2426 = vadd.f32 %v1686, %v2230
      %2427 = vadd.xlane.f32.xlu0 %v2426
      %v2428 = vpop.xlane.xlu0 %2427
      %v2429 = vadd.f32 %v1687, %v2231
      %2430 = vadd.xlane.f32.xlu0 %v2429
      %v2431 = vpop.xlane.xlu0 %2430
      %v2432 = vadd.f32 %v1688, %v2232
      %2433 = vadd.xlane.f32.xlu0 %v2432
      %v2434 = vpop.xlane.xlu0 %2433
      %v2435 = vadd.f32 %v1689, %v2233
      %2436 = vadd.xlane.f32.xlu0 %v2435
      %v2437 = vpop.xlane.xlu0 %2436
      %v2438 = vadd.f32 %v1690, %v2234
      %2439 = vadd.xlane.f32.xlu0 %v2438
      %v2440 = vpop.xlane.xlu0 %2439
      %v2441 = vadd.f32 %v1691, %v2235
      %2442 = vadd.xlane.f32.xlu0 %v2441
      %v2443 = vpop.xlane.xlu0 %2442
      %v2444 = vadd.f32 %v1820, %v2364
      %2445 = vadd.xlane.f32.xlu0 %v2444
      %v2446 = vpop.xlane.xlu0 %2445
      %v2447 = vadd.f32 %v1821, %v2365
      %2448 = vadd.xlane.f32.xlu0 %v2447
      %v2449 = vpop.xlane.xlu0 %2448
      %v2450 = vadd.f32 %v1822, %v2366
      %2451 = vadd.xlane.f32.xlu0 %v2450
      %v2452 = vpop.xlane.xlu0 %2451
      %v2453 = vadd.f32 %v1823, %v2367
      %2454 = vadd.xlane.f32.xlu0 %v2453
      %v2455 = vpop.xlane.xlu0 %2454
      %v2456 = vadd.f32 %v1824, %v2368
      %2457 = vadd.xlane.f32.xlu0 %v2456
      %v2458 = vpop.xlane.xlu0 %2457
      %v2459 = vadd.f32 %v1825, %v2369
      %2460 = vadd.xlane.f32.xlu0 %v2459
      %v2461 = vpop.xlane.xlu0 %2460
      %v2462 = vadd.f32 %v1826, %v2370
      %2463 = vadd.xlane.f32.xlu0 %v2462
      %v2464 = vpop.xlane.xlu0 %2463
      %v2465 = vadd.f32 %v1827, %v2371
      %2466 = vadd.xlane.f32.xlu0 %v2465
      %v2467 = vpop.xlane.xlu0 %2466
      %v2468 = vrcp.pop 256.0
      %v2469 = vmul.f32 %v2374, %v2468
      %v2470 = vmul.f32 %v2377, %v2468
      %v2471 = vmul.f32 %v2380, %v2468
      %v2472 = vmul.f32 %v2383, %v2468
      %v2473 = vmul.f32 %v2386, %v2468
      %v2474 = vmul.f32 %v2389, %v2468
      %v2475 = vmul.f32 %v2392, %v2468
      %v2476 = vmul.f32 %v2395, %v2468
      %v2477 = vmul.f32 %v2398, %v2468
      %v2478 = vmul.f32 %v2401, %v2468
      %v2479 = vmul.f32 %v2404, %v2468
      %v2480 = vmul.f32 %v2407, %v2468
      %v2481 = vmul.f32 %v2410, %v2468
      %v2482 = vmul.f32 %v2413, %v2468
      %v2483 = vmul.f32 %v2416, %v2468
      %v2484 = vmul.f32 %v2419, %v2468
      %v2485 = vmul.f32 %v2422, %v2468
      %v2486 = vmul.f32 %v2425, %v2468
      %v2487 = vmul.f32 %v2428, %v2468
      %v2488 = vmul.f32 %v2431, %v2468
      %v2489 = vmul.f32 %v2434, %v2468
      %v2490 = vmul.f32 %v2437, %v2468
      %v2491 = vmul.f32 %v2440, %v2468
      %v2492 = vmul.f32 %v2443, %v2468
      %v2493 = vmul.f32 %v2446, %v2468
      %v2494 = vmul.f32 %v2449, %v2468
      %v2495 = vmul.f32 %v2452, %v2468
      %v2496 = vmul.f32 %v2455, %v2468
      %v2497 = vmul.f32 %v2458, %v2468
      %v2498 = vmul.f32 %v2461, %v2468
      %v2499 = vmul.f32 %v2464, %v2468
      %v2500 = vmul.f32 %v2467, %v2468
      %v2533 = vlaneseq
      %v2534 = vand.u32 %v2533, 127
      %v2535 = vlaneseq
      %v2536 = vshrl.u32 %v2535, 7
      %v2537 = vsub.s32 %v2534, %v2536
      %v2538 = vrot.slane %v2469, %v2537
      %v2539 = vlaneseq
      %v2540 = vshrl.u32 %v2539, 7
      %v2541 = vsub.s32 %v2534, %v2540
      %v2542 = vrot.slane %v2470, %v2541
      %v2543 = vlaneseq
      %v2544 = vshrl.u32 %v2543, 7
      %v2545 = vsub.s32 %v2534, %v2544
      %v2546 = vrot.slane %v2471, %v2545
      %v2547 = vlaneseq
      %v2548 = vshrl.u32 %v2547, 7
      %v2549 = vsub.s32 %v2534, %v2548
      %v2550 = vrot.slane %v2472, %v2549
      %v2551 = vlaneseq
      %v2552 = vshrl.u32 %v2551, 7
      %v2553 = vsub.s32 %v2534, %v2552
      %v2554 = vrot.slane %v2473, %v2553
      %v2555 = vlaneseq
      %v2556 = vshrl.u32 %v2555, 7
      %v2557 = vsub.s32 %v2534, %v2556
      %v2558 = vrot.slane %v2474, %v2557
      %v2559 = vlaneseq
      %v2560 = vshrl.u32 %v2559, 7
      %v2561 = vsub.s32 %v2534, %v2560
      %v2562 = vrot.slane %v2475, %v2561
      %v2563 = vlaneseq
      %v2564 = vshrl.u32 %v2563, 7
      %v2565 = vsub.s32 %v2534, %v2564
      %v2566 = vrot.slane %v2476, %v2565
      %v2567 = vlaneseq
      %v2568 = vshrl.u32 %v2567, 7
      %v2569 = vsub.s32 %v2534, %v2568
      %v2570 = vrot.slane %v2477, %v2569
      %v2571 = vlaneseq
      %v2572 = vshrl.u32 %v2571, 7
      %v2573 = vsub.s32 %v2534, %v2572
      %v2574 = vrot.slane %v2478, %v2573
      %v2575 = vlaneseq
      %v2576 = vshrl.u32 %v2575, 7
      %v2577 = vsub.s32 %v2534, %v2576
      %v2578 = vrot.slane %v2479, %v2577
      %v2579 = vlaneseq
      %v2580 = vshrl.u32 %v2579, 7
      %v2581 = vsub.s32 %v2534, %v2580
      %v2582 = vrot.slane %v2480, %v2581
      %v2583 = vlaneseq
      %v2584 = vshrl.u32 %v2583, 7
      %v2585 = vsub.s32 %v2534, %v2584
      %v2586 = vrot.slane %v2481, %v2585
      %v2587 = vlaneseq
      %v2588 = vshrl.u32 %v2587, 7
      %v2589 = vsub.s32 %v2534, %v2588
      %v2590 = vrot.slane %v2482, %v2589
      %v2591 = vlaneseq
      %v2592 = vshrl.u32 %v2591, 7
      %v2593 = vsub.s32 %v2534, %v2592
      %v2594 = vrot.slane %v2483, %v2593
      %v2595 = vlaneseq
      %v2596 = vshrl.u32 %v2595, 7
      %v2597 = vsub.s32 %v2534, %v2596
      %v2598 = vrot.slane %v2484, %v2597
      %v2599 = vlaneseq
      %v2600 = vshrl.u32 %v2599, 7
      %v2601 = vsub.s32 %v2534, %v2600
      %v2602 = vrot.slane %v2485, %v2601
      %v2603 = vlaneseq
      %v2604 = vshrl.u32 %v2603, 7
      %v2605 = vsub.s32 %v2534, %v2604
      %v2606 = vrot.slane %v2486, %v2605
      %v2607 = vlaneseq
      %v2608 = vshrl.u32 %v2607, 7
      %v2609 = vsub.s32 %v2534, %v2608
      %v2610 = vrot.slane %v2487, %v2609
      %v2611 = vlaneseq
      %v2612 = vshrl.u32 %v2611, 7
      %v2613 = vsub.s32 %v2534, %v2612
      %v2614 = vrot.slane %v2488, %v2613
      %v2615 = vlaneseq
      %v2616 = vshrl.u32 %v2615, 7
      %v2617 = vsub.s32 %v2534, %v2616
      %v2618 = vrot.slane %v2489, %v2617
      %v2619 = vlaneseq
      %v2620 = vshrl.u32 %v2619, 7
      %v2621 = vsub.s32 %v2534, %v2620
      %v2622 = vrot.slane %v2490, %v2621
      %v2623 = vlaneseq
      %v2624 = vshrl.u32 %v2623, 7
      %v2625 = vsub.s32 %v2534, %v2624
      %v2626 = vrot.slane %v2491, %v2625
      %v2627 = vlaneseq
      %v2628 = vshrl.u32 %v2627, 7
      %v2629 = vsub.s32 %v2534, %v2628
      %v2630 = vrot.slane %v2492, %v2629
      %v2631 = vlaneseq
      %v2632 = vshrl.u32 %v2631, 7
      %v2633 = vsub.s32 %v2534, %v2632
      %v2634 = vrot.slane %v2493, %v2633
      %v2635 = vlaneseq
      %v2636 = vshrl.u32 %v2635, 7
      %v2637 = vsub.s32 %v2534, %v2636
      %v2638 = vrot.slane %v2494, %v2637
      %v2639 = vlaneseq
      %v2640 = vshrl.u32 %v2639, 7
      %v2641 = vsub.s32 %v2534, %v2640
      %v2642 = vrot.slane %v2495, %v2641
      %v2643 = vlaneseq
      %v2644 = vshrl.u32 %v2643, 7
      %v2645 = vsub.s32 %v2534, %v2644
      %v2646 = vrot.slane %v2496, %v2645
      %v2647 = vlaneseq
      %v2648 = vshrl.u32 %v2647, 7
      %v2649 = vsub.s32 %v2534, %v2648
      %v2650 = vrot.slane %v2497, %v2649
      %v2651 = vlaneseq
      %v2652 = vshrl.u32 %v2651, 7
      %v2653 = vsub.s32 %v2534, %v2652
      %v2654 = vrot.slane %v2498, %v2653
      %v2655 = vlaneseq
      %v2656 = vshrl.u32 %v2655, 7
      %v2657 = vsub.s32 %v2534, %v2656
      %v2658 = vrot.slane %v2499, %v2657
      %v2659 = vlaneseq
      %v2660 = vshrl.u32 %v2659, 7
      %v2661 = vsub.s32 %v2534, %v2660
      %v2662 = vrot.slane %v2500, %v2661
      %vm2663 = vcmask 1041409
      %v2664 = vsel %vm2663, %v2542, %v2538
      %vm2665 = vcmask 1042434
      %v2666 = vsel %vm2665, %v2546, %v2664
      %vm2667 = vcmask 1043459
      %v2668 = vsel %vm2667, %v2550, %v2666
      %vm2669 = vcmask 1044484
      %v2670 = vsel %vm2669, %v2554, %v2668
      %vm2671 = vcmask 1045509
      %v2672 = vsel %vm2671, %v2558, %v2670
      %vm2673 = vcmask 1046534
      %v2674 = vsel %vm2673, %v2562, %v2672
      %vm2675 = vcmask 1047559
      %v2676 = vsel %vm2675, %v2566, %v2674
      %v2677 = vsel %vm2663, %v2574, %v2570
      %v2678 = vsel %vm2665, %v2578, %v2677
      %v2679 = vsel %vm2667, %v2582, %v2678
      %v2680 = vsel %vm2669, %v2586, %v2679
      %v2681 = vsel %vm2671, %v2590, %v2680
      %v2682 = vsel %vm2673, %v2594, %v2681
      %v2683 = vsel %vm2675, %v2598, %v2682
      %v2684 = vsel %vm2663, %v2606, %v2602
      %v2685 = vsel %vm2665, %v2610, %v2684
      %v2686 = vsel %vm2667, %v2614, %v2685
      %v2687 = vsel %vm2669, %v2618, %v2686
      %v2688 = vsel %vm2671, %v2622, %v2687
      %v2689 = vsel %vm2673, %v2626, %v2688
      %v2690 = vsel %vm2675, %v2630, %v2689
      %v2691 = vsel %vm2663, %v2638, %v2634
      %v2692 = vsel %vm2665, %v2642, %v2691
      %v2693 = vsel %vm2667, %v2646, %v2692
      %v2694 = vsel %vm2669, %v2650, %v2693
      %v2695 = vsel %vm2671, %v2654, %v2694
      %v2696 = vsel %vm2673, %v2658, %v2695
      %v2697 = vsel %vm2675, %v2662, %v2696
      %2702 = vxpose.xlu0.b32.start [1/16] %v2676, 128
      %2703 = vxpose.xlu0.b32.cont [2/16] %v2683, 128
      %2704 = vxpose.xlu0.b32.cont [3/16] %v2690, 128
      %2705 = vxpose.xlu0.b32.cont [4/16] %v2697, 128
      %2706 = vxpose.xlu0.b32.cont [5/16] 0.0, 128
      %2707 = vxpose.xlu0.b32.cont [6/16] 0.0, 128
      %2708 = vxpose.xlu0.b32.cont [7/16] 0.0, 128
      %2709 = vxpose.xlu0.b32.cont [8/16] 0.0, 128
      %2710 = vxpose.xlu0.b32.cont [9/16] 0.0, 128
      %2711 = vxpose.xlu0.b32.cont [10/16] 0.0, 128
      %2712 = vxpose.xlu0.b32.cont [11/16] 0.0, 128
      %2713 = vxpose.xlu0.b32.cont [12/16] 0.0, 128
      %2714 = vxpose.xlu0.b32.cont [13/16] 0.0, 128
      %2715 = vxpose.xlu0.b32.cont [14/16] 0.0, 128
      %2716 = vxpose.xlu0.b32.cont [15/16] 0.0, 128
      %2717 = vxpose.xlu0.b32.end [16/16] 0.0, 128
      %v2718 = vpop.trf.xlu0
      %v2719 = vpop.trf.xlu0
      %v2720 = vpop.trf.xlu0
      %v2721 = vpop.trf.xlu0
      %v2722 = vpop.trf.xlu0
      %v2723 = vpop.trf.xlu0
      %v2724 = vpop.trf.xlu0
      %v2725 = vpop.trf.xlu0
      %v2726 = vpop.trf.xlu0
      %v2727 = vpop.trf.xlu0
      %v2728 = vpop.trf.xlu0
      %v2729 = vpop.trf.xlu0
      %v2730 = vpop.trf.xlu0
      %v2731 = vpop.trf.xlu0
      %v2732 = vpop.trf.xlu0
      %v2733 = vpop.trf.xlu0
      %v2734 = vld [vmem:[%s3] sm:$0xff]
      %v2735 = vld [vmem:[%s3 + $0x8] sm:$0xff]
      %v2736 = vld [vmem:[%s3 + $0x10] sm:$0xff]
      %v2737 = vld [vmem:[%s3 + $0x18] sm:$0xff]
      %v2738 = vpack.c.bf16 %v2718, %v2718
      %v2739 = vpack.c.bf16 %v2735, %v2734
      %v2740 = vpack.c.bf16 %v2737, %v2736
      %v2741 = vld [vmem:[%s4] sm:$0x1]
      %v2743 = vlaneseq
      %v2744 = vshrl.u32 %v2743, 7
      %v2745 = vsub.s32 0, %v2744
      %v2746 = vrot.slane %v2741, %v2745
      %vm2748 = vcmask 261120
      %v2750 = vsel %vm2748, %v2738, 0
      %2752 = vmatprep.subr.bf16.mxu0 0
      %2753 = vmatpush1.bf16.msra.mxu0 %v2739
      %2754 = vmatprep.subr.bf16.mxu0 0
      %2755 = vmatpush1.bf16.msra.mxu0 %v2740
      %2756 = vmatprep.subr.bf16.mxu0 0
      %2757 = vmatpush1.bf16.msra.mxu0 0
      %2758 = vmatprep.subr.bf16.mxu0 0
      %2759 = vmatpush1.bf16.msra.mxu0 0
      %2760 = vmatprep.subr.bf16.mxu0 0
      %2761 = vmatpush1.bf16.msra.mxu0 0
      %2762 = vmatprep.subr.bf16.mxu0 0
      %2763 = vmatpush1.bf16.msra.mxu0 0
      %2764 = vmatprep.subr.bf16.mxu0 0
      %2765 = vmatpush1.bf16.msra.mxu0 0
      %2766 = vmatprep.subr.bf16.mxu0 0
      %2767 = vmatpush1.bf16.msra.mxu0 0
      %2768 = vmatprep.subr.bf16.mxu0 0
      %2769 = vmatpush1.bf16.msra.mxu0 0
      %2770 = vmatprep.subr.bf16.mxu0 0
      %2771 = vmatpush1.bf16.msra.mxu0 0
      %2772 = vmatprep.subr.bf16.mxu0 0
      %2773 = vmatpush1.bf16.msra.mxu0 0
      %2774 = vmatprep.subr.bf16.mxu0 0
      %2775 = vmatpush1.bf16.msra.mxu0 0
      %2776 = vmatprep.subr.bf16.mxu0 0
      %2777 = vmatpush1.bf16.msra.mxu0 0
      %2778 = vmatprep.subr.bf16.mxu0 0
      %2779 = vmatpush1.bf16.msra.mxu0 0
      %2780 = vmatprep.subr.bf16.mxu0 0
      %2781 = vmatpush1.bf16.msra.mxu0 0
      %2782 = vmatprep.subr.bf16.mxu0 0
      %2783 = vmatpush1.bf16.msra.mxu0 0
      %2784 = vmatprep.mubr.bf16.mxu0 0
      %2785 = vmatmul.mubr.bf16.gmra.mrb[0].mxu0 %v2750
      %v2786 = vpop.f32.mrb[0].mxu0
      %v2787 = vadd.f32 %v2746, %v2786
      %v2788 = vpop.f32.mrb[0].mxu0
      %v2789 = vpop.f32.mrb[0].mxu0
      %v2790 = vpop.f32.mrb[0].mxu0
      %2791 = vdwg.mxu0
      %v2792 = vmax.f32 %v2787, 0.0
      %v2794 = vcombine.high %v2792, %v2792
      %v2796 = vunpack.c.l.s4 1966171168
      %v2797 = vunpack.c.0.s8 %v2796
      %v2798 = vlaneseq
      %v2799 = vshrl.u32 %v2798, 7
      %v2800 = vsub.s32 %v2797, %v2799
      %v2801 = vrot.slane %v2792, %v2800
      %v2803 = vunpack.c.l.s4 1966171168
      %v2804 = vunpack.c.0.s8 %v2803
      %v2805 = vlaneseq
      %v2806 = vshrl.u32 %v2805, 7
      %v2807 = vsub.s32 %v2804, %v2806
      %v2808 = vrot.slane %v2794, %v2807
      %v2809 = vcombine.high %v2801, %v2801
      %v2810 = vcombine.high %v2808, %v2808
      %v2812 = vunpack.c.l.s4 1966171168
      %v2813 = vunpack.c.0.s8 %v2812
      %v2814 = vlaneseq
      %v2815 = vshrl.u32 %v2814, 7
      %v2816 = vsub.s32 %v2813, %v2815
      %v2817 = vrot.slane %v2801, %v2816
      %v2819 = vunpack.c.l.s4 1966171168
      %v2820 = vunpack.c.0.s8 %v2819
      %v2821 = vlaneseq
      %v2822 = vshrl.u32 %v2821, 7
      %v2823 = vsub.s32 %v2820, %v2822
      %v2824 = vrot.slane %v2808, %v2823
      %v2826 = vunpack.c.l.s4 1966171168
      %v2827 = vunpack.c.0.s8 %v2826
      %v2828 = vlaneseq
      %v2829 = vshrl.u32 %v2828, 7
      %v2830 = vsub.s32 %v2827, %v2829
      %v2831 = vrot.slane %v2809, %v2830
      %v2833 = vunpack.c.l.s4 1966171168
      %v2834 = vunpack.c.0.s8 %v2833
      %v2835 = vlaneseq
      %v2836 = vshrl.u32 %v2835, 7
      %v2837 = vsub.s32 %v2834, %v2836
      %v2838 = vrot.slane %v2810, %v2837
      %v2839 = vcombine.high %v2817, %v2817
      %v2840 = vcombine.high %v2824, %v2824
      %v2841 = vcombine.high %v2831, %v2831
      %v2842 = vcombine.high %v2838, %v2838
      %v2851 = vmul.f32 %v2817, %v2817
      %v2852 = vmul.f32 %v2817, %v2831
      %v2853 = vmul.f32 %v2817, %v2839
      %v2854 = vmul.f32 %v2817, %v2841
      %v2855 = vmul.f32 %v2817, %v2824
      %v2856 = vmul.f32 %v2817, %v2838
      %v2857 = vmul.f32 %v2817, %v2840
      %v2858 = vmul.f32 %v2817, %v2842
      %v2859 = vmul.f32 %v2831, %v2817
      %v2860 = vmul.f32 %v2831, %v2831
      %v2861 = vmul.f32 %v2831, %v2839
      %v2862 = vmul.f32 %v2831, %v2841
      %v2863 = vmul.f32 %v2831, %v2824
      %v2864 = vmul.f32 %v2831, %v2838
      %v2865 = vmul.f32 %v2831, %v2840
      %v2866 = vmul.f32 %v2831, %v2842
      %v2867 = vmul.f32 %v2839, %v2817
      %v2868 = vmul.f32 %v2839, %v2831
      %v2869 = vmul.f32 %v2839, %v2839
      %v2870 = vmul.f32 %v2839, %v2841
      %v2871 = vmul.f32 %v2839, %v2824
      %v2872 = vmul.f32 %v2839, %v2838
      %v2873 = vmul.f32 %v2839, %v2840
      %v2874 = vmul.f32 %v2839, %v2842
      %v2875 = vmul.f32 %v2841, %v2817
      %v2876 = vmul.f32 %v2841, %v2831
      %v2877 = vmul.f32 %v2841, %v2839
      %v2878 = vmul.f32 %v2841, %v2841
      %v2879 = vmul.f32 %v2841, %v2824
      %v2880 = vmul.f32 %v2841, %v2838
      %v2881 = vmul.f32 %v2841, %v2840
      %v2882 = vmul.f32 %v2841, %v2842
      %v2883 = vmul.f32 %v2824, %v2817
      %v2884 = vmul.f32 %v2824, %v2831
      %v2885 = vmul.f32 %v2824, %v2839
      %v2886 = vmul.f32 %v2824, %v2841
      %v2887 = vmul.f32 %v2824, %v2824
      %v2888 = vmul.f32 %v2824, %v2838
      %v2889 = vmul.f32 %v2824, %v2840
      %v2890 = vmul.f32 %v2824, %v2842
      %v2891 = vmul.f32 %v2838, %v2817
      %v2892 = vmul.f32 %v2838, %v2831
      %v2893 = vmul.f32 %v2838, %v2839
      %v2894 = vmul.f32 %v2838, %v2841
      %v2895 = vmul.f32 %v2838, %v2824
      %v2896 = vmul.f32 %v2838, %v2838
      %v2897 = vmul.f32 %v2838, %v2840
      %v2898 = vmul.f32 %v2838, %v2842
      %v2899 = vmul.f32 %v2840, %v2817
      %v2900 = vmul.f32 %v2840, %v2831
      %v2901 = vmul.f32 %v2840, %v2839
      %v2902 = vmul.f32 %v2840, %v2841
      %v2903 = vmul.f32 %v2840, %v2824
      %v2904 = vmul.f32 %v2840, %v2838
      %v2905 = vmul.f32 %v2840, %v2840
      %v2906 = vmul.f32 %v2840, %v2842
      %v2907 = vmul.f32 %v2842, %v2817
      %v2908 = vmul.f32 %v2842, %v2831
      %v2909 = vmul.f32 %v2842, %v2839
      %v2910 = vmul.f32 %v2842, %v2841
      %v2911 = vmul.f32 %v2842, %v2824
      %v2912 = vmul.f32 %v2842, %v2838
      %v2913 = vmul.f32 %v2842, %v2840
      %v2914 = vmul.f32 %v2842, %v2842
      %v2979 = vlaneseq
      %v2980 = vshrl.u32 %v2979, 7
      %v2981 = vsub.s32 0, %v2980
      %v2982 = vrot.slane %v2851, %v2981
      %v2983 = vlaneseq
      %v2984 = vshrl.u32 %v2983, 7
      %v2985 = vsub.s32 0, %v2984
      %v2986 = vrot.slane %v2852, %v2985
      %v2987 = vlaneseq
      %v2988 = vshrl.u32 %v2987, 7
      %v2989 = vsub.s32 0, %v2988
      %v2990 = vrot.slane %v2853, %v2989
      %v2991 = vlaneseq
      %v2992 = vshrl.u32 %v2991, 7
      %v2993 = vsub.s32 0, %v2992
      %v2994 = vrot.slane %v2854, %v2993
      %v2995 = vlaneseq
      %v2996 = vshrl.u32 %v2995, 7
      %v2997 = vsub.s32 0, %v2996
      %v2998 = vrot.slane %v2855, %v2997
      %v2999 = vlaneseq
      %v3000 = vshrl.u32 %v2999, 7
      %v3001 = vsub.s32 0, %v3000
      %v3002 = vrot.slane %v2856, %v3001
      %v3003 = vlaneseq
      %v3004 = vshrl.u32 %v3003, 7
      %v3005 = vsub.s32 0, %v3004
      %v3006 = vrot.slane %v2857, %v3005
      %v3007 = vlaneseq
      %v3008 = vshrl.u32 %v3007, 7
      %v3009 = vsub.s32 0, %v3008
      %v3010 = vrot.slane %v2858, %v3009
      %v3011 = vlaneseq
      %v3012 = vshrl.u32 %v3011, 7
      %v3013 = vsub.s32 0, %v3012
      %v3014 = vrot.slane %v2859, %v3013
      %v3015 = vlaneseq
      %v3016 = vshrl.u32 %v3015, 7
      %v3017 = vsub.s32 0, %v3016
      %v3018 = vrot.slane %v2860, %v3017
      %v3019 = vlaneseq
      %v3020 = vshrl.u32 %v3019, 7
      %v3021 = vsub.s32 0, %v3020
      %v3022 = vrot.slane %v2861, %v3021
      %v3023 = vlaneseq
      %v3024 = vshrl.u32 %v3023, 7
      %v3025 = vsub.s32 0, %v3024
      %v3026 = vrot.slane %v2862, %v3025
      %v3027 = vlaneseq
      %v3028 = vshrl.u32 %v3027, 7
      %v3029 = vsub.s32 0, %v3028
      %v3030 = vrot.slane %v2863, %v3029
      %v3031 = vlaneseq
      %v3032 = vshrl.u32 %v3031, 7
      %v3033 = vsub.s32 0, %v3032
      %v3034 = vrot.slane %v2864, %v3033
      %v3035 = vlaneseq
      %v3036 = vshrl.u32 %v3035, 7
      %v3037 = vsub.s32 0, %v3036
      %v3038 = vrot.slane %v2865, %v3037
      %v3039 = vlaneseq
      %v3040 = vshrl.u32 %v3039, 7
      %v3041 = vsub.s32 0, %v3040
      %v3042 = vrot.slane %v2866, %v3041
      %v3043 = vlaneseq
      %v3044 = vshrl.u32 %v3043, 7
      %v3045 = vsub.s32 0, %v3044
      %v3046 = vrot.slane %v2867, %v3045
      %v3047 = vlaneseq
      %v3048 = vshrl.u32 %v3047, 7
      %v3049 = vsub.s32 0, %v3048
      %v3050 = vrot.slane %v2868, %v3049
      %v3051 = vlaneseq
      %v3052 = vshrl.u32 %v3051, 7
      %v3053 = vsub.s32 0, %v3052
      %v3054 = vrot.slane %v2869, %v3053
      %v3055 = vlaneseq
      %v3056 = vshrl.u32 %v3055, 7
      %v3057 = vsub.s32 0, %v3056
      %v3058 = vrot.slane %v2870, %v3057
      %v3059 = vlaneseq
      %v3060 = vshrl.u32 %v3059, 7
      %v3061 = vsub.s32 0, %v3060
      %v3062 = vrot.slane %v2871, %v3061
      %v3063 = vlaneseq
      %v3064 = vshrl.u32 %v3063, 7
      %v3065 = vsub.s32 0, %v3064
      %v3066 = vrot.slane %v2872, %v3065
      %v3067 = vlaneseq
      %v3068 = vshrl.u32 %v3067, 7
      %v3069 = vsub.s32 0, %v3068
      %v3070 = vrot.slane %v2873, %v3069
      %v3071 = vlaneseq
      %v3072 = vshrl.u32 %v3071, 7
      %v3073 = vsub.s32 0, %v3072
      %v3074 = vrot.slane %v2874, %v3073
      %v3075 = vlaneseq
      %v3076 = vshrl.u32 %v3075, 7
      %v3077 = vsub.s32 0, %v3076
      %v3078 = vrot.slane %v2875, %v3077
      %v3079 = vlaneseq
      %v3080 = vshrl.u32 %v3079, 7
      %v3081 = vsub.s32 0, %v3080
      %v3082 = vrot.slane %v2876, %v3081
      %v3083 = vlaneseq
      %v3084 = vshrl.u32 %v3083, 7
      %v3085 = vsub.s32 0, %v3084
      %v3086 = vrot.slane %v2877, %v3085
      %v3087 = vlaneseq
      %v3088 = vshrl.u32 %v3087, 7
      %v3089 = vsub.s32 0, %v3088
      %v3090 = vrot.slane %v2878, %v3089
      %v3091 = vlaneseq
      %v3092 = vshrl.u32 %v3091, 7
      %v3093 = vsub.s32 0, %v3092
      %v3094 = vrot.slane %v2879, %v3093
      %v3095 = vlaneseq
      %v3096 = vshrl.u32 %v3095, 7
      %v3097 = vsub.s32 0, %v3096
      %v3098 = vrot.slane %v2880, %v3097
      %v3099 = vlaneseq
      %v3100 = vshrl.u32 %v3099, 7
      %v3101 = vsub.s32 0, %v3100
      %v3102 = vrot.slane %v2881, %v3101
      %v3103 = vlaneseq
      %v3104 = vshrl.u32 %v3103, 7
      %v3105 = vsub.s32 0, %v3104
      %v3106 = vrot.slane %v2882, %v3105
      %v3107 = vlaneseq
      %v3108 = vshrl.u32 %v3107, 7
      %v3109 = vsub.s32 0, %v3108
      %v3110 = vrot.slane %v2883, %v3109
      %v3111 = vlaneseq
      %v3112 = vshrl.u32 %v3111, 7
      %v3113 = vsub.s32 0, %v3112
      %v3114 = vrot.slane %v2884, %v3113
      %v3115 = vlaneseq
      %v3116 = vshrl.u32 %v3115, 7
      %v3117 = vsub.s32 0, %v3116
      %v3118 = vrot.slane %v2885, %v3117
      %v3119 = vlaneseq
      %v3120 = vshrl.u32 %v3119, 7
      %v3121 = vsub.s32 0, %v3120
      %v3122 = vrot.slane %v2886, %v3121
      %v3123 = vlaneseq
      %v3124 = vshrl.u32 %v3123, 7
      %v3125 = vsub.s32 0, %v3124
      %v3126 = vrot.slane %v2887, %v3125
      %v3127 = vlaneseq
      %v3128 = vshrl.u32 %v3127, 7
      %v3129 = vsub.s32 0, %v3128
      %v3130 = vrot.slane %v2888, %v3129
      %v3131 = vlaneseq
      %v3132 = vshrl.u32 %v3131, 7
      %v3133 = vsub.s32 0, %v3132
      %v3134 = vrot.slane %v2889, %v3133
      %v3135 = vlaneseq
      %v3136 = vshrl.u32 %v3135, 7
      %v3137 = vsub.s32 0, %v3136
      %v3138 = vrot.slane %v2890, %v3137
      %v3139 = vlaneseq
      %v3140 = vshrl.u32 %v3139, 7
      %v3141 = vsub.s32 0, %v3140
      %v3142 = vrot.slane %v2891, %v3141
      %v3143 = vlaneseq
      %v3144 = vshrl.u32 %v3143, 7
      %v3145 = vsub.s32 0, %v3144
      %v3146 = vrot.slane %v2892, %v3145
      %v3147 = vlaneseq
      %v3148 = vshrl.u32 %v3147, 7
      %v3149 = vsub.s32 0, %v3148
      %v3150 = vrot.slane %v2893, %v3149
      %v3151 = vlaneseq
      %v3152 = vshrl.u32 %v3151, 7
      %v3153 = vsub.s32 0, %v3152
      %v3154 = vrot.slane %v2894, %v3153
      %v3155 = vlaneseq
      %v3156 = vshrl.u32 %v3155, 7
      %v3157 = vsub.s32 0, %v3156
      %v3158 = vrot.slane %v2895, %v3157
      %v3159 = vlaneseq
      %v3160 = vshrl.u32 %v3159, 7
      %v3161 = vsub.s32 0, %v3160
      %v3162 = vrot.slane %v2896, %v3161
      %v3163 = vlaneseq
      %v3164 = vshrl.u32 %v3163, 7
      %v3165 = vsub.s32 0, %v3164
      %v3166 = vrot.slane %v2897, %v3165
      %v3167 = vlaneseq
      %v3168 = vshrl.u32 %v3167, 7
      %v3169 = vsub.s32 0, %v3168
      %v3170 = vrot.slane %v2898, %v3169
      %v3171 = vlaneseq
      %v3172 = vshrl.u32 %v3171, 7
      %v3173 = vsub.s32 0, %v3172
      %v3174 = vrot.slane %v2899, %v3173
      %v3175 = vlaneseq
      %v3176 = vshrl.u32 %v3175, 7
      %v3177 = vsub.s32 0, %v3176
      %v3178 = vrot.slane %v2900, %v3177
      %v3179 = vlaneseq
      %v3180 = vshrl.u32 %v3179, 7
      %v3181 = vsub.s32 0, %v3180
      %v3182 = vrot.slane %v2901, %v3181
      %v3183 = vlaneseq
      %v3184 = vshrl.u32 %v3183, 7
      %v3185 = vsub.s32 0, %v3184
      %v3186 = vrot.slane %v2902, %v3185
      %v3187 = vlaneseq
      %v3188 = vshrl.u32 %v3187, 7
      %v3189 = vsub.s32 0, %v3188
      %v3190 = vrot.slane %v2903, %v3189
      %v3191 = vlaneseq
      %v3192 = vshrl.u32 %v3191, 7
      %v3193 = vsub.s32 0, %v3192
      %v3194 = vrot.slane %v2904, %v3193
      %v3195 = vlaneseq
      %v3196 = vshrl.u32 %v3195, 7
      %v3197 = vsub.s32 0, %v3196
      %v3198 = vrot.slane %v2905, %v3197
      %v3199 = vlaneseq
      %v3200 = vshrl.u32 %v3199, 7
      %v3201 = vsub.s32 0, %v3200
      %v3202 = vrot.slane %v2906, %v3201
      %v3203 = vlaneseq
      %v3204 = vshrl.u32 %v3203, 7
      %v3205 = vsub.s32 0, %v3204
      %v3206 = vrot.slane %v2907, %v3205
      %v3207 = vlaneseq
      %v3208 = vshrl.u32 %v3207, 7
      %v3209 = vsub.s32 0, %v3208
      %v3210 = vrot.slane %v2908, %v3209
      %v3211 = vlaneseq
      %v3212 = vshrl.u32 %v3211, 7
      %v3213 = vsub.s32 0, %v3212
      %v3214 = vrot.slane %v2909, %v3213
      %v3215 = vlaneseq
      %v3216 = vshrl.u32 %v3215, 7
      %v3217 = vsub.s32 0, %v3216
      %v3218 = vrot.slane %v2910, %v3217
      %v3219 = vlaneseq
      %v3220 = vshrl.u32 %v3219, 7
      %v3221 = vsub.s32 0, %v3220
      %v3222 = vrot.slane %v2911, %v3221
      %v3223 = vlaneseq
      %v3224 = vshrl.u32 %v3223, 7
      %v3225 = vsub.s32 0, %v3224
      %v3226 = vrot.slane %v2912, %v3225
      %v3227 = vlaneseq
      %v3228 = vshrl.u32 %v3227, 7
      %v3229 = vsub.s32 0, %v3228
      %v3230 = vrot.slane %v2913, %v3229
      %v3231 = vlaneseq
      %v3232 = vshrl.u32 %v3231, 7
      %v3233 = vsub.s32 0, %v3232
      %v3234 = vrot.slane %v2914, %v3233
      %v3299 = vmul.f32 %v2982, %v2792
      %v3300 = vmul.f32 %v2986, %v2792
      %v3301 = vmul.f32 %v2990, %v2792
      %v3302 = vmul.f32 %v2994, %v2792
      %v3303 = vmul.f32 %v2998, %v2792
      %v3304 = vmul.f32 %v3002, %v2792
      %v3305 = vmul.f32 %v3006, %v2792
      %v3306 = vmul.f32 %v3010, %v2792
      %v3307 = vmul.f32 %v3014, %v2792
      %v3308 = vmul.f32 %v3018, %v2792
      %v3309 = vmul.f32 %v3022, %v2792
      %v3310 = vmul.f32 %v3026, %v2792
      %v3311 = vmul.f32 %v3030, %v2792
      %v3312 = vmul.f32 %v3034, %v2792
      %v3313 = vmul.f32 %v3038, %v2792
      %v3314 = vmul.f32 %v3042, %v2792
      %v3315 = vmul.f32 %v3046, %v2792
      %v3316 = vmul.f32 %v3050, %v2792
      %v3317 = vmul.f32 %v3054, %v2792
      %v3318 = vmul.f32 %v3058, %v2792
      %v3319 = vmul.f32 %v3062, %v2792
      %v3320 = vmul.f32 %v3066, %v2792
      %v3321 = vmul.f32 %v3070, %v2792
      %v3322 = vmul.f32 %v3074, %v2792
      %v3323 = vmul.f32 %v3078, %v2792
      %v3324 = vmul.f32 %v3082, %v2792
      %v3325 = vmul.f32 %v3086, %v2792
      %v3326 = vmul.f32 %v3090, %v2792
      %v3327 = vmul.f32 %v3094, %v2792
      %v3328 = vmul.f32 %v3098, %v2792
      %v3329 = vmul.f32 %v3102, %v2792
      %v3330 = vmul.f32 %v3106, %v2792
      %v3331 = vmul.f32 %v3110, %v2792
      %v3332 = vmul.f32 %v3114, %v2792
      %v3333 = vmul.f32 %v3118, %v2792
      %v3334 = vmul.f32 %v3122, %v2792
      %v3335 = vmul.f32 %v3126, %v2792
      %v3336 = vmul.f32 %v3130, %v2792
      %v3337 = vmul.f32 %v3134, %v2792
      %v3338 = vmul.f32 %v3138, %v2792
      %v3339 = vmul.f32 %v3142, %v2792
      %v3340 = vmul.f32 %v3146, %v2792
      %v3341 = vmul.f32 %v3150, %v2792
      %v3342 = vmul.f32 %v3154, %v2792
      %v3343 = vmul.f32 %v3158, %v2792
      %v3344 = vmul.f32 %v3162, %v2792
      %v3345 = vmul.f32 %v3166, %v2792
      %v3346 = vmul.f32 %v3170, %v2792
      %v3347 = vmul.f32 %v3174, %v2792
      %v3348 = vmul.f32 %v3178, %v2792
      %v3349 = vmul.f32 %v3182, %v2792
      %v3350 = vmul.f32 %v3186, %v2792
      %v3351 = vmul.f32 %v3190, %v2792
      %v3352 = vmul.f32 %v3194, %v2792
      %v3353 = vmul.f32 %v3198, %v2792
      %v3354 = vmul.f32 %v3202, %v2792
      %v3355 = vmul.f32 %v3206, %v2792
      %v3356 = vmul.f32 %v3210, %v2792
      %v3357 = vmul.f32 %v3214, %v2792
      %v3358 = vmul.f32 %v3218, %v2792
      %v3359 = vmul.f32 %v3222, %v2792
      %v3360 = vmul.f32 %v3226, %v2792
      %v3361 = vmul.f32 %v3230, %v2792
      %v3362 = vmul.f32 %v3234, %v2792
      %v3363 = vld [vmem:[%s5] sm:$0xff]
      %v3364 = vld [vmem:[%s5 + $0x8] sm:$0xff]
      %v3365 = vld [vmem:[%s5 + $0x10] sm:$0xff]
      %v3366 = vld [vmem:[%s5 + $0x18] sm:$0xff]
      %v3367 = vld [vmem:[%s5 + $0x20] sm:$0xff]
      %v3368 = vld [vmem:[%s5 + $0x28] sm:$0xff]
      %v3369 = vld [vmem:[%s5 + $0x30] sm:$0xff]
      %v3370 = vld [vmem:[%s5 + $0x38] sm:$0xff]
      %v3371 = vld [vmem:[%s5 + $0x40] sm:$0xff]
      %v3372 = vld [vmem:[%s5 + $0x48] sm:$0xff]
      %v3373 = vld [vmem:[%s5 + $0x50] sm:$0xff]
      %v3374 = vld [vmem:[%s5 + $0x58] sm:$0xff]
      %v3375 = vld [vmem:[%s5 + $0x60] sm:$0xff]
      %v3376 = vld [vmem:[%s5 + $0x68] sm:$0xff]
      %v3377 = vld [vmem:[%s5 + $0x70] sm:$0xff]
      %v3378 = vld [vmem:[%s5 + $0x78] sm:$0xff]
      %v3379 = vld [vmem:[%s5 + $0x80] sm:$0xff]
      %v3380 = vld [vmem:[%s5 + $0x88] sm:$0xff]
      %v3381 = vld [vmem:[%s5 + $0x90] sm:$0xff]
      %v3382 = vld [vmem:[%s5 + $0x98] sm:$0xff]
      %v3383 = vld [vmem:[%s5 + $0xa0] sm:$0xff]
      %v3384 = vld [vmem:[%s5 + $0xa8] sm:$0xff]
      %v3385 = vld [vmem:[%s5 + $0xb0] sm:$0xff]
      %v3386 = vld [vmem:[%s5 + $0xb8] sm:$0xff]
      %v3387 = vld [vmem:[%s5 + $0xc0] sm:$0xff]
      %v3388 = vld [vmem:[%s5 + $0xc8] sm:$0xff]
      %v3389 = vld [vmem:[%s5 + $0xd0] sm:$0xff]
      %v3390 = vld [vmem:[%s5 + $0xd8] sm:$0xff]
      %v3391 = vld [vmem:[%s5 + $0xe0] sm:$0xff]
      %v3392 = vld [vmem:[%s5 + $0xe8] sm:$0xff]
      %v3393 = vld [vmem:[%s5 + $0xf0] sm:$0xff]
      %v3394 = vld [vmem:[%s5 + $0xf8] sm:$0xff]
      %v3395 = vsel %vm2748, %v3299, 0.0
      %v3396 = vsel %vm2748, %v3307, 0.0
      %v3397 = vadd.f32 %v3395, %v3396
      %v3398 = vsel %vm2748, %v3315, 0.0
      %v3399 = vadd.f32 %v3397, %v3398
      %v3400 = vsel %vm2748, %v3323, 0.0
      %v3401 = vadd.f32 %v3399, %v3400
      %v3402 = vsel %vm2748, %v3331, 0.0
      %v3403 = vadd.f32 %v3401, %v3402
      %v3404 = vsel %vm2748, %v3339, 0.0
      %v3405 = vadd.f32 %v3403, %v3404
      %v3406 = vsel %vm2748, %v3347, 0.0
      %v3407 = vadd.f32 %v3405, %v3406
      %v3408 = vsel %vm2748, %v3355, 0.0
      %v3409 = vadd.f32 %v3407, %v3408
      %v3410 = vsel %vm2748, %v3300, 0.0
      %v3411 = vsel %vm2748, %v3308, 0.0
      %v3412 = vadd.f32 %v3410, %v3411
      %v3413 = vsel %vm2748, %v3316, 0.0
      %v3414 = vadd.f32 %v3412, %v3413
      %v3415 = vsel %vm2748, %v3324, 0.0
      %v3416 = vadd.f32 %v3414, %v3415
      %v3417 = vsel %vm2748, %v3332, 0.0
      %v3418 = vadd.f32 %v3416, %v3417
      %v3419 = vsel %vm2748, %v3340, 0.0
      %v3420 = vadd.f32 %v3418, %v3419
      %v3421 = vsel %vm2748, %v3348, 0.0
      %v3422 = vadd.f32 %v3420, %v3421
      %v3423 = vsel %vm2748, %v3356, 0.0
      %v3424 = vadd.f32 %v3422, %v3423
      %v3425 = vsel %vm2748, %v3301, 0.0
      %v3426 = vsel %vm2748, %v3309, 0.0
      %v3427 = vadd.f32 %v3425, %v3426
      %v3428 = vsel %vm2748, %v3317, 0.0
      %v3429 = vadd.f32 %v3427, %v3428
      %v3430 = vsel %vm2748, %v3325, 0.0
      %v3431 = vadd.f32 %v3429, %v3430
      %v3432 = vsel %vm2748, %v3333, 0.0
      %v3433 = vadd.f32 %v3431, %v3432
      %v3434 = vsel %vm2748, %v3341, 0.0
      %v3435 = vadd.f32 %v3433, %v3434
      %v3436 = vsel %vm2748, %v3349, 0.0
      %v3437 = vadd.f32 %v3435, %v3436
      %v3438 = vsel %vm2748, %v3357, 0.0
      %v3439 = vadd.f32 %v3437, %v3438
      %v3440 = vsel %vm2748, %v3302, 0.0
      %v3441 = vsel %vm2748, %v3310, 0.0
      %v3442 = vadd.f32 %v3440, %v3441
      %v3443 = vsel %vm2748, %v3318, 0.0
      %v3444 = vadd.f32 %v3442, %v3443
      %v3445 = vsel %vm2748, %v3326, 0.0
      %v3446 = vadd.f32 %v3444, %v3445
      %v3447 = vsel %vm2748, %v3334, 0.0
      %v3448 = vadd.f32 %v3446, %v3447
      %v3449 = vsel %vm2748, %v3342, 0.0
      %v3450 = vadd.f32 %v3448, %v3449
      %v3451 = vsel %vm2748, %v3350, 0.0
      %v3452 = vadd.f32 %v3450, %v3451
      %v3453 = vsel %vm2748, %v3358, 0.0
      %v3454 = vadd.f32 %v3452, %v3453
      %v3455 = vsel %vm2748, %v3303, 0.0
      %v3456 = vsel %vm2748, %v3311, 0.0
      %v3457 = vadd.f32 %v3455, %v3456
      %v3458 = vsel %vm2748, %v3319, 0.0
      %v3459 = vadd.f32 %v3457, %v3458
      %v3460 = vsel %vm2748, %v3327, 0.0
      %v3461 = vadd.f32 %v3459, %v3460
      %v3462 = vsel %vm2748, %v3335, 0.0
      %v3463 = vadd.f32 %v3461, %v3462
      %v3464 = vsel %vm2748, %v3343, 0.0
      %v3465 = vadd.f32 %v3463, %v3464
      %v3466 = vsel %vm2748, %v3351, 0.0
      %v3467 = vadd.f32 %v3465, %v3466
      %v3468 = vsel %vm2748, %v3359, 0.0
      %v3469 = vadd.f32 %v3467, %v3468
      %v3470 = vsel %vm2748, %v3304, 0.0
      %v3471 = vsel %vm2748, %v3312, 0.0
      %v3472 = vadd.f32 %v3470, %v3471
      %v3473 = vsel %vm2748, %v3320, 0.0
      %v3474 = vadd.f32 %v3472, %v3473
      %v3475 = vsel %vm2748, %v3328, 0.0
      %v3476 = vadd.f32 %v3474, %v3475
      %v3477 = vsel %vm2748, %v3336, 0.0
      %v3478 = vadd.f32 %v3476, %v3477
      %v3479 = vsel %vm2748, %v3344, 0.0
      %v3480 = vadd.f32 %v3478, %v3479
      %v3481 = vsel %vm2748, %v3352, 0.0
      %v3482 = vadd.f32 %v3480, %v3481
      %v3483 = vsel %vm2748, %v3360, 0.0
      %v3484 = vadd.f32 %v3482, %v3483
      %v3485 = vsel %vm2748, %v3305, 0.0
      %v3486 = vsel %vm2748, %v3313, 0.0
      %v3487 = vadd.f32 %v3485, %v3486
      %v3488 = vsel %vm2748, %v3321, 0.0
      %v3489 = vadd.f32 %v3487, %v3488
      %v3490 = vsel %vm2748, %v3329, 0.0
      %v3491 = vadd.f32 %v3489, %v3490
      %v3492 = vsel %vm2748, %v3337, 0.0
      %v3493 = vadd.f32 %v3491, %v3492
      %v3494 = vsel %vm2748, %v3345, 0.0
      %v3495 = vadd.f32 %v3493, %v3494
      %v3496 = vsel %vm2748, %v3353, 0.0
      %v3497 = vadd.f32 %v3495, %v3496
      %v3498 = vsel %vm2748, %v3361, 0.0
      %v3499 = vadd.f32 %v3497, %v3498
      %v3500 = vsel %vm2748, %v3306, 0.0
      %v3501 = vsel %vm2748, %v3314, 0.0
      %v3502 = vadd.f32 %v3500, %v3501
      %v3503 = vsel %vm2748, %v3322, 0.0
      %v3504 = vadd.f32 %v3502, %v3503
      %v3505 = vsel %vm2748, %v3330, 0.0
      %v3506 = vadd.f32 %v3504, %v3505
      %v3507 = vsel %vm2748, %v3338, 0.0
      %v3508 = vadd.f32 %v3506, %v3507
      %v3509 = vsel %vm2748, %v3346, 0.0
      %v3510 = vadd.f32 %v3508, %v3509
      %v3511 = vsel %vm2748, %v3354, 0.0
      %v3512 = vadd.f32 %v3510, %v3511
      %v3513 = vsel %vm2748, %v3362, 0.0
      %v3514 = vadd.f32 %v3512, %v3513
      %v3515 = vrcp.pop 8.0
      %v3516 = vmul.f32 %v3409, %v3515
      %v3517 = vmul.f32 %v3424, %v3515
      %v3518 = vmul.f32 %v3439, %v3515
      %v3519 = vmul.f32 %v3454, %v3515
      %v3520 = vmul.f32 %v3469, %v3515
      %v3521 = vmul.f32 %v3484, %v3515
      %v3522 = vmul.f32 %v3499, %v3515
      %v3523 = vmul.f32 %v3514, %v3515
      %v3524 = vadd.f32 %v3395, %v3410
      %v3525 = vadd.f32 %v3524, %v3425
      %v3526 = vadd.f32 %v3525, %v3440
      %v3527 = vadd.f32 %v3526, %v3455
      %v3528 = vadd.f32 %v3527, %v3470
      %v3529 = vadd.f32 %v3528, %v3485
      %v3530 = vadd.f32 %v3529, %v3500
      %v3531 = vadd.f32 %v3396, %v3411
      %v3532 = vadd.f32 %v3531, %v3426
      %v3533 = vadd.f32 %v3532, %v3441
      %v3534 = vadd.f32 %v3533, %v3456
      %v3535 = vadd.f32 %v3534, %v3471
      %v3536 = vadd.f32 %v3535, %v3486
      %v3537 = vadd.f32 %v3536, %v3501
      %v3538 = vadd.f32 %v3398, %v3413
      %v3539 = vadd.f32 %v3538, %v3428
      %v3540 = vadd.f32 %v3539, %v3443
      %v3541 = vadd.f32 %v3540, %v3458
      %v3542 = vadd.f32 %v3541, %v3473
      %v3543 = vadd.f32 %v3542, %v3488
      %v3544 = vadd.f32 %v3543, %v3503
      %v3545 = vadd.f32 %v3400, %v3415
      %v3546 = vadd.f32 %v3545, %v3430
      %v3547 = vadd.f32 %v3546, %v3445
      %v3548 = vadd.f32 %v3547, %v3460
      %v3549 = vadd.f32 %v3548, %v3475
      %v3550 = vadd.f32 %v3549, %v3490
      %v3551 = vadd.f32 %v3550, %v3505
      %v3552 = vadd.f32 %v3402, %v3417
      %v3553 = vadd.f32 %v3552, %v3432
      %v3554 = vadd.f32 %v3553, %v3447
      %v3555 = vadd.f32 %v3554, %v3462
      %v3556 = vadd.f32 %v3555, %v3477
      %v3557 = vadd.f32 %v3556, %v3492
      %v3558 = vadd.f32 %v3557, %v3507
      %v3559 = vadd.f32 %v3404, %v3419
      %v3560 = vadd.f32 %v3559, %v3434
      %v3561 = vadd.f32 %v3560, %v3449
      %v3562 = vadd.f32 %v3561, %v3464
      %v3563 = vadd.f32 %v3562, %v3479
      %v3564 = vadd.f32 %v3563, %v3494
      %v3565 = vadd.f32 %v3564, %v3509
      %v3566 = vadd.f32 %v3406, %v3421
      %v3567 = vadd.f32 %v3566, %v3436
      %v3568 = vadd.f32 %v3567, %v3451
      %v3569 = vadd.f32 %v3568, %v3466
      %v3570 = vadd.f32 %v3569, %v3481
      %v3571 = vadd.f32 %v3570, %v3496
      %v3572 = vadd.f32 %v3571, %v3511
      %v3573 = vadd.f32 %v3408, %v3423
      %v3574 = vadd.f32 %v3573, %v3438
      %v3575 = vadd.f32 %v3574, %v3453
      %v3576 = vadd.f32 %v3575, %v3468
      %v3577 = vadd.f32 %v3576, %v3483
      %v3578 = vadd.f32 %v3577, %v3498
      %v3579 = vadd.f32 %v3578, %v3513
      %v3580 = vmul.f32 %v3530, %v3515
      %v3581 = vmul.f32 %v3537, %v3515
      %v3582 = vmul.f32 %v3544, %v3515
      %v3583 = vmul.f32 %v3551, %v3515
      %v3584 = vmul.f32 %v3558, %v3515
      %v3585 = vmul.f32 %v3565, %v3515
      %v3586 = vmul.f32 %v3572, %v3515
      %v3587 = vmul.f32 %v3579, %v3515
      %v3588 = vrot.slane %v3395, 4
      %v3589 = vadd.f32 %v3395, %v3588
      %v3590 = vrot.slane %v3589, 2
      %v3591 = vadd.f32 %v3589, %v3590
      %v3592 = vrot.slane %v3591, 1
      %v3593 = vadd.f32 %v3591, %v3592
      %v3594 = vrot.slane %v3410, 4
      %v3595 = vadd.f32 %v3410, %v3594
      %v3596 = vrot.slane %v3595, 2
      %v3597 = vadd.f32 %v3595, %v3596
      %v3598 = vrot.slane %v3597, 1
      %v3599 = vadd.f32 %v3597, %v3598
      %v3600 = vrot.slane %v3425, 4
      %v3601 = vadd.f32 %v3425, %v3600
      %v3602 = vrot.slane %v3601, 2
      %v3603 = vadd.f32 %v3601, %v3602
      %v3604 = vrot.slane %v3603, 1
      %v3605 = vadd.f32 %v3603, %v3604
      %v3606 = vrot.slane %v3440, 4
      %v3607 = vadd.f32 %v3440, %v3606
      %v3608 = vrot.slane %v3607, 2
      %v3609 = vadd.f32 %v3607, %v3608
      %v3610 = vrot.slane %v3609, 1
      %v3611 = vadd.f32 %v3609, %v3610
      %v3612 = vrot.slane %v3455, 4
      %v3613 = vadd.f32 %v3455, %v3612
      %v3614 = vrot.slane %v3613, 2
      %v3615 = vadd.f32 %v3613, %v3614
      %v3616 = vrot.slane %v3615, 1
      %v3617 = vadd.f32 %v3615, %v3616
      %v3618 = vrot.slane %v3470, 4
      %v3619 = vadd.f32 %v3470, %v3618
      %v3620 = vrot.slane %v3619, 2
      %v3621 = vadd.f32 %v3619, %v3620
      %v3622 = vrot.slane %v3621, 1
      %v3623 = vadd.f32 %v3621, %v3622
      %v3624 = vrot.slane %v3485, 4
      %v3625 = vadd.f32 %v3485, %v3624
      %v3626 = vrot.slane %v3625, 2
      %v3627 = vadd.f32 %v3625, %v3626
      %v3628 = vrot.slane %v3627, 1
      %v3629 = vadd.f32 %v3627, %v3628
      %v3630 = vrot.slane %v3500, 4
      %v3631 = vadd.f32 %v3500, %v3630
      %v3632 = vrot.slane %v3631, 2
      %v3633 = vadd.f32 %v3631, %v3632
      %v3634 = vrot.slane %v3633, 1
      %v3635 = vadd.f32 %v3633, %v3634
      %v3636 = vrot.slane %v3396, 4
      %v3637 = vadd.f32 %v3396, %v3636
      %v3638 = vrot.slane %v3637, 2
      %v3639 = vadd.f32 %v3637, %v3638
      %v3640 = vrot.slane %v3639, 1
      %v3641 = vadd.f32 %v3639, %v3640
      %v3642 = vrot.slane %v3411, 4
      %v3643 = vadd.f32 %v3411, %v3642
      %v3644 = vrot.slane %v3643, 2
      %v3645 = vadd.f32 %v3643, %v3644
      %v3646 = vrot.slane %v3645, 1
      %v3647 = vadd.f32 %v3645, %v3646
      %v3648 = vrot.slane %v3426, 4
      %v3649 = vadd.f32 %v3426, %v3648
      %v3650 = vrot.slane %v3649, 2
      %v3651 = vadd.f32 %v3649, %v3650
      %v3652 = vrot.slane %v3651, 1
      %v3653 = vadd.f32 %v3651, %v3652
      %v3654 = vrot.slane %v3441, 4
      %v3655 = vadd.f32 %v3441, %v3654
      %v3656 = vrot.slane %v3655, 2
      %v3657 = vadd.f32 %v3655, %v3656
      %v3658 = vrot.slane %v3657, 1
      %v3659 = vadd.f32 %v3657, %v3658
      %v3660 = vrot.slane %v3456, 4
      %v3661 = vadd.f32 %v3456, %v3660
      %v3662 = vrot.slane %v3661, 2
      %v3663 = vadd.f32 %v3661, %v3662
      %v3664 = vrot.slane %v3663, 1
      %v3665 = vadd.f32 %v3663, %v3664
      %v3666 = vrot.slane %v3471, 4
      %v3667 = vadd.f32 %v3471, %v3666
      %v3668 = vrot.slane %v3667, 2
      %v3669 = vadd.f32 %v3667, %v3668
      %v3670 = vrot.slane %v3669, 1
      %v3671 = vadd.f32 %v3669, %v3670
      %v3672 = vrot.slane %v3486, 4
      %v3673 = vadd.f32 %v3486, %v3672
      %v3674 = vrot.slane %v3673, 2
      %v3675 = vadd.f32 %v3673, %v3674
      %v3676 = vrot.slane %v3675, 1
      %v3677 = vadd.f32 %v3675, %v3676
      %v3678 = vrot.slane %v3501, 4
      %v3679 = vadd.f32 %v3501, %v3678
      %v3680 = vrot.slane %v3679, 2
      %v3681 = vadd.f32 %v3679, %v3680
      %v3682 = vrot.slane %v3681, 1
      %v3683 = vadd.f32 %v3681, %v3682
      %v3684 = vrot.slane %v3398, 4
      %v3685 = vadd.f32 %v3398, %v3684
      %v3686 = vrot.slane %v3685, 2
      %v3687 = vadd.f32 %v3685, %v3686
      %v3688 = vrot.slane %v3687, 1
      %v3689 = vadd.f32 %v3687, %v3688
      %v3690 = vrot.slane %v3413, 4
      %v3691 = vadd.f32 %v3413, %v3690
      %v3692 = vrot.slane %v3691, 2
      %v3693 = vadd.f32 %v3691, %v3692
      %v3694 = vrot.slane %v3693, 1
      %v3695 = vadd.f32 %v3693, %v3694
      %v3696 = vrot.slane %v3428, 4
      %v3697 = vadd.f32 %v3428, %v3696
      %v3698 = vrot.slane %v3697, 2
      %v3699 = vadd.f32 %v3697, %v3698
      %v3700 = vrot.slane %v3699, 1
      %v3701 = vadd.f32 %v3699, %v3700
      %v3702 = vrot.slane %v3443, 4
      %v3703 = vadd.f32 %v3443, %v3702
      %v3704 = vrot.slane %v3703, 2
      %v3705 = vadd.f32 %v3703, %v3704
      %v3706 = vrot.slane %v3705, 1
      %v3707 = vadd.f32 %v3705, %v3706
      %v3708 = vrot.slane %v3458, 4
      %v3709 = vadd.f32 %v3458, %v3708
      %v3710 = vrot.slane %v3709, 2
      %v3711 = vadd.f32 %v3709, %v3710
      %v3712 = vrot.slane %v3711, 1
      %v3713 = vadd.f32 %v3711, %v3712
      %v3714 = vrot.slane %v3473, 4
      %v3715 = vadd.f32 %v3473, %v3714
      %v3716 = vrot.slane %v3715, 2
      %v3717 = vadd.f32 %v3715, %v3716
      %v3718 = vrot.slane %v3717, 1
      %v3719 = vadd.f32 %v3717, %v3718
      %v3720 = vrot.slane %v3488, 4
      %v3721 = vadd.f32 %v3488, %v3720
      %v3722 = vrot.slane %v3721, 2
      %v3723 = vadd.f32 %v3721, %v3722
      %v3724 = vrot.slane %v3723, 1
      %v3725 = vadd.f32 %v3723, %v3724
      %v3726 = vrot.slane %v3503, 4
      %v3727 = vadd.f32 %v3503, %v3726
      %v3728 = vrot.slane %v3727, 2
      %v3729 = vadd.f32 %v3727, %v3728
      %v3730 = vrot.slane %v3729, 1
      %v3731 = vadd.f32 %v3729, %v3730
      %v3732 = vrot.slane %v3400, 4
      %v3733 = vadd.f32 %v3400, %v3732
      %v3734 = vrot.slane %v3733, 2
      %v3735 = vadd.f32 %v3733, %v3734
      %v3736 = vrot.slane %v3735, 1
      %v3737 = vadd.f32 %v3735, %v3736
      %v3738 = vrot.slane %v3415, 4
      %v3739 = vadd.f32 %v3415, %v3738
      %v3740 = vrot.slane %v3739, 2
      %v3741 = vadd.f32 %v3739, %v3740
      %v3742 = vrot.slane %v3741, 1
      %v3743 = vadd.f32 %v3741, %v3742
      %v3744 = vrot.slane %v3430, 4
      %v3745 = vadd.f32 %v3430, %v3744
      %v3746 = vrot.slane %v3745, 2
      %v3747 = vadd.f32 %v3745, %v3746
      %v3748 = vrot.slane %v3747, 1
      %v3749 = vadd.f32 %v3747, %v3748
      %v3750 = vrot.slane %v3445, 4
      %v3751 = vadd.f32 %v3445, %v3750
      %v3752 = vrot.slane %v3751, 2
      %v3753 = vadd.f32 %v3751, %v3752
      %v3754 = vrot.slane %v3753, 1
      %v3755 = vadd.f32 %v3753, %v3754
      %v3756 = vrot.slane %v3460, 4
      %v3757 = vadd.f32 %v3460, %v3756
      %v3758 = vrot.slane %v3757, 2
      %v3759 = vadd.f32 %v3757, %v3758
      %v3760 = vrot.slane %v3759, 1
      %v3761 = vadd.f32 %v3759, %v3760
      %v3762 = vrot.slane %v3475, 4
      %v3763 = vadd.f32 %v3475, %v3762
      %v3764 = vrot.slane %v3763, 2
      %v3765 = vadd.f32 %v3763, %v3764
      %v3766 = vrot.slane %v3765, 1
      %v3767 = vadd.f32 %v3765, %v3766
      %v3768 = vrot.slane %v3490, 4
      %v3769 = vadd.f32 %v3490, %v3768
      %v3770 = vrot.slane %v3769, 2
      %v3771 = vadd.f32 %v3769, %v3770
      %v3772 = vrot.slane %v3771, 1
      %v3773 = vadd.f32 %v3771, %v3772
      %v3774 = vrot.slane %v3505, 4
      %v3775 = vadd.f32 %v3505, %v3774
      %v3776 = vrot.slane %v3775, 2
      %v3777 = vadd.f32 %v3775, %v3776
      %v3778 = vrot.slane %v3777, 1
      %v3779 = vadd.f32 %v3777, %v3778
      %v3780 = vrot.slane %v3402, 4
      %v3781 = vadd.f32 %v3402, %v3780
      %v3782 = vrot.slane %v3781, 2
      %v3783 = vadd.f32 %v3781, %v3782
      %v3784 = vrot.slane %v3783, 1
      %v3785 = vadd.f32 %v3783, %v3784
      %v3786 = vrot.slane %v3417, 4
      %v3787 = vadd.f32 %v3417, %v3786
      %v3788 = vrot.slane %v3787, 2
      %v3789 = vadd.f32 %v3787, %v3788
      %v3790 = vrot.slane %v3789, 1
      %v3791 = vadd.f32 %v3789, %v3790
      %v3792 = vrot.slane %v3432, 4
      %v3793 = vadd.f32 %v3432, %v3792
      %v3794 = vrot.slane %v3793, 2
      %v3795 = vadd.f32 %v3793, %v3794
      %v3796 = vrot.slane %v3795, 1
      %v3797 = vadd.f32 %v3795, %v3796
      %v3798 = vrot.slane %v3447, 4
      %v3799 = vadd.f32 %v3447, %v3798
      %v3800 = vrot.slane %v3799, 2
      %v3801 = vadd.f32 %v3799, %v3800
      %v3802 = vrot.slane %v3801, 1
      %v3803 = vadd.f32 %v3801, %v3802
      %v3804 = vrot.slane %v3462, 4
      %v3805 = vadd.f32 %v3462, %v3804
      %v3806 = vrot.slane %v3805, 2
      %v3807 = vadd.f32 %v3805, %v3806
      %v3808 = vrot.slane %v3807, 1
      %v3809 = vadd.f32 %v3807, %v3808
      %v3810 = vrot.slane %v3477, 4
      %v3811 = vadd.f32 %v3477, %v3810
      %v3812 = vrot.slane %v3811, 2
      %v3813 = vadd.f32 %v3811, %v3812
      %v3814 = vrot.slane %v3813, 1
      %v3815 = vadd.f32 %v3813, %v3814
      %v3816 = vrot.slane %v3492, 4
      %v3817 = vadd.f32 %v3492, %v3816
      %v3818 = vrot.slane %v3817, 2
      %v3819 = vadd.f32 %v3817, %v3818
      %v3820 = vrot.slane %v3819, 1
      %v3821 = vadd.f32 %v3819, %v3820
      %v3822 = vrot.slane %v3507, 4
      %v3823 = vadd.f32 %v3507, %v3822
      %v3824 = vrot.slane %v3823, 2
      %v3825 = vadd.f32 %v3823, %v3824
      %v3826 = vrot.slane %v3825, 1
      %v3827 = vadd.f32 %v3825, %v3826
      %v3828 = vrot.slane %v3404, 4
      %v3829 = vadd.f32 %v3404, %v3828
      %v3830 = vrot.slane %v3829, 2
      %v3831 = vadd.f32 %v3829, %v3830
      %v3832 = vrot.slane %v3831, 1
      %v3833 = vadd.f32 %v3831, %v3832
      %v3834 = vrot.slane %v3419, 4
      %v3835 = vadd.f32 %v3419, %v3834
      %v3836 = vrot.slane %v3835, 2
      %v3837 = vadd.f32 %v3835, %v3836
      %v3838 = vrot.slane %v3837, 1
      %v3839 = vadd.f32 %v3837, %v3838
      %v3840 = vrot.slane %v3434, 4
      %v3841 = vadd.f32 %v3434, %v3840
      %v3842 = vrot.slane %v3841, 2
      %v3843 = vadd.f32 %v3841, %v3842
      %v3844 = vrot.slane %v3843, 1
      %v3845 = vadd.f32 %v3843, %v3844
      %v3846 = vrot.slane %v3449, 4
      %v3847 = vadd.f32 %v3449, %v3846
      %v3848 = vrot.slane %v3847, 2
      %v3849 = vadd.f32 %v3847, %v3848
      %v3850 = vrot.slane %v3849, 1
      %v3851 = vadd.f32 %v3849, %v3850
      %v3852 = vrot.slane %v3464, 4
      %v3853 = vadd.f32 %v3464, %v3852
      %v3854 = vrot.slane %v3853, 2
      %v3855 = vadd.f32 %v3853, %v3854
      %v3856 = vrot.slane %v3855, 1
      %v3857 = vadd.f32 %v3855, %v3856
      %v3858 = vrot.slane %v3479, 4
      %v3859 = vadd.f32 %v3479, %v3858
      %v3860 = vrot.slane %v3859, 2
      %v3861 = vadd.f32 %v3859, %v3860
      %v3862 = vrot.slane %v3861, 1
      %v3863 = vadd.f32 %v3861, %v3862
      %v3864 = vrot.slane %v3494, 4
      %v3865 = vadd.f32 %v3494, %v3864
      %v3866 = vrot.slane %v3865, 2
      %v3867 = vadd.f32 %v3865, %v3866
      %v3868 = vrot.slane %v3867, 1
      %v3869 = vadd.f32 %v3867, %v3868
      %v3870 = vrot.slane %v3509, 4
      %v3871 = vadd.f32 %v3509, %v3870
      %v3872 = vrot.slane %v3871, 2
      %v3873 = vadd.f32 %v3871, %v3872
      %v3874 = vrot.slane %v3873, 1
      %v3875 = vadd.f32 %v3873, %v3874
      %v3876 = vrot.slane %v3406, 4
      %v3877 = vadd.f32 %v3406, %v3876
      %v3878 = vrot.slane %v3877, 2
      %v3879 = vadd.f32 %v3877, %v3878
      %v3880 = vrot.slane %v3879, 1
      %v3881 = vadd.f32 %v3879, %v3880
      %v3882 = vrot.slane %v3421, 4
      %v3883 = vadd.f32 %v3421, %v3882
      %v3884 = vrot.slane %v3883, 2
      %v3885 = vadd.f32 %v3883, %v3884
      %v3886 = vrot.slane %v3885, 1
      %v3887 = vadd.f32 %v3885, %v3886
      %v3888 = vrot.slane %v3436, 4
      %v3889 = vadd.f32 %v3436, %v3888
      %v3890 = vrot.slane %v3889, 2
      %v3891 = vadd.f32 %v3889, %v3890
      %v3892 = vrot.slane %v3891, 1
      %v3893 = vadd.f32 %v3891, %v3892
      %v3894 = vrot.slane %v3451, 4
      %v3895 = vadd.f32 %v3451, %v3894
      %v3896 = vrot.slane %v3895, 2
      %v3897 = vadd.f32 %v3895, %v3896
      %v3898 = vrot.slane %v3897, 1
      %v3899 = vadd.f32 %v3897, %v3898
      %v3900 = vrot.slane %v3466, 4
      %v3901 = vadd.f32 %v3466, %v3900
      %v3902 = vrot.slane %v3901, 2
      %v3903 = vadd.f32 %v3901, %v3902
      %v3904 = vrot.slane %v3903, 1
      %v3905 = vadd.f32 %v3903, %v3904
      %v3906 = vrot.slane %v3481, 4
      %v3907 = vadd.f32 %v3481, %v3906
      %v3908 = vrot.slane %v3907, 2
      %v3909 = vadd.f32 %v3907, %v3908
      %v3910 = vrot.slane %v3909, 1
      %v3911 = vadd.f32 %v3909, %v3910
      %v3912 = vrot.slane %v3496, 4
      %v3913 = vadd.f32 %v3496, %v3912
      %v3914 = vrot.slane %v3913, 2
      %v3915 = vadd.f32 %v3913, %v3914
      %v3916 = vrot.slane %v3915, 1
      %v3917 = vadd.f32 %v3915, %v3916
      %v3918 = vrot.slane %v3511, 4
      %v3919 = vadd.f32 %v3511, %v3918
      %v3920 = vrot.slane %v3919, 2
      %v3921 = vadd.f32 %v3919, %v3920
      %v3922 = vrot.slane %v3921, 1
      %v3923 = vadd.f32 %v3921, %v3922
      %v3924 = vrot.slane %v3408, 4
      %v3925 = vadd.f32 %v3408, %v3924
      %v3926 = vrot.slane %v3925, 2
      %v3927 = vadd.f32 %v3925, %v3926
      %v3928 = vrot.slane %v3927, 1
      %v3929 = vadd.f32 %v3927, %v3928
      %v3930 = vrot.slane %v3423, 4
      %v3931 = vadd.f32 %v3423, %v3930
      %v3932 = vrot.slane %v3931, 2
      %v3933 = vadd.f32 %v3931, %v3932
      %v3934 = vrot.slane %v3933, 1
      %v3935 = vadd.f32 %v3933, %v3934
      %v3936 = vrot.slane %v3438, 4
      %v3937 = vadd.f32 %v3438, %v3936
      %v3938 = vrot.slane %v3937, 2
      %v3939 = vadd.f32 %v3937, %v3938
      %v3940 = vrot.slane %v3939, 1
      %v3941 = vadd.f32 %v3939, %v3940
      %v3942 = vrot.slane %v3453, 4
      %v3943 = vadd.f32 %v3453, %v3942
      %v3944 = vrot.slane %v3943, 2
      %v3945 = vadd.f32 %v3943, %v3944
      %v3946 = vrot.slane %v3945, 1
      %v3947 = vadd.f32 %v3945, %v3946
      %v3948 = vrot.slane %v3468, 4
      %v3949 = vadd.f32 %v3468, %v3948
      %v3950 = vrot.slane %v3949, 2
      %v3951 = vadd.f32 %v3949, %v3950
      %v3952 = vrot.slane %v3951, 1
      %v3953 = vadd.f32 %v3951, %v3952
      %v3954 = vrot.slane %v3483, 4
      %v3955 = vadd.f32 %v3483, %v3954
      %v3956 = vrot.slane %v3955, 2
      %v3957 = vadd.f32 %v3955, %v3956
      %v3958 = vrot.slane %v3957, 1
      %v3959 = vadd.f32 %v3957, %v3958
      %v3960 = vrot.slane %v3498, 4
      %v3961 = vadd.f32 %v3498, %v3960
      %v3962 = vrot.slane %v3961, 2
      %v3963 = vadd.f32 %v3961, %v3962
      %v3964 = vrot.slane %v3963, 1
      %v3965 = vadd.f32 %v3963, %v3964
      %v3966 = vrot.slane %v3513, 4
      %v3967 = vadd.f32 %v3513, %v3966
      %v3968 = vrot.slane %v3967, 2
      %v3969 = vadd.f32 %v3967, %v3968
      %v3970 = vrot.slane %v3969, 1
      %v3971 = vadd.f32 %v3969, %v3970
      %v3972 = vmul.f32 %v3593, %v3515
      %v3973 = vmul.f32 %v3599, %v3515
      %v3974 = vmul.f32 %v3605, %v3515
      %v3975 = vmul.f32 %v3611, %v3515
      %v3976 = vmul.f32 %v3617, %v3515
      %v3977 = vmul.f32 %v3623, %v3515
      %v3978 = vmul.f32 %v3629, %v3515
      %v3979 = vmul.f32 %v3635, %v3515
      %v3980 = vmul.f32 %v3641, %v3515
      %v3981 = vmul.f32 %v3647, %v3515
      %v3982 = vmul.f32 %v3653, %v3515
      %v3983 = vmul.f32 %v3659, %v3515
      %v3984 = vmul.f32 %v3665, %v3515
      %v3985 = vmul.f32 %v3671, %v3515
      %v3986 = vmul.f32 %v3677, %v3515
      %v3987 = vmul.f32 %v3683, %v3515
      %v3988 = vmul.f32 %v3689, %v3515
      %v3989 = vmul.f32 %v3695, %v3515
      %v3990 = vmul.f32 %v3701, %v3515
      %v3991 = vmul.f32 %v3707, %v3515
      %v3992 = vmul.f32 %v3713, %v3515
      %v3993 = vmul.f32 %v3719, %v3515
      %v3994 = vmul.f32 %v3725, %v3515
      %v3995 = vmul.f32 %v3731, %v3515
      %v3996 = vmul.f32 %v3737, %v3515
      %v3997 = vmul.f32 %v3743, %v3515
      %v3998 = vmul.f32 %v3749, %v3515
      %v3999 = vmul.f32 %v3755, %v3515
      %v4000 = vmul.f32 %v3761, %v3515
      %v4001 = vmul.f32 %v3767, %v3515
      %v4002 = vmul.f32 %v3773, %v3515
      %v4003 = vmul.f32 %v3779, %v3515
      %v4004 = vmul.f32 %v3785, %v3515
      %v4005 = vmul.f32 %v3791, %v3515
      %v4006 = vmul.f32 %v3797, %v3515
      %v4007 = vmul.f32 %v3803, %v3515
      %v4008 = vmul.f32 %v3809, %v3515
      %v4009 = vmul.f32 %v3815, %v3515
      %v4010 = vmul.f32 %v3821, %v3515
      %v4011 = vmul.f32 %v3827, %v3515
      %v4012 = vmul.f32 %v3833, %v3515
      %v4013 = vmul.f32 %v3839, %v3515
      %v4014 = vmul.f32 %v3845, %v3515
      %v4015 = vmul.f32 %v3851, %v3515
      %v4016 = vmul.f32 %v3857, %v3515
      %v4017 = vmul.f32 %v3863, %v3515
      %v4018 = vmul.f32 %v3869, %v3515
      %v4019 = vmul.f32 %v3875, %v3515
      %v4020 = vmul.f32 %v3881, %v3515
      %v4021 = vmul.f32 %v3887, %v3515
      %v4022 = vmul.f32 %v3893, %v3515
      %v4023 = vmul.f32 %v3899, %v3515
      %v4024 = vmul.f32 %v3905, %v3515
      %v4025 = vmul.f32 %v3911, %v3515
      %v4026 = vmul.f32 %v3917, %v3515
      %v4027 = vmul.f32 %v3923, %v3515
      %v4028 = vmul.f32 %v3929, %v3515
      %v4029 = vmul.f32 %v3935, %v3515
      %v4030 = vmul.f32 %v3941, %v3515
      %v4031 = vmul.f32 %v3947, %v3515
      %v4032 = vmul.f32 %v3953, %v3515
      %v4033 = vmul.f32 %v3959, %v3515
      %v4034 = vmul.f32 %v3965, %v3515
      %v4035 = vmul.f32 %v3971, %v3515
      %v4036 = vsel %vm2748, %v3516, 0.0
      %v4037 = vsel %vm2748, %v3517, 0.0
      %v4038 = vadd.f32 %v4036, %v4037
      %v4039 = vsel %vm2748, %v3518, 0.0
      %v4040 = vadd.f32 %v4038, %v4039
      %v4041 = vsel %vm2748, %v3519, 0.0
      %v4042 = vadd.f32 %v4040, %v4041
      %v4043 = vsel %vm2748, %v3520, 0.0
      %v4044 = vadd.f32 %v4042, %v4043
      %v4045 = vsel %vm2748, %v3521, 0.0
      %v4046 = vadd.f32 %v4044, %v4045
      %v4047 = vsel %vm2748, %v3522, 0.0
      %v4048 = vadd.f32 %v4046, %v4047
      %v4049 = vsel %vm2748, %v3523, 0.0
      %v4050 = vadd.f32 %v4048, %v4049
      %v4051 = vmul.f32 %v4050, %v3515
      %v4052 = vrot.slane %v4036, 4
      %v4053 = vadd.f32 %v4036, %v4052
      %v4054 = vrot.slane %v4053, 2
      %v4055 = vadd.f32 %v4053, %v4054
      %v4056 = vrot.slane %v4055, 1
      %v4057 = vadd.f32 %v4055, %v4056
      %v4058 = vrot.slane %v4037, 4
      %v4059 = vadd.f32 %v4037, %v4058
      %v4060 = vrot.slane %v4059, 2
      %v4061 = vadd.f32 %v4059, %v4060
      %v4062 = vrot.slane %v4061, 1
      %v4063 = vadd.f32 %v4061, %v4062
      %v4064 = vrot.slane %v4039, 4
      %v4065 = vadd.f32 %v4039, %v4064
      %v4066 = vrot.slane %v4065, 2
      %v4067 = vadd.f32 %v4065, %v4066
      %v4068 = vrot.slane %v4067, 1
      %v4069 = vadd.f32 %v4067, %v4068
      %v4070 = vrot.slane %v4041, 4
      %v4071 = vadd.f32 %v4041, %v4070
      %v4072 = vrot.slane %v4071, 2
      %v4073 = vadd.f32 %v4071, %v4072
      %v4074 = vrot.slane %v4073, 1
      %v4075 = vadd.f32 %v4073, %v4074
      %v4076 = vrot.slane %v4043, 4
      %v4077 = vadd.f32 %v4043, %v4076
      %v4078 = vrot.slane %v4077, 2
      %v4079 = vadd.f32 %v4077, %v4078
      %v4080 = vrot.slane %v4079, 1
      %v4081 = vadd.f32 %v4079, %v4080
      %v4082 = vrot.slane %v4045, 4
      %v4083 = vadd.f32 %v4045, %v4082
      %v4084 = vrot.slane %v4083, 2
      %v4085 = vadd.f32 %v4083, %v4084
      %v4086 = vrot.slane %v4085, 1
      %v4087 = vadd.f32 %v4085, %v4086
      %v4088 = vrot.slane %v4047, 4
      %v4089 = vadd.f32 %v4047, %v4088
      %v4090 = vrot.slane %v4089, 2
      %v4091 = vadd.f32 %v4089, %v4090
      %v4092 = vrot.slane %v4091, 1
      %v4093 = vadd.f32 %v4091, %v4092
      %v4094 = vrot.slane %v4049, 4
      %v4095 = vadd.f32 %v4049, %v4094
      %v4096 = vrot.slane %v4095, 2
      %v4097 = vadd.f32 %v4095, %v4096
      %v4098 = vrot.slane %v4097, 1
      %v4099 = vadd.f32 %v4097, %v4098
      %v4100 = vmul.f32 %v4057, %v3515
      %v4101 = vmul.f32 %v4063, %v3515
      %v4102 = vmul.f32 %v4069, %v3515
      %v4103 = vmul.f32 %v4075, %v3515
      %v4104 = vmul.f32 %v4081, %v3515
      %v4105 = vmul.f32 %v4087, %v3515
      %v4106 = vmul.f32 %v4093, %v3515
      %v4107 = vmul.f32 %v4099, %v3515
      %v4108 = vsel %vm2748, %v3580, 0.0
      %v4109 = vrot.slane %v4108, 4
      %v4110 = vadd.f32 %v4108, %v4109
      %v4111 = vrot.slane %v4110, 2
      %v4112 = vadd.f32 %v4110, %v4111
      %v4113 = vrot.slane %v4112, 1
      %v4114 = vadd.f32 %v4112, %v4113
      %v4115 = vsel %vm2748, %v3581, 0.0
      %v4116 = vrot.slane %v4115, 4
      %v4117 = vadd.f32 %v4115, %v4116
      %v4118 = vrot.slane %v4117, 2
      %v4119 = vadd.f32 %v4117, %v4118
      %v4120 = vrot.slane %v4119, 1
      %v4121 = vadd.f32 %v4119, %v4120
      %v4122 = vsel %vm2748, %v3582, 0.0
      %v4123 = vrot.slane %v4122, 4
      %v4124 = vadd.f32 %v4122, %v4123
      %v4125 = vrot.slane %v4124, 2
      %v4126 = vadd.f32 %v4124, %v4125
      %v4127 = vrot.slane %v4126, 1
      %v4128 = vadd.f32 %v4126, %v4127
      %v4129 = vsel %vm2748, %v3583, 0.0
      %v4130 = vrot.slane %v4129, 4
      %v4131 = vadd.f32 %v4129, %v4130
      %v4132 = vrot.slane %v4131, 2
      %v4133 = vadd.f32 %v4131, %v4132
      %v4134 = vrot.slane %v4133, 1
      %v4135 = vadd.f32 %v4133, %v4134
      %v4136 = vsel %vm2748, %v3584, 0.0
      %v4137 = vrot.slane %v4136, 4
      %v4138 = vadd.f32 %v4136, %v4137
      %v4139 = vrot.slane %v4138, 2
      %v4140 = vadd.f32 %v4138, %v4139
      %v4141 = vrot.slane %v4140, 1
      %v4142 = vadd.f32 %v4140, %v4141
      %v4143 = vsel %vm2748, %v3585, 0.0
      %v4144 = vrot.slane %v4143, 4
      %v4145 = vadd.f32 %v4143, %v4144
      %v4146 = vrot.slane %v4145, 2
      %v4147 = vadd.f32 %v4145, %v4146
      %v4148 = vrot.slane %v4147, 1
      %v4149 = vadd.f32 %v4147, %v4148
      %v4150 = vsel %vm2748, %v3586, 0.0
      %v4151 = vrot.slane %v4150, 4
      %v4152 = vadd.f32 %v4150, %v4151
      %v4153 = vrot.slane %v4152, 2
      %v4154 = vadd.f32 %v4152, %v4153
      %v4155 = vrot.slane %v4154, 1
      %v4156 = vadd.f32 %v4154, %v4155
      %v4157 = vsel %vm2748, %v3587, 0.0
      %v4158 = vrot.slane %v4157, 4
      %v4159 = vadd.f32 %v4157, %v4158
      %v4160 = vrot.slane %v4159, 2
      %v4161 = vadd.f32 %v4159, %v4160
      %v4162 = vrot.slane %v4161, 1
      %v4163 = vadd.f32 %v4161, %v4162
      %v4164 = vmul.f32 %v4114, %v3515
      %v4165 = vmul.f32 %v4121, %v3515
      %v4166 = vmul.f32 %v4128, %v3515
      %v4167 = vmul.f32 %v4135, %v3515
      %v4168 = vmul.f32 %v4142, %v3515
      %v4169 = vmul.f32 %v4149, %v3515
      %v4170 = vmul.f32 %v4156, %v3515
      %v4171 = vmul.f32 %v4163, %v3515
      %v4172 = vsel %vm2748, %v4051, 0.0
      %v4173 = vrot.slane %v4172, 4
      %v4174 = vadd.f32 %v4172, %v4173
      %v4175 = vrot.slane %v4174, 2
      %v4176 = vadd.f32 %v4174, %v4175
      %v4177 = vrot.slane %v4176, 1
      %v4178 = vadd.f32 %v4176, %v4177
      %v4179 = vmul.f32 %v4178, %v3515
      %v4180 = vpack.c.bf16 %v3300, %v3299
      %v4181 = vpack.c.bf16 %v3302, %v3301
      %v4182 = vpack.c.bf16 %v3304, %v3303
      %v4183 = vpack.c.bf16 %v3306, %v3305
      %v4184 = vpack.c.bf16 %v3308, %v3307
      %v4185 = vpack.c.bf16 %v3310, %v3309
      %v4186 = vpack.c.bf16 %v3312, %v3311
      %v4187 = vpack.c.bf16 %v3314, %v3313
      %v4188 = vpack.c.bf16 %v3316, %v3315
      %v4189 = vpack.c.bf16 %v3318, %v3317
      %v4190 = vpack.c.bf16 %v3320, %v3319
      %v4191 = vpack.c.bf16 %v3322, %v3321
      %v4192 = vpack.c.bf16 %v3324, %v3323
      %v4193 = vpack.c.bf16 %v3326, %v3325
      %v4194 = vpack.c.bf16 %v3328, %v3327
      %v4195 = vpack.c.bf16 %v3330, %v3329
      %v4196 = vpack.c.bf16 %v3332, %v3331
      %v4197 = vpack.c.bf16 %v3334, %v3333
      %v4198 = vpack.c.bf16 %v3336, %v3335
      %v4199 = vpack.c.bf16 %v3338, %v3337
      %v4200 = vpack.c.bf16 %v3340, %v3339
      %v4201 = vpack.c.bf16 %v3342, %v3341
      %v4202 = vpack.c.bf16 %v3344, %v3343
      %v4203 = vpack.c.bf16 %v3346, %v3345
      %v4204 = vpack.c.bf16 %v3348, %v3347
      %v4205 = vpack.c.bf16 %v3350, %v3349
      %v4206 = vpack.c.bf16 %v3352, %v3351
      %v4207 = vpack.c.bf16 %v3354, %v3353
      %v4208 = vpack.c.bf16 %v3356, %v3355
      %v4209 = vpack.c.bf16 %v3358, %v3357
      %v4210 = vpack.c.bf16 %v3360, %v3359
      %v4211 = vpack.c.bf16 %v3362, %v3361
      %v4212 = vpack.c.bf16 %v3364, %v3363
      %v4213 = vpack.c.bf16 %v3366, %v3365
      %v4215 = vsel %vm2748, %v4180, 0
      %v4218 = vsel %vm2748, %v4181, 0
      %v4221 = vsel %vm2748, %v4182, 0
      %v4224 = vsel %vm2748, %v4183, 0
      %v4227 = vsel %vm2748, %v4184, 0
      %v4230 = vsel %vm2748, %v4185, 0
      %v4233 = vsel %vm2748, %v4186, 0
      %v4236 = vsel %vm2748, %v4187, 0
      %v4239 = vsel %vm2748, %v4188, 0
      %v4242 = vsel %vm2748, %v4189, 0
      %v4245 = vsel %vm2748, %v4190, 0
      %v4248 = vsel %vm2748, %v4191, 0
      %v4251 = vsel %vm2748, %v4192, 0
      %v4254 = vsel %vm2748, %v4193, 0
      %v4257 = vsel %vm2748, %v4194, 0
      %v4260 = vsel %vm2748, %v4195, 0
      %v4263 = vsel %vm2748, %v4196, 0
      %v4266 = vsel %vm2748, %v4197, 0
      %v4269 = vsel %vm2748, %v4198, 0
      %v4272 = vsel %vm2748, %v4199, 0
      %v4275 = vsel %vm2748, %v4200, 0
      %v4278 = vsel %vm2748, %v4201, 0
      %v4281 = vsel %vm2748, %v4202, 0
      %v4284 = vsel %vm2748, %v4203, 0
      %v4287 = vsel %vm2748, %v4204, 0
      %v4290 = vsel %vm2748, %v4205, 0
      %v4293 = vsel %vm2748, %v4206, 0
      %v4296 = vsel %vm2748, %v4207, 0
      %v4299 = vsel %vm2748, %v4208, 0
      %v4302 = vsel %vm2748, %v4209, 0
      %v4305 = vsel %vm2748, %v4210, 0
      %v4308 = vsel %vm2748, %v4211, 0
      %4310 = vmatprep.subr.bf16.mxu0 0
      %4311 = vmatpush1.bf16.msra.mxu0 %v4212
      %4312 = vmatprep.subr.bf16.mxu0 0
      %4313 = vmatpush1.bf16.msra.mxu0 %v4213
      %4314 = vmatprep.subr.bf16.mxu0 0
      %4315 = vmatpush1.bf16.msra.mxu0 0
      %4316 = vmatprep.subr.bf16.mxu0 0
      %4317 = vmatpush1.bf16.msra.mxu0 0
      %4318 = vmatprep.subr.bf16.mxu0 0
      %4319 = vmatpush1.bf16.msra.mxu0 0
      %4320 = vmatprep.subr.bf16.mxu0 0
      %4321 = vmatpush1.bf16.msra.mxu0 0
      %4322 = vmatprep.subr.bf16.mxu0 0
      %4323 = vmatpush1.bf16.msra.mxu0 0
      %4324 = vmatprep.subr.bf16.mxu0 0
      %4325 = vmatpush1.bf16.msra.mxu0 0
      %4326 = vmatprep.subr.bf16.mxu0 0
      %4327 = vmatpush1.bf16.msra.mxu0 0
      %4328 = vmatprep.subr.bf16.mxu0 0
      %4329 = vmatpush1.bf16.msra.mxu0 0
      %4330 = vmatprep.subr.bf16.mxu0 0
      %4331 = vmatpush1.bf16.msra.mxu0 0
      %4332 = vmatprep.subr.bf16.mxu0 0
      %4333 = vmatpush1.bf16.msra.mxu0 0
      %4334 = vmatprep.subr.bf16.mxu0 0
      %4335 = vmatpush1.bf16.msra.mxu0 0
      %4336 = vmatprep.subr.bf16.mxu0 0
      %4337 = vmatpush1.bf16.msra.mxu0 0
      %4338 = vmatprep.subr.bf16.mxu0 0
      %4339 = vmatpush1.bf16.msra.mxu0 0
      %4340 = vmatprep.subr.bf16.mxu0 0
      %4341 = vmatpush1.bf16.msra.mxu0 0
      %4342 = vmatprep.mubr.bf16.mxu0 0
      %4343 = vmatmul.mubr.bf16.gmra.mrb[0].mxu0 %v4215
      %v4344 = vpop.f32.mrb[0].mxu0
      %v4345 = vadd.f32 0.0, %v4344
      %v4346 = vpop.f32.mrb[0].mxu0
      %v4347 = vpop.f32.mrb[0].mxu0
      %v4348 = vadd.f32 0.0, %v4347
      %v4349 = vpop.f32.mrb[0].mxu0
      %4350 = vmatprep.mubr.bf16.mxu0 0
      %4351 = vmatmul.mubr.bf16.gmra.mrb[0].mxu0 %v4218
      %v4352 = vpop.f32.mrb[0].mxu0
      %v4353 = vadd.f32 0.0, %v4352
      %v4354 = vpop.f32.mrb[0].mxu0
      %v4355 = vpop.f32.mrb[0].mxu0
      %v4356 = vadd.f32 0.0, %v4355
      %v4357 = vpop.f32.mrb[0].mxu0
      %4358 = vmatprep.mubr.bf16.mxu0 0
      %4359 = vmatmul.mubr.bf16.gmra.mrb[0].mxu0 %v4221
      %v4360 = vpop.f32.mrb[0].mxu0
      %v4361 = vadd.f32 0.0, %v4360
      %v4362 = vpop.f32.mrb[0].mxu0
      %v4363 = vpop.f32.mrb[0].mxu0
      %v4364 = vadd.f32 0.0, %v4363
      %v4365 = vpop.f32.mrb[0].mxu0
      %4366 = vmatprep.mubr.bf16.mxu0 0
      %4367 = vmatmul.mubr.bf16.gmra.mrb[0].mxu0 %v4224
      %v4368 = vpop.f32.mrb[0].mxu0
      %v4369 = vadd.f32 0.0, %v4368
      %v4370 = vpop.f32.mrb[0].mxu0
      %v4371 = vpop.f32.mrb[0].mxu0
      %v4372 = vadd.f32 0.0, %v4371
      %v4373 = vpop.f32.mrb[0].mxu0
      %4374 = vmatprep.mubr.bf16.mxu0 0
      %4375 = vmatmul.mubr.bf16.gmra.mrb[0].mxu0 %v4227
      %v4376 = vpop.f32.mrb[0].mxu0
      %v4377 = vadd.f32 0.0, %v4376
      %v4378 = vpop.f32.mrb[0].mxu0
      %v4379 = vpop.f32.mrb[0].mxu0
      %v4380 = vadd.f32 0.0, %v4379
      %v4381 = vpop.f32.mrb[0].mxu0
      %4382 = vmatprep.mubr.bf16.mxu0 0
      %4383 = vmatmul.mubr.bf16.gmra.mrb[0].mxu0 %v4230
      %v4384 = vpop.f32.mrb[0].mxu0
      %v4385 = vadd.f32 0.0, %v4384
      %v4386 = vpop.f32.mrb[0].mxu0
      %v4387 = vpop.f32.mrb[0].mxu0
      %v4388 = vadd.f32 0.0, %v4387
      %v4389 = vpop.f32.mrb[0].mxu0
      %4390 = vmatprep.mubr.bf16.mxu0 0
      %4391 = vmatmul.mubr.bf16.gmra.mrb[0].mxu0 %v4233
      %v4392 = vpop.f32.mrb[0].mxu0
      %v4393 = vadd.f32 0.0, %v4392
      %v4394 = vpop.f32.mrb[0].mxu0
      %v4395 = vpop.f32.mrb[0].mxu0
      %v4396 = vadd.f32 0.0, %v4395
      %v4397 = vpop.f32.mrb[0].mxu0
      %4398 = vmatprep.mubr.bf16.mxu0 0
      %4399 = vmatmul.mubr.bf16.gmra.mrb[0].mxu0 %v4236
      %v4400 = vpop.f32.mrb[0].mxu0
      %v4401 = vadd.f32 0.0, %v4400
      %v4402 = vpop.f32.mrb[0].mxu0
      %v4403 = vpop.f32.mrb[0].mxu0
      %v4404 = vadd.f32 0.0, %v4403
      %v4405 = vpop.f32.mrb[0].mxu0
      %4406 = vmatprep.mubr.bf16.mxu0 0
      %4407 = vmatmul.mubr.bf16.gmra.mrb[0].mxu0 %v4239
      %v4408 = vpop.f32.mrb[0].mxu0
      %v4409 = vadd.f32 0.0, %v4408
      %v4410 = vpop.f32.mrb[0].mxu0
      %v4411 = vpop.f32.mrb[0].mxu0
      %v4412 = vadd.f32 0.0, %v4411
      %v4413 = vpop.f32.mrb[0].mxu0
      %4414 = vmatprep.mubr.bf16.mxu0 0
      %4415 = vmatmul.mubr.bf16.gmra.mrb[0].mxu0 %v4242
      %v4416 = vpop.f32.mrb[0].mxu0
      %v4417 = vadd.f32 0.0, %v4416
      %v4418 = vpop.f32.mrb[0].mxu0
      %v4419 = vpop.f32.mrb[0].mxu0
      %v4420 = vadd.f32 0.0, %v4419
      %v4421 = vpop.f32.mrb[0].mxu0
      %4422 = vmatprep.mubr.bf16.mxu0 0
      %4423 = vmatmul.mubr.bf16.gmra.mrb[0].mxu0 %v4245
      %v4424 = vpop.f32.mrb[0].mxu0
      %v4425 = vadd.f32 0.0, %v4424
      %v4426 = vpop.f32.mrb[0].mxu0
      %v4427 = vpop.f32.mrb[0].mxu0
      %v4428 = vadd.f32 0.0, %v4427
      %v4429 = vpop.f32.mrb[0].mxu0
      %4430 = vmatprep.mubr.bf16.mxu0 0
      %4431 = vmatmul.mubr.bf16.gmra.mrb[0].mxu0 %v4248
      %v4432 = vpop.f32.mrb[0].mxu0
      %v4433 = vadd.f32 0.0, %v4432
      %v4434 = vpop.f32.mrb[0].mxu0
      %v4435 = vpop.f32.mrb[0].mxu0
      %v4436 = vadd.f32 0.0, %v4435
      %v4437 = vpop.f32.mrb[0].mxu0
      %4438 = vmatprep.mubr.bf16.mxu0 0
      %4439 = vmatmul.mubr.bf16.gmra.mrb[0].mxu0 %v4251
      %v4440 = vpop.f32.mrb[0].mxu0
      %v4441 = vadd.f32 0.0, %v4440
      %v4442 = vpop.f32.mrb[0].mxu0
      %v4443 = vpop.f32.mrb[0].mxu0
      %v4444 = vadd.f32 0.0, %v4443
      %v4445 = vpop.f32.mrb[0].mxu0
      %4446 = vmatprep.mubr.bf16.mxu0 0
      %4447 = vmatmul.mubr.bf16.gmra.mrb[0].mxu0 %v4254
      %v4448 = vpop.f32.mrb[0].mxu0
      %v4449 = vadd.f32 0.0, %v4448
      %v4450 = vpop.f32.mrb[0].mxu0
      %v4451 = vpop.f32.mrb[0].mxu0
      %v4452 = vadd.f32 0.0, %v4451
      %v4453 = vpop.f32.mrb[0].mxu0
      %4454 = vmatprep.mubr.bf16.mxu0 0
      %4455 = vmatmul.mubr.bf16.gmra.mrb[0].mxu0 %v4257
      %v4456 = vpop.f32.mrb[0].mxu0
      %v4457 = vadd.f32 0.0, %v4456
      %v4458 = vpop.f32.mrb[0].mxu0
      %v4459 = vpop.f32.mrb[0].mxu0
      %v4460 = vadd.f32 0.0, %v4459
      %v4461 = vpop.f32.mrb[0].mxu0
      %4462 = vmatprep.mubr.bf16.mxu0 0
      %4463 = vmatmul.mubr.bf16.gmra.mrb[0].mxu0 %v4260
      %v4464 = vpop.f32.mrb[0].mxu0
      %v4465 = vadd.f32 0.0, %v4464
      %v4466 = vpop.f32.mrb[0].mxu0
      %v4467 = vpop.f32.mrb[0].mxu0
      %v4468 = vadd.f32 0.0, %v4467
      %v4469 = vpop.f32.mrb[0].mxu0
      %4470 = vmatprep.mubr.bf16.mxu0 0
      %4471 = vmatmul.mubr.bf16.gmra.mrb[0].mxu0 %v4263
      %v4472 = vpop.f32.mrb[0].mxu0
      %v4473 = vadd.f32 0.0, %v4472
      %v4474 = vpop.f32.mrb[0].mxu0
      %v4475 = vpop.f32.mrb[0].mxu0
      %v4476 = vadd.f32 0.0, %v4475
      %v4477 = vpop.f32.mrb[0].mxu0
      %4478 = vmatprep.mubr.bf16.mxu0 0
      %4479 = vmatmul.mubr.bf16.gmra.mrb[0].mxu0 %v4266
      %v4480 = vpop.f32.mrb[0].mxu0
      %v4481 = vadd.f32 0.0, %v4480
      %v4482 = vpop.f32.mrb[0].mxu0
      %v4483 = vpop.f32.mrb[0].mxu0
      %v4484 = vadd.f32 0.0, %v4483
      %v4485 = vpop.f32.mrb[0].mxu0
      %4486 = vmatprep.mubr.bf16.mxu0 0
      %4487 = vmatmul.mubr.bf16.gmra.mrb[0].mxu0 %v4269
      %v4488 = vpop.f32.mrb[0].mxu0
      %v4489 = vadd.f32 0.0, %v4488
      %v4490 = vpop.f32.mrb[0].mxu0
      %v4491 = vpop.f32.mrb[0].mxu0
      %v4492 = vadd.f32 0.0, %v4491
      %v4493 = vpop.f32.mrb[0].mxu0
      %4494 = vmatprep.mubr.bf16.mxu0 0
      %4495 = vmatmul.mubr.bf16.gmra.mrb[0].mxu0 %v4272
      %v4496 = vpop.f32.mrb[0].mxu0
      %v4497 = vadd.f32 0.0, %v4496
      %v4498 = vpop.f32.mrb[0].mxu0
      %v4499 = vpop.f32.mrb[0].mxu0
      %v4500 = vadd.f32 0.0, %v4499
      %v4501 = vpop.f32.mrb[0].mxu0
      %4502 = vmatprep.mubr.bf16.mxu0 0
      %4503 = vmatmul.mubr.bf16.gmra.mrb[0].mxu0 %v4275
      %v4504 = vpop.f32.mrb[0].mxu0
      %v4505 = vadd.f32 0.0, %v4504
      %v4506 = vpop.f32.mrb[0].mxu0
      %v4507 = vpop.f32.mrb[0].mxu0
      %v4508 = vadd.f32 0.0, %v4507
      %v4509 = vpop.f32.mrb[0].mxu0
      %4510 = vmatprep.mubr.bf16.mxu0 0
      %4511 = vmatmul.mubr.bf16.gmra.mrb[0].mxu0 %v4278
      %v4512 = vpop.f32.mrb[0].mxu0
      %v4513 = vadd.f32 0.0, %v4512
      %v4514 = vpop.f32.mrb[0].mxu0
      %v4515 = vpop.f32.mrb[0].mxu0
      %v4516 = vadd.f32 0.0, %v4515
      %v4517 = vpop.f32.mrb[0].mxu0
      %4518 = vmatprep.mubr.bf16.mxu0 0
      %4519 = vmatmul.mubr.bf16.gmra.mrb[0].mxu0 %v4281
      %v4520 = vpop.f32.mrb[0].mxu0
      %v4521 = vadd.f32 0.0, %v4520
      %v4522 = vpop.f32.mrb[0].mxu0
      %v4523 = vpop.f32.mrb[0].mxu0
      %v4524 = vadd.f32 0.0, %v4523
      %v4525 = vpop.f32.mrb[0].mxu0
      %4526 = vmatprep.mubr.bf16.mxu0 0
      %4527 = vmatmul.mubr.bf16.gmra.mrb[0].mxu0 %v4284
      %v4528 = vpop.f32.mrb[0].mxu0
      %v4529 = vadd.f32 0.0, %v4528
      %v4530 = vpop.f32.mrb[0].mxu0
      %v4531 = vpop.f32.mrb[0].mxu0
      %v4532 = vadd.f32 0.0, %v4531
      %v4533 = vpop.f32.mrb[0].mxu0
      %4534 = vmatprep.mubr.bf16.mxu0 0
      %4535 = vmatmul.mubr.bf16.gmra.mrb[0].mxu0 %v4287
      %v4536 = vpop.f32.mrb[0].mxu0
      %v4537 = vadd.f32 0.0, %v4536
      %v4538 = vpop.f32.mrb[0].mxu0
      %v4539 = vpop.f32.mrb[0].mxu0
      %v4540 = vadd.f32 0.0, %v4539
      %v4541 = vpop.f32.mrb[0].mxu0
      %4542 = vmatprep.mubr.bf16.mxu0 0
      %4543 = vmatmul.mubr.bf16.gmra.mrb[0].mxu0 %v4290
      %v4544 = vpop.f32.mrb[0].mxu0
      %v4545 = vadd.f32 0.0, %v4544
      %v4546 = vpop.f32.mrb[0].mxu0
      %v4547 = vpop.f32.mrb[0].mxu0
      %v4548 = vadd.f32 0.0, %v4547
      %v4549 = vpop.f32.mrb[0].mxu0
      %4550 = vmatprep.mubr.bf16.mxu0 0
      %4551 = vmatmul.mubr.bf16.gmra.mrb[0].mxu0 %v4293
      %v4552 = vpop.f32.mrb[0].mxu0
      %v4553 = vadd.f32 0.0, %v4552
      %v4554 = vpop.f32.mrb[0].mxu0
      %v4555 = vpop.f32.mrb[0].mxu0
      %v4556 = vadd.f32 0.0, %v4555
      %v4557 = vpop.f32.mrb[0].mxu0
      %4558 = vmatprep.mubr.bf16.mxu0 0
      %4559 = vmatmul.mubr.bf16.gmra.mrb[0].mxu0 %v4296
      %v4560 = vpop.f32.mrb[0].mxu0
      %v4561 = vadd.f32 0.0, %v4560
      %v4562 = vpop.f32.mrb[0].mxu0
      %v4563 = vpop.f32.mrb[0].mxu0
      %v4564 = vadd.f32 0.0, %v4563
      %v4565 = vpop.f32.mrb[0].mxu0
      %4566 = vmatprep.mubr.bf16.mxu0 0
      %4567 = vmatmul.mubr.bf16.gmra.mrb[0].mxu0 %v4299
      %v4568 = vpop.f32.mrb[0].mxu0
      %v4569 = vadd.f32 0.0, %v4568
      %v4570 = vpop.f32.mrb[0].mxu0
      %v4571 = vpop.f32.mrb[0].mxu0
      %v4572 = vadd.f32 0.0, %v4571
      %v4573 = vpop.f32.mrb[0].mxu0
      %4574 = vmatprep.mubr.bf16.mxu0 0
      %4575 = vmatmul.mubr.bf16.gmra.mrb[0].mxu0 %v4302
      %v4576 = vpop.f32.mrb[0].mxu0
      %v4577 = vadd.f32 0.0, %v4576
      %v4578 = vpop.f32.mrb[0].mxu0
      %v4579 = vpop.f32.mrb[0].mxu0
      %v4580 = vadd.f32 0.0, %v4579
      %v4581 = vpop.f32.mrb[0].mxu0
      %4582 = vmatprep.mubr.bf16.mxu0 0
      %4583 = vmatmul.mubr.bf16.gmra.mrb[0].mxu0 %v4305
      %v4584 = vpop.f32.mrb[0].mxu0
      %v4585 = vadd.f32 0.0, %v4584
      %v4586 = vpop.f32.mrb[0].mxu0
      %v4587 = vpop.f32.mrb[0].mxu0
      %v4588 = vadd.f32 0.0, %v4587
      %v4589 = vpop.f32.mrb[0].mxu0
      %4590 = vmatprep.mubr.bf16.mxu0 0
      %4591 = vmatmul.mubr.bf16.gmra.mrb[0].mxu0 %v4308
      %v4592 = vpop.f32.mrb[0].mxu0
      %v4593 = vadd.f32 0.0, %v4592
      %v4594 = vpop.f32.mrb[0].mxu0
      %v4595 = vpop.f32.mrb[0].mxu0
      %v4596 = vadd.f32 0.0, %v4595
      %v4597 = vpop.f32.mrb[0].mxu0
      %4598 = vdwg.mxu0
      %v4599 = vpack.c.bf16 %v3517, %v3516
      %v4600 = vpack.c.bf16 %v3519, %v3518
      %v4601 = vpack.c.bf16 %v3521, %v3520
      %v4602 = vpack.c.bf16 %v3523, %v3522
      %v4603 = vpack.c.bf16 %v3368, %v3367
      %v4604 = vpack.c.bf16 %v3370, %v3369
      %v4606 = vsel %vm2748, %v4599, 0
      %v4609 = vsel %vm2748, %v4600, 0
      %v4612 = vsel %vm2748, %v4601, 0
      %v4615 = vsel %vm2748, %v4602, 0
      %4617 = vmatprep.subr.bf16.mxu0 0
      %4618 = vmatpush1.bf16.msra.mxu0 %v4603
      %4619 = vmatprep.subr.bf16.mxu0 0
      %4620 = vmatpush1.bf16.msra.mxu0 %v4604
      %4621 = vmatprep.subr.bf16.mxu0 0
      %4622 = vmatpush1.bf16.msra.mxu0 0
      %4623 = vmatprep.subr.bf16.mxu0 0
      %4624 = vmatpush1.bf16.msra.mxu0 0
      %4625 = vmatprep.subr.bf16.mxu0 0
      %4626 = vmatpush1.bf16.msra.mxu0 0
      %4627 = vmatprep.subr.bf16.mxu0 0
      %4628 = vmatpush1.bf16.msra.mxu0 0
      %4629 = vmatprep.subr.bf16.mxu0 0
      %4630 = vmatpush1.bf16.msra.mxu0 0
      %4631 = vmatprep.subr.bf16.mxu0 0
      %4632 = vmatpush1.bf16.msra.mxu0 0
      %4633 = vmatprep.subr.bf16.mxu0 0
      %4634 = vmatpush1.bf16.msra.mxu0 0
      %4635 = vmatprep.subr.bf16.mxu0 0
      %4636 = vmatpush1.bf16.msra.mxu0 0
      %4637 = vmatprep.subr.bf16.mxu0 0
      %4638 = vmatpush1.bf16.msra.mxu0 0
      %4639 = vmatprep.subr.bf16.mxu0 0
      %4640 = vmatpush1.bf16.msra.mxu0 0
      %4641 = vmatprep.subr.bf16.mxu0 0
      %4642 = vmatpush1.bf16.msra.mxu0 0
      %4643 = vmatprep.subr.bf16.mxu0 0
      %4644 = vmatpush1.bf16.msra.mxu0 0
      %4645 = vmatprep.subr.bf16.mxu0 0
      %4646 = vmatpush1.bf16.msra.mxu0 0
      %4647 = vmatprep.subr.bf16.mxu0 0
      %4648 = vmatpush1.bf16.msra.mxu0 0
      %4649 = vmatprep.mubr.bf16.mxu0 0
      %4650 = vmatmul.mubr.bf16.gmra.mrb[0].mxu0 %v4606
      %v4651 = vpop.f32.mrb[0].mxu0
      %v4652 = vadd.f32 0.0, %v4651
      %v4653 = vpop.f32.mrb[0].mxu0
      %v4654 = vpop.f32.mrb[0].mxu0
      %v4655 = vadd.f32 0.0, %v4654
      %v4656 = vpop.f32.mrb[0].mxu0
      %4657 = vmatprep.mubr.bf16.mxu0 0
      %4658 = vmatmul.mubr.bf16.gmra.mrb[0].mxu0 %v4609
      %v4659 = vpop.f32.mrb[0].mxu0
      %v4660 = vadd.f32 0.0, %v4659
      %v4661 = vpop.f32.mrb[0].mxu0
      %v4662 = vpop.f32.mrb[0].mxu0
      %v4663 = vadd.f32 0.0, %v4662
      %v4664 = vpop.f32.mrb[0].mxu0
      %4665 = vmatprep.mubr.bf16.mxu0 0
      %4666 = vmatmul.mubr.bf16.gmra.mrb[0].mxu0 %v4612
      %v4667 = vpop.f32.mrb[0].mxu0
      %v4668 = vadd.f32 0.0, %v4667
      %v4669 = vpop.f32.mrb[0].mxu0
      %v4670 = vpop.f32.mrb[0].mxu0
      %v4671 = vadd.f32 0.0, %v4670
      %v4672 = vpop.f32.mrb[0].mxu0
      %4673 = vmatprep.mubr.bf16.mxu0 0
      %4674 = vmatmul.mubr.bf16.gmra.mrb[0].mxu0 %v4615
      %v4675 = vpop.f32.mrb[0].mxu0
      %v4676 = vadd.f32 0.0, %v4675
      %v4677 = vpop.f32.mrb[0].mxu0
      %v4678 = vpop.f32.mrb[0].mxu0
      %v4679 = vadd.f32 0.0, %v4678
      %v4680 = vpop.f32.mrb[0].mxu0
      %4681 = vdwg.mxu0
      %v4682 = vadd.f32 %v4345, %v4652
      %v4683 = vadd.f32 %v4348, %v4655
      %v4684 = vadd.f32 %v4353, %v4660
      %v4685 = vadd.f32 %v4356, %v4663
      %v4686 = vadd.f32 %v4361, %v4668
      %v4687 = vadd.f32 %v4364, %v4671
      %v4688 = vadd.f32 %v4369, %v4676
      %v4689 = vadd.f32 %v4372, %v4679
      %v4690 = vadd.f32 %v4377, %v4652
      %v4691 = vadd.f32 %v4380, %v4655
      %v4692 = vadd.f32 %v4385, %v4660
      %v4693 = vadd.f32 %v4388, %v4663
      %v4694 = vadd.f32 %v4393, %v4668
      %v4695 = vadd.f32 %v4396, %v4671
      %v4696 = vadd.f32 %v4401, %v4676
      %v4697 = vadd.f32 %v4404, %v4679
      %v4698 = vadd.f32 %v4409, %v4652
      %v4699 = vadd.f32 %v4412, %v4655
      %v4700 = vadd.f32 %v4417, %v4660
      %v4701 = vadd.f32 %v4420, %v4663
      %v4702 = vadd.f32 %v4425, %v4668
      %v4703 = vadd.f32 %v4428, %v4671
      %v4704 = vadd.f32 %v4433, %v4676
      %v4705 = vadd.f32 %v4436, %v4679
      %v4706 = vadd.f32 %v4441, %v4652
      %v4707 = vadd.f32 %v4444, %v4655
      %v4708 = vadd.f32 %v4449, %v4660
      %v4709 = vadd.f32 %v4452, %v4663
      %v4710 = vadd.f32 %v4457, %v4668
      %v4711 = vadd.f32 %v4460, %v4671
      %v4712 = vadd.f32 %v4465, %v4676
      %v4713 = vadd.f32 %v4468, %v4679
      %v4714 = vadd.f32 %v4473, %v4652
      %v4715 = vadd.f32 %v4476, %v4655
      %v4716 = vadd.f32 %v4481, %v4660
      %v4717 = vadd.f32 %v4484, %v4663
      %v4718 = vadd.f32 %v4489, %v4668
      %v4719 = vadd.f32 %v4492, %v4671
      %v4720 = vadd.f32 %v4497, %v4676
      %v4721 = vadd.f32 %v4500, %v4679
      %v4722 = vadd.f32 %v4505, %v4652
      %v4723 = vadd.f32 %v4508, %v4655
      %v4724 = vadd.f32 %v4513, %v4660
      %v4725 = vadd.f32 %v4516, %v4663
      %v4726 = vadd.f32 %v4521, %v4668
      %v4727 = vadd.f32 %v4524, %v4671
      %v4728 = vadd.f32 %v4529, %v4676
      %v4729 = vadd.f32 %v4532, %v4679
      %v4730 = vadd.f32 %v4537, %v4652
      %v4731 = vadd.f32 %v4540, %v4655
      %v4732 = vadd.f32 %v4545, %v4660
      %v4733 = vadd.f32 %v4548, %v4663
      %v4734 = vadd.f32 %v4553, %v4668
      %v4735 = vadd.f32 %v4556, %v4671
      %v4736 = vadd.f32 %v4561, %v4676
      %v4737 = vadd.f32 %v4564, %v4679
      %v4738 = vadd.f32 %v4569, %v4652
      %v4739 = vadd.f32 %v4572, %v4655
      %v4740 = vadd.f32 %v4577, %v4660
      %v4741 = vadd.f32 %v4580, %v4663
      %v4742 = vadd.f32 %v4585, %v4668
      %v4743 = vadd.f32 %v4588, %v4671
      %v4744 = vadd.f32 %v4593, %v4676
      %v4745 = vadd.f32 %v4596, %v4679
      %v4746 = vpack.c.bf16 %v3581, %v3580
      %v4747 = vpack.c.bf16 %v3583, %v3582
      %v4748 = vpack.c.bf16 %v3585, %v3584
      %v4749 = vpack.c.bf16 %v3587, %v3586
      %v4750 = vpack.c.bf16 %v3372, %v3371
      %v4751 = vpack.c.bf16 %v3374, %v3373
      %v4753 = vsel %vm2748, %v4746, 0
      %v4756 = vsel %vm2748, %v4747, 0
      %v4759 = vsel %vm2748, %v4748, 0
      %v4762 = vsel %vm2748, %v4749, 0
      %4764 = vmatprep.subr.bf16.mxu0 0
      %4765 = vmatpush1.bf16.msra.mxu0 %v4750
      %4766 = vmatprep.subr.bf16.mxu0 0
      %4767 = vmatpush1.bf16.msra.mxu0 %v4751
      %4768 = vmatprep.subr.bf16.mxu0 0
      %4769 = vmatpush1.bf16.msra.mxu0 0
      %4770 = vmatprep.subr.bf16.mxu0 0
      %4771 = vmatpush1.bf16.msra.mxu0 0
      %4772 = vmatprep.subr.bf16.mxu0 0
      %4773 = vmatpush1.bf16.msra.mxu0 0
      %4774 = vmatprep.subr.bf16.mxu0 0
      %4775 = vmatpush1.bf16.msra.mxu0 0
      %4776 = vmatprep.subr.bf16.mxu0 0
      %4777 = vmatpush1.bf16.msra.mxu0 0
      %4778 = vmatprep.subr.bf16.mxu0 0
      %4779 = vmatpush1.bf16.msra.mxu0 0
      %4780 = vmatprep.subr.bf16.mxu0 0
      %4781 = vmatpush1.bf16.msra.mxu0 0
      %4782 = vmatprep.subr.bf16.mxu0 0
      %4783 = vmatpush1.bf16.msra.mxu0 0
      %4784 = vmatprep.subr.bf16.mxu0 0
      %4785 = vmatpush1.bf16.msra.mxu0 0
      %4786 = vmatprep.subr.bf16.mxu0 0
      %4787 = vmatpush1.bf16.msra.mxu0 0
      %4788 = vmatprep.subr.bf16.mxu0 0
      %4789 = vmatpush1.bf16.msra.mxu0 0
      %4790 = vmatprep.subr.bf16.mxu0 0
      %4791 = vmatpush1.bf16.msra.mxu0 0
      %4792 = vmatprep.subr.bf16.mxu0 0
      %4793 = vmatpush1.bf16.msra.mxu0 0
      %4794 = vmatprep.subr.bf16.mxu0 0
      %4795 = vmatpush1.bf16.msra.mxu0 0
      %4796 = vmatprep.mubr.bf16.mxu0 0
      %4797 = vmatmul.mubr.bf16.gmra.mrb[0].mxu0 %v4753
      %v4798 = vpop.f32.mrb[0].mxu0
      %v4799 = vadd.f32 0.0, %v4798
      %v4800 = vpop.f32.mrb[0].mxu0
      %v4801 = vpop.f32.mrb[0].mxu0
      %v4802 = vadd.f32 0.0, %v4801
      %v4803 = vpop.f32.mrb[0].mxu0
      %4804 = vmatprep.mubr.bf16.mxu0 0
      %4805 = vmatmul.mubr.bf16.gmra.mrb[0].mxu0 %v4756
      %v4806 = vpop.f32.mrb[0].mxu0
      %v4807 = vadd.f32 0.0, %v4806
      %v4808 = vpop.f32.mrb[0].mxu0
      %v4809 = vpop.f32.mrb[0].mxu0
      %v4810 = vadd.f32 0.0, %v4809
      %v4811 = vpop.f32.mrb[0].mxu0
      %4812 = vmatprep.mubr.bf16.mxu0 0
      %4813 = vmatmul.mubr.bf16.gmra.mrb[0].mxu0 %v4759
      %v4814 = vpop.f32.mrb[0].mxu0
      %v4815 = vadd.f32 0.0, %v4814
      %v4816 = vpop.f32.mrb[0].mxu0
      %v4817 = vpop.f32.mrb[0].mxu0
      %v4818 = vadd.f32 0.0, %v4817
      %v4819 = vpop.f32.mrb[0].mxu0
      %4820 = vmatprep.mubr.bf16.mxu0 0
      %4821 = vmatmul.mubr.bf16.gmra.mrb[0].mxu0 %v4762
      %v4822 = vpop.f32.mrb[0].mxu0
      %v4823 = vadd.f32 0.0, %v4822
      %v4824 = vpop.f32.mrb[0].mxu0
      %v4825 = vpop.f32.mrb[0].mxu0
      %v4826 = vadd.f32 0.0, %v4825
      %v4827 = vpop.f32.mrb[0].mxu0
      %4828 = vdwg.mxu0
      %v4829 = vadd.f32 %v4682, %v4799
      %v4830 = vadd.f32 %v4683, %v4799
      %v4831 = vadd.f32 %v4684, %v4799
      %v4832 = vadd.f32 %v4685, %v4799
      %v4833 = vadd.f32 %v4686, %v4799
      %v4834 = vadd.f32 %v4687, %v4799
      %v4835 = vadd.f32 %v4688, %v4799
      %v4836 = vadd.f32 %v4689, %v4799
      %v4837 = vadd.f32 %v4690, %v4802
      %v4838 = vadd.f32 %v4691, %v4802
      %v4839 = vadd.f32 %v4692, %v4802
      %v4840 = vadd.f32 %v4693, %v4802
      %v4841 = vadd.f32 %v4694, %v4802
      %v4842 = vadd.f32 %v4695, %v4802
      %v4843 = vadd.f32 %v4696, %v4802
      %v4844 = vadd.f32 %v4697, %v4802
      %v4845 = vadd.f32 %v4698, %v4807
      %v4846 = vadd.f32 %v4699, %v4807
      %v4847 = vadd.f32 %v4700, %v4807
      %v4848 = vadd.f32 %v4701, %v4807
      %v4849 = vadd.f32 %v4702, %v4807
      %v4850 = vadd.f32 %v4703, %v4807
      %v4851 = vadd.f32 %v4704, %v4807
      %v4852 = vadd.f32 %v4705, %v4807
      %v4853 = vadd.f32 %v4706, %v4810
      %v4854 = vadd.f32 %v4707, %v4810
      %v4855 = vadd.f32 %v4708, %v4810
      %v4856 = vadd.f32 %v4709, %v4810
      %v4857 = vadd.f32 %v4710, %v4810
      %v4858 = vadd.f32 %v4711, %v4810
      %v4859 = vadd.f32 %v4712, %v4810
      %v4860 = vadd.f32 %v4713, %v4810
      %v4861 = vadd.f32 %v4714, %v4815
      %v4862 = vadd.f32 %v4715, %v4815
      %v4863 = vadd.f32 %v4716, %v4815
      %v4864 = vadd.f32 %v4717, %v4815
      %v4865 = vadd.f32 %v4718, %v4815
      %v4866 = vadd.f32 %v4719, %v4815
      %v4867 = vadd.f32 %v4720, %v4815
      %v4868 = vadd.f32 %v4721, %v4815
      %v4869 = vadd.f32 %v4722, %v4818
      %v4870 = vadd.f32 %v4723, %v4818
      %v4871 = vadd.f32 %v4724, %v4818
      %v4872 = vadd.f32 %v4725, %v4818
      %v4873 = vadd.f32 %v4726, %v4818
      %v4874 = vadd.f32 %v4727, %v4818
      %v4875 = vadd.f32 %v4728, %v4818
      %v4876 = vadd.f32 %v4729, %v4818
      %v4877 = vadd.f32 %v4730, %v4823
      %v4878 = vadd.f32 %v4731, %v4823
      %v4879 = vadd.f32 %v4732, %v4823
      %v4880 = vadd.f32 %v4733, %v4823
      %v4881 = vadd.f32 %v4734, %v4823
      %v4882 = vadd.f32 %v4735, %v4823
      %v4883 = vadd.f32 %v4736, %v4823
      %v4884 = vadd.f32 %v4737, %v4823
      %v4885 = vadd.f32 %v4738, %v4826
      %v4886 = vadd.f32 %v4739, %v4826
      %v4887 = vadd.f32 %v4740, %v4826
      %v4888 = vadd.f32 %v4741, %v4826
      %v4889 = vadd.f32 %v4742, %v4826
      %v4890 = vadd.f32 %v4743, %v4826
      %v4891 = vadd.f32 %v4744, %v4826
      %v4892 = vadd.f32 %v4745, %v4826
      %v4893 = vpack.c.bf16 %v3972, %v3972
      %v4894 = vpack.c.bf16 %v3973, %v3973
      %v4895 = vpack.c.bf16 %v3974, %v3974
      %v4896 = vpack.c.bf16 %v3975, %v3975
      %v4897 = vpack.c.bf16 %v3976, %v3976
      %v4898 = vpack.c.bf16 %v3977, %v3977
      %v4899 = vpack.c.bf16 %v3978, %v3978
      %v4900 = vpack.c.bf16 %v3979, %v3979
      %v4901 = vpack.c.bf16 %v3980, %v3980
      %v4902 = vpack.c.bf16 %v3981, %v3981
      %v4903 = vpack.c.bf16 %v3982, %v3982
      %v4904 = vpack.c.bf16 %v3983, %v3983
      %v4905 = vpack.c.bf16 %v3984, %v3984
      %v4906 = vpack.c.bf16 %v3985, %v3985
      %v4907 = vpack.c.bf16 %v3986, %v3986
      %v4908 = vpack.c.bf16 %v3987, %v3987
      %v4909 = vpack.c.bf16 %v3988, %v3988
      %v4910 = vpack.c.bf16 %v3989, %v3989
      %v4911 = vpack.c.bf16 %v3990, %v3990
      %v4912 = vpack.c.bf16 %v3991, %v3991
      %v4913 = vpack.c.bf16 %v3992, %v3992
      %v4914 = vpack.c.bf16 %v3993, %v3993
      %v4915 = vpack.c.bf16 %v3994, %v3994
      %v4916 = vpack.c.bf16 %v3995, %v3995
      %v4917 = vpack.c.bf16 %v3996, %v3996
      %v4918 = vpack.c.bf16 %v3997, %v3997
      %v4919 = vpack.c.bf16 %v3998, %v3998
      %v4920 = vpack.c.bf16 %v3999, %v3999
      %v4921 = vpack.c.bf16 %v4000, %v4000
      %v4922 = vpack.c.bf16 %v4001, %v4001
      %v4923 = vpack.c.bf16 %v4002, %v4002
      %v4924 = vpack.c.bf16 %v4003, %v4003
      %v4925 = vpack.c.bf16 %v4004, %v4004
      %v4926 = vpack.c.bf16 %v4005, %v4005
      %v4927 = vpack.c.bf16 %v4006, %v4006
      %v4928 = vpack.c.bf16 %v4007, %v4007
      %v4929 = vpack.c.bf16 %v4008, %v4008
      %v4930 = vpack.c.bf16 %v4009, %v4009
      %v4931 = vpack.c.bf16 %v4010, %v4010
      %v4932 = vpack.c.bf16 %v4011, %v4011
      %v4933 = vpack.c.bf16 %v4012, %v4012
      %v4934 = vpack.c.bf16 %v4013, %v4013
      %v4935 = vpack.c.bf16 %v4014, %v4014
      %v4936 = vpack.c.bf16 %v4015, %v4015
      %v4937 = vpack.c.bf16 %v4016, %v4016
      %v4938 = vpack.c.bf16 %v4017, %v4017
      %v4939 = vpack.c.bf16 %v4018, %v4018
      %v4940 = vpack.c.bf16 %v4019, %v4019
      %v4941 = vpack.c.bf16 %v4020, %v4020
      %v4942 = vpack.c.bf16 %v4021, %v4021
      %v4943 = vpack.c.bf16 %v4022, %v4022
      %v4944 = vpack.c.bf16 %v4023, %v4023
      %v4945 = vpack.c.bf16 %v4024, %v4024
      %v4946 = vpack.c.bf16 %v4025, %v4025
      %v4947 = vpack.c.bf16 %v4026, %v4026
      %v4948 = vpack.c.bf16 %v4027, %v4027
      %v4949 = vpack.c.bf16 %v4028, %v4028
      %v4950 = vpack.c.bf16 %v4029, %v4029
      %v4951 = vpack.c.bf16 %v4030, %v4030
      %v4952 = vpack.c.bf16 %v4031, %v4031
      %v4953 = vpack.c.bf16 %v4032, %v4032
      %v4954 = vpack.c.bf16 %v4033, %v4033
      %v4955 = vpack.c.bf16 %v4034, %v4034
      %v4956 = vpack.c.bf16 %v4035, %v4035
      %v4957 = vpack.c.bf16 %v3376, %v3375
      %v4958 = vpack.c.bf16 %v3378, %v3377
      %v5023 = vunpack.c.l.b16 %v4893
      %v5024 = vunpack.c.l.b16 %v4894
      %v5025 = vunpack.c.l.b16 %v4895
      %v5026 = vunpack.c.l.b16 %v4896
      %v5027 = vunpack.c.l.b16 %v4897
      %v5028 = vunpack.c.l.b16 %v4898
      %v5029 = vunpack.c.l.b16 %v4899
      %v5030 = vunpack.c.l.b16 %v4900
      %v5031 = vunpack.c.l.b16 %v4901
      %v5032 = vunpack.c.l.b16 %v4902
      %v5033 = vunpack.c.l.b16 %v4903
      %v5034 = vunpack.c.l.b16 %v4904
      %v5035 = vunpack.c.l.b16 %v4905
      %v5036 = vunpack.c.l.b16 %v4906
      %v5037 = vunpack.c.l.b16 %v4907
      %v5038 = vunpack.c.l.b16 %v4908
      %v5039 = vunpack.c.l.b16 %v4909
      %v5040 = vunpack.c.l.b16 %v4910
      %v5041 = vunpack.c.l.b16 %v4911
      %v5042 = vunpack.c.l.b16 %v4912
      %v5043 = vunpack.c.l.b16 %v4913
      %v5044 = vunpack.c.l.b16 %v4914
      %v5045 = vunpack.c.l.b16 %v4915
      %v5046 = vunpack.c.l.b16 %v4916
      %v5047 = vunpack.c.l.b16 %v4917
      %v5048 = vunpack.c.l.b16 %v4918
      %v5049 = vunpack.c.l.b16 %v4919
      %v5050 = vunpack.c.l.b16 %v4920
      %v5051 = vunpack.c.l.b16 %v4921
      %v5052 = vunpack.c.l.b16 %v4922
      %v5053 = vunpack.c.l.b16 %v4923
      %v5054 = vunpack.c.l.b16 %v4924
      %v5055 = vunpack.c.l.b16 %v4925
      %v5056 = vunpack.c.l.b16 %v4926
      %v5057 = vunpack.c.l.b16 %v4927
      %v5058 = vunpack.c.l.b16 %v4928
      %v5059 = vunpack.c.l.b16 %v4929
      %v5060 = vunpack.c.l.b16 %v4930
      %v5061 = vunpack.c.l.b16 %v4931
      %v5062 = vunpack.c.l.b16 %v4932
      %v5063 = vunpack.c.l.b16 %v4933
      %v5064 = vunpack.c.l.b16 %v4934
      %v5065 = vunpack.c.l.b16 %v4935
      %v5066 = vunpack.c.l.b16 %v4936
      %v5067 = vunpack.c.l.b16 %v4937
      %v5068 = vunpack.c.l.b16 %v4938
      %v5069 = vunpack.c.l.b16 %v4939
      %v5070 = vunpack.c.l.b16 %v4940
      %v5071 = vunpack.c.l.b16 %v4941
      %v5072 = vunpack.c.l.b16 %v4942
      %v5073 = vunpack.c.l.b16 %v4943
      %v5074 = vunpack.c.l.b16 %v4944
      %v5075 = vunpack.c.l.b16 %v4945
      %v5076 = vunpack.c.l.b16 %v4946
      %v5077 = vunpack.c.l.b16 %v4947
      %v5078 = vunpack.c.l.b16 %v4948
      %v5079 = vunpack.c.l.b16 %v4949
      %v5080 = vunpack.c.l.b16 %v4950
      %v5081 = vunpack.c.l.b16 %v4951
      %v5082 = vunpack.c.l.b16 %v4952
      %v5083 = vunpack.c.l.b16 %v4953
      %v5084 = vunpack.c.l.b16 %v4954
      %v5085 = vunpack.c.l.b16 %v4955
      %v5086 = vunpack.c.l.b16 %v4956
      %v5087 = vsel %vm2663, %v5024, %v5023
      %v5088 = vsel %vm2665, %v5025, %v5087
      %v5089 = vsel %vm2667, %v5026, %v5088
      %v5090 = vsel %vm2669, %v5027, %v5089
      %v5091 = vsel %vm2671, %v5028, %v5090
      %v5092 = vsel %vm2673, %v5029, %v5091
      %v5093 = vsel %vm2675, %v5030, %v5092
      %v5094 = vsel %vm2663, %v5032, %v5031
      %v5095 = vsel %vm2665, %v5033, %v5094
      %v5096 = vsel %vm2667, %v5034, %v5095
      %v5097 = vsel %vm2669, %v5035, %v5096
      %v5098 = vsel %vm2671, %v5036, %v5097
      %v5099 = vsel %vm2673, %v5037, %v5098
      %v5100 = vsel %vm2675, %v5038, %v5099
      %v5101 = vsel %vm2663, %v5040, %v5039
      %v5102 = vsel %vm2665, %v5041, %v5101
      %v5103 = vsel %vm2667, %v5042, %v5102
      %v5104 = vsel %vm2669, %v5043, %v5103
      %v5105 = vsel %vm2671, %v5044, %v5104
      %v5106 = vsel %vm2673, %v5045, %v5105
      %v5107 = vsel %vm2675, %v5046, %v5106
      %v5108 = vsel %vm2663, %v5048, %v5047
      %v5109 = vsel %vm2665, %v5049, %v5108
      %v5110 = vsel %vm2667, %v5050, %v5109
      %v5111 = vsel %vm2669, %v5051, %v5110
      %v5112 = vsel %vm2671, %v5052, %v5111
      %v5113 = vsel %vm2673, %v5053, %v5112
      %v5114 = vsel %vm2675, %v5054, %v5113
      %v5115 = vsel %vm2663, %v5056, %v5055
      %v5116 = vsel %vm2665, %v5057, %v5115
      %v5117 = vsel %vm2667, %v5058, %v5116
      %v5118 = vsel %vm2669, %v5059, %v5117
      %v5119 = vsel %vm2671, %v5060, %v5118
      %v5120 = vsel %vm2673, %v5061, %v5119
      %v5121 = vsel %vm2675, %v5062, %v5120
      %v5122 = vsel %vm2663, %v5064, %v5063
      %v5123 = vsel %vm2665, %v5065, %v5122
      %v5124 = vsel %vm2667, %v5066, %v5123
      %v5125 = vsel %vm2669, %v5067, %v5124
      %v5126 = vsel %vm2671, %v5068, %v5125
      %v5127 = vsel %vm2673, %v5069, %v5126
      %v5128 = vsel %vm2675, %v5070, %v5127
      %v5129 = vsel %vm2663, %v5072, %v5071
      %v5130 = vsel %vm2665, %v5073, %v5129
      %v5131 = vsel %vm2667, %v5074, %v5130
      %v5132 = vsel %vm2669, %v5075, %v5131
      %v5133 = vsel %vm2671, %v5076, %v5132
      %v5134 = vsel %vm2673, %v5077, %v5133
      %v5135 = vsel %vm2675, %v5078, %v5134
      %v5136 = vsel %vm2663, %v5080, %v5079
      %v5137 = vsel %vm2665, %v5081, %v5136
      %v5138 = vsel %vm2667, %v5082, %v5137
      %v5139 = vsel %vm2669, %v5083, %v5138
      %v5140 = vsel %vm2671, %v5084, %v5139
      %v5141 = vsel %vm2673, %v5085, %v5140
      %v5142 = vsel %vm2675, %v5086, %v5141
      %v5143 = vpack.c.b16 %v5100, %v5093
      %v5144 = vpack.c.b16 %v5114, %v5107
      %v5145 = vpack.c.b16 %v5128, %v5121
      %v5146 = vpack.c.b16 %v5142, %v5135
      %v5148 = vsel %vm2748, %v5143, 0
      %v5151 = vsel %vm2748, %v5144, 0
      %v5154 = vsel %vm2748, %v5145, 0
      %v5157 = vsel %vm2748, %v5146, 0
      %5159 = vmatprep.subr.bf16.mxu0 0
      %5160 = vmatpush1.bf16.msra.mxu0 %v4957
      %5161 = vmatprep.subr.bf16.mxu0 0
      %5162 = vmatpush1.bf16.msra.mxu0 %v4958
      %5163 = vmatprep.subr.bf16.mxu0 0
      %5164 = vmatpush1.bf16.msra.mxu0 0
      %5165 = vmatprep.subr.bf16.mxu0 0
      %5166 = vmatpush1.bf16.msra.mxu0 0
      %5167 = vmatprep.subr.bf16.mxu0 0
      %5168 = vmatpush1.bf16.msra.mxu0 0
      %5169 = vmatprep.subr.bf16.mxu0 0
      %5170 = vmatpush1.bf16.msra.mxu0 0
      %5171 = vmatprep.subr.bf16.mxu0 0
      %5172 = vmatpush1.bf16.msra.mxu0 0
      %5173 = vmatprep.subr.bf16.mxu0 0
      %5174 = vmatpush1.bf16.msra.mxu0 0
      %5175 = vmatprep.subr.bf16.mxu0 0
      %5176 = vmatpush1.bf16.msra.mxu0 0
      %5177 = vmatprep.subr.bf16.mxu0 0
      %5178 = vmatpush1.bf16.msra.mxu0 0
      %5179 = vmatprep.subr.bf16.mxu0 0
      %5180 = vmatpush1.bf16.msra.mxu0 0
      %5181 = vmatprep.subr.bf16.mxu0 0
      %5182 = vmatpush1.bf16.msra.mxu0 0
      %5183 = vmatprep.subr.bf16.mxu0 0
      %5184 = vmatpush1.bf16.msra.mxu0 0
      %5185 = vmatprep.subr.bf16.mxu0 0
      %5186 = vmatpush1.bf16.msra.mxu0 0
      %5187 = vmatprep.subr.bf16.mxu0 0
      %5188 = vmatpush1.bf16.msra.mxu0 0
      %5189 = vmatprep.subr.bf16.mxu0 0
      %5190 = vmatpush1.bf16.msra.mxu0 0
      %5191 = vmatprep.mubr.bf16.mxu0 0
      %5192 = vmatmul.mubr.bf16.gmra.mrb[0].mxu0 %v5148
      %v5193 = vpop.f32.mrb[0].mxu0
      %v5194 = vadd.f32 0.0, %v5193
      %v5195 = vpop.f32.mrb[0].mxu0
      %v5196 = vpop.f32.mrb[0].mxu0
      %v5197 = vadd.f32 0.0, %v5196
      %v5198 = vpop.f32.mrb[0].mxu0
      %5199 = vmatprep.mubr.bf16.mxu0 0
      %5200 = vmatmul.mubr.bf16.gmra.mrb[0].mxu0 %v5151
      %v5201 = vpop.f32.mrb[0].mxu0
      %v5202 = vadd.f32 0.0, %v5201
      %v5203 = vpop.f32.mrb[0].mxu0
      %v5204 = vpop.f32.mrb[0].mxu0
      %v5205 = vadd.f32 0.0, %v5204
      %v5206 = vpop.f32.mrb[0].mxu0
      %5207 = vmatprep.mubr.bf16.mxu0 0
      %5208 = vmatmul.mubr.bf16.gmra.mrb[0].mxu0 %v5154
      %v5209 = vpop.f32.mrb[0].mxu0
      %v5210 = vadd.f32 0.0, %v5209
      %v5211 = vpop.f32.mrb[0].mxu0
      %v5212 = vpop.f32.mrb[0].mxu0
      %v5213 = vadd.f32 0.0, %v5212
      %v5214 = vpop.f32.mrb[0].mxu0
      %5215 = vmatprep.mubr.bf16.mxu0 0
      %5216 = vmatmul.mubr.bf16.gmra.mrb[0].mxu0 %v5157
      %v5217 = vpop.f32.mrb[0].mxu0
      %v5218 = vadd.f32 0.0, %v5217
      %v5219 = vpop.f32.mrb[0].mxu0
      %v5220 = vpop.f32.mrb[0].mxu0
      %v5221 = vadd.f32 0.0, %v5220
      %v5222 = vpop.f32.mrb[0].mxu0
      %5223 = vdwg.mxu0
      %v5232 = vcombine.high %v5194, %v5194
      %v5234 = vunpack.c.l.s4 1966171168
      %v5235 = vunpack.c.0.s8 %v5234
      %v5236 = vlaneseq
      %v5237 = vshrl.u32 %v5236, 7
      %v5238 = vsub.s32 %v5235, %v5237
      %v5239 = vrot.slane %v5194, %v5238
      %v5241 = vunpack.c.l.s4 1966171168
      %v5242 = vunpack.c.0.s8 %v5241
      %v5243 = vlaneseq
      %v5244 = vshrl.u32 %v5243, 7
      %v5245 = vsub.s32 %v5242, %v5244
      %v5246 = vrot.slane %v5232, %v5245
      %v5247 = vcombine.high %v5239, %v5239
      %v5248 = vcombine.high %v5246, %v5246
      %v5250 = vunpack.c.l.s4 1966171168
      %v5251 = vunpack.c.0.s8 %v5250
      %v5252 = vlaneseq
      %v5253 = vshrl.u32 %v5252, 7
      %v5254 = vsub.s32 %v5251, %v5253
      %v5255 = vrot.slane %v5239, %v5254
      %v5257 = vunpack.c.l.s4 1966171168
      %v5258 = vunpack.c.0.s8 %v5257
      %v5259 = vlaneseq
      %v5260 = vshrl.u32 %v5259, 7
      %v5261 = vsub.s32 %v5258, %v5260
      %v5262 = vrot.slane %v5246, %v5261
      %v5264 = vunpack.c.l.s4 1966171168
      %v5265 = vunpack.c.0.s8 %v5264
      %v5266 = vlaneseq
      %v5267 = vshrl.u32 %v5266, 7
      %v5268 = vsub.s32 %v5265, %v5267
      %v5269 = vrot.slane %v5247, %v5268
      %v5271 = vunpack.c.l.s4 1966171168
      %v5272 = vunpack.c.0.s8 %v5271
      %v5273 = vlaneseq
      %v5274 = vshrl.u32 %v5273, 7
      %v5275 = vsub.s32 %v5272, %v5274
      %v5276 = vrot.slane %v5248, %v5275
      %v5277 = vcombine.high %v5255, %v5255
      %v5278 = vcombine.high %v5262, %v5262
      %v5279 = vcombine.high %v5269, %v5269
      %v5280 = vcombine.high %v5276, %v5276
      %v5281 = vcombine.high %v5197, %v5197
      %v5283 = vunpack.c.l.s4 1966171168
      %v5284 = vunpack.c.0.s8 %v5283
      %v5285 = vlaneseq
      %v5286 = vshrl.u32 %v5285, 7
      %v5287 = vsub.s32 %v5284, %v5286
      %v5288 = vrot.slane %v5197, %v5287
      %v5290 = vunpack.c.l.s4 1966171168
      %v5291 = vunpack.c.0.s8 %v5290
      %v5292 = vlaneseq
      %v5293 = vshrl.u32 %v5292, 7
      %v5294 = vsub.s32 %v5291, %v5293
      %v5295 = vrot.slane %v5281, %v5294
      %v5296 = vcombine.high %v5288, %v5288
      %v5297 = vcombine.high %v5295, %v5295
      %v5299 = vunpack.c.l.s4 1966171168
      %v5300 = vunpack.c.0.s8 %v5299
      %v5301 = vlaneseq
      %v5302 = vshrl.u32 %v5301, 7
      %v5303 = vsub.s32 %v5300, %v5302
      %v5304 = vrot.slane %v5288, %v5303
      %v5306 = vunpack.c.l.s4 1966171168
      %v5307 = vunpack.c.0.s8 %v5306
      %v5308 = vlaneseq
      %v5309 = vshrl.u32 %v5308, 7
      %v5310 = vsub.s32 %v5307, %v5309
      %v5311 = vrot.slane %v5295, %v5310
      %v5313 = vunpack.c.l.s4 1966171168
      %v5314 = vunpack.c.0.s8 %v5313
      %v5315 = vlaneseq
      %v5316 = vshrl.u32 %v5315, 7
      %v5317 = vsub.s32 %v5314, %v5316
      %v5318 = vrot.slane %v5296, %v5317
      %v5320 = vunpack.c.l.s4 1966171168
      %v5321 = vunpack.c.0.s8 %v5320
      %v5322 = vlaneseq
      %v5323 = vshrl.u32 %v5322, 7
      %v5324 = vsub.s32 %v5321, %v5323
      %v5325 = vrot.slane %v5297, %v5324
      %v5326 = vcombine.high %v5304, %v5304
      %v5327 = vcombine.high %v5311, %v5311
      %v5328 = vcombine.high %v5318, %v5318
      %v5329 = vcombine.high %v5325, %v5325
      %v5330 = vcombine.high %v5202, %v5202
      %v5332 = vunpack.c.l.s4 1966171168
      %v5333 = vunpack.c.0.s8 %v5332
      %v5334 = vlaneseq
      %v5335 = vshrl.u32 %v5334, 7
      %v5336 = vsub.s32 %v5333, %v5335
      %v5337 = vrot.slane %v5202, %v5336
      %v5339 = vunpack.c.l.s4 1966171168
      %v5340 = vunpack.c.0.s8 %v5339
      %v5341 = vlaneseq
      %v5342 = vshrl.u32 %v5341, 7
      %v5343 = vsub.s32 %v5340, %v5342
      %v5344 = vrot.slane %v5330, %v5343
      %v5345 = vcombine.high %v5337, %v5337
      %v5346 = vcombine.high %v5344, %v5344
      %v5348 = vunpack.c.l.s4 1966171168
      %v5349 = vunpack.c.0.s8 %v5348
      %v5350 = vlaneseq
      %v5351 = vshrl.u32 %v5350, 7
      %v5352 = vsub.s32 %v5349, %v5351
      %v5353 = vrot.slane %v5337, %v5352
      %v5355 = vunpack.c.l.s4 1966171168
      %v5356 = vunpack.c.0.s8 %v5355
      %v5357 = vlaneseq
      %v5358 = vshrl.u32 %v5357, 7
      %v5359 = vsub.s32 %v5356, %v5358
      %v5360 = vrot.slane %v5344, %v5359
      %v5362 = vunpack.c.l.s4 1966171168
      %v5363 = vunpack.c.0.s8 %v5362
      %v5364 = vlaneseq
      %v5365 = vshrl.u32 %v5364, 7
      %v5366 = vsub.s32 %v5363, %v5365
      %v5367 = vrot.slane %v5345, %v5366
      %v5369 = vunpack.c.l.s4 1966171168
      %v5370 = vunpack.c.0.s8 %v5369
      %v5371 = vlaneseq
      %v5372 = vshrl.u32 %v5371, 7
      %v5373 = vsub.s32 %v5370, %v5372
      %v5374 = vrot.slane %v5346, %v5373
      %v5375 = vcombine.high %v5353, %v5353
      %v5376 = vcombine.high %v5360, %v5360
      %v5377 = vcombine.high %v5367, %v5367
      %v5378 = vcombine.high %v5374, %v5374
      %v5379 = vcombine.high %v5205, %v5205
      %v5381 = vunpack.c.l.s4 1966171168
      %v5382 = vunpack.c.0.s8 %v5381
      %v5383 = vlaneseq
      %v5384 = vshrl.u32 %v5383, 7
      %v5385 = vsub.s32 %v5382, %v5384
      %v5386 = vrot.slane %v5205, %v5385
      %v5388 = vunpack.c.l.s4 1966171168
      %v5389 = vunpack.c.0.s8 %v5388
      %v5390 = vlaneseq
      %v5391 = vshrl.u32 %v5390, 7
      %v5392 = vsub.s32 %v5389, %v5391
      %v5393 = vrot.slane %v5379, %v5392
      %v5394 = vcombine.high %v5386, %v5386
      %v5395 = vcombine.high %v5393, %v5393
      %v5397 = vunpack.c.l.s4 1966171168
      %v5398 = vunpack.c.0.s8 %v5397
      %v5399 = vlaneseq
      %v5400 = vshrl.u32 %v5399, 7
      %v5401 = vsub.s32 %v5398, %v5400
      %v5402 = vrot.slane %v5386, %v5401
      %v5404 = vunpack.c.l.s4 1966171168
      %v5405 = vunpack.c.0.s8 %v5404
      %v5406 = vlaneseq
      %v5407 = vshrl.u32 %v5406, 7
      %v5408 = vsub.s32 %v5405, %v5407
      %v5409 = vrot.slane %v5393, %v5408
      %v5411 = vunpack.c.l.s4 1966171168
      %v5412 = vunpack.c.0.s8 %v5411
      %v5413 = vlaneseq
      %v5414 = vshrl.u32 %v5413, 7
      %v5415 = vsub.s32 %v5412, %v5414
      %v5416 = vrot.slane %v5394, %v5415
      %v5418 = vunpack.c.l.s4 1966171168
      %v5419 = vunpack.c.0.s8 %v5418
      %v5420 = vlaneseq
      %v5421 = vshrl.u32 %v5420, 7
      %v5422 = vsub.s32 %v5419, %v5421
      %v5423 = vrot.slane %v5395, %v5422
      %v5424 = vcombine.high %v5402, %v5402
      %v5425 = vcombine.high %v5409, %v5409
      %v5426 = vcombine.high %v5416, %v5416
      %v5427 = vcombine.high %v5423, %v5423
      %v5428 = vcombine.high %v5210, %v5210
      %v5430 = vunpack.c.l.s4 1966171168
      %v5431 = vunpack.c.0.s8 %v5430
      %v5432 = vlaneseq
      %v5433 = vshrl.u32 %v5432, 7
      %v5434 = vsub.s32 %v5431, %v5433
      %v5435 = vrot.slane %v5210, %v5434
      %v5437 = vunpack.c.l.s4 1966171168
      %v5438 = vunpack.c.0.s8 %v5437
      %v5439 = vlaneseq
      %v5440 = vshrl.u32 %v5439, 7
      %v5441 = vsub.s32 %v5438, %v5440
      %v5442 = vrot.slane %v5428, %v5441
      %v5443 = vcombine.high %v5435, %v5435
      %v5444 = vcombine.high %v5442, %v5442
      %v5446 = vunpack.c.l.s4 1966171168
      %v5447 = vunpack.c.0.s8 %v5446
      %v5448 = vlaneseq
      %v5449 = vshrl.u32 %v5448, 7
      %v5450 = vsub.s32 %v5447, %v5449
      %v5451 = vrot.slane %v5435, %v5450
      %v5453 = vunpack.c.l.s4 1966171168
      %v5454 = vunpack.c.0.s8 %v5453
      %v5455 = vlaneseq
      %v5456 = vshrl.u32 %v5455, 7
      %v5457 = vsub.s32 %v5454, %v5456
      %v5458 = vrot.slane %v5442, %v5457
      %v5460 = vunpack.c.l.s4 1966171168
      %v5461 = vunpack.c.0.s8 %v5460
      %v5462 = vlaneseq
      %v5463 = vshrl.u32 %v5462, 7
      %v5464 = vsub.s32 %v5461, %v5463
      %v5465 = vrot.slane %v5443, %v5464
      %v5467 = vunpack.c.l.s4 1966171168
      %v5468 = vunpack.c.0.s8 %v5467
      %v5469 = vlaneseq
      %v5470 = vshrl.u32 %v5469, 7
      %v5471 = vsub.s32 %v5468, %v5470
      %v5472 = vrot.slane %v5444, %v5471
      %v5473 = vcombine.high %v5451, %v5451
      %v5474 = vcombine.high %v5458, %v5458
      %v5475 = vcombine.high %v5465, %v5465
      %v5476 = vcombine.high %v5472, %v5472
      %v5477 = vcombine.high %v5213, %v5213
      %v5479 = vunpack.c.l.s4 1966171168
      %v5480 = vunpack.c.0.s8 %v5479
      %v5481 = vlaneseq
      %v5482 = vshrl.u32 %v5481, 7
      %v5483 = vsub.s32 %v5480, %v5482
      %v5484 = vrot.slane %v5213, %v5483
      %v5486 = vunpack.c.l.s4 1966171168
      %v5487 = vunpack.c.0.s8 %v5486
      %v5488 = vlaneseq
      %v5489 = vshrl.u32 %v5488, 7
      %v5490 = vsub.s32 %v5487, %v5489
      %v5491 = vrot.slane %v5477, %v5490
      %v5492 = vcombine.high %v5484, %v5484
      %v5493 = vcombine.high %v5491, %v5491
      %v5495 = vunpack.c.l.s4 1966171168
      %v5496 = vunpack.c.0.s8 %v5495
      %v5497 = vlaneseq
      %v5498 = vshrl.u32 %v5497, 7
      %v5499 = vsub.s32 %v5496, %v5498
      %v5500 = vrot.slane %v5484, %v5499
      %v5502 = vunpack.c.l.s4 1966171168
      %v5503 = vunpack.c.0.s8 %v5502
      %v5504 = vlaneseq
      %v5505 = vshrl.u32 %v5504, 7
      %v5506 = vsub.s32 %v5503, %v5505
      %v5507 = vrot.slane %v5491, %v5506
      %v5509 = vunpack.c.l.s4 1966171168
      %v5510 = vunpack.c.0.s8 %v5509
      %v5511 = vlaneseq
      %v5512 = vshrl.u32 %v5511, 7
      %v5513 = vsub.s32 %v5510, %v5512
      %v5514 = vrot.slane %v5492, %v5513
      %v5516 = vunpack.c.l.s4 1966171168
      %v5517 = vunpack.c.0.s8 %v5516
      %v5518 = vlaneseq
      %v5519 = vshrl.u32 %v5518, 7
      %v5520 = vsub.s32 %v5517, %v5519
      %v5521 = vrot.slane %v5493, %v5520
      %v5522 = vcombine.high %v5500, %v5500
      %v5523 = vcombine.high %v5507, %v5507
      %v5524 = vcombine.high %v5514, %v5514
      %v5525 = vcombine.high %v5521, %v5521
      %v5526 = vcombine.high %v5218, %v5218
      %v5528 = vunpack.c.l.s4 1966171168
      %v5529 = vunpack.c.0.s8 %v5528
      %v5530 = vlaneseq
      %v5531 = vshrl.u32 %v5530, 7
      %v5532 = vsub.s32 %v5529, %v5531
      %v5533 = vrot.slane %v5218, %v5532
      %v5535 = vunpack.c.l.s4 1966171168
      %v5536 = vunpack.c.0.s8 %v5535
      %v5537 = vlaneseq
      %v5538 = vshrl.u32 %v5537, 7
      %v5539 = vsub.s32 %v5536, %v5538
      %v5540 = vrot.slane %v5526, %v5539
      %v5541 = vcombine.high %v5533, %v5533
      %v5542 = vcombine.high %v5540, %v5540
      %v5544 = vunpack.c.l.s4 1966171168
      %v5545 = vunpack.c.0.s8 %v5544
      %v5546 = vlaneseq
      %v5547 = vshrl.u32 %v5546, 7
      %v5548 = vsub.s32 %v5545, %v5547
      %v5549 = vrot.slane %v5533, %v5548
      %v5551 = vunpack.c.l.s4 1966171168
      %v5552 = vunpack.c.0.s8 %v5551
      %v5553 = vlaneseq
      %v5554 = vshrl.u32 %v5553, 7
      %v5555 = vsub.s32 %v5552, %v5554
      %v5556 = vrot.slane %v5540, %v5555
      %v5558 = vunpack.c.l.s4 1966171168
      %v5559 = vunpack.c.0.s8 %v5558
      %v5560 = vlaneseq
      %v5561 = vshrl.u32 %v5560, 7
      %v5562 = vsub.s32 %v5559, %v5561
      %v5563 = vrot.slane %v5541, %v5562
      %v5565 = vunpack.c.l.s4 1966171168
      %v5566 = vunpack.c.0.s8 %v5565
      %v5567 = vlaneseq
      %v5568 = vshrl.u32 %v5567, 7
      %v5569 = vsub.s32 %v5566, %v5568
      %v5570 = vrot.slane %v5542, %v5569
      %v5571 = vcombine.high %v5549, %v5549
      %v5572 = vcombine.high %v5556, %v5556
      %v5573 = vcombine.high %v5563, %v5563
      %v5574 = vcombine.high %v5570, %v5570
      %v5575 = vcombine.high %v5221, %v5221
      %v5577 = vunpack.c.l.s4 1966171168
      %v5578 = vunpack.c.0.s8 %v5577
      %v5579 = vlaneseq
      %v5580 = vshrl.u32 %v5579, 7
      %v5581 = vsub.s32 %v5578, %v5580
      %v5582 = vrot.slane %v5221, %v5581
      %v5584 = vunpack.c.l.s4 1966171168
      %v5585 = vunpack.c.0.s8 %v5584
      %v5586 = vlaneseq
      %v5587 = vshrl.u32 %v5586, 7
      %v5588 = vsub.s32 %v5585, %v5587
      %v5589 = vrot.slane %v5575, %v5588
      %v5590 = vcombine.high %v5582, %v5582
      %v5591 = vcombine.high %v5589, %v5589
      %v5593 = vunpack.c.l.s4 1966171168
      %v5594 = vunpack.c.0.s8 %v5593
      %v5595 = vlaneseq
      %v5596 = vshrl.u32 %v5595, 7
      %v5597 = vsub.s32 %v5594, %v5596
      %v5598 = vrot.slane %v5582, %v5597
      %v5600 = vunpack.c.l.s4 1966171168
      %v5601 = vunpack.c.0.s8 %v5600
      %v5602 = vlaneseq
      %v5603 = vshrl.u32 %v5602, 7
      %v5604 = vsub.s32 %v5601, %v5603
      %v5605 = vrot.slane %v5589, %v5604
      %v5607 = vunpack.c.l.s4 1966171168
      %v5608 = vunpack.c.0.s8 %v5607
      %v5609 = vlaneseq
      %v5610 = vshrl.u32 %v5609, 7
      %v5611 = vsub.s32 %v5608, %v5610
      %v5612 = vrot.slane %v5590, %v5611
      %v5614 = vunpack.c.l.s4 1966171168
      %v5615 = vunpack.c.0.s8 %v5614
      %v5616 = vlaneseq
      %v5617 = vshrl.u32 %v5616, 7
      %v5618 = vsub.s32 %v5615, %v5617
      %v5619 = vrot.slane %v5591, %v5618
      %v5620 = vcombine.high %v5598, %v5598
      %v5621 = vcombine.high %v5605, %v5605
      %v5622 = vcombine.high %v5612, %v5612
      %v5623 = vcombine.high %v5619, %v5619
      %v5624 = vlaneseq
      %v5625 = vshrl.u32 %v5624, 7
      %v5626 = vsub.s32 0, %v5625
      %v5627 = vrot.slane %v5255, %v5626
      %v5628 = vlaneseq
      %v5629 = vshrl.u32 %v5628, 7
      %v5630 = vsub.s32 0, %v5629
      %v5631 = vrot.slane %v5269, %v5630
      %v5632 = vlaneseq
      %v5633 = vshrl.u32 %v5632, 7
      %v5634 = vsub.s32 0, %v5633
      %v5635 = vrot.slane %v5277, %v5634
      %v5636 = vlaneseq
      %v5637 = vshrl.u32 %v5636, 7
      %v5638 = vsub.s32 0, %v5637
      %v5639 = vrot.slane %v5279, %v5638
      %v5640 = vlaneseq
      %v5641 = vshrl.u32 %v5640, 7
      %v5642 = vsub.s32 0, %v5641
      %v5643 = vrot.slane %v5262, %v5642
      %v5644 = vlaneseq
      %v5645 = vshrl.u32 %v5644, 7
      %v5646 = vsub.s32 0, %v5645
      %v5647 = vrot.slane %v5276, %v5646
      %v5648 = vlaneseq
      %v5649 = vshrl.u32 %v5648, 7
      %v5650 = vsub.s32 0, %v5649
      %v5651 = vrot.slane %v5278, %v5650
      %v5652 = vlaneseq
      %v5653 = vshrl.u32 %v5652, 7
      %v5654 = vsub.s32 0, %v5653
      %v5655 = vrot.slane %v5280, %v5654
      %v5656 = vlaneseq
      %v5657 = vshrl.u32 %v5656, 7
      %v5658 = vsub.s32 0, %v5657
      %v5659 = vrot.slane %v5304, %v5658
      %v5660 = vlaneseq
      %v5661 = vshrl.u32 %v5660, 7
      %v5662 = vsub.s32 0, %v5661
      %v5663 = vrot.slane %v5318, %v5662
      %v5664 = vlaneseq
      %v5665 = vshrl.u32 %v5664, 7
      %v5666 = vsub.s32 0, %v5665
      %v5667 = vrot.slane %v5326, %v5666
      %v5668 = vlaneseq
      %v5669 = vshrl.u32 %v5668, 7
      %v5670 = vsub.s32 0, %v5669
      %v5671 = vrot.slane %v5328, %v5670
      %v5672 = vlaneseq
      %v5673 = vshrl.u32 %v5672, 7
      %v5674 = vsub.s32 0, %v5673
      %v5675 = vrot.slane %v5311, %v5674
      %v5676 = vlaneseq
      %v5677 = vshrl.u32 %v5676, 7
      %v5678 = vsub.s32 0, %v5677
      %v5679 = vrot.slane %v5325, %v5678
      %v5680 = vlaneseq
      %v5681 = vshrl.u32 %v5680, 7
      %v5682 = vsub.s32 0, %v5681
      %v5683 = vrot.slane %v5327, %v5682
      %v5684 = vlaneseq
      %v5685 = vshrl.u32 %v5684, 7
      %v5686 = vsub.s32 0, %v5685
      %v5687 = vrot.slane %v5329, %v5686
      %v5688 = vlaneseq
      %v5689 = vshrl.u32 %v5688, 7
      %v5690 = vsub.s32 0, %v5689
      %v5691 = vrot.slane %v5353, %v5690
      %v5692 = vlaneseq
      %v5693 = vshrl.u32 %v5692, 7
      %v5694 = vsub.s32 0, %v5693
      %v5695 = vrot.slane %v5367, %v5694
      %v5696 = vlaneseq
      %v5697 = vshrl.u32 %v5696, 7
      %v5698 = vsub.s32 0, %v5697
      %v5699 = vrot.slane %v5375, %v5698
      %v5700 = vlaneseq
      %v5701 = vshrl.u32 %v5700, 7
      %v5702 = vsub.s32 0, %v5701
      %v5703 = vrot.slane %v5377, %v5702
      %v5704 = vlaneseq
      %v5705 = vshrl.u32 %v5704, 7
      %v5706 = vsub.s32 0, %v5705
      %v5707 = vrot.slane %v5360, %v5706
      %v5708 = vlaneseq
      %v5709 = vshrl.u32 %v5708, 7
      %v5710 = vsub.s32 0, %v5709
      %v5711 = vrot.slane %v5374, %v5710
      %v5712 = vlaneseq
      %v5713 = vshrl.u32 %v5712, 7
      %v5714 = vsub.s32 0, %v5713
      %v5715 = vrot.slane %v5376, %v5714
      %v5716 = vlaneseq
      %v5717 = vshrl.u32 %v5716, 7
      %v5718 = vsub.s32 0, %v5717
      %v5719 = vrot.slane %v5378, %v5718
      %v5720 = vlaneseq
      %v5721 = vshrl.u32 %v5720, 7
      %v5722 = vsub.s32 0, %v5721
      %v5723 = vrot.slane %v5402, %v5722
      %v5724 = vlaneseq
      %v5725 = vshrl.u32 %v5724, 7
      %v5726 = vsub.s32 0, %v5725
      %v5727 = vrot.slane %v5416, %v5726
      %v5728 = vlaneseq
      %v5729 = vshrl.u32 %v5728, 7
      %v5730 = vsub.s32 0, %v5729
      %v5731 = vrot.slane %v5424, %v5730
      %v5732 = vlaneseq
      %v5733 = vshrl.u32 %v5732, 7
      %v5734 = vsub.s32 0, %v5733
      %v5735 = vrot.slane %v5426, %v5734
      %v5736 = vlaneseq
      %v5737 = vshrl.u32 %v5736, 7
      %v5738 = vsub.s32 0, %v5737
      %v5739 = vrot.slane %v5409, %v5738
      %v5740 = vlaneseq
      %v5741 = vshrl.u32 %v5740, 7
      %v5742 = vsub.s32 0, %v5741
      %v5743 = vrot.slane %v5423, %v5742
      %v5744 = vlaneseq
      %v5745 = vshrl.u32 %v5744, 7
      %v5746 = vsub.s32 0, %v5745
      %v5747 = vrot.slane %v5425, %v5746
      %v5748 = vlaneseq
      %v5749 = vshrl.u32 %v5748, 7
      %v5750 = vsub.s32 0, %v5749
      %v5751 = vrot.slane %v5427, %v5750
      %v5752 = vlaneseq
      %v5753 = vshrl.u32 %v5752, 7
      %v5754 = vsub.s32 0, %v5753
      %v5755 = vrot.slane %v5451, %v5754
      %v5756 = vlaneseq
      %v5757 = vshrl.u32 %v5756, 7
      %v5758 = vsub.s32 0, %v5757
      %v5759 = vrot.slane %v5465, %v5758
      %v5760 = vlaneseq
      %v5761 = vshrl.u32 %v5760, 7
      %v5762 = vsub.s32 0, %v5761
      %v5763 = vrot.slane %v5473, %v5762
      %v5764 = vlaneseq
      %v5765 = vshrl.u32 %v5764, 7
      %v5766 = vsub.s32 0, %v5765
      %v5767 = vrot.slane %v5475, %v5766
      %v5768 = vlaneseq
      %v5769 = vshrl.u32 %v5768, 7
      %v5770 = vsub.s32 0, %v5769
      %v5771 = vrot.slane %v5458, %v5770
      %v5772 = vlaneseq
      %v5773 = vshrl.u32 %v5772, 7
      %v5774 = vsub.s32 0, %v5773
      %v5775 = vrot.slane %v5472, %v5774
      %v5776 = vlaneseq
      %v5777 = vshrl.u32 %v5776, 7
      %v5778 = vsub.s32 0, %v5777
      %v5779 = vrot.slane %v5474, %v5778
      %v5780 = vlaneseq
      %v5781 = vshrl.u32 %v5780, 7
      %v5782 = vsub.s32 0, %v5781
      %v5783 = vrot.slane %v5476, %v5782
      %v5784 = vlaneseq
      %v5785 = vshrl.u32 %v5784, 7
      %v5786 = vsub.s32 0, %v5785
      %v5787 = vrot.slane %v5500, %v5786
      %v5788 = vlaneseq
      %v5789 = vshrl.u32 %v5788, 7
      %v5790 = vsub.s32 0, %v5789
      %v5791 = vrot.slane %v5514, %v5790
      %v5792 = vlaneseq
      %v5793 = vshrl.u32 %v5792, 7
      %v5794 = vsub.s32 0, %v5793
      %v5795 = vrot.slane %v5522, %v5794
      %v5796 = vlaneseq
      %v5797 = vshrl.u32 %v5796, 7
      %v5798 = vsub.s32 0, %v5797
      %v5799 = vrot.slane %v5524, %v5798
      %v5800 = vlaneseq
      %v5801 = vshrl.u32 %v5800, 7
      %v5802 = vsub.s32 0, %v5801
      %v5803 = vrot.slane %v5507, %v5802
      %v5804 = vlaneseq
      %v5805 = vshrl.u32 %v5804, 7
      %v5806 = vsub.s32 0, %v5805
      %v5807 = vrot.slane %v5521, %v5806
      %v5808 = vlaneseq
      %v5809 = vshrl.u32 %v5808, 7
      %v5810 = vsub.s32 0, %v5809
      %v5811 = vrot.slane %v5523, %v5810
      %v5812 = vlaneseq
      %v5813 = vshrl.u32 %v5812, 7
      %v5814 = vsub.s32 0, %v5813
      %v5815 = vrot.slane %v5525, %v5814
      %v5816 = vlaneseq
      %v5817 = vshrl.u32 %v5816, 7
      %v5818 = vsub.s32 0, %v5817
      %v5819 = vrot.slane %v5549, %v5818
      %v5820 = vlaneseq
      %v5821 = vshrl.u32 %v5820, 7
      %v5822 = vsub.s32 0, %v5821
      %v5823 = vrot.slane %v5563, %v5822
      %v5824 = vlaneseq
      %v5825 = vshrl.u32 %v5824, 7
      %v5826 = vsub.s32 0, %v5825
      %v5827 = vrot.slane %v5571, %v5826
      %v5828 = vlaneseq
      %v5829 = vshrl.u32 %v5828, 7
      %v5830 = vsub.s32 0, %v5829
      %v5831 = vrot.slane %v5573, %v5830
      %v5832 = vlaneseq
      %v5833 = vshrl.u32 %v5832, 7
      %v5834 = vsub.s32 0, %v5833
      %v5835 = vrot.slane %v5556, %v5834
      %v5836 = vlaneseq
      %v5837 = vshrl.u32 %v5836, 7
      %v5838 = vsub.s32 0, %v5837
      %v5839 = vrot.slane %v5570, %v5838
      %v5840 = vlaneseq
      %v5841 = vshrl.u32 %v5840, 7
      %v5842 = vsub.s32 0, %v5841
      %v5843 = vrot.slane %v5572, %v5842
      %v5844 = vlaneseq
      %v5845 = vshrl.u32 %v5844, 7
      %v5846 = vsub.s32 0, %v5845
      %v5847 = vrot.slane %v5574, %v5846
      %v5848 = vlaneseq
      %v5849 = vshrl.u32 %v5848, 7
      %v5850 = vsub.s32 0, %v5849
      %v5851 = vrot.slane %v5598, %v5850
      %v5852 = vlaneseq
      %v5853 = vshrl.u32 %v5852, 7
      %v5854 = vsub.s32 0, %v5853
      %v5855 = vrot.slane %v5612, %v5854
      %v5856 = vlaneseq
      %v5857 = vshrl.u32 %v5856, 7
      %v5858 = vsub.s32 0, %v5857
      %v5859 = vrot.slane %v5620, %v5858
      %v5860 = vlaneseq
      %v5861 = vshrl.u32 %v5860, 7
      %v5862 = vsub.s32 0, %v5861
      %v5863 = vrot.slane %v5622, %v5862
      %v5864 = vlaneseq
      %v5865 = vshrl.u32 %v5864, 7
      %v5866 = vsub.s32 0, %v5865
      %v5867 = vrot.slane %v5605, %v5866
      %v5868 = vlaneseq
      %v5869 = vshrl.u32 %v5868, 7
      %v5870 = vsub.s32 0, %v5869
      %v5871 = vrot.slane %v5619, %v5870
      %v5872 = vlaneseq
      %v5873 = vshrl.u32 %v5872, 7
      %v5874 = vsub.s32 0, %v5873
      %v5875 = vrot.slane %v5621, %v5874
      %v5876 = vlaneseq
      %v5877 = vshrl.u32 %v5876, 7
      %v5878 = vsub.s32 0, %v5877
      %v5879 = vrot.slane %v5623, %v5878
      %v5944 = vadd.f32 %v4829, %v5627
      %v5945 = vadd.f32 %v4830, %v5631
      %v5946 = vadd.f32 %v4831, %v5635
      %v5947 = vadd.f32 %v4832, %v5639
      %v5948 = vadd.f32 %v4833, %v5643
      %v5949 = vadd.f32 %v4834, %v5647
      %v5950 = vadd.f32 %v4835, %v5651
      %v5951 = vadd.f32 %v4836, %v5655
      %v5952 = vadd.f32 %v4837, %v5659
      %v5953 = vadd.f32 %v4838, %v5663
      %v5954 = vadd.f32 %v4839, %v5667
      %v5955 = vadd.f32 %v4840, %v5671
      %v5956 = vadd.f32 %v4841, %v5675
      %v5957 = vadd.f32 %v4842, %v5679
      %v5958 = vadd.f32 %v4843, %v5683
      %v5959 = vadd.f32 %v4844, %v5687
      %v5960 = vadd.f32 %v4845, %v5691
      %v5961 = vadd.f32 %v4846, %v5695
      %v5962 = vadd.f32 %v4847, %v5699
      %v5963 = vadd.f32 %v4848, %v5703
      %v5964 = vadd.f32 %v4849, %v5707
      %v5965 = vadd.f32 %v4850, %v5711
      %v5966 = vadd.f32 %v4851, %v5715
      %v5967 = vadd.f32 %v4852, %v5719
      %v5968 = vadd.f32 %v4853, %v5723
      %v5969 = vadd.f32 %v4854, %v5727
      %v5970 = vadd.f32 %v4855, %v5731
      %v5971 = vadd.f32 %v4856, %v5735
      %v5972 = vadd.f32 %v4857, %v5739
      %v5973 = vadd.f32 %v4858, %v5743
      %v5974 = vadd.f32 %v4859, %v5747
      %v5975 = vadd.f32 %v4860, %v5751
      %v5976 = vadd.f32 %v4861, %v5755
      %v5977 = vadd.f32 %v4862, %v5759
      %v5978 = vadd.f32 %v4863, %v5763
      %v5979 = vadd.f32 %v4864, %v5767
      %v5980 = vadd.f32 %v4865, %v5771
      %v5981 = vadd.f32 %v4866, %v5775
      %v5982 = vadd.f32 %v4867, %v5779
      %v5983 = vadd.f32 %v4868, %v5783
      %v5984 = vadd.f32 %v4869, %v5787
      %v5985 = vadd.f32 %v4870, %v5791
      %v5986 = vadd.f32 %v4871, %v5795
      %v5987 = vadd.f32 %v4872, %v5799
      %v5988 = vadd.f32 %v4873, %v5803
      %v5989 = vadd.f32 %v4874, %v5807
      %v5990 = vadd.f32 %v4875, %v5811
      %v5991 = vadd.f32 %v4876, %v5815
      %v5992 = vadd.f32 %v4877, %v5819
      %v5993 = vadd.f32 %v4878, %v5823
      %v5994 = vadd.f32 %v4879, %v5827
      %v5995 = vadd.f32 %v4880, %v5831
      %v5996 = vadd.f32 %v4881, %v5835
      %v5997 = vadd.f32 %v4882, %v5839
      %v5998 = vadd.f32 %v4883, %v5843
      %v5999 = vadd.f32 %v4884, %v5847
      %v6000 = vadd.f32 %v4885, %v5851
      %v6001 = vadd.f32 %v4886, %v5855
      %v6002 = vadd.f32 %v4887, %v5859
      %v6003 = vadd.f32 %v4888, %v5863
      %v6004 = vadd.f32 %v4889, %v5867
      %v6005 = vadd.f32 %v4890, %v5871
      %v6006 = vadd.f32 %v4891, %v5875
      %v6007 = vadd.f32 %v4892, %v5879
      %v6008 = vpack.c.bf16 %v4051, %v4051
      %v6009 = vpack.c.bf16 %v3380, %v3379
      %v6010 = vpack.c.bf16 %v3382, %v3381
      %v6012 = vsel %vm2748, %v6008, 0
      %6014 = vmatprep.subr.bf16.mxu0 0
      %6015 = vmatpush1.bf16.msra.mxu0 %v6009
      %6016 = vmatprep.subr.bf16.mxu0 0
      %6017 = vmatpush1.bf16.msra.mxu0 %v6010
      %6018 = vmatprep.subr.bf16.mxu0 0
      %6019 = vmatpush1.bf16.msra.mxu0 0
      %6020 = vmatprep.subr.bf16.mxu0 0
      %6021 = vmatpush1.bf16.msra.mxu0 0
      %6022 = vmatprep.subr.bf16.mxu0 0
      %6023 = vmatpush1.bf16.msra.mxu0 0
      %6024 = vmatprep.subr.bf16.mxu0 0
      %6025 = vmatpush1.bf16.msra.mxu0 0
      %6026 = vmatprep.subr.bf16.mxu0 0
      %6027 = vmatpush1.bf16.msra.mxu0 0
      %6028 = vmatprep.subr.bf16.mxu0 0
      %6029 = vmatpush1.bf16.msra.mxu0 0
      %6030 = vmatprep.subr.bf16.mxu0 0
      %6031 = vmatpush1.bf16.msra.mxu0 0
      %6032 = vmatprep.subr.bf16.mxu0 0
      %6033 = vmatpush1.bf16.msra.mxu0 0
      %6034 = vmatprep.subr.bf16.mxu0 0
      %6035 = vmatpush1.bf16.msra.mxu0 0
      %6036 = vmatprep.subr.bf16.mxu0 0
      %6037 = vmatpush1.bf16.msra.mxu0 0
      %6038 = vmatprep.subr.bf16.mxu0 0
      %6039 = vmatpush1.bf16.msra.mxu0 0
      %6040 = vmatprep.subr.bf16.mxu0 0
      %6041 = vmatpush1.bf16.msra.mxu0 0
      %6042 = vmatprep.subr.bf16.mxu0 0
      %6043 = vmatpush1.bf16.msra.mxu0 0
      %6044 = vmatprep.subr.bf16.mxu0 0
      %6045 = vmatpush1.bf16.msra.mxu0 0
      %6046 = vmatprep.mubr.bf16.mxu0 0
      %6047 = vmatmul.mubr.bf16.gmra.mrb[0].mxu0 %v6012
      %v6048 = vpop.f32.mrb[0].mxu0
      %v6049 = vadd.f32 0.0, %v6048
      %v6050 = vpop.f32.mrb[0].mxu0
      %v6051 = vpop.f32.mrb[0].mxu0
      %v6052 = vpop.f32.mrb[0].mxu0
      %6053 = vdwg.mxu0
      %v6054 = vadd.f32 %v5944, %v6049
      %v6055 = vadd.f32 %v5945, %v6049
      %v6056 = vadd.f32 %v5946, %v6049
      %v6057 = vadd.f32 %v5947, %v6049
      %v6058 = vadd.f32 %v5948, %v6049
      %v6059 = vadd.f32 %v5949, %v6049
      %v6060 = vadd.f32 %v5950, %v6049
      %v6061 = vadd.f32 %v5951, %v6049
      %v6062 = vadd.f32 %v5952, %v6049
      %v6063 = vadd.f32 %v5953, %v6049
      %v6064 = vadd.f32 %v5954, %v6049
      %v6065 = vadd.f32 %v5955, %v6049
      %v6066 = vadd.f32 %v5956, %v6049
      %v6067 = vadd.f32 %v5957, %v6049
      %v6068 = vadd.f32 %v5958, %v6049
      %v6069 = vadd.f32 %v5959, %v6049
      %v6070 = vadd.f32 %v5960, %v6049
      %v6071 = vadd.f32 %v5961, %v6049
      %v6072 = vadd.f32 %v5962, %v6049
      %v6073 = vadd.f32 %v5963, %v6049
      %v6074 = vadd.f32 %v5964, %v6049
      %v6075 = vadd.f32 %v5965, %v6049
      %v6076 = vadd.f32 %v5966, %v6049
      %v6077 = vadd.f32 %v5967, %v6049
      %v6078 = vadd.f32 %v5968, %v6049
      %v6079 = vadd.f32 %v5969, %v6049
      %v6080 = vadd.f32 %v5970, %v6049
      %v6081 = vadd.f32 %v5971, %v6049
      %v6082 = vadd.f32 %v5972, %v6049
      %v6083 = vadd.f32 %v5973, %v6049
      %v6084 = vadd.f32 %v5974, %v6049
      %v6085 = vadd.f32 %v5975, %v6049
      %v6086 = vadd.f32 %v5976, %v6049
      %v6087 = vadd.f32 %v5977, %v6049
      %v6088 = vadd.f32 %v5978, %v6049
      %v6089 = vadd.f32 %v5979, %v6049
      %v6090 = vadd.f32 %v5980, %v6049
      %v6091 = vadd.f32 %v5981, %v6049
      %v6092 = vadd.f32 %v5982, %v6049
      %v6093 = vadd.f32 %v5983, %v6049
      %v6094 = vadd.f32 %v5984, %v6049
      %v6095 = vadd.f32 %v5985, %v6049
      %v6096 = vadd.f32 %v5986, %v6049
      %v6097 = vadd.f32 %v5987, %v6049
      %v6098 = vadd.f32 %v5988, %v6049
      %v6099 = vadd.f32 %v5989, %v6049
      %v6100 = vadd.f32 %v5990, %v6049
      %v6101 = vadd.f32 %v5991, %v6049
      %v6102 = vadd.f32 %v5992, %v6049
      %v6103 = vadd.f32 %v5993, %v6049
      %v6104 = vadd.f32 %v5994, %v6049
      %v6105 = vadd.f32 %v5995, %v6049
      %v6106 = vadd.f32 %v5996, %v6049
      %v6107 = vadd.f32 %v5997, %v6049
      %v6108 = vadd.f32 %v5998, %v6049
      %v6109 = vadd.f32 %v5999, %v6049
      %v6110 = vadd.f32 %v6000, %v6049
      %v6111 = vadd.f32 %v6001, %v6049
      %v6112 = vadd.f32 %v6002, %v6049
      %v6113 = vadd.f32 %v6003, %v6049
      %v6114 = vadd.f32 %v6004, %v6049
      %v6115 = vadd.f32 %v6005, %v6049
      %v6116 = vadd.f32 %v6006, %v6049
      %v6117 = vadd.f32 %v6007, %v6049
      %v6118 = vpack.c.bf16 %v4100, %v4100
      %v6119 = vpack.c.bf16 %v4101, %v4101
      %v6120 = vpack.c.bf16 %v4102, %v4102
      %v6121 = vpack.c.bf16 %v4103, %v4103
      %v6122 = vpack.c.bf16 %v4104, %v4104
      %v6123 = vpack.c.bf16 %v4105, %v4105
      %v6124 = vpack.c.bf16 %v4106, %v4106
      %v6125 = vpack.c.bf16 %v4107, %v4107
      %v6126 = vpack.c.bf16 %v3384, %v3383
      %v6127 = vpack.c.bf16 %v3386, %v3385
      %v6136 = vunpack.c.l.b16 %v6118
      %v6137 = vunpack.c.l.b16 %v6119
      %v6138 = vunpack.c.l.b16 %v6120
      %v6139 = vunpack.c.l.b16 %v6121
      %v6140 = vunpack.c.l.b16 %v6122
      %v6141 = vunpack.c.l.b16 %v6123
      %v6142 = vunpack.c.l.b16 %v6124
      %v6143 = vunpack.c.l.b16 %v6125
      %v6144 = vsel %vm2663, %v6137, %v6136
      %v6145 = vsel %vm2665, %v6138, %v6144
      %v6146 = vsel %vm2667, %v6139, %v6145
      %v6147 = vsel %vm2669, %v6140, %v6146
      %v6148 = vsel %vm2671, %v6141, %v6147
      %v6149 = vsel %vm2673, %v6142, %v6148
      %v6150 = vsel %vm2675, %v6143, %v6149
      %v6151 = vpack.c.b16 %v6150, %v6150
      %v6153 = vsel %vm2748, %v6151, 0
      %6155 = vmatprep.subr.bf16.mxu0 0
      %6156 = vmatpush1.bf16.msra.mxu0 %v6126
      %6157 = vmatprep.subr.bf16.mxu0 0
      %6158 = vmatpush1.bf16.msra.mxu0 %v6127
      %6159 = vmatprep.subr.bf16.mxu0 0
      %6160 = vmatpush1.bf16.msra.mxu0 0
      %6161 = vmatprep.subr.bf16.mxu0 0
      %6162 = vmatpush1.bf16.msra.mxu0 0
      %6163 = vmatprep.subr.bf16.mxu0 0
      %6164 = vmatpush1.bf16.msra.mxu0 0
      %6165 = vmatprep.subr.bf16.mxu0 0
      %6166 = vmatpush1.bf16.msra.mxu0 0
      %6167 = vmatprep.subr.bf16.mxu0 0
      %6168 = vmatpush1.bf16.msra.mxu0 0
      %6169 = vmatprep.subr.bf16.mxu0 0
      %6170 = vmatpush1.bf16.msra.mxu0 0
      %6171 = vmatprep.subr.bf16.mxu0 0
      %6172 = vmatpush1.bf16.msra.mxu0 0
      %6173 = vmatprep.subr.bf16.mxu0 0
      %6174 = vmatpush1.bf16.msra.mxu0 0
      %6175 = vmatprep.subr.bf16.mxu0 0
      %6176 = vmatpush1.bf16.msra.mxu0 0
      %6177 = vmatprep.subr.bf16.mxu0 0
      %6178 = vmatpush1.bf16.msra.mxu0 0
      %6179 = vmatprep.subr.bf16.mxu0 0
      %6180 = vmatpush1.bf16.msra.mxu0 0
      %6181 = vmatprep.subr.bf16.mxu0 0
      %6182 = vmatpush1.bf16.msra.mxu0 0
      %6183 = vmatprep.subr.bf16.mxu0 0
      %6184 = vmatpush1.bf16.msra.mxu0 0
      %6185 = vmatprep.subr.bf16.mxu0 0
      %6186 = vmatpush1.bf16.msra.mxu0 0
      %6187 = vmatprep.mubr.bf16.mxu0 0
      %6188 = vmatmul.mubr.bf16.gmra.mrb[0].mxu0 %v6153
      %v6189 = vpop.f32.mrb[0].mxu0
      %v6190 = vadd.f32 0.0, %v6189
      %v6191 = vpop.f32.mrb[0].mxu0
      %v6192 = vpop.f32.mrb[0].mxu0
      %v6193 = vpop.f32.mrb[0].mxu0
      %6194 = vdwg.mxu0
      %v6196 = vcombine.high %v6190, %v6190
      %v6198 = vunpack.c.l.s4 1966171168
      %v6199 = vunpack.c.0.s8 %v6198
      %v6200 = vlaneseq
      %v6201 = vshrl.u32 %v6200, 7
      %v6202 = vsub.s32 %v6199, %v6201
      %v6203 = vrot.slane %v6190, %v6202
      %v6205 = vunpack.c.l.s4 1966171168
      %v6206 = vunpack.c.0.s8 %v6205
      %v6207 = vlaneseq
      %v6208 = vshrl.u32 %v6207, 7
      %v6209 = vsub.s32 %v6206, %v6208
      %v6210 = vrot.slane %v6196, %v6209
      %v6211 = vcombine.high %v6203, %v6203
      %v6212 = vcombine.high %v6210, %v6210
      %v6214 = vunpack.c.l.s4 1966171168
      %v6215 = vunpack.c.0.s8 %v6214
      %v6216 = vlaneseq
      %v6217 = vshrl.u32 %v6216, 7
      %v6218 = vsub.s32 %v6215, %v6217
      %v6219 = vrot.slane %v6203, %v6218
      %v6221 = vunpack.c.l.s4 1966171168
      %v6222 = vunpack.c.0.s8 %v6221
      %v6223 = vlaneseq
      %v6224 = vshrl.u32 %v6223, 7
      %v6225 = vsub.s32 %v6222, %v6224
      %v6226 = vrot.slane %v6210, %v6225
      %v6228 = vunpack.c.l.s4 1966171168
      %v6229 = vunpack.c.0.s8 %v6228
      %v6230 = vlaneseq
      %v6231 = vshrl.u32 %v6230, 7
      %v6232 = vsub.s32 %v6229, %v6231
      %v6233 = vrot.slane %v6211, %v6232
      %v6235 = vunpack.c.l.s4 1966171168
      %v6236 = vunpack.c.0.s8 %v6235
      %v6237 = vlaneseq
      %v6238 = vshrl.u32 %v6237, 7
      %v6239 = vsub.s32 %v6236, %v6238
      %v6240 = vrot.slane %v6212, %v6239
      %v6241 = vcombine.high %v6219, %v6219
      %v6242 = vcombine.high %v6226, %v6226
      %v6243 = vcombine.high %v6233, %v6233
      %v6244 = vcombine.high %v6240, %v6240
      %v6245 = vlaneseq
      %v6246 = vshrl.u32 %v6245, 7
      %v6247 = vsub.s32 0, %v6246
      %v6248 = vrot.slane %v6219, %v6247
      %v6249 = vlaneseq
      %v6250 = vshrl.u32 %v6249, 7
      %v6251 = vsub.s32 0, %v6250
      %v6252 = vrot.slane %v6233, %v6251
      %v6253 = vlaneseq
      %v6254 = vshrl.u32 %v6253, 7
      %v6255 = vsub.s32 0, %v6254
      %v6256 = vrot.slane %v6241, %v6255
      %v6257 = vlaneseq
      %v6258 = vshrl.u32 %v6257, 7
      %v6259 = vsub.s32 0, %v6258
      %v6260 = vrot.slane %v6243, %v6259
      %v6261 = vlaneseq
      %v6262 = vshrl.u32 %v6261, 7
      %v6263 = vsub.s32 0, %v6262
      %v6264 = vrot.slane %v6226, %v6263
      %v6265 = vlaneseq
      %v6266 = vshrl.u32 %v6265, 7
      %v6267 = vsub.s32 0, %v6266
      %v6268 = vrot.slane %v6240, %v6267
      %v6269 = vlaneseq
      %v6270 = vshrl.u32 %v6269, 7
      %v6271 = vsub.s32 0, %v6270
      %v6272 = vrot.slane %v6242, %v6271
      %v6273 = vlaneseq
      %v6274 = vshrl.u32 %v6273, 7
      %v6275 = vsub.s32 0, %v6274
      %v6276 = vrot.slane %v6244, %v6275
      %v6285 = vadd.f32 %v6054, %v6248
      %v6286 = vadd.f32 %v6055, %v6252
      %v6287 = vadd.f32 %v6056, %v6256
      %v6288 = vadd.f32 %v6057, %v6260
      %v6289 = vadd.f32 %v6058, %v6264
      %v6290 = vadd.f32 %v6059, %v6268
      %v6291 = vadd.f32 %v6060, %v6272
      %v6292 = vadd.f32 %v6061, %v6276
      %v6293 = vadd.f32 %v6062, %v6248
      %v6294 = vadd.f32 %v6063, %v6252
      %v6295 = vadd.f32 %v6064, %v6256
      %v6296 = vadd.f32 %v6065, %v6260
      %v6297 = vadd.f32 %v6066, %v6264
      %v6298 = vadd.f32 %v6067, %v6268
      %v6299 = vadd.f32 %v6068, %v6272
      %v6300 = vadd.f32 %v6069, %v6276
      %v6301 = vadd.f32 %v6070, %v6248
      %v6302 = vadd.f32 %v6071, %v6252
      %v6303 = vadd.f32 %v6072, %v6256
      %v6304 = vadd.f32 %v6073, %v6260
      %v6305 = vadd.f32 %v6074, %v6264
      %v6306 = vadd.f32 %v6075, %v6268
      %v6307 = vadd.f32 %v6076, %v6272
      %v6308 = vadd.f32 %v6077, %v6276
      %v6309 = vadd.f32 %v6078, %v6248
      %v6310 = vadd.f32 %v6079, %v6252
      %v6311 = vadd.f32 %v6080, %v6256
      %v6312 = vadd.f32 %v6081, %v6260
      %v6313 = vadd.f32 %v6082, %v6264
      %v6314 = vadd.f32 %v6083, %v6268
      %v6315 = vadd.f32 %v6084, %v6272
      %v6316 = vadd.f32 %v6085, %v6276
      %v6317 = vadd.f32 %v6086, %v6248
      %v6318 = vadd.f32 %v6087, %v6252
      %v6319 = vadd.f32 %v6088, %v6256
      %v6320 = vadd.f32 %v6089, %v6260
      %v6321 = vadd.f32 %v6090, %v6264
      %v6322 = vadd.f32 %v6091, %v6268
      %v6323 = vadd.f32 %v6092, %v6272
      %v6324 = vadd.f32 %v6093, %v6276
      %v6325 = vadd.f32 %v6094, %v6248
      %v6326 = vadd.f32 %v6095, %v6252
      %v6327 = vadd.f32 %v6096, %v6256
      %v6328 = vadd.f32 %v6097, %v6260
      %v6329 = vadd.f32 %v6098, %v6264
      %v6330 = vadd.f32 %v6099, %v6268
      %v6331 = vadd.f32 %v6100, %v6272
      %v6332 = vadd.f32 %v6101, %v6276
      %v6333 = vadd.f32 %v6102, %v6248
      %v6334 = vadd.f32 %v6103, %v6252
      %v6335 = vadd.f32 %v6104, %v6256
      %v6336 = vadd.f32 %v6105, %v6260
      %v6337 = vadd.f32 %v6106, %v6264
      %v6338 = vadd.f32 %v6107, %v6268
      %v6339 = vadd.f32 %v6108, %v6272
      %v6340 = vadd.f32 %v6109, %v6276
      %v6341 = vadd.f32 %v6110, %v6248
      %v6342 = vadd.f32 %v6111, %v6252
      %v6343 = vadd.f32 %v6112, %v6256
      %v6344 = vadd.f32 %v6113, %v6260
      %v6345 = vadd.f32 %v6114, %v6264
      %v6346 = vadd.f32 %v6115, %v6268
      %v6347 = vadd.f32 %v6116, %v6272
      %v6348 = vadd.f32 %v6117, %v6276
      %v6349 = vpack.c.bf16 %v4164, %v4164
      %v6350 = vpack.c.bf16 %v4165, %v4165
      %v6351 = vpack.c.bf16 %v4166, %v4166
      %v6352 = vpack.c.bf16 %v4167, %v4167
      %v6353 = vpack.c.bf16 %v4168, %v4168
      %v6354 = vpack.c.bf16 %v4169, %v4169
      %v6355 = vpack.c.bf16 %v4170, %v4170
      %v6356 = vpack.c.bf16 %v4171, %v4171
      %v6357 = vpack.c.bf16 %v3388, %v3387
      %v6358 = vpack.c.bf16 %v3390, %v3389
      %v6367 = vunpack.c.l.b16 %v6349
      %v6368 = vunpack.c.l.b16 %v6350
      %v6369 = vunpack.c.l.b16 %v6351
      %v6370 = vunpack.c.l.b16 %v6352
      %v6371 = vunpack.c.l.b16 %v6353
      %v6372 = vunpack.c.l.b16 %v6354
      %v6373 = vunpack.c.l.b16 %v6355
      %v6374 = vunpack.c.l.b16 %v6356
      %v6375 = vsel %vm2663, %v6368, %v6367
      %v6376 = vsel %vm2665, %v6369, %v6375
      %v6377 = vsel %vm2667, %v6370, %v6376
      %v6378 = vsel %vm2669, %v6371, %v6377
      %v6379 = vsel %vm2671, %v6372, %v6378
      %v6380 = vsel %vm2673, %v6373, %v6379
      %v6381 = vsel %vm2675, %v6374, %v6380
      %v6382 = vpack.c.b16 %v6381, %v6381
      %v6384 = vsel %vm2748, %v6382, 0
      %6386 = vmatprep.subr.bf16.mxu0 0
      %6387 = vmatpush1.bf16.msra.mxu0 %v6357
      %6388 = vmatprep.subr.bf16.mxu0 0
      %6389 = vmatpush1.bf16.msra.mxu0 %v6358
      %6390 = vmatprep.subr.bf16.mxu0 0
      %6391 = vmatpush1.bf16.msra.mxu0 0
      %6392 = vmatprep.subr.bf16.mxu0 0
      %6393 = vmatpush1.bf16.msra.mxu0 0
      %6394 = vmatprep.subr.bf16.mxu0 0
      %6395 = vmatpush1.bf16.msra.mxu0 0
      %6396 = vmatprep.subr.bf16.mxu0 0
      %6397 = vmatpush1.bf16.msra.mxu0 0
      %6398 = vmatprep.subr.bf16.mxu0 0
      %6399 = vmatpush1.bf16.msra.mxu0 0
      %6400 = vmatprep.subr.bf16.mxu0 0
      %6401 = vmatpush1.bf16.msra.mxu0 0
      %6402 = vmatprep.subr.bf16.mxu0 0
      %6403 = vmatpush1.bf16.msra.mxu0 0
      %6404 = vmatprep.subr.bf16.mxu0 0
      %6405 = vmatpush1.bf16.msra.mxu0 0
      %6406 = vmatprep.subr.bf16.mxu0 0
      %6407 = vmatpush1.bf16.msra.mxu0 0
      %6408 = vmatprep.subr.bf16.mxu0 0
      %6409 = vmatpush1.bf16.msra.mxu0 0
      %6410 = vmatprep.subr.bf16.mxu0 0
      %6411 = vmatpush1.bf16.msra.mxu0 0
      %6412 = vmatprep.subr.bf16.mxu0 0
      %6413 = vmatpush1.bf16.msra.mxu0 0
      %6414 = vmatprep.subr.bf16.mxu0 0
      %6415 = vmatpush1.bf16.msra.mxu0 0
      %6416 = vmatprep.subr.bf16.mxu0 0
      %6417 = vmatpush1.bf16.msra.mxu0 0
      %6418 = vmatprep.mubr.bf16.mxu0 0
      %6419 = vmatmul.mubr.bf16.gmra.mrb[0].mxu0 %v6384
      %v6420 = vpop.f32.mrb[0].mxu0
      %v6421 = vadd.f32 0.0, %v6420
      %v6422 = vpop.f32.mrb[0].mxu0
      %v6423 = vpop.f32.mrb[0].mxu0
      %v6424 = vpop.f32.mrb[0].mxu0
      %6425 = vdwg.mxu0
      %v6427 = vcombine.high %v6421, %v6421
      %v6429 = vunpack.c.l.s4 1966171168
      %v6430 = vunpack.c.0.s8 %v6429
      %v6431 = vlaneseq
      %v6432 = vshrl.u32 %v6431, 7
      %v6433 = vsub.s32 %v6430, %v6432
      %v6434 = vrot.slane %v6421, %v6433
      %v6436 = vunpack.c.l.s4 1966171168
      %v6437 = vunpack.c.0.s8 %v6436
      %v6438 = vlaneseq
      %v6439 = vshrl.u32 %v6438, 7
      %v6440 = vsub.s32 %v6437, %v6439
      %v6441 = vrot.slane %v6427, %v6440
      %v6442 = vcombine.high %v6434, %v6434
      %v6443 = vcombine.high %v6441, %v6441
      %v6445 = vunpack.c.l.s4 1966171168
      %v6446 = vunpack.c.0.s8 %v6445
      %v6447 = vlaneseq
      %v6448 = vshrl.u32 %v6447, 7
      %v6449 = vsub.s32 %v6446, %v6448
      %v6450 = vrot.slane %v6434, %v6449
      %v6452 = vunpack.c.l.s4 1966171168
      %v6453 = vunpack.c.0.s8 %v6452
      %v6454 = vlaneseq
      %v6455 = vshrl.u32 %v6454, 7
      %v6456 = vsub.s32 %v6453, %v6455
      %v6457 = vrot.slane %v6441, %v6456
      %v6459 = vunpack.c.l.s4 1966171168
      %v6460 = vunpack.c.0.s8 %v6459
      %v6461 = vlaneseq
      %v6462 = vshrl.u32 %v6461, 7
      %v6463 = vsub.s32 %v6460, %v6462
      %v6464 = vrot.slane %v6442, %v6463
      %v6466 = vunpack.c.l.s4 1966171168
      %v6467 = vunpack.c.0.s8 %v6466
      %v6468 = vlaneseq
      %v6469 = vshrl.u32 %v6468, 7
      %v6470 = vsub.s32 %v6467, %v6469
      %v6471 = vrot.slane %v6443, %v6470
      %v6472 = vcombine.high %v6450, %v6450
      %v6473 = vcombine.high %v6457, %v6457
      %v6474 = vcombine.high %v6464, %v6464
      %v6475 = vcombine.high %v6471, %v6471
      %v6476 = vlaneseq
      %v6477 = vshrl.u32 %v6476, 7
      %v6478 = vsub.s32 0, %v6477
      %v6479 = vrot.slane %v6450, %v6478
      %v6480 = vlaneseq
      %v6481 = vshrl.u32 %v6480, 7
      %v6482 = vsub.s32 0, %v6481
      %v6483 = vrot.slane %v6464, %v6482
      %v6484 = vlaneseq
      %v6485 = vshrl.u32 %v6484, 7
      %v6486 = vsub.s32 0, %v6485
      %v6487 = vrot.slane %v6472, %v6486
      %v6488 = vlaneseq
      %v6489 = vshrl.u32 %v6488, 7
      %v6490 = vsub.s32 0, %v6489
      %v6491 = vrot.slane %v6474, %v6490
      %v6492 = vlaneseq
      %v6493 = vshrl.u32 %v6492, 7
      %v6494 = vsub.s32 0, %v6493
      %v6495 = vrot.slane %v6457, %v6494
      %v6496 = vlaneseq
      %v6497 = vshrl.u32 %v6496, 7
      %v6498 = vsub.s32 0, %v6497
      %v6499 = vrot.slane %v6471, %v6498
      %v6500 = vlaneseq
      %v6501 = vshrl.u32 %v6500, 7
      %v6502 = vsub.s32 0, %v6501
      %v6503 = vrot.slane %v6473, %v6502
      %v6504 = vlaneseq
      %v6505 = vshrl.u32 %v6504, 7
      %v6506 = vsub.s32 0, %v6505
      %v6507 = vrot.slane %v6475, %v6506
      %v6516 = vadd.f32 %v6285, %v6479
      %v6517 = vadd.f32 %v6286, %v6479
      %v6518 = vadd.f32 %v6287, %v6479
      %v6519 = vadd.f32 %v6288, %v6479
      %v6520 = vadd.f32 %v6289, %v6479
      %v6521 = vadd.f32 %v6290, %v6479
      %v6522 = vadd.f32 %v6291, %v6479
      %v6523 = vadd.f32 %v6292, %v6479
      %v6524 = vadd.f32 %v6293, %v6483
      %v6525 = vadd.f32 %v6294, %v6483
      %v6526 = vadd.f32 %v6295, %v6483
      %v6527 = vadd.f32 %v6296, %v6483
      %v6528 = vadd.f32 %v6297, %v6483
      %v6529 = vadd.f32 %v6298, %v6483
      %v6530 = vadd.f32 %v6299, %v6483
      %v6531 = vadd.f32 %v6300, %v6483
      %v6532 = vadd.f32 %v6301, %v6487
      %v6533 = vadd.f32 %v6302, %v6487
      %v6534 = vadd.f32 %v6303, %v6487
      %v6535 = vadd.f32 %v6304, %v6487
      %v6536 = vadd.f32 %v6305, %v6487
      %v6537 = vadd.f32 %v6306, %v6487
      %v6538 = vadd.f32 %v6307, %v6487
      %v6539 = vadd.f32 %v6308, %v6487
      %v6540 = vadd.f32 %v6309, %v6491
      %v6541 = vadd.f32 %v6310, %v6491
      %v6542 = vadd.f32 %v6311, %v6491
      %v6543 = vadd.f32 %v6312, %v6491
      %v6544 = vadd.f32 %v6313, %v6491
      %v6545 = vadd.f32 %v6314, %v6491
      %v6546 = vadd.f32 %v6315, %v6491
      %v6547 = vadd.f32 %v6316, %v6491
      %v6548 = vadd.f32 %v6317, %v6495
      %v6549 = vadd.f32 %v6318, %v6495
      %v6550 = vadd.f32 %v6319, %v6495
      %v6551 = vadd.f32 %v6320, %v6495
      %v6552 = vadd.f32 %v6321, %v6495
      %v6553 = vadd.f32 %v6322, %v6495
      %v6554 = vadd.f32 %v6323, %v6495
      %v6555 = vadd.f32 %v6324, %v6495
      %v6556 = vadd.f32 %v6325, %v6499
      %v6557 = vadd.f32 %v6326, %v6499
      %v6558 = vadd.f32 %v6327, %v6499
      %v6559 = vadd.f32 %v6328, %v6499
      %v6560 = vadd.f32 %v6329, %v6499
      %v6561 = vadd.f32 %v6330, %v6499
      %v6562 = vadd.f32 %v6331, %v6499
      %v6563 = vadd.f32 %v6332, %v6499
      %v6564 = vadd.f32 %v6333, %v6503
      %v6565 = vadd.f32 %v6334, %v6503
      %v6566 = vadd.f32 %v6335, %v6503
      %v6567 = vadd.f32 %v6336, %v6503
      %v6568 = vadd.f32 %v6337, %v6503
      %v6569 = vadd.f32 %v6338, %v6503
      %v6570 = vadd.f32 %v6339, %v6503
      %v6571 = vadd.f32 %v6340, %v6503
      %v6572 = vadd.f32 %v6341, %v6507
      %v6573 = vadd.f32 %v6342, %v6507
      %v6574 = vadd.f32 %v6343, %v6507
      %v6575 = vadd.f32 %v6344, %v6507
      %v6576 = vadd.f32 %v6345, %v6507
      %v6577 = vadd.f32 %v6346, %v6507
      %v6578 = vadd.f32 %v6347, %v6507
      %v6579 = vadd.f32 %v6348, %v6507
      %v6580 = vpack.c.bf16 %v4179, %v4179
      %v6581 = vpack.c.bf16 %v3392, %v3391
      %v6582 = vpack.c.bf16 %v3394, %v3393
      %v6584 = vsel %vm2748, %v6580, 0
      %6586 = vmatprep.subr.bf16.mxu0 0
      %6587 = vmatpush1.bf16.msra.mxu0 %v6581
      %6588 = vmatprep.subr.bf16.mxu0 0
      %6589 = vmatpush1.bf16.msra.mxu0 %v6582
      %6590 = vmatprep.subr.bf16.mxu0 0
      %6591 = vmatpush1.bf16.msra.mxu0 0
      %6592 = vmatprep.subr.bf16.mxu0 0
      %6593 = vmatpush1.bf16.msra.mxu0 0
      %6594 = vmatprep.subr.bf16.mxu0 0
      %6595 = vmatpush1.bf16.msra.mxu0 0
      %6596 = vmatprep.subr.bf16.mxu0 0
      %6597 = vmatpush1.bf16.msra.mxu0 0
      %6598 = vmatprep.subr.bf16.mxu0 0
      %6599 = vmatpush1.bf16.msra.mxu0 0
      %6600 = vmatprep.subr.bf16.mxu0 0
      %6601 = vmatpush1.bf16.msra.mxu0 0
      %6602 = vmatprep.subr.bf16.mxu0 0
      %6603 = vmatpush1.bf16.msra.mxu0 0
      %6604 = vmatprep.subr.bf16.mxu0 0
      %6605 = vmatpush1.bf16.msra.mxu0 0
      %6606 = vmatprep.subr.bf16.mxu0 0
      %6607 = vmatpush1.bf16.msra.mxu0 0
      %6608 = vmatprep.subr.bf16.mxu0 0
      %6609 = vmatpush1.bf16.msra.mxu0 0
      %6610 = vmatprep.subr.bf16.mxu0 0
      %6611 = vmatpush1.bf16.msra.mxu0 0
      %6612 = vmatprep.subr.bf16.mxu0 0
      %6613 = vmatpush1.bf16.msra.mxu0 0
      %6614 = vmatprep.subr.bf16.mxu0 0
      %6615 = vmatpush1.bf16.msra.mxu0 0
      %6616 = vmatprep.subr.bf16.mxu0 0
      %6617 = vmatpush1.bf16.msra.mxu0 0
      %6618 = vmatprep.mubr.bf16.mxu0 0
      %6619 = vmatmul.mubr.bf16.gmra.mrb[0].mxu0 %v6584
      %v6620 = vpop.f32.mrb[0].mxu0
      %v6621 = vadd.f32 0.0, %v6620
      %v6622 = vpop.f32.mrb[0].mxu0
      %v6623 = vpop.f32.mrb[0].mxu0
      %v6624 = vpop.f32.mrb[0].mxu0
      %6625 = vdwg.mxu0
      %v6626 = vlaneseq
      %v6627 = vshrl.u32 %v6626, 7
      %v6628 = vsub.s32 0, %v6627
      %v6629 = vrot.slane %v6621, %v6628
      %v6630 = vadd.f32 %v6516, %v6629
      %v6631 = vadd.f32 %v6517, %v6629
      %v6632 = vadd.f32 %v6518, %v6629
      %v6633 = vadd.f32 %v6519, %v6629
      %v6634 = vadd.f32 %v6520, %v6629
      %v6635 = vadd.f32 %v6521, %v6629
      %v6636 = vadd.f32 %v6522, %v6629
      %v6637 = vadd.f32 %v6523, %v6629
      %v6638 = vadd.f32 %v6524, %v6629
      %v6639 = vadd.f32 %v6525, %v6629
      %v6640 = vadd.f32 %v6526, %v6629
      %v6641 = vadd.f32 %v6527, %v6629
      %v6642 = vadd.f32 %v6528, %v6629
      %v6643 = vadd.f32 %v6529, %v6629
      %v6644 = vadd.f32 %v6530, %v6629
      %v6645 = vadd.f32 %v6531, %v6629
      %v6646 = vadd.f32 %v6532, %v6629
      %v6647 = vadd.f32 %v6533, %v6629
      %v6648 = vadd.f32 %v6534, %v6629
      %v6649 = vadd.f32 %v6535, %v6629
      %v6650 = vadd.f32 %v6536, %v6629
      %v6651 = vadd.f32 %v6537, %v6629
      %v6652 = vadd.f32 %v6538, %v6629
      %v6653 = vadd.f32 %v6539, %v6629
      %v6654 = vadd.f32 %v6540, %v6629
      %v6655 = vadd.f32 %v6541, %v6629
      %v6656 = vadd.f32 %v6542, %v6629
      %v6657 = vadd.f32 %v6543, %v6629
      %v6658 = vadd.f32 %v6544, %v6629
      %v6659 = vadd.f32 %v6545, %v6629
      %v6660 = vadd.f32 %v6546, %v6629
      %v6661 = vadd.f32 %v6547, %v6629
      %v6662 = vadd.f32 %v6548, %v6629
      %v6663 = vadd.f32 %v6549, %v6629
      %v6664 = vadd.f32 %v6550, %v6629
      %v6665 = vadd.f32 %v6551, %v6629
      %v6666 = vadd.f32 %v6552, %v6629
      %v6667 = vadd.f32 %v6553, %v6629
      %v6668 = vadd.f32 %v6554, %v6629
      %v6669 = vadd.f32 %v6555, %v6629
      %v6670 = vadd.f32 %v6556, %v6629
      %v6671 = vadd.f32 %v6557, %v6629
      %v6672 = vadd.f32 %v6558, %v6629
      %v6673 = vadd.f32 %v6559, %v6629
      %v6674 = vadd.f32 %v6560, %v6629
      %v6675 = vadd.f32 %v6561, %v6629
      %v6676 = vadd.f32 %v6562, %v6629
      %v6677 = vadd.f32 %v6563, %v6629
      %v6678 = vadd.f32 %v6564, %v6629
      %v6679 = vadd.f32 %v6565, %v6629
      %v6680 = vadd.f32 %v6566, %v6629
      %v6681 = vadd.f32 %v6567, %v6629
      %v6682 = vadd.f32 %v6568, %v6629
      %v6683 = vadd.f32 %v6569, %v6629
      %v6684 = vadd.f32 %v6570, %v6629
      %v6685 = vadd.f32 %v6571, %v6629
      %v6686 = vadd.f32 %v6572, %v6629
      %v6687 = vadd.f32 %v6573, %v6629
      %v6688 = vadd.f32 %v6574, %v6629
      %v6689 = vadd.f32 %v6575, %v6629
      %v6690 = vadd.f32 %v6576, %v6629
      %v6691 = vadd.f32 %v6577, %v6629
      %v6692 = vadd.f32 %v6578, %v6629
      %v6693 = vadd.f32 %v6579, %v6629
      %v6694 = vld [vmem:[%s6] sm:$0x1]
      %v6696 = vlaneseq
      %v6697 = vshrl.u32 %v6696, 7
      %v6698 = vsub.s32 0, %v6697
      %v6699 = vrot.slane %v6694, %v6698
      %v6701 = vadd.f32 %v6630, %v6699
      %v6702 = vadd.f32 %v6631, %v6699
      %v6703 = vadd.f32 %v6632, %v6699
      %v6704 = vadd.f32 %v6633, %v6699
      %v6705 = vadd.f32 %v6634, %v6699
      %v6706 = vadd.f32 %v6635, %v6699
      %v6707 = vadd.f32 %v6636, %v6699
      %v6708 = vadd.f32 %v6637, %v6699
      %v6709 = vadd.f32 %v6638, %v6699
      %v6710 = vadd.f32 %v6639, %v6699
      %v6711 = vadd.f32 %v6640, %v6699
      %v6712 = vadd.f32 %v6641, %v6699
      %v6713 = vadd.f32 %v6642, %v6699
      %v6714 = vadd.f32 %v6643, %v6699
      %v6715 = vadd.f32 %v6644, %v6699
      %v6716 = vadd.f32 %v6645, %v6699
      %v6717 = vadd.f32 %v6646, %v6699
      %v6718 = vadd.f32 %v6647, %v6699
      %v6719 = vadd.f32 %v6648, %v6699
      %v6720 = vadd.f32 %v6649, %v6699
      %v6721 = vadd.f32 %v6650, %v6699
      %v6722 = vadd.f32 %v6651, %v6699
      %v6723 = vadd.f32 %v6652, %v6699
      %v6724 = vadd.f32 %v6653, %v6699
      %v6725 = vadd.f32 %v6654, %v6699
      %v6726 = vadd.f32 %v6655, %v6699
      %v6727 = vadd.f32 %v6656, %v6699
      %v6728 = vadd.f32 %v6657, %v6699
      %v6729 = vadd.f32 %v6658, %v6699
      %v6730 = vadd.f32 %v6659, %v6699
      %v6731 = vadd.f32 %v6660, %v6699
      %v6732 = vadd.f32 %v6661, %v6699
      %v6733 = vadd.f32 %v6662, %v6699
      %v6734 = vadd.f32 %v6663, %v6699
      %v6735 = vadd.f32 %v6664, %v6699
      %v6736 = vadd.f32 %v6665, %v6699
      %v6737 = vadd.f32 %v6666, %v6699
      %v6738 = vadd.f32 %v6667, %v6699
      %v6739 = vadd.f32 %v6668, %v6699
      %v6740 = vadd.f32 %v6669, %v6699
      %v6741 = vadd.f32 %v6670, %v6699
      %v6742 = vadd.f32 %v6671, %v6699
      %v6743 = vadd.f32 %v6672, %v6699
      %v6744 = vadd.f32 %v6673, %v6699
      %v6745 = vadd.f32 %v6674, %v6699
      %v6746 = vadd.f32 %v6675, %v6699
      %v6747 = vadd.f32 %v6676, %v6699
      %v6748 = vadd.f32 %v6677, %v6699
      %v6749 = vadd.f32 %v6678, %v6699
      %v6750 = vadd.f32 %v6679, %v6699
      %v6751 = vadd.f32 %v6680, %v6699
      %v6752 = vadd.f32 %v6681, %v6699
      %v6753 = vadd.f32 %v6682, %v6699
      %v6754 = vadd.f32 %v6683, %v6699
      %v6755 = vadd.f32 %v6684, %v6699
      %v6756 = vadd.f32 %v6685, %v6699
      %v6757 = vadd.f32 %v6686, %v6699
      %v6758 = vadd.f32 %v6687, %v6699
      %v6759 = vadd.f32 %v6688, %v6699
      %v6760 = vadd.f32 %v6689, %v6699
      %v6761 = vadd.f32 %v6690, %v6699
      %v6762 = vadd.f32 %v6691, %v6699
      %v6763 = vadd.f32 %v6692, %v6699
      %v6764 = vadd.f32 %v6693, %v6699
      %v6765 = vmax.f32 %v6701, 0.0
      %v6766 = vmax.f32 %v6702, 0.0
      %v6767 = vmax.f32 %v6703, 0.0
      %v6768 = vmax.f32 %v6704, 0.0
      %v6769 = vmax.f32 %v6705, 0.0
      %v6770 = vmax.f32 %v6706, 0.0
      %v6771 = vmax.f32 %v6707, 0.0
      %v6772 = vmax.f32 %v6708, 0.0
      %v6773 = vmax.f32 %v6709, 0.0
      %v6774 = vmax.f32 %v6710, 0.0
      %v6775 = vmax.f32 %v6711, 0.0
      %v6776 = vmax.f32 %v6712, 0.0
      %v6777 = vmax.f32 %v6713, 0.0
      %v6778 = vmax.f32 %v6714, 0.0
      %v6779 = vmax.f32 %v6715, 0.0
      %v6780 = vmax.f32 %v6716, 0.0
      %v6781 = vmax.f32 %v6717, 0.0
      %v6782 = vmax.f32 %v6718, 0.0
      %v6783 = vmax.f32 %v6719, 0.0
      %v6784 = vmax.f32 %v6720, 0.0
      %v6785 = vmax.f32 %v6721, 0.0
      %v6786 = vmax.f32 %v6722, 0.0
      %v6787 = vmax.f32 %v6723, 0.0
      %v6788 = vmax.f32 %v6724, 0.0
      %v6789 = vmax.f32 %v6725, 0.0
      %v6790 = vmax.f32 %v6726, 0.0
      %v6791 = vmax.f32 %v6727, 0.0
      %v6792 = vmax.f32 %v6728, 0.0
      %v6793 = vmax.f32 %v6729, 0.0
      %v6794 = vmax.f32 %v6730, 0.0
      %v6795 = vmax.f32 %v6731, 0.0
      %v6796 = vmax.f32 %v6732, 0.0
      %v6797 = vmax.f32 %v6733, 0.0
      %v6798 = vmax.f32 %v6734, 0.0
      %v6799 = vmax.f32 %v6735, 0.0
      %v6800 = vmax.f32 %v6736, 0.0
      %v6801 = vmax.f32 %v6737, 0.0
      %v6802 = vmax.f32 %v6738, 0.0
      %v6803 = vmax.f32 %v6739, 0.0
      %v6804 = vmax.f32 %v6740, 0.0
      %v6805 = vmax.f32 %v6741, 0.0
      %v6806 = vmax.f32 %v6742, 0.0
      %v6807 = vmax.f32 %v6743, 0.0
      %v6808 = vmax.f32 %v6744, 0.0
      %v6809 = vmax.f32 %v6745, 0.0
      %v6810 = vmax.f32 %v6746, 0.0
      %v6811 = vmax.f32 %v6747, 0.0
      %v6812 = vmax.f32 %v6748, 0.0
      %v6813 = vmax.f32 %v6749, 0.0
      %v6814 = vmax.f32 %v6750, 0.0
      %v6815 = vmax.f32 %v6751, 0.0
      %v6816 = vmax.f32 %v6752, 0.0
      %v6817 = vmax.f32 %v6753, 0.0
      %v6818 = vmax.f32 %v6754, 0.0
      %v6819 = vmax.f32 %v6755, 0.0
      %v6820 = vmax.f32 %v6756, 0.0
      %v6821 = vmax.f32 %v6757, 0.0
      %v6822 = vmax.f32 %v6758, 0.0
      %v6823 = vmax.f32 %v6759, 0.0
      %v6824 = vmax.f32 %v6760, 0.0
      %v6825 = vmax.f32 %v6761, 0.0
      %v6826 = vmax.f32 %v6762, 0.0
      %v6827 = vmax.f32 %v6763, 0.0
      %v6828 = vmax.f32 %v6764, 0.0
      %v6829 = vld [vmem:[%s7] sm:$0xff]
      %v6830 = vld [vmem:[%s7 + $0x8] sm:$0xff]
      %v6831 = vld [vmem:[%s7 + $0x10] sm:$0xff]
      %v6832 = vld [vmem:[%s7 + $0x18] sm:$0xff]
      %v6833 = vld [vmem:[%s7 + $0x20] sm:$0xff]
      %v6834 = vld [vmem:[%s7 + $0x28] sm:$0xff]
      %v6835 = vld [vmem:[%s7 + $0x30] sm:$0xff]
      %v6836 = vld [vmem:[%s7 + $0x38] sm:$0xff]
      %v6837 = vld [vmem:[%s7 + $0x40] sm:$0xff]
      %v6838 = vld [vmem:[%s7 + $0x48] sm:$0xff]
      %v6839 = vld [vmem:[%s7 + $0x50] sm:$0xff]
      %v6840 = vld [vmem:[%s7 + $0x58] sm:$0xff]
      %v6841 = vld [vmem:[%s7 + $0x60] sm:$0xff]
      %v6842 = vld [vmem:[%s7 + $0x68] sm:$0xff]
      %v6843 = vld [vmem:[%s7 + $0x70] sm:$0xff]
      %v6844 = vld [vmem:[%s7 + $0x78] sm:$0xff]
      %v6845 = vld [vmem:[%s7 + $0x80] sm:$0xff]
      %v6846 = vld [vmem:[%s7 + $0x88] sm:$0xff]
      %v6847 = vld [vmem:[%s7 + $0x90] sm:$0xff]
      %v6848 = vld [vmem:[%s7 + $0x98] sm:$0xff]
      %v6849 = vld [vmem:[%s7 + $0xa0] sm:$0xff]
      %v6850 = vld [vmem:[%s7 + $0xa8] sm:$0xff]
      %v6851 = vld [vmem:[%s7 + $0xb0] sm:$0xff]
      %v6852 = vld [vmem:[%s7 + $0xb8] sm:$0xff]
      %v6853 = vld [vmem:[%s7 + $0xc0] sm:$0xff]
      %v6854 = vld [vmem:[%s7 + $0xc8] sm:$0xff]
      %v6855 = vld [vmem:[%s7 + $0xd0] sm:$0xff]
      %v6856 = vld [vmem:[%s7 + $0xd8] sm:$0xff]
      %v6857 = vld [vmem:[%s7 + $0xe0] sm:$0xff]
      %v6858 = vld [vmem:[%s7 + $0xe8] sm:$0xff]
      %v6859 = vld [vmem:[%s7 + $0xf0] sm:$0xff]
      %v6860 = vld [vmem:[%s7 + $0xf8] sm:$0xff]
      %v6861 = vsel %vm2748, %v6765, 0.0
      %v6862 = vsel %vm2748, %v6773, 0.0
      %v6863 = vadd.f32 %v6861, %v6862
      %v6864 = vsel %vm2748, %v6781, 0.0
      %v6865 = vadd.f32 %v6863, %v6864
      %v6866 = vsel %vm2748, %v6789, 0.0
      %v6867 = vadd.f32 %v6865, %v6866
      %v6868 = vsel %vm2748, %v6797, 0.0
      %v6869 = vadd.f32 %v6867, %v6868
      %v6870 = vsel %vm2748, %v6805, 0.0
      %v6871 = vadd.f32 %v6869, %v6870
      %v6872 = vsel %vm2748, %v6813, 0.0
      %v6873 = vadd.f32 %v6871, %v6872
      %v6874 = vsel %vm2748, %v6821, 0.0
      %v6875 = vadd.f32 %v6873, %v6874
      %v6876 = vsel %vm2748, %v6766, 0.0
      %v6877 = vsel %vm2748, %v6774, 0.0
      %v6878 = vadd.f32 %v6876, %v6877
      %v6879 = vsel %vm2748, %v6782, 0.0
      %v6880 = vadd.f32 %v6878, %v6879
      %v6881 = vsel %vm2748, %v6790, 0.0
      %v6882 = vadd.f32 %v6880, %v6881
      %v6883 = vsel %vm2748, %v6798, 0.0
      %v6884 = vadd.f32 %v6882, %v6883
      %v6885 = vsel %vm2748, %v6806, 0.0
      %v6886 = vadd.f32 %v6884, %v6885
      %v6887 = vsel %vm2748, %v6814, 0.0
      %v6888 = vadd.f32 %v6886, %v6887
      %v6889 = vsel %vm2748, %v6822, 0.0
      %v6890 = vadd.f32 %v6888, %v6889
      %v6891 = vsel %vm2748, %v6767, 0.0
      %v6892 = vsel %vm2748, %v6775, 0.0
      %v6893 = vadd.f32 %v6891, %v6892
      %v6894 = vsel %vm2748, %v6783, 0.0
      %v6895 = vadd.f32 %v6893, %v6894
      %v6896 = vsel %vm2748, %v6791, 0.0
      %v6897 = vadd.f32 %v6895, %v6896
      %v6898 = vsel %vm2748, %v6799, 0.0
      %v6899 = vadd.f32 %v6897, %v6898
      %v6900 = vsel %vm2748, %v6807, 0.0
      %v6901 = vadd.f32 %v6899, %v6900
      %v6902 = vsel %vm2748, %v6815, 0.0
      %v6903 = vadd.f32 %v6901, %v6902
      %v6904 = vsel %vm2748, %v6823, 0.0
      %v6905 = vadd.f32 %v6903, %v6904
      %v6906 = vsel %vm2748, %v6768, 0.0
      %v6907 = vsel %vm2748, %v6776, 0.0
      %v6908 = vadd.f32 %v6906, %v6907
      %v6909 = vsel %vm2748, %v6784, 0.0
      %v6910 = vadd.f32 %v6908, %v6909
      %v6911 = vsel %vm2748, %v6792, 0.0
      %v6912 = vadd.f32 %v6910, %v6911
      %v6913 = vsel %vm2748, %v6800, 0.0
      %v6914 = vadd.f32 %v6912, %v6913
      %v6915 = vsel %vm2748, %v6808, 0.0
      %v6916 = vadd.f32 %v6914, %v6915
      %v6917 = vsel %vm2748, %v6816, 0.0
      %v6918 = vadd.f32 %v6916, %v6917
      %v6919 = vsel %vm2748, %v6824, 0.0
      %v6920 = vadd.f32 %v6918, %v6919
      %v6921 = vsel %vm2748, %v6769, 0.0
      %v6922 = vsel %vm2748, %v6777, 0.0
      %v6923 = vadd.f32 %v6921, %v6922
      %v6924 = vsel %vm2748, %v6785, 0.0
      %v6925 = vadd.f32 %v6923, %v6924
      %v6926 = vsel %vm2748, %v6793, 0.0
      %v6927 = vadd.f32 %v6925, %v6926
      %v6928 = vsel %vm2748, %v6801, 0.0
      %v6929 = vadd.f32 %v6927, %v6928
      %v6930 = vsel %vm2748, %v6809, 0.0
      %v6931 = vadd.f32 %v6929, %v6930
      %v6932 = vsel %vm2748, %v6817, 0.0
      %v6933 = vadd.f32 %v6931, %v6932
      %v6934 = vsel %vm2748, %v6825, 0.0
      %v6935 = vadd.f32 %v6933, %v6934
      %v6936 = vsel %vm2748, %v6770, 0.0
      %v6937 = vsel %vm2748, %v6778, 0.0
      %v6938 = vadd.f32 %v6936, %v6937
      %v6939 = vsel %vm2748, %v6786, 0.0
      %v6940 = vadd.f32 %v6938, %v6939
      %v6941 = vsel %vm2748, %v6794, 0.0
      %v6942 = vadd.f32 %v6940, %v6941
      %v6943 = vsel %vm2748, %v6802, 0.0
      %v6944 = vadd.f32 %v6942, %v6943
      %v6945 = vsel %vm2748, %v6810, 0.0
      %v6946 = vadd.f32 %v6944, %v6945
      %v6947 = vsel %vm2748, %v6818, 0.0
      %v6948 = vadd.f32 %v6946, %v6947
      %v6949 = vsel %vm2748, %v6826, 0.0
      %v6950 = vadd.f32 %v6948, %v6949
      %v6951 = vsel %vm2748, %v6771, 0.0
      %v6952 = vsel %vm2748, %v6779, 0.0
      %v6953 = vadd.f32 %v6951, %v6952
      %v6954 = vsel %vm2748, %v6787, 0.0
      %v6955 = vadd.f32 %v6953, %v6954
      %v6956 = vsel %vm2748, %v6795, 0.0
      %v6957 = vadd.f32 %v6955, %v6956
      %v6958 = vsel %vm2748, %v6803, 0.0
      %v6959 = vadd.f32 %v6957, %v6958
      %v6960 = vsel %vm2748, %v6811, 0.0
      %v6961 = vadd.f32 %v6959, %v6960
      %v6962 = vsel %vm2748, %v6819, 0.0
      %v6963 = vadd.f32 %v6961, %v6962
      %v6964 = vsel %vm2748, %v6827, 0.0
      %v6965 = vadd.f32 %v6963, %v6964
      %v6966 = vsel %vm2748, %v6772, 0.0
      %v6967 = vsel %vm2748, %v6780, 0.0
      %v6968 = vadd.f32 %v6966, %v6967
      %v6969 = vsel %vm2748, %v6788, 0.0
      %v6970 = vadd.f32 %v6968, %v6969
      %v6971 = vsel %vm2748, %v6796, 0.0
      %v6972 = vadd.f32 %v6970, %v6971
      %v6973 = vsel %vm2748, %v6804, 0.0
      %v6974 = vadd.f32 %v6972, %v6973
      %v6975 = vsel %vm2748, %v6812, 0.0
      %v6976 = vadd.f32 %v6974, %v6975
      %v6977 = vsel %vm2748, %v6820, 0.0
      %v6978 = vadd.f32 %v6976, %v6977
      %v6979 = vsel %vm2748, %v6828, 0.0
      %v6980 = vadd.f32 %v6978, %v6979
      %v6981 = vmul.f32 %v6875, %v3515
      %v6982 = vmul.f32 %v6890, %v3515
      %v6983 = vmul.f32 %v6905, %v3515
      %v6984 = vmul.f32 %v6920, %v3515
      %v6985 = vmul.f32 %v6935, %v3515
      %v6986 = vmul.f32 %v6950, %v3515
      %v6987 = vmul.f32 %v6965, %v3515
      %v6988 = vmul.f32 %v6980, %v3515
      %v6989 = vadd.f32 %v6861, %v6876
      %v6990 = vadd.f32 %v6989, %v6891
      %v6991 = vadd.f32 %v6990, %v6906
      %v6992 = vadd.f32 %v6991, %v6921
      %v6993 = vadd.f32 %v6992, %v6936
      %v6994 = vadd.f32 %v6993, %v6951
      %v6995 = vadd.f32 %v6994, %v6966
      %v6996 = vadd.f32 %v6862, %v6877
      %v6997 = vadd.f32 %v6996, %v6892
      %v6998 = vadd.f32 %v6997, %v6907
      %v6999 = vadd.f32 %v6998, %v6922
      %v7000 = vadd.f32 %v6999, %v6937
      %v7001 = vadd.f32 %v7000, %v6952
      %v7002 = vadd.f32 %v7001, %v6967
      %v7003 = vadd.f32 %v6864, %v6879
      %v7004 = vadd.f32 %v7003, %v6894
      %v7005 = vadd.f32 %v7004, %v6909
      %v7006 = vadd.f32 %v7005, %v6924
      %v7007 = vadd.f32 %v7006, %v6939
      %v7008 = vadd.f32 %v7007, %v6954
      %v7009 = vadd.f32 %v7008, %v6969
      %v7010 = vadd.f32 %v6866, %v6881
      %v7011 = vadd.f32 %v7010, %v6896
      %v7012 = vadd.f32 %v7011, %v6911
      %v7013 = vadd.f32 %v7012, %v6926
      %v7014 = vadd.f32 %v7013, %v6941
      %v7015 = vadd.f32 %v7014, %v6956
      %v7016 = vadd.f32 %v7015, %v6971
      %v7017 = vadd.f32 %v6868, %v6883
      %v7018 = vadd.f32 %v7017, %v6898
      %v7019 = vadd.f32 %v7018, %v6913
      %v7020 = vadd.f32 %v7019, %v6928
      %v7021 = vadd.f32 %v7020, %v6943
      %v7022 = vadd.f32 %v7021, %v6958
      %v7023 = vadd.f32 %v7022, %v6973
      %v7024 = vadd.f32 %v6870, %v6885
      %v7025 = vadd.f32 %v7024, %v6900
      %v7026 = vadd.f32 %v7025, %v6915
      %v7027 = vadd.f32 %v7026, %v6930
      %v7028 = vadd.f32 %v7027, %v6945
      %v7029 = vadd.f32 %v7028, %v6960
      %v7030 = vadd.f32 %v7029, %v6975
      %v7031 = vadd.f32 %v6872, %v6887
      %v7032 = vadd.f32 %v7031, %v6902
      %v7033 = vadd.f32 %v7032, %v6917
      %v7034 = vadd.f32 %v7033, %v6932
      %v7035 = vadd.f32 %v7034, %v6947
      %v7036 = vadd.f32 %v7035, %v6962
      %v7037 = vadd.f32 %v7036, %v6977
      %v7038 = vadd.f32 %v6874, %v6889
      %v7039 = vadd.f32 %v7038, %v6904
      %v7040 = vadd.f32 %v7039, %v6919
      %v7041 = vadd.f32 %v7040, %v6934
      %v7042 = vadd.f32 %v7041, %v6949
      %v7043 = vadd.f32 %v7042, %v6964
      %v7044 = vadd.f32 %v7043, %v6979
      %v7045 = vmul.f32 %v6995, %v3515
      %v7046 = vmul.f32 %v7002, %v3515
      %v7047 = vmul.f32 %v7009, %v3515
      %v7048 = vmul.f32 %v7016, %v3515
      %v7049 = vmul.f32 %v7023, %v3515
      %v7050 = vmul.f32 %v7030, %v3515
      %v7051 = vmul.f32 %v7037, %v3515
      %v7052 = vmul.f32 %v7044, %v3515
      %v7053 = vrot.slane %v6861, 4
      %v7054 = vadd.f32 %v6861, %v7053
      %v7055 = vrot.slane %v7054, 2
      %v7056 = vadd.f32 %v7054, %v7055
      %v7057 = vrot.slane %v7056, 1
      %v7058 = vadd.f32 %v7056, %v7057
      %v7059 = vrot.slane %v6876, 4
      %v7060 = vadd.f32 %v6876, %v7059
      %v7061 = vrot.slane %v7060, 2
      %v7062 = vadd.f32 %v7060, %v7061
      %v7063 = vrot.slane %v7062, 1
      %v7064 = vadd.f32 %v7062, %v7063
      %v7065 = vrot.slane %v6891, 4
      %v7066 = vadd.f32 %v6891, %v7065
      %v7067 = vrot.slane %v7066, 2
      %v7068 = vadd.f32 %v7066, %v7067
      %v7069 = vrot.slane %v7068, 1
      %v7070 = vadd.f32 %v7068, %v7069
      %v7071 = vrot.slane %v6906, 4
      %v7072 = vadd.f32 %v6906, %v7071
      %v7073 = vrot.slane %v7072, 2
      %v7074 = vadd.f32 %v7072, %v7073
      %v7075 = vrot.slane %v7074, 1
      %v7076 = vadd.f32 %v7074, %v7075
      %v7077 = vrot.slane %v6921, 4
      %v7078 = vadd.f32 %v6921, %v7077
      %v7079 = vrot.slane %v7078, 2
      %v7080 = vadd.f32 %v7078, %v7079
      %v7081 = vrot.slane %v7080, 1
      %v7082 = vadd.f32 %v7080, %v7081
      %v7083 = vrot.slane %v6936, 4
      %v7084 = vadd.f32 %v6936, %v7083
      %v7085 = vrot.slane %v7084, 2
      %v7086 = vadd.f32 %v7084, %v7085
      %v7087 = vrot.slane %v7086, 1
      %v7088 = vadd.f32 %v7086, %v7087
      %v7089 = vrot.slane %v6951, 4
      %v7090 = vadd.f32 %v6951, %v7089
      %v7091 = vrot.slane %v7090, 2
      %v7092 = vadd.f32 %v7090, %v7091
      %v7093 = vrot.slane %v7092, 1
      %v7094 = vadd.f32 %v7092, %v7093
      %v7095 = vrot.slane %v6966, 4
      %v7096 = vadd.f32 %v6966, %v7095
      %v7097 = vrot.slane %v7096, 2
      %v7098 = vadd.f32 %v7096, %v7097
      %v7099 = vrot.slane %v7098, 1
      %v7100 = vadd.f32 %v7098, %v7099
      %v7101 = vrot.slane %v6862, 4
      %v7102 = vadd.f32 %v6862, %v7101
      %v7103 = vrot.slane %v7102, 2
      %v7104 = vadd.f32 %v7102, %v7103
      %v7105 = vrot.slane %v7104, 1
      %v7106 = vadd.f32 %v7104, %v7105
      %v7107 = vrot.slane %v6877, 4
      %v7108 = vadd.f32 %v6877, %v7107
      %v7109 = vrot.slane %v7108, 2
      %v7110 = vadd.f32 %v7108, %v7109
      %v7111 = vrot.slane %v7110, 1
      %v7112 = vadd.f32 %v7110, %v7111
      %v7113 = vrot.slane %v6892, 4
      %v7114 = vadd.f32 %v6892, %v7113
      %v7115 = vrot.slane %v7114, 2
      %v7116 = vadd.f32 %v7114, %v7115
      %v7117 = vrot.slane %v7116, 1
      %v7118 = vadd.f32 %v7116, %v7117
      %v7119 = vrot.slane %v6907, 4
      %v7120 = vadd.f32 %v6907, %v7119
      %v7121 = vrot.slane %v7120, 2
      %v7122 = vadd.f32 %v7120, %v7121
      %v7123 = vrot.slane %v7122, 1
      %v7124 = vadd.f32 %v7122, %v7123
      %v7125 = vrot.slane %v6922, 4
      %v7126 = vadd.f32 %v6922, %v7125
      %v7127 = vrot.slane %v7126, 2
      %v7128 = vadd.f32 %v7126, %v7127
      %v7129 = vrot.slane %v7128, 1
      %v7130 = vadd.f32 %v7128, %v7129
      %v7131 = vrot.slane %v6937, 4
      %v7132 = vadd.f32 %v6937, %v7131
      %v7133 = vrot.slane %v7132, 2
      %v7134 = vadd.f32 %v7132, %v7133
      %v7135 = vrot.slane %v7134, 1
      %v7136 = vadd.f32 %v7134, %v7135
      %v7137 = vrot.slane %v6952, 4
      %v7138 = vadd.f32 %v6952, %v7137
      %v7139 = vrot.slane %v7138, 2
      %v7140 = vadd.f32 %v7138, %v7139
      %v7141 = vrot.slane %v7140, 1
      %v7142 = vadd.f32 %v7140, %v7141
      %v7143 = vrot.slane %v6967, 4
      %v7144 = vadd.f32 %v6967, %v7143
      %v7145 = vrot.slane %v7144, 2
      %v7146 = vadd.f32 %v7144, %v7145
      %v7147 = vrot.slane %v7146, 1
      %v7148 = vadd.f32 %v7146, %v7147
      %v7149 = vrot.slane %v6864, 4
      %v7150 = vadd.f32 %v6864, %v7149
      %v7151 = vrot.slane %v7150, 2
      %v7152 = vadd.f32 %v7150, %v7151
      %v7153 = vrot.slane %v7152, 1
      %v7154 = vadd.f32 %v7152, %v7153
      %v7155 = vrot.slane %v6879, 4
      %v7156 = vadd.f32 %v6879, %v7155
      %v7157 = vrot.slane %v7156, 2
      %v7158 = vadd.f32 %v7156, %v7157
      %v7159 = vrot.slane %v7158, 1
      %v7160 = vadd.f32 %v7158, %v7159
      %v7161 = vrot.slane %v6894, 4
      %v7162 = vadd.f32 %v6894, %v7161
      %v7163 = vrot.slane %v7162, 2
      %v7164 = vadd.f32 %v7162, %v7163
      %v7165 = vrot.slane %v7164, 1
      %v7166 = vadd.f32 %v7164, %v7165
      %v7167 = vrot.slane %v6909, 4
      %v7168 = vadd.f32 %v6909, %v7167
      %v7169 = vrot.slane %v7168, 2
      %v7170 = vadd.f32 %v7168, %v7169
      %v7171 = vrot.slane %v7170, 1
      %v7172 = vadd.f32 %v7170, %v7171
      %v7173 = vrot.slane %v6924, 4
      %v7174 = vadd.f32 %v6924, %v7173
      %v7175 = vrot.slane %v7174, 2
      %v7176 = vadd.f32 %v7174, %v7175
      %v7177 = vrot.slane %v7176, 1
      %v7178 = vadd.f32 %v7176, %v7177
      %v7179 = vrot.slane %v6939, 4
      %v7180 = vadd.f32 %v6939, %v7179
      %v7181 = vrot.slane %v7180, 2
      %v7182 = vadd.f32 %v7180, %v7181
      %v7183 = vrot.slane %v7182, 1
      %v7184 = vadd.f32 %v7182, %v7183
      %v7185 = vrot.slane %v6954, 4
      %v7186 = vadd.f32 %v6954, %v7185
      %v7187 = vrot.slane %v7186, 2
      %v7188 = vadd.f32 %v7186, %v7187
      %v7189 = vrot.slane %v7188, 1
      %v7190 = vadd.f32 %v7188, %v7189
      %v7191 = vrot.slane %v6969, 4
      %v7192 = vadd.f32 %v6969, %v7191
      %v7193 = vrot.slane %v7192, 2
      %v7194 = vadd.f32 %v7192, %v7193
      %v7195 = vrot.slane %v7194, 1
      %v7196 = vadd.f32 %v7194, %v7195
      %v7197 = vrot.slane %v6866, 4
      %v7198 = vadd.f32 %v6866, %v7197
      %v7199 = vrot.slane %v7198, 2
      %v7200 = vadd.f32 %v7198, %v7199
      %v7201 = vrot.slane %v7200, 1
      %v7202 = vadd.f32 %v7200, %v7201
      %v7203 = vrot.slane %v6881, 4
      %v7204 = vadd.f32 %v6881, %v7203
      %v7205 = vrot.slane %v7204, 2
      %v7206 = vadd.f32 %v7204, %v7205
      %v7207 = vrot.slane %v7206, 1
      %v7208 = vadd.f32 %v7206, %v7207
      %v7209 = vrot.slane %v6896, 4
      %v7210 = vadd.f32 %v6896, %v7209
      %v7211 = vrot.slane %v7210, 2
      %v7212 = vadd.f32 %v7210, %v7211
      %v7213 = vrot.slane %v7212, 1
      %v7214 = vadd.f32 %v7212, %v7213
      %v7215 = vrot.slane %v6911, 4
      %v7216 = vadd.f32 %v6911, %v7215
      %v7217 = vrot.slane %v7216, 2
      %v7218 = vadd.f32 %v7216, %v7217
      %v7219 = vrot.slane %v7218, 1
      %v7220 = vadd.f32 %v7218, %v7219
      %v7221 = vrot.slane %v6926, 4
      %v7222 = vadd.f32 %v6926, %v7221
      %v7223 = vrot.slane %v7222, 2
      %v7224 = vadd.f32 %v7222, %v7223
      %v7225 = vrot.slane %v7224, 1
      %v7226 = vadd.f32 %v7224, %v7225
      %v7227 = vrot.slane %v6941, 4
      %v7228 = vadd.f32 %v6941, %v7227
      %v7229 = vrot.slane %v7228, 2
      %v7230 = vadd.f32 %v7228, %v7229
      %v7231 = vrot.slane %v7230, 1
      %v7232 = vadd.f32 %v7230, %v7231
      %v7233 = vrot.slane %v6956, 4
      %v7234 = vadd.f32 %v6956, %v7233
      %v7235 = vrot.slane %v7234, 2
      %v7236 = vadd.f32 %v7234, %v7235
      %v7237 = vrot.slane %v7236, 1
      %v7238 = vadd.f32 %v7236, %v7237
      %v7239 = vrot.slane %v6971, 4
      %v7240 = vadd.f32 %v6971, %v7239
      %v7241 = vrot.slane %v7240, 2
      %v7242 = vadd.f32 %v7240, %v7241
      %v7243 = vrot.slane %v7242, 1
      %v7244 = vadd.f32 %v7242, %v7243
      %v7245 = vrot.slane %v6868, 4
      %v7246 = vadd.f32 %v6868, %v7245
      %v7247 = vrot.slane %v7246, 2
      %v7248 = vadd.f32 %v7246, %v7247
      %v7249 = vrot.slane %v7248, 1
      %v7250 = vadd.f32 %v7248, %v7249
      %v7251 = vrot.slane %v6883, 4
      %v7252 = vadd.f32 %v6883, %v7251
      %v7253 = vrot.slane %v7252, 2
      %v7254 = vadd.f32 %v7252, %v7253
      %v7255 = vrot.slane %v7254, 1
      %v7256 = vadd.f32 %v7254, %v7255
      %v7257 = vrot.slane %v6898, 4
      %v7258 = vadd.f32 %v6898, %v7257
      %v7259 = vrot.slane %v7258, 2
      %v7260 = vadd.f32 %v7258, %v7259
      %v7261 = vrot.slane %v7260, 1
      %v7262 = vadd.f32 %v7260, %v7261
      %v7263 = vrot.slane %v6913, 4
      %v7264 = vadd.f32 %v6913, %v7263
      %v7265 = vrot.slane %v7264, 2
      %v7266 = vadd.f32 %v7264, %v7265
      %v7267 = vrot.slane %v7266, 1
      %v7268 = vadd.f32 %v7266, %v7267
      %v7269 = vrot.slane %v6928, 4
      %v7270 = vadd.f32 %v6928, %v7269
      %v7271 = vrot.slane %v7270, 2
      %v7272 = vadd.f32 %v7270, %v7271
      %v7273 = vrot.slane %v7272, 1
      %v7274 = vadd.f32 %v7272, %v7273
      %v7275 = vrot.slane %v6943, 4
      %v7276 = vadd.f32 %v6943, %v7275
      %v7277 = vrot.slane %v7276, 2
      %v7278 = vadd.f32 %v7276, %v7277
      %v7279 = vrot.slane %v7278, 1
      %v7280 = vadd.f32 %v7278, %v7279
      %v7281 = vrot.slane %v6958, 4
      %v7282 = vadd.f32 %v6958, %v7281
      %v7283 = vrot.slane %v7282, 2
      %v7284 = vadd.f32 %v7282, %v7283
      %v7285 = vrot.slane %v7284, 1
      %v7286 = vadd.f32 %v7284, %v7285
      %v7287 = vrot.slane %v6973, 4
      %v7288 = vadd.f32 %v6973, %v7287
      %v7289 = vrot.slane %v7288, 2
      %v7290 = vadd.f32 %v7288, %v7289
      %v7291 = vrot.slane %v7290, 1
      %v7292 = vadd.f32 %v7290, %v7291
      %v7293 = vrot.slane %v6870, 4
      %v7294 = vadd.f32 %v6870, %v7293
      %v7295 = vrot.slane %v7294, 2
      %v7296 = vadd.f32 %v7294, %v7295
      %v7297 = vrot.slane %v7296, 1
      %v7298 = vadd.f32 %v7296, %v7297
      %v7299 = vrot.slane %v6885, 4
      %v7300 = vadd.f32 %v6885, %v7299
      %v7301 = vrot.slane %v7300, 2
      %v7302 = vadd.f32 %v7300, %v7301
      %v7303 = vrot.slane %v7302, 1
      %v7304 = vadd.f32 %v7302, %v7303
      %v7305 = vrot.slane %v6900, 4
      %v7306 = vadd.f32 %v6900, %v7305
      %v7307 = vrot.slane %v7306, 2
      %v7308 = vadd.f32 %v7306, %v7307
      %v7309 = vrot.slane %v7308, 1
      %v7310 = vadd.f32 %v7308, %v7309
      %v7311 = vrot.slane %v6915, 4
      %v7312 = vadd.f32 %v6915, %v7311
      %v7313 = vrot.slane %v7312, 2
      %v7314 = vadd.f32 %v7312, %v7313
      %v7315 = vrot.slane %v7314, 1
      %v7316 = vadd.f32 %v7314, %v7315
      %v7317 = vrot.slane %v6930, 4
      %v7318 = vadd.f32 %v6930, %v7317
      %v7319 = vrot.slane %v7318, 2
      %v7320 = vadd.f32 %v7318, %v7319
      %v7321 = vrot.slane %v7320, 1
      %v7322 = vadd.f32 %v7320, %v7321
      %v7323 = vrot.slane %v6945, 4
      %v7324 = vadd.f32 %v6945, %v7323
      %v7325 = vrot.slane %v7324, 2
      %v7326 = vadd.f32 %v7324, %v7325
      %v7327 = vrot.slane %v7326, 1
      %v7328 = vadd.f32 %v7326, %v7327
      %v7329 = vrot.slane %v6960, 4
      %v7330 = vadd.f32 %v6960, %v7329
      %v7331 = vrot.slane %v7330, 2
      %v7332 = vadd.f32 %v7330, %v7331
      %v7333 = vrot.slane %v7332, 1
      %v7334 = vadd.f32 %v7332, %v7333
      %v7335 = vrot.slane %v6975, 4
      %v7336 = vadd.f32 %v6975, %v7335
      %v7337 = vrot.slane %v7336, 2
      %v7338 = vadd.f32 %v7336, %v7337
      %v7339 = vrot.slane %v7338, 1
      %v7340 = vadd.f32 %v7338, %v7339
      %v7341 = vrot.slane %v6872, 4
      %v7342 = vadd.f32 %v6872, %v7341
      %v7343 = vrot.slane %v7342, 2
      %v7344 = vadd.f32 %v7342, %v7343
      %v7345 = vrot.slane %v7344, 1
      %v7346 = vadd.f32 %v7344, %v7345
      %v7347 = vrot.slane %v6887, 4
      %v7348 = vadd.f32 %v6887, %v7347
      %v7349 = vrot.slane %v7348, 2
      %v7350 = vadd.f32 %v7348, %v7349
      %v7351 = vrot.slane %v7350, 1
      %v7352 = vadd.f32 %v7350, %v7351
      %v7353 = vrot.slane %v6902, 4
      %v7354 = vadd.f32 %v6902, %v7353
      %v7355 = vrot.slane %v7354, 2
      %v7356 = vadd.f32 %v7354, %v7355
      %v7357 = vrot.slane %v7356, 1
      %v7358 = vadd.f32 %v7356, %v7357
      %v7359 = vrot.slane %v6917, 4
      %v7360 = vadd.f32 %v6917, %v7359
      %v7361 = vrot.slane %v7360, 2
      %v7362 = vadd.f32 %v7360, %v7361
      %v7363 = vrot.slane %v7362, 1
      %v7364 = vadd.f32 %v7362, %v7363
      %v7365 = vrot.slane %v6932, 4
      %v7366 = vadd.f32 %v6932, %v7365
      %v7367 = vrot.slane %v7366, 2
      %v7368 = vadd.f32 %v7366, %v7367
      %v7369 = vrot.slane %v7368, 1
      %v7370 = vadd.f32 %v7368, %v7369
      %v7371 = vrot.slane %v6947, 4
      %v7372 = vadd.f32 %v6947, %v7371
      %v7373 = vrot.slane %v7372, 2
      %v7374 = vadd.f32 %v7372, %v7373
      %v7375 = vrot.slane %v7374, 1
      %v7376 = vadd.f32 %v7374, %v7375
      %v7377 = vrot.slane %v6962, 4
      %v7378 = vadd.f32 %v6962, %v7377
      %v7379 = vrot.slane %v7378, 2
      %v7380 = vadd.f32 %v7378, %v7379
      %v7381 = vrot.slane %v7380, 1
      %v7382 = vadd.f32 %v7380, %v7381
      %v7383 = vrot.slane %v6977, 4
      %v7384 = vadd.f32 %v6977, %v7383
      %v7385 = vrot.slane %v7384, 2
      %v7386 = vadd.f32 %v7384, %v7385
      %v7387 = vrot.slane %v7386, 1
      %v7388 = vadd.f32 %v7386, %v7387
      %v7389 = vrot.slane %v6874, 4
      %v7390 = vadd.f32 %v6874, %v7389
      %v7391 = vrot.slane %v7390, 2
      %v7392 = vadd.f32 %v7390, %v7391
      %v7393 = vrot.slane %v7392, 1
      %v7394 = vadd.f32 %v7392, %v7393
      %v7395 = vrot.slane %v6889, 4
      %v7396 = vadd.f32 %v6889, %v7395
      %v7397 = vrot.slane %v7396, 2
      %v7398 = vadd.f32 %v7396, %v7397
      %v7399 = vrot.slane %v7398, 1
      %v7400 = vadd.f32 %v7398, %v7399
      %v7401 = vrot.slane %v6904, 4
      %v7402 = vadd.f32 %v6904, %v7401
      %v7403 = vrot.slane %v7402, 2
      %v7404 = vadd.f32 %v7402, %v7403
      %v7405 = vrot.slane %v7404, 1
      %v7406 = vadd.f32 %v7404, %v7405
      %v7407 = vrot.slane %v6919, 4
      %v7408 = vadd.f32 %v6919, %v7407
      %v7409 = vrot.slane %v7408, 2
      %v7410 = vadd.f32 %v7408, %v7409
      %v7411 = vrot.slane %v7410, 1
      %v7412 = vadd.f32 %v7410, %v7411
      %v7413 = vrot.slane %v6934, 4
      %v7414 = vadd.f32 %v6934, %v7413
      %v7415 = vrot.slane %v7414, 2
      %v7416 = vadd.f32 %v7414, %v7415
      %v7417 = vrot.slane %v7416, 1
      %v7418 = vadd.f32 %v7416, %v7417
      %v7419 = vrot.slane %v6949, 4
      %v7420 = vadd.f32 %v6949, %v7419
      %v7421 = vrot.slane %v7420, 2
      %v7422 = vadd.f32 %v7420, %v7421
      %v7423 = vrot.slane %v7422, 1
      %v7424 = vadd.f32 %v7422, %v7423
      %v7425 = vrot.slane %v6964, 4
      %v7426 = vadd.f32 %v6964, %v7425
      %v7427 = vrot.slane %v7426, 2
      %v7428 = vadd.f32 %v7426, %v7427
      %v7429 = vrot.slane %v7428, 1
      %v7430 = vadd.f32 %v7428, %v7429
      %v7431 = vrot.slane %v6979, 4
      %v7432 = vadd.f32 %v6979, %v7431
      %v7433 = vrot.slane %v7432, 2
      %v7434 = vadd.f32 %v7432, %v7433
      %v7435 = vrot.slane %v7434, 1
      %v7436 = vadd.f32 %v7434, %v7435
      %v7437 = vmul.f32 %v7058, %v3515
      %v7438 = vmul.f32 %v7064, %v3515
      %v7439 = vmul.f32 %v7070, %v3515
      %v7440 = vmul.f32 %v7076, %v3515
      %v7441 = vmul.f32 %v7082, %v3515
      %v7442 = vmul.f32 %v7088, %v3515
      %v7443 = vmul.f32 %v7094, %v3515
      %v7444 = vmul.f32 %v7100, %v3515
      %v7445 = vmul.f32 %v7106, %v3515
      %v7446 = vmul.f32 %v7112, %v3515
      %v7447 = vmul.f32 %v7118, %v3515
      %v7448 = vmul.f32 %v7124, %v3515
      %v7449 = vmul.f32 %v7130, %v3515
      %v7450 = vmul.f32 %v7136, %v3515
      %v7451 = vmul.f32 %v7142, %v3515
      %v7452 = vmul.f32 %v7148, %v3515
      %v7453 = vmul.f32 %v7154, %v3515
      %v7454 = vmul.f32 %v7160, %v3515
      %v7455 = vmul.f32 %v7166, %v3515
      %v7456 = vmul.f32 %v7172, %v3515
      %v7457 = vmul.f32 %v7178, %v3515
      %v7458 = vmul.f32 %v7184, %v3515
      %v7459 = vmul.f32 %v7190, %v3515
      %v7460 = vmul.f32 %v7196, %v3515
      %v7461 = vmul.f32 %v7202, %v3515
      %v7462 = vmul.f32 %v7208, %v3515
      %v7463 = vmul.f32 %v7214, %v3515
      %v7464 = vmul.f32 %v7220, %v3515
      %v7465 = vmul.f32 %v7226, %v3515
      %v7466 = vmul.f32 %v7232, %v3515
      %v7467 = vmul.f32 %v7238, %v3515
      %v7468 = vmul.f32 %v7244, %v3515
      %v7469 = vmul.f32 %v7250, %v3515
      %v7470 = vmul.f32 %v7256, %v3515
      %v7471 = vmul.f32 %v7262, %v3515
      %v7472 = vmul.f32 %v7268, %v3515
      %v7473 = vmul.f32 %v7274, %v3515
      %v7474 = vmul.f32 %v7280, %v3515
      %v7475 = vmul.f32 %v7286, %v3515
      %v7476 = vmul.f32 %v7292, %v3515
      %v7477 = vmul.f32 %v7298, %v3515
      %v7478 = vmul.f32 %v7304, %v3515
      %v7479 = vmul.f32 %v7310, %v3515
      %v7480 = vmul.f32 %v7316, %v3515
      %v7481 = vmul.f32 %v7322, %v3515
      %v7482 = vmul.f32 %v7328, %v3515
      %v7483 = vmul.f32 %v7334, %v3515
      %v7484 = vmul.f32 %v7340, %v3515
      %v7485 = vmul.f32 %v7346, %v3515
      %v7486 = vmul.f32 %v7352, %v3515
      %v7487 = vmul.f32 %v7358, %v3515
      %v7488 = vmul.f32 %v7364, %v3515
      %v7489 = vmul.f32 %v7370, %v3515
      %v7490 = vmul.f32 %v7376, %v3515
      %v7491 = vmul.f32 %v7382, %v3515
      %v7492 = vmul.f32 %v7388, %v3515
      %v7493 = vmul.f32 %v7394, %v3515
      %v7494 = vmul.f32 %v7400, %v3515
      %v7495 = vmul.f32 %v7406, %v3515
      %v7496 = vmul.f32 %v7412, %v3515
      %v7497 = vmul.f32 %v7418, %v3515
      %v7498 = vmul.f32 %v7424, %v3515
      %v7499 = vmul.f32 %v7430, %v3515
      %v7500 = vmul.f32 %v7436, %v3515
      %v7501 = vsel %vm2748, %v6981, 0.0
      %v7502 = vsel %vm2748, %v6982, 0.0
      %v7503 = vadd.f32 %v7501, %v7502
      %v7504 = vsel %vm2748, %v6983, 0.0
      %v7505 = vadd.f32 %v7503, %v7504
      %v7506 = vsel %vm2748, %v6984, 0.0
      %v7507 = vadd.f32 %v7505, %v7506
      %v7508 = vsel %vm2748, %v6985, 0.0
      %v7509 = vadd.f32 %v7507, %v7508
      %v7510 = vsel %vm2748, %v6986, 0.0
      %v7511 = vadd.f32 %v7509, %v7510
      %v7512 = vsel %vm2748, %v6987, 0.0
      %v7513 = vadd.f32 %v7511, %v7512
      %v7514 = vsel %vm2748, %v6988, 0.0
      %v7515 = vadd.f32 %v7513, %v7514
      %v7516 = vmul.f32 %v7515, %v3515
      %v7517 = vrot.slane %v7501, 4
      %v7518 = vadd.f32 %v7501, %v7517
      %v7519 = vrot.slane %v7518, 2
      %v7520 = vadd.f32 %v7518, %v7519
      %v7521 = vrot.slane %v7520, 1
      %v7522 = vadd.f32 %v7520, %v7521
      %v7523 = vrot.slane %v7502, 4
      %v7524 = vadd.f32 %v7502, %v7523
      %v7525 = vrot.slane %v7524, 2
      %v7526 = vadd.f32 %v7524, %v7525
      %v7527 = vrot.slane %v7526, 1
      %v7528 = vadd.f32 %v7526, %v7527
      %v7529 = vrot.slane %v7504, 4
      %v7530 = vadd.f32 %v7504, %v7529
      %v7531 = vrot.slane %v7530, 2
      %v7532 = vadd.f32 %v7530, %v7531
      %v7533 = vrot.slane %v7532, 1
      %v7534 = vadd.f32 %v7532, %v7533
      %v7535 = vrot.slane %v7506, 4
      %v7536 = vadd.f32 %v7506, %v7535
      %v7537 = vrot.slane %v7536, 2
      %v7538 = vadd.f32 %v7536, %v7537
      %v7539 = vrot.slane %v7538, 1
      %v7540 = vadd.f32 %v7538, %v7539
      %v7541 = vrot.slane %v7508, 4
      %v7542 = vadd.f32 %v7508, %v7541
      %v7543 = vrot.slane %v7542, 2
      %v7544 = vadd.f32 %v7542, %v7543
      %v7545 = vrot.slane %v7544, 1
      %v7546 = vadd.f32 %v7544, %v7545
      %v7547 = vrot.slane %v7510, 4
      %v7548 = vadd.f32 %v7510, %v7547
      %v7549 = vrot.slane %v7548, 2
      %v7550 = vadd.f32 %v7548, %v7549
      %v7551 = vrot.slane %v7550, 1
      %v7552 = vadd.f32 %v7550, %v7551
      %v7553 = vrot.slane %v7512, 4
      %v7554 = vadd.f32 %v7512, %v7553
      %v7555 = vrot.slane %v7554, 2
      %v7556 = vadd.f32 %v7554, %v7555
      %v7557 = vrot.slane %v7556, 1
      %v7558 = vadd.f32 %v7556, %v7557
      %v7559 = vrot.slane %v7514, 4
      %v7560 = vadd.f32 %v7514, %v7559
      %v7561 = vrot.slane %v7560, 2
      %v7562 = vadd.f32 %v7560, %v7561
      %v7563 = vrot.slane %v7562, 1
      %v7564 = vadd.f32 %v7562, %v7563
      %v7565 = vmul.f32 %v7522, %v3515
      %v7566 = vmul.f32 %v7528, %v3515
      %v7567 = vmul.f32 %v7534, %v3515
      %v7568 = vmul.f32 %v7540, %v3515
      %v7569 = vmul.f32 %v7546, %v3515
      %v7570 = vmul.f32 %v7552, %v3515
      %v7571 = vmul.f32 %v7558, %v3515
      %v7572 = vmul.f32 %v7564, %v3515
      %v7573 = vsel %vm2748, %v7045, 0.0
      %v7574 = vrot.slane %v7573, 4
      %v7575 = vadd.f32 %v7573, %v7574
      %v7576 = vrot.slane %v7575, 2
      %v7577 = vadd.f32 %v7575, %v7576
      %v7578 = vrot.slane %v7577, 1
      %v7579 = vadd.f32 %v7577, %v7578
      %v7580 = vsel %vm2748, %v7046, 0.0
      %v7581 = vrot.slane %v7580, 4
      %v7582 = vadd.f32 %v7580, %v7581
      %v7583 = vrot.slane %v7582, 2
      %v7584 = vadd.f32 %v7582, %v7583
      %v7585 = vrot.slane %v7584, 1
      %v7586 = vadd.f32 %v7584, %v7585
      %v7587 = vsel %vm2748, %v7047, 0.0
      %v7588 = vrot.slane %v7587, 4
      %v7589 = vadd.f32 %v7587, %v7588
      %v7590 = vrot.slane %v7589, 2
      %v7591 = vadd.f32 %v7589, %v7590
      %v7592 = vrot.slane %v7591, 1
      %v7593 = vadd.f32 %v7591, %v7592
      %v7594 = vsel %vm2748, %v7048, 0.0
      %v7595 = vrot.slane %v7594, 4
      %v7596 = vadd.f32 %v7594, %v7595
      %v7597 = vrot.slane %v7596, 2
      %v7598 = vadd.f32 %v7596, %v7597
      %v7599 = vrot.slane %v7598, 1
      %v7600 = vadd.f32 %v7598, %v7599
      %v7601 = vsel %vm2748, %v7049, 0.0
      %v7602 = vrot.slane %v7601, 4
      %v7603 = vadd.f32 %v7601, %v7602
      %v7604 = vrot.slane %v7603, 2
      %v7605 = vadd.f32 %v7603, %v7604
      %v7606 = vrot.slane %v7605, 1
      %v7607 = vadd.f32 %v7605, %v7606
      %v7608 = vsel %vm2748, %v7050, 0.0
      %v7609 = vrot.slane %v7608, 4
      %v7610 = vadd.f32 %v7608, %v7609
      %v7611 = vrot.slane %v7610, 2
      %v7612 = vadd.f32 %v7610, %v7611
      %v7613 = vrot.slane %v7612, 1
      %v7614 = vadd.f32 %v7612, %v7613
      %v7615 = vsel %vm2748, %v7051, 0.0
      %v7616 = vrot.slane %v7615, 4
      %v7617 = vadd.f32 %v7615, %v7616
      %v7618 = vrot.slane %v7617, 2
      %v7619 = vadd.f32 %v7617, %v7618
      %v7620 = vrot.slane %v7619, 1
      %v7621 = vadd.f32 %v7619, %v7620
      %v7622 = vsel %vm2748, %v7052, 0.0
      %v7623 = vrot.slane %v7622, 4
      %v7624 = vadd.f32 %v7622, %v7623
      %v7625 = vrot.slane %v7624, 2
      %v7626 = vadd.f32 %v7624, %v7625
      %v7627 = vrot.slane %v7626, 1
      %v7628 = vadd.f32 %v7626, %v7627
      %v7629 = vmul.f32 %v7579, %v3515
      %v7630 = vmul.f32 %v7586, %v3515
      %v7631 = vmul.f32 %v7593, %v3515
      %v7632 = vmul.f32 %v7600, %v3515
      %v7633 = vmul.f32 %v7607, %v3515
      %v7634 = vmul.f32 %v7614, %v3515
      %v7635 = vmul.f32 %v7621, %v3515
      %v7636 = vmul.f32 %v7628, %v3515
      %v7637 = vsel %vm2748, %v7516, 0.0
      %v7638 = vrot.slane %v7637, 4
      %v7639 = vadd.f32 %v7637, %v7638
      %v7640 = vrot.slane %v7639, 2
      %v7641 = vadd.f32 %v7639, %v7640
      %v7642 = vrot.slane %v7641, 1
      %v7643 = vadd.f32 %v7641, %v7642
      %v7644 = vmul.f32 %v7643, %v3515
      %v7645 = vpack.c.bf16 %v6766, %v6765
      %v7646 = vpack.c.bf16 %v6768, %v6767
      %v7647 = vpack.c.bf16 %v6770, %v6769
      %v7648 = vpack.c.bf16 %v6772, %v6771
      %v7649 = vpack.c.bf16 %v6774, %v6773
      %v7650 = vpack.c.bf16 %v6776, %v6775
      %v7651 = vpack.c.bf16 %v6778, %v6777
      %v7652 = vpack.c.bf16 %v6780, %v6779
      %v7653 = vpack.c.bf16 %v6782, %v6781
      %v7654 = vpack.c.bf16 %v6784, %v6783
      %v7655 = vpack.c.bf16 %v6786, %v6785
      %v7656 = vpack.c.bf16 %v6788, %v6787
      %v7657 = vpack.c.bf16 %v6790, %v6789
      %v7658 = vpack.c.bf16 %v6792, %v6791
      %v7659 = vpack.c.bf16 %v6794, %v6793
      %v7660 = vpack.c.bf16 %v6796, %v6795
      %v7661 = vpack.c.bf16 %v6798, %v6797
      %v7662 = vpack.c.bf16 %v6800, %v6799
      %v7663 = vpack.c.bf16 %v6802, %v6801
      %v7664 = vpack.c.bf16 %v6804, %v6803
      %v7665 = vpack.c.bf16 %v6806, %v6805
      %v7666 = vpack.c.bf16 %v6808, %v6807
      %v7667 = vpack.c.bf16 %v6810, %v6809
      %v7668 = vpack.c.bf16 %v6812, %v6811
      %v7669 = vpack.c.bf16 %v6814, %v6813
      %v7670 = vpack.c.bf16 %v6816, %v6815
      %v7671 = vpack.c.bf16 %v6818, %v6817
      %v7672 = vpack.c.bf16 %v6820, %v6819
      %v7673 = vpack.c.bf16 %v6822, %v6821
      %v7674 = vpack.c.bf16 %v6824, %v6823
      %v7675 = vpack.c.bf16 %v6826, %v6825
      %v7676 = vpack.c.bf16 %v6828, %v6827
      %v7677 = vpack.c.bf16 %v6830, %v6829
      %v7678 = vpack.c.bf16 %v6832, %v6831
      %v7680 = vsel %vm2748, %v7645, 0
      %v7683 = vsel %vm2748, %v7646, 0
      %v7686 = vsel %vm2748, %v7647, 0
      %v7689 = vsel %vm2748, %v7648, 0
      %v7692 = vsel %vm2748, %v7649, 0
      %v7695 = vsel %vm2748, %v7650, 0
      %v7698 = vsel %vm2748, %v7651, 0
      %v7701 = vsel %vm2748, %v7652, 0
      %v7704 = vsel %vm2748, %v7653, 0
      %v7707 = vsel %vm2748, %v7654, 0
      %v7710 = vsel %vm2748, %v7655, 0
      %v7713 = vsel %vm2748, %v7656, 0
      %v7716 = vsel %vm2748, %v7657, 0
      %v7719 = vsel %vm2748, %v7658, 0
      %v7722 = vsel %vm2748, %v7659, 0
      %v7725 = vsel %vm2748, %v7660, 0
      %v7728 = vsel %vm2748, %v7661, 0
      %v7731 = vsel %vm2748, %v7662, 0
      %v7734 = vsel %vm2748, %v7663, 0
      %v7737 = vsel %vm2748, %v7664, 0
      %v7740 = vsel %vm2748, %v7665, 0
      %v7743 = vsel %vm2748, %v7666, 0
      %v7746 = vsel %vm2748, %v7667, 0
      %v7749 = vsel %vm2748, %v7668, 0
      %v7752 = vsel %vm2748, %v7669, 0
      %v7755 = vsel %vm2748, %v7670, 0
      %v7758 = vsel %vm2748, %v7671, 0
      %v7761 = vsel %vm2748, %v7672, 0
      %v7764 = vsel %vm2748, %v7673, 0
      %v7767 = vsel %vm2748, %v7674, 0
      %v7770 = vsel %vm2748, %v7675, 0
      %v7773 = vsel %vm2748, %v7676, 0
      %7775 = vmatprep.subr.bf16.mxu0 0
      %7776 = vmatpush1.bf16.msra.mxu0 %v7677
      %7777 = vmatprep.subr.bf16.mxu0 0
      %7778 = vmatpush1.bf16.msra.mxu0 %v7678
      %7779 = vmatprep.subr.bf16.mxu0 0
      %7780 = vmatpush1.bf16.msra.mxu0 0
      %7781 = vmatprep.subr.bf16.mxu0 0
      %7782 = vmatpush1.bf16.msra.mxu0 0
      %7783 = vmatprep.subr.bf16.mxu0 0
      %7784 = vmatpush1.bf16.msra.mxu0 0
      %7785 = vmatprep.subr.bf16.mxu0 0
      %7786 = vmatpush1.bf16.msra.mxu0 0
      %7787 = vmatprep.subr.bf16.mxu0 0
      %7788 = vmatpush1.bf16.msra.mxu0 0
      %7789 = vmatprep.subr.bf16.mxu0 0
      %7790 = vmatpush1.bf16.msra.mxu0 0
      %7791 = vmatprep.subr.bf16.mxu0 0
      %7792 = vmatpush1.bf16.msra.mxu0 0
      %7793 = vmatprep.subr.bf16.mxu0 0
      %7794 = vmatpush1.bf16.msra.mxu0 0
      %7795 = vmatprep.subr.bf16.mxu0 0
      %7796 = vmatpush1.bf16.msra.mxu0 0
      %7797 = vmatprep.subr.bf16.mxu0 0
      %7798 = vmatpush1.bf16.msra.mxu0 0
      %7799 = vmatprep.subr.bf16.mxu0 0
      %7800 = vmatpush1.bf16.msra.mxu0 0
      %7801 = vmatprep.subr.bf16.mxu0 0
      %7802 = vmatpush1.bf16.msra.mxu0 0
      %7803 = vmatprep.subr.bf16.mxu0 0
      %7804 = vmatpush1.bf16.msra.mxu0 0
      %7805 = vmatprep.subr.bf16.mxu0 0
      %7806 = vmatpush1.bf16.msra.mxu0 0
      %7807 = vmatprep.mubr.bf16.mxu0 0
      %7808 = vmatmul.mubr.bf16.gmra.mrb[0].mxu0 %v7680
      %v7809 = vpop.f32.mrb[0].mxu0
      %v7810 = vadd.f32 0.0, %v7809
      %v7811 = vpop.f32.mrb[0].mxu0
      %v7812 = vpop.f32.mrb[0].mxu0
      %v7813 = vadd.f32 0.0, %v7812
      %v7814 = vpop.f32.mrb[0].mxu0
      %7815 = vmatprep.mubr.bf16.mxu0 0
      %7816 = vmatmul.mubr.bf16.gmra.mrb[0].mxu0 %v7683
      %v7817 = vpop.f32.mrb[0].mxu0
      %v7818 = vadd.f32 0.0, %v7817
      %v7819 = vpop.f32.mrb[0].mxu0
      %v7820 = vpop.f32.mrb[0].mxu0
      %v7821 = vadd.f32 0.0, %v7820
      %v7822 = vpop.f32.mrb[0].mxu0
      %7823 = vmatprep.mubr.bf16.mxu0 0
      %7824 = vmatmul.mubr.bf16.gmra.mrb[0].mxu0 %v7686
      %v7825 = vpop.f32.mrb[0].mxu0
      %v7826 = vadd.f32 0.0, %v7825
      %v7827 = vpop.f32.mrb[0].mxu0
      %v7828 = vpop.f32.mrb[0].mxu0
      %v7829 = vadd.f32 0.0, %v7828
      %v7830 = vpop.f32.mrb[0].mxu0
      %7831 = vmatprep.mubr.bf16.mxu0 0
      %7832 = vmatmul.mubr.bf16.gmra.mrb[0].mxu0 %v7689
      %v7833 = vpop.f32.mrb[0].mxu0
      %v7834 = vadd.f32 0.0, %v7833
      %v7835 = vpop.f32.mrb[0].mxu0
      %v7836 = vpop.f32.mrb[0].mxu0
      %v7837 = vadd.f32 0.0, %v7836
      %v7838 = vpop.f32.mrb[0].mxu0
      %7839 = vmatprep.mubr.bf16.mxu0 0
      %7840 = vmatmul.mubr.bf16.gmra.mrb[0].mxu0 %v7692
      %v7841 = vpop.f32.mrb[0].mxu0
      %v7842 = vadd.f32 0.0, %v7841
      %v7843 = vpop.f32.mrb[0].mxu0
      %v7844 = vpop.f32.mrb[0].mxu0
      %v7845 = vadd.f32 0.0, %v7844
      %v7846 = vpop.f32.mrb[0].mxu0
      %7847 = vmatprep.mubr.bf16.mxu0 0
      %7848 = vmatmul.mubr.bf16.gmra.mrb[0].mxu0 %v7695
      %v7849 = vpop.f32.mrb[0].mxu0
      %v7850 = vadd.f32 0.0, %v7849
      %v7851 = vpop.f32.mrb[0].mxu0
      %v7852 = vpop.f32.mrb[0].mxu0
      %v7853 = vadd.f32 0.0, %v7852
      %v7854 = vpop.f32.mrb[0].mxu0
      %7855 = vmatprep.mubr.bf16.mxu0 0
      %7856 = vmatmul.mubr.bf16.gmra.mrb[0].mxu0 %v7698
      %v7857 = vpop.f32.mrb[0].mxu0
      %v7858 = vadd.f32 0.0, %v7857
      %v7859 = vpop.f32.mrb[0].mxu0
      %v7860 = vpop.f32.mrb[0].mxu0
      %v7861 = vadd.f32 0.0, %v7860
      %v7862 = vpop.f32.mrb[0].mxu0
      %7863 = vmatprep.mubr.bf16.mxu0 0
      %7864 = vmatmul.mubr.bf16.gmra.mrb[0].mxu0 %v7701
      %v7865 = vpop.f32.mrb[0].mxu0
      %v7866 = vadd.f32 0.0, %v7865
      %v7867 = vpop.f32.mrb[0].mxu0
      %v7868 = vpop.f32.mrb[0].mxu0
      %v7869 = vadd.f32 0.0, %v7868
      %v7870 = vpop.f32.mrb[0].mxu0
      %7871 = vmatprep.mubr.bf16.mxu0 0
      %7872 = vmatmul.mubr.bf16.gmra.mrb[0].mxu0 %v7704
      %v7873 = vpop.f32.mrb[0].mxu0
      %v7874 = vadd.f32 0.0, %v7873
      %v7875 = vpop.f32.mrb[0].mxu0
      %v7876 = vpop.f32.mrb[0].mxu0
      %v7877 = vadd.f32 0.0, %v7876
      %v7878 = vpop.f32.mrb[0].mxu0
      %7879 = vmatprep.mubr.bf16.mxu0 0
      %7880 = vmatmul.mubr.bf16.gmra.mrb[0].mxu0 %v7707
      %v7881 = vpop.f32.mrb[0].mxu0
      %v7882 = vadd.f32 0.0, %v7881
      %v7883 = vpop.f32.mrb[0].mxu0
      %v7884 = vpop.f32.mrb[0].mxu0
      %v7885 = vadd.f32 0.0, %v7884
      %v7886 = vpop.f32.mrb[0].mxu0
      %7887 = vmatprep.mubr.bf16.mxu0 0
      %7888 = vmatmul.mubr.bf16.gmra.mrb[0].mxu0 %v7710
      %v7889 = vpop.f32.mrb[0].mxu0
      %v7890 = vadd.f32 0.0, %v7889
      %v7891 = vpop.f32.mrb[0].mxu0
      %v7892 = vpop.f32.mrb[0].mxu0
      %v7893 = vadd.f32 0.0, %v7892
      %v7894 = vpop.f32.mrb[0].mxu0
      %7895 = vmatprep.mubr.bf16.mxu0 0
      %7896 = vmatmul.mubr.bf16.gmra.mrb[0].mxu0 %v7713
      %v7897 = vpop.f32.mrb[0].mxu0
      %v7898 = vadd.f32 0.0, %v7897
      %v7899 = vpop.f32.mrb[0].mxu0
      %v7900 = vpop.f32.mrb[0].mxu0
      %v7901 = vadd.f32 0.0, %v7900
      %v7902 = vpop.f32.mrb[0].mxu0
      %7903 = vmatprep.mubr.bf16.mxu0 0
      %7904 = vmatmul.mubr.bf16.gmra.mrb[0].mxu0 %v7716
      %v7905 = vpop.f32.mrb[0].mxu0
      %v7906 = vadd.f32 0.0, %v7905
      %v7907 = vpop.f32.mrb[0].mxu0
      %v7908 = vpop.f32.mrb[0].mxu0
      %v7909 = vadd.f32 0.0, %v7908
      %v7910 = vpop.f32.mrb[0].mxu0
      %7911 = vmatprep.mubr.bf16.mxu0 0
      %7912 = vmatmul.mubr.bf16.gmra.mrb[0].mxu0 %v7719
      %v7913 = vpop.f32.mrb[0].mxu0
      %v7914 = vadd.f32 0.0, %v7913
      %v7915 = vpop.f32.mrb[0].mxu0
      %v7916 = vpop.f32.mrb[0].mxu0
      %v7917 = vadd.f32 0.0, %v7916
      %v7918 = vpop.f32.mrb[0].mxu0
      %7919 = vmatprep.mubr.bf16.mxu0 0
      %7920 = vmatmul.mubr.bf16.gmra.mrb[0].mxu0 %v7722
      %v7921 = vpop.f32.mrb[0].mxu0
      %v7922 = vadd.f32 0.0, %v7921
      %v7923 = vpop.f32.mrb[0].mxu0
      %v7924 = vpop.f32.mrb[0].mxu0
      %v7925 = vadd.f32 0.0, %v7924
      %v7926 = vpop.f32.mrb[0].mxu0
      %7927 = vmatprep.mubr.bf16.mxu0 0
      %7928 = vmatmul.mubr.bf16.gmra.mrb[0].mxu0 %v7725
      %v7929 = vpop.f32.mrb[0].mxu0
      %v7930 = vadd.f32 0.0, %v7929
      %v7931 = vpop.f32.mrb[0].mxu0
      %v7932 = vpop.f32.mrb[0].mxu0
      %v7933 = vadd.f32 0.0, %v7932
      %v7934 = vpop.f32.mrb[0].mxu0
      %7935 = vmatprep.mubr.bf16.mxu0 0
      %7936 = vmatmul.mubr.bf16.gmra.mrb[0].mxu0 %v7728
      %v7937 = vpop.f32.mrb[0].mxu0
      %v7938 = vadd.f32 0.0, %v7937
      %v7939 = vpop.f32.mrb[0].mxu0
      %v7940 = vpop.f32.mrb[0].mxu0
      %v7941 = vadd.f32 0.0, %v7940
      %v7942 = vpop.f32.mrb[0].mxu0
      %7943 = vmatprep.mubr.bf16.mxu0 0
      %7944 = vmatmul.mubr.bf16.gmra.mrb[0].mxu0 %v7731
      %v7945 = vpop.f32.mrb[0].mxu0
      %v7946 = vadd.f32 0.0, %v7945
      %v7947 = vpop.f32.mrb[0].mxu0
      %v7948 = vpop.f32.mrb[0].mxu0
      %v7949 = vadd.f32 0.0, %v7948
      %v7950 = vpop.f32.mrb[0].mxu0
      %7951 = vmatprep.mubr.bf16.mxu0 0
      %7952 = vmatmul.mubr.bf16.gmra.mrb[0].mxu0 %v7734
      %v7953 = vpop.f32.mrb[0].mxu0
      %v7954 = vadd.f32 0.0, %v7953
      %v7955 = vpop.f32.mrb[0].mxu0
      %v7956 = vpop.f32.mrb[0].mxu0
      %v7957 = vadd.f32 0.0, %v7956
      %v7958 = vpop.f32.mrb[0].mxu0
      %7959 = vmatprep.mubr.bf16.mxu0 0
      %7960 = vmatmul.mubr.bf16.gmra.mrb[0].mxu0 %v7737
      %v7961 = vpop.f32.mrb[0].mxu0
      %v7962 = vadd.f32 0.0, %v7961
      %v7963 = vpop.f32.mrb[0].mxu0
      %v7964 = vpop.f32.mrb[0].mxu0
      %v7965 = vadd.f32 0.0, %v7964
      %v7966 = vpop.f32.mrb[0].mxu0
      %7967 = vmatprep.mubr.bf16.mxu0 0
      %7968 = vmatmul.mubr.bf16.gmra.mrb[0].mxu0 %v7740
      %v7969 = vpop.f32.mrb[0].mxu0
      %v7970 = vadd.f32 0.0, %v7969
      %v7971 = vpop.f32.mrb[0].mxu0
      %v7972 = vpop.f32.mrb[0].mxu0
      %v7973 = vadd.f32 0.0, %v7972
      %v7974 = vpop.f32.mrb[0].mxu0
      %7975 = vmatprep.mubr.bf16.mxu0 0
      %7976 = vmatmul.mubr.bf16.gmra.mrb[0].mxu0 %v7743
      %v7977 = vpop.f32.mrb[0].mxu0
      %v7978 = vadd.f32 0.0, %v7977
      %v7979 = vpop.f32.mrb[0].mxu0
      %v7980 = vpop.f32.mrb[0].mxu0
      %v7981 = vadd.f32 0.0, %v7980
      %v7982 = vpop.f32.mrb[0].mxu0
      %7983 = vmatprep.mubr.bf16.mxu0 0
      %7984 = vmatmul.mubr.bf16.gmra.mrb[0].mxu0 %v7746
      %v7985 = vpop.f32.mrb[0].mxu0
      %v7986 = vadd.f32 0.0, %v7985
      %v7987 = vpop.f32.mrb[0].mxu0
      %v7988 = vpop.f32.mrb[0].mxu0
      %v7989 = vadd.f32 0.0, %v7988
      %v7990 = vpop.f32.mrb[0].mxu0
      %7991 = vmatprep.mubr.bf16.mxu0 0
      %7992 = vmatmul.mubr.bf16.gmra.mrb[0].mxu0 %v7749
      %v7993 = vpop.f32.mrb[0].mxu0
      %v7994 = vadd.f32 0.0, %v7993
      %v7995 = vpop.f32.mrb[0].mxu0
      %v7996 = vpop.f32.mrb[0].mxu0
      %v7997 = vadd.f32 0.0, %v7996
      %v7998 = vpop.f32.mrb[0].mxu0
      %7999 = vmatprep.mubr.bf16.mxu0 0
      %8000 = vmatmul.mubr.bf16.gmra.mrb[0].mxu0 %v7752
      %v8001 = vpop.f32.mrb[0].mxu0
      %v8002 = vadd.f32 0.0, %v8001
      %v8003 = vpop.f32.mrb[0].mxu0
      %v8004 = vpop.f32.mrb[0].mxu0
      %v8005 = vadd.f32 0.0, %v8004
      %v8006 = vpop.f32.mrb[0].mxu0
      %8007 = vmatprep.mubr.bf16.mxu0 0
      %8008 = vmatmul.mubr.bf16.gmra.mrb[0].mxu0 %v7755
      %v8009 = vpop.f32.mrb[0].mxu0
      %v8010 = vadd.f32 0.0, %v8009
      %v8011 = vpop.f32.mrb[0].mxu0
      %v8012 = vpop.f32.mrb[0].mxu0
      %v8013 = vadd.f32 0.0, %v8012
      %v8014 = vpop.f32.mrb[0].mxu0
      %8015 = vmatprep.mubr.bf16.mxu0 0
      %8016 = vmatmul.mubr.bf16.gmra.mrb[0].mxu0 %v7758
      %v8017 = vpop.f32.mrb[0].mxu0
      %v8018 = vadd.f32 0.0, %v8017
      %v8019 = vpop.f32.mrb[0].mxu0
      %v8020 = vpop.f32.mrb[0].mxu0
      %v8021 = vadd.f32 0.0, %v8020
      %v8022 = vpop.f32.mrb[0].mxu0
      %8023 = vmatprep.mubr.bf16.mxu0 0
      %8024 = vmatmul.mubr.bf16.gmra.mrb[0].mxu0 %v7761
      %v8025 = vpop.f32.mrb[0].mxu0
      %v8026 = vadd.f32 0.0, %v8025
      %v8027 = vpop.f32.mrb[0].mxu0
      %v8028 = vpop.f32.mrb[0].mxu0
      %v8029 = vadd.f32 0.0, %v8028
      %v8030 = vpop.f32.mrb[0].mxu0
      %8031 = vmatprep.mubr.bf16.mxu0 0
      %8032 = vmatmul.mubr.bf16.gmra.mrb[0].mxu0 %v7764
      %v8033 = vpop.f32.mrb[0].mxu0
      %v8034 = vadd.f32 0.0, %v8033
      %v8035 = vpop.f32.mrb[0].mxu0
      %v8036 = vpop.f32.mrb[0].mxu0
      %v8037 = vadd.f32 0.0, %v8036
      %v8038 = vpop.f32.mrb[0].mxu0
      %8039 = vmatprep.mubr.bf16.mxu0 0
      %8040 = vmatmul.mubr.bf16.gmra.mrb[0].mxu0 %v7767
      %v8041 = vpop.f32.mrb[0].mxu0
      %v8042 = vadd.f32 0.0, %v8041
      %v8043 = vpop.f32.mrb[0].mxu0
      %v8044 = vpop.f32.mrb[0].mxu0
      %v8045 = vadd.f32 0.0, %v8044
      %v8046 = vpop.f32.mrb[0].mxu0
      %8047 = vmatprep.mubr.bf16.mxu0 0
      %8048 = vmatmul.mubr.bf16.gmra.mrb[0].mxu0 %v7770
      %v8049 = vpop.f32.mrb[0].mxu0
      %v8050 = vadd.f32 0.0, %v8049
      %v8051 = vpop.f32.mrb[0].mxu0
      %v8052 = vpop.f32.mrb[0].mxu0
      %v8053 = vadd.f32 0.0, %v8052
      %v8054 = vpop.f32.mrb[0].mxu0
      %8055 = vmatprep.mubr.bf16.mxu0 0
      %8056 = vmatmul.mubr.bf16.gmra.mrb[0].mxu0 %v7773
      %v8057 = vpop.f32.mrb[0].mxu0
      %v8058 = vadd.f32 0.0, %v8057
      %v8059 = vpop.f32.mrb[0].mxu0
      %v8060 = vpop.f32.mrb[0].mxu0
      %v8061 = vadd.f32 0.0, %v8060
      %v8062 = vpop.f32.mrb[0].mxu0
      %8063 = vdwg.mxu0
      %v8064 = vpack.c.bf16 %v6982, %v6981
      %v8065 = vpack.c.bf16 %v6984, %v6983
      %v8066 = vpack.c.bf16 %v6986, %v6985
      %v8067 = vpack.c.bf16 %v6988, %v6987
      %v8068 = vpack.c.bf16 %v6834, %v6833
      %v8069 = vpack.c.bf16 %v6836, %v6835
      %v8071 = vsel %vm2748, %v8064, 0
      %v8074 = vsel %vm2748, %v8065, 0
      %v8077 = vsel %vm2748, %v8066, 0
      %v8080 = vsel %vm2748, %v8067, 0
      %8082 = vmatprep.subr.bf16.mxu0 0
      %8083 = vmatpush1.bf16.msra.mxu0 %v8068
      %8084 = vmatprep.subr.bf16.mxu0 0
      %8085 = vmatpush1.bf16.msra.mxu0 %v8069
      %8086 = vmatprep.subr.bf16.mxu0 0
      %8087 = vmatpush1.bf16.msra.mxu0 0
      %8088 = vmatprep.subr.bf16.mxu0 0
      %8089 = vmatpush1.bf16.msra.mxu0 0
      %8090 = vmatprep.subr.bf16.mxu0 0
      %8091 = vmatpush1.bf16.msra.mxu0 0
      %8092 = vmatprep.subr.bf16.mxu0 0
      %8093 = vmatpush1.bf16.msra.mxu0 0
      %8094 = vmatprep.subr.bf16.mxu0 0
      %8095 = vmatpush1.bf16.msra.mxu0 0
      %8096 = vmatprep.subr.bf16.mxu0 0
      %8097 = vmatpush1.bf16.msra.mxu0 0
      %8098 = vmatprep.subr.bf16.mxu0 0
      %8099 = vmatpush1.bf16.msra.mxu0 0
      %8100 = vmatprep.subr.bf16.mxu0 0
      %8101 = vmatpush1.bf16.msra.mxu0 0
      %8102 = vmatprep.subr.bf16.mxu0 0
      %8103 = vmatpush1.bf16.msra.mxu0 0
      %8104 = vmatprep.subr.bf16.mxu0 0
      %8105 = vmatpush1.bf16.msra.mxu0 0
      %8106 = vmatprep.subr.bf16.mxu0 0
      %8107 = vmatpush1.bf16.msra.mxu0 0
      %8108 = vmatprep.subr.bf16.mxu0 0
      %8109 = vmatpush1.bf16.msra.mxu0 0
      %8110 = vmatprep.subr.bf16.mxu0 0
      %8111 = vmatpush1.bf16.msra.mxu0 0
      %8112 = vmatprep.subr.bf16.mxu0 0
      %8113 = vmatpush1.bf16.msra.mxu0 0
      %8114 = vmatprep.mubr.bf16.mxu0 0
      %8115 = vmatmul.mubr.bf16.gmra.mrb[0].mxu0 %v8071
      %v8116 = vpop.f32.mrb[0].mxu0
      %v8117 = vadd.f32 0.0, %v8116
      %v8118 = vpop.f32.mrb[0].mxu0
      %v8119 = vpop.f32.mrb[0].mxu0
      %v8120 = vadd.f32 0.0, %v8119
      %v8121 = vpop.f32.mrb[0].mxu0
      %8122 = vmatprep.mubr.bf16.mxu0 0
      %8123 = vmatmul.mubr.bf16.gmra.mrb[0].mxu0 %v8074
      %v8124 = vpop.f32.mrb[0].mxu0
      %v8125 = vadd.f32 0.0, %v8124
      %v8126 = vpop.f32.mrb[0].mxu0
      %v8127 = vpop.f32.mrb[0].mxu0
      %v8128 = vadd.f32 0.0, %v8127
      %v8129 = vpop.f32.mrb[0].mxu0
      %8130 = vmatprep.mubr.bf16.mxu0 0
      %8131 = vmatmul.mubr.bf16.gmra.mrb[0].mxu0 %v8077
      %v8132 = vpop.f32.mrb[0].mxu0
      %v8133 = vadd.f32 0.0, %v8132
      %v8134 = vpop.f32.mrb[0].mxu0
      %v8135 = vpop.f32.mrb[0].mxu0
      %v8136 = vadd.f32 0.0, %v8135
      %v8137 = vpop.f32.mrb[0].mxu0
      %8138 = vmatprep.mubr.bf16.mxu0 0
      %8139 = vmatmul.mubr.bf16.gmra.mrb[0].mxu0 %v8080
      %v8140 = vpop.f32.mrb[0].mxu0
      %v8141 = vadd.f32 0.0, %v8140
      %v8142 = vpop.f32.mrb[0].mxu0
      %v8143 = vpop.f32.mrb[0].mxu0
      %v8144 = vadd.f32 0.0, %v8143
      %v8145 = vpop.f32.mrb[0].mxu0
      %8146 = vdwg.mxu0
      %v8147 = vadd.f32 %v7810, %v8117
      %v8148 = vadd.f32 %v7813, %v8120
      %v8149 = vadd.f32 %v7818, %v8125
      %v8150 = vadd.f32 %v7821, %v8128
      %v8151 = vadd.f32 %v7826, %v8133
      %v8152 = vadd.f32 %v7829, %v8136
      %v8153 = vadd.f32 %v7834, %v8141
      %v8154 = vadd.f32 %v7837, %v8144
      %v8155 = vadd.f32 %v7842, %v8117
      %v8156 = vadd.f32 %v7845, %v8120
      %v8157 = vadd.f32 %v7850, %v8125
      %v8158 = vadd.f32 %v7853, %v8128
      %v8159 = vadd.f32 %v7858, %v8133
      %v8160 = vadd.f32 %v7861, %v8136
      %v8161 = vadd.f32 %v7866, %v8141
      %v8162 = vadd.f32 %v7869, %v8144
      %v8163 = vadd.f32 %v7874, %v8117
      %v8164 = vadd.f32 %v7877, %v8120
      %v8165 = vadd.f32 %v7882, %v8125
      %v8166 = vadd.f32 %v7885, %v8128
      %v8167 = vadd.f32 %v7890, %v8133
      %v8168 = vadd.f32 %v7893, %v8136
      %v8169 = vadd.f32 %v7898, %v8141
      %v8170 = vadd.f32 %v7901, %v8144
      %v8171 = vadd.f32 %v7906, %v8117
      %v8172 = vadd.f32 %v7909, %v8120
      %v8173 = vadd.f32 %v7914, %v8125
      %v8174 = vadd.f32 %v7917, %v8128
      %v8175 = vadd.f32 %v7922, %v8133
      %v8176 = vadd.f32 %v7925, %v8136
      %v8177 = vadd.f32 %v7930, %v8141
      %v8178 = vadd.f32 %v7933, %v8144
      %v8179 = vadd.f32 %v7938, %v8117
      %v8180 = vadd.f32 %v7941, %v8120
      %v8181 = vadd.f32 %v7946, %v8125
      %v8182 = vadd.f32 %v7949, %v8128
      %v8183 = vadd.f32 %v7954, %v8133
      %v8184 = vadd.f32 %v7957, %v8136
      %v8185 = vadd.f32 %v7962, %v8141
      %v8186 = vadd.f32 %v7965, %v8144
      %v8187 = vadd.f32 %v7970, %v8117
      %v8188 = vadd.f32 %v7973, %v8120
      %v8189 = vadd.f32 %v7978, %v8125
      %v8190 = vadd.f32 %v7981, %v8128
      %v8191 = vadd.f32 %v7986, %v8133
      %v8192 = vadd.f32 %v7989, %v8136
      %v8193 = vadd.f32 %v7994, %v8141
      %v8194 = vadd.f32 %v7997, %v8144
      %v8195 = vadd.f32 %v8002, %v8117
      %v8196 = vadd.f32 %v8005, %v8120
      %v8197 = vadd.f32 %v8010, %v8125
      %v8198 = vadd.f32 %v8013, %v8128
      %v8199 = vadd.f32 %v8018, %v8133
      %v8200 = vadd.f32 %v8021, %v8136
      %v8201 = vadd.f32 %v8026, %v8141
      %v8202 = vadd.f32 %v8029, %v8144
      %v8203 = vadd.f32 %v8034, %v8117
      %v8204 = vadd.f32 %v8037, %v8120
      %v8205 = vadd.f32 %v8042, %v8125
      %v8206 = vadd.f32 %v8045, %v8128
      %v8207 = vadd.f32 %v8050, %v8133
      %v8208 = vadd.f32 %v8053, %v8136
      %v8209 = vadd.f32 %v8058, %v8141
      %v8210 = vadd.f32 %v8061, %v8144
      %v8211 = vpack.c.bf16 %v7046, %v7045
      %v8212 = vpack.c.bf16 %v7048, %v7047
      %v8213 = vpack.c.bf16 %v7050, %v7049
      %v8214 = vpack.c.bf16 %v7052, %v7051
      %v8215 = vpack.c.bf16 %v6838, %v6837
      %v8216 = vpack.c.bf16 %v6840, %v6839
      %v8218 = vsel %vm2748, %v8211, 0
      %v8221 = vsel %vm2748, %v8212, 0
      %v8224 = vsel %vm2748, %v8213, 0
      %v8227 = vsel %vm2748, %v8214, 0
      %8229 = vmatprep.subr.bf16.mxu0 0
      %8230 = vmatpush1.bf16.msra.mxu0 %v8215
      %8231 = vmatprep.subr.bf16.mxu0 0
      %8232 = vmatpush1.bf16.msra.mxu0 %v8216
      %8233 = vmatprep.subr.bf16.mxu0 0
      %8234 = vmatpush1.bf16.msra.mxu0 0
      %8235 = vmatprep.subr.bf16.mxu0 0
      %8236 = vmatpush1.bf16.msra.mxu0 0
      %8237 = vmatprep.subr.bf16.mxu0 0
      %8238 = vmatpush1.bf16.msra.mxu0 0
      %8239 = vmatprep.subr.bf16.mxu0 0
      %8240 = vmatpush1.bf16.msra.mxu0 0
      %8241 = vmatprep.subr.bf16.mxu0 0
      %8242 = vmatpush1.bf16.msra.mxu0 0
      %8243 = vmatprep.subr.bf16.mxu0 0
      %8244 = vmatpush1.bf16.msra.mxu0 0
      %8245 = vmatprep.subr.bf16.mxu0 0
      %8246 = vmatpush1.bf16.msra.mxu0 0
      %8247 = vmatprep.subr.bf16.mxu0 0
      %8248 = vmatpush1.bf16.msra.mxu0 0
      %8249 = vmatprep.subr.bf16.mxu0 0
      %8250 = vmatpush1.bf16.msra.mxu0 0
      %8251 = vmatprep.subr.bf16.mxu0 0
      %8252 = vmatpush1.bf16.msra.mxu0 0
      %8253 = vmatprep.subr.bf16.mxu0 0
      %8254 = vmatpush1.bf16.msra.mxu0 0
      %8255 = vmatprep.subr.bf16.mxu0 0
      %8256 = vmatpush1.bf16.msra.mxu0 0
      %8257 = vmatprep.subr.bf16.mxu0 0
      %8258 = vmatpush1.bf16.msra.mxu0 0
      %8259 = vmatprep.subr.bf16.mxu0 0
      %8260 = vmatpush1.bf16.msra.mxu0 0
      %8261 = vmatprep.mubr.bf16.mxu0 0
      %8262 = vmatmul.mubr.bf16.gmra.mrb[0].mxu0 %v8218
      %v8263 = vpop.f32.mrb[0].mxu0
      %v8264 = vadd.f32 0.0, %v8263
      %v8265 = vpop.f32.mrb[0].mxu0
      %v8266 = vpop.f32.mrb[0].mxu0
      %v8267 = vadd.f32 0.0, %v8266
      %v8268 = vpop.f32.mrb[0].mxu0
      %8269 = vmatprep.mubr.bf16.mxu0 0
      %8270 = vmatmul.mubr.bf16.gmra.mrb[0].mxu0 %v8221
      %v8271 = vpop.f32.mrb[0].mxu0
      %v8272 = vadd.f32 0.0, %v8271
      %v8273 = vpop.f32.mrb[0].mxu0
      %v8274 = vpop.f32.mrb[0].mxu0
      %v8275 = vadd.f32 0.0, %v8274
      %v8276 = vpop.f32.mrb[0].mxu0
      %8277 = vmatprep.mubr.bf16.mxu0 0
      %8278 = vmatmul.mubr.bf16.gmra.mrb[0].mxu0 %v8224
      %v8279 = vpop.f32.mrb[0].mxu0
      %v8280 = vadd.f32 0.0, %v8279
      %v8281 = vpop.f32.mrb[0].mxu0
      %v8282 = vpop.f32.mrb[0].mxu0
      %v8283 = vadd.f32 0.0, %v8282
      %v8284 = vpop.f32.mrb[0].mxu0
      %8285 = vmatprep.mubr.bf16.mxu0 0
      %8286 = vmatmul.mubr.bf16.gmra.mrb[0].mxu0 %v8227
      %v8287 = vpop.f32.mrb[0].mxu0
      %v8288 = vadd.f32 0.0, %v8287
      %v8289 = vpop.f32.mrb[0].mxu0
      %v8290 = vpop.f32.mrb[0].mxu0
      %v8291 = vadd.f32 0.0, %v8290
      %v8292 = vpop.f32.mrb[0].mxu0
      %8293 = vdwg.mxu0
      %v8294 = vadd.f32 %v8147, %v8264
      %v8295 = vadd.f32 %v8148, %v8264
      %v8296 = vadd.f32 %v8149, %v8264
      %v8297 = vadd.f32 %v8150, %v8264
      %v8298 = vadd.f32 %v8151, %v8264
      %v8299 = vadd.f32 %v8152, %v8264
      %v8300 = vadd.f32 %v8153, %v8264
      %v8301 = vadd.f32 %v8154, %v8264
      %v8302 = vadd.f32 %v8155, %v8267
      %v8303 = vadd.f32 %v8156, %v8267
      %v8304 = vadd.f32 %v8157, %v8267
      %v8305 = vadd.f32 %v8158, %v8267
      %v8306 = vadd.f32 %v8159, %v8267
      %v8307 = vadd.f32 %v8160, %v8267
      %v8308 = vadd.f32 %v8161, %v8267
      %v8309 = vadd.f32 %v8162, %v8267
      %v8310 = vadd.f32 %v8163, %v8272
      %v8311 = vadd.f32 %v8164, %v8272
      %v8312 = vadd.f32 %v8165, %v8272
      %v8313 = vadd.f32 %v8166, %v8272
      %v8314 = vadd.f32 %v8167, %v8272
      %v8315 = vadd.f32 %v8168, %v8272
      %v8316 = vadd.f32 %v8169, %v8272
      %v8317 = vadd.f32 %v8170, %v8272
      %v8318 = vadd.f32 %v8171, %v8275
      %v8319 = vadd.f32 %v8172, %v8275
      %v8320 = vadd.f32 %v8173, %v8275
      %v8321 = vadd.f32 %v8174, %v8275
      %v8322 = vadd.f32 %v8175, %v8275
      %v8323 = vadd.f32 %v8176, %v8275
      %v8324 = vadd.f32 %v8177, %v8275
      %v8325 = vadd.f32 %v8178, %v8275
      %v8326 = vadd.f32 %v8179, %v8280
      %v8327 = vadd.f32 %v8180, %v8280
      %v8328 = vadd.f32 %v8181, %v8280
      %v8329 = vadd.f32 %v8182, %v8280
      %v8330 = vadd.f32 %v8183, %v8280
      %v8331 = vadd.f32 %v8184, %v8280
      %v8332 = vadd.f32 %v8185, %v8280
      %v8333 = vadd.f32 %v8186, %v8280
      %v8334 = vadd.f32 %v8187, %v8283
      %v8335 = vadd.f32 %v8188, %v8283
      %v8336 = vadd.f32 %v8189, %v8283
      %v8337 = vadd.f32 %v8190, %v8283
      %v8338 = vadd.f32 %v8191, %v8283
      %v8339 = vadd.f32 %v8192, %v8283
      %v8340 = vadd.f32 %v8193, %v8283
      %v8341 = vadd.f32 %v8194, %v8283
      %v8342 = vadd.f32 %v8195, %v8288
      %v8343 = vadd.f32 %v8196, %v8288
      %v8344 = vadd.f32 %v8197, %v8288
      %v8345 = vadd.f32 %v8198, %v8288
      %v8346 = vadd.f32 %v8199, %v8288
      %v8347 = vadd.f32 %v8200, %v8288
      %v8348 = vadd.f32 %v8201, %v8288
      %v8349 = vadd.f32 %v8202, %v8288
      %v8350 = vadd.f32 %v8203, %v8291
      %v8351 = vadd.f32 %v8204, %v8291
      %v8352 = vadd.f32 %v8205, %v8291
      %v8353 = vadd.f32 %v8206, %v8291
      %v8354 = vadd.f32 %v8207, %v8291
      %v8355 = vadd.f32 %v8208, %v8291
      %v8356 = vadd.f32 %v8209, %v8291
      %v8357 = vadd.f32 %v8210, %v8291
      %v8358 = vpack.c.bf16 %v7437, %v7437
      %v8359 = vpack.c.bf16 %v7438, %v7438
      %v8360 = vpack.c.bf16 %v7439, %v7439
      %v8361 = vpack.c.bf16 %v7440, %v7440
      %v8362 = vpack.c.bf16 %v7441, %v7441
      %v8363 = vpack.c.bf16 %v7442, %v7442
      %v8364 = vpack.c.bf16 %v7443, %v7443
      %v8365 = vpack.c.bf16 %v7444, %v7444
      %v8366 = vpack.c.bf16 %v7445, %v7445
      %v8367 = vpack.c.bf16 %v7446, %v7446
      %v8368 = vpack.c.bf16 %v7447, %v7447
      %v8369 = vpack.c.bf16 %v7448, %v7448
      %v8370 = vpack.c.bf16 %v7449, %v7449
      %v8371 = vpack.c.bf16 %v7450, %v7450
      %v8372 = vpack.c.bf16 %v7451, %v7451
      %v8373 = vpack.c.bf16 %v7452, %v7452
      %v8374 = vpack.c.bf16 %v7453, %v7453
      %v8375 = vpack.c.bf16 %v7454, %v7454
      %v8376 = vpack.c.bf16 %v7455, %v7455
      %v8377 = vpack.c.bf16 %v7456, %v7456
      %v8378 = vpack.c.bf16 %v7457, %v7457
      %v8379 = vpack.c.bf16 %v7458, %v7458
      %v8380 = vpack.c.bf16 %v7459, %v7459
      %v8381 = vpack.c.bf16 %v7460, %v7460
      %v8382 = vpack.c.bf16 %v7461, %v7461
      %v8383 = vpack.c.bf16 %v7462, %v7462
      %v8384 = vpack.c.bf16 %v7463, %v7463
      %v8385 = vpack.c.bf16 %v7464, %v7464
      %v8386 = vpack.c.bf16 %v7465, %v7465
      %v8387 = vpack.c.bf16 %v7466, %v7466
      %v8388 = vpack.c.bf16 %v7467, %v7467
      %v8389 = vpack.c.bf16 %v7468, %v7468
      %v8390 = vpack.c.bf16 %v7469, %v7469
      %v8391 = vpack.c.bf16 %v7470, %v7470
      %v8392 = vpack.c.bf16 %v7471, %v7471
      %v8393 = vpack.c.bf16 %v7472, %v7472
      %v8394 = vpack.c.bf16 %v7473, %v7473
      %v8395 = vpack.c.bf16 %v7474, %v7474
      %v8396 = vpack.c.bf16 %v7475, %v7475
      %v8397 = vpack.c.bf16 %v7476, %v7476
      %v8398 = vpack.c.bf16 %v7477, %v7477
      %v8399 = vpack.c.bf16 %v7478, %v7478
      %v8400 = vpack.c.bf16 %v7479, %v7479
      %v8401 = vpack.c.bf16 %v7480, %v7480
      %v8402 = vpack.c.bf16 %v7481, %v7481
      %v8403 = vpack.c.bf16 %v7482, %v7482
      %v8404 = vpack.c.bf16 %v7483, %v7483
      %v8405 = vpack.c.bf16 %v7484, %v7484
      %v8406 = vpack.c.bf16 %v7485, %v7485
      %v8407 = vpack.c.bf16 %v7486, %v7486
      %v8408 = vpack.c.bf16 %v7487, %v7487
      %v8409 = vpack.c.bf16 %v7488, %v7488
      %v8410 = vpack.c.bf16 %v7489, %v7489
      %v8411 = vpack.c.bf16 %v7490, %v7490
      %v8412 = vpack.c.bf16 %v7491, %v7491
      %v8413 = vpack.c.bf16 %v7492, %v7492
      %v8414 = vpack.c.bf16 %v7493, %v7493
      %v8415 = vpack.c.bf16 %v7494, %v7494
      %v8416 = vpack.c.bf16 %v7495, %v7495
      %v8417 = vpack.c.bf16 %v7496, %v7496
      %v8418 = vpack.c.bf16 %v7497, %v7497
      %v8419 = vpack.c.bf16 %v7498, %v7498
      %v8420 = vpack.c.bf16 %v7499, %v7499
      %v8421 = vpack.c.bf16 %v7500, %v7500
      %v8422 = vpack.c.bf16 %v6842, %v6841
      %v8423 = vpack.c.bf16 %v6844, %v6843
      %v8488 = vunpack.c.l.b16 %v8358
      %v8489 = vunpack.c.l.b16 %v8359
      %v8490 = vunpack.c.l.b16 %v8360
      %v8491 = vunpack.c.l.b16 %v8361
      %v8492 = vunpack.c.l.b16 %v8362
      %v8493 = vunpack.c.l.b16 %v8363
      %v8494 = vunpack.c.l.b16 %v8364
      %v8495 = vunpack.c.l.b16 %v8365
      %v8496 = vunpack.c.l.b16 %v8366
      %v8497 = vunpack.c.l.b16 %v8367
      %v8498 = vunpack.c.l.b16 %v8368
      %v8499 = vunpack.c.l.b16 %v8369
      %v8500 = vunpack.c.l.b16 %v8370
      %v8501 = vunpack.c.l.b16 %v8371
      %v8502 = vunpack.c.l.b16 %v8372
      %v8503 = vunpack.c.l.b16 %v8373
      %v8504 = vunpack.c.l.b16 %v8374
      %v8505 = vunpack.c.l.b16 %v8375
      %v8506 = vunpack.c.l.b16 %v8376
      %v8507 = vunpack.c.l.b16 %v8377
      %v8508 = vunpack.c.l.b16 %v8378
      %v8509 = vunpack.c.l.b16 %v8379
      %v8510 = vunpack.c.l.b16 %v8380
      %v8511 = vunpack.c.l.b16 %v8381
      %v8512 = vunpack.c.l.b16 %v8382
      %v8513 = vunpack.c.l.b16 %v8383
      %v8514 = vunpack.c.l.b16 %v8384
      %v8515 = vunpack.c.l.b16 %v8385
      %v8516 = vunpack.c.l.b16 %v8386
      %v8517 = vunpack.c.l.b16 %v8387
      %v8518 = vunpack.c.l.b16 %v8388
      %v8519 = vunpack.c.l.b16 %v8389
      %v8520 = vunpack.c.l.b16 %v8390
      %v8521 = vunpack.c.l.b16 %v8391
      %v8522 = vunpack.c.l.b16 %v8392
      %v8523 = vunpack.c.l.b16 %v8393
      %v8524 = vunpack.c.l.b16 %v8394
      %v8525 = vunpack.c.l.b16 %v8395
      %v8526 = vunpack.c.l.b16 %v8396
      %v8527 = vunpack.c.l.b16 %v8397
      %v8528 = vunpack.c.l.b16 %v8398
      %v8529 = vunpack.c.l.b16 %v8399
      %v8530 = vunpack.c.l.b16 %v8400
      %v8531 = vunpack.c.l.b16 %v8401
      %v8532 = vunpack.c.l.b16 %v8402
      %v8533 = vunpack.c.l.b16 %v8403
      %v8534 = vunpack.c.l.b16 %v8404
      %v8535 = vunpack.c.l.b16 %v8405
      %v8536 = vunpack.c.l.b16 %v8406
      %v8537 = vunpack.c.l.b16 %v8407
      %v8538 = vunpack.c.l.b16 %v8408
      %v8539 = vunpack.c.l.b16 %v8409
      %v8540 = vunpack.c.l.b16 %v8410
      %v8541 = vunpack.c.l.b16 %v8411
      %v8542 = vunpack.c.l.b16 %v8412
      %v8543 = vunpack.c.l.b16 %v8413
      %v8544 = vunpack.c.l.b16 %v8414
      %v8545 = vunpack.c.l.b16 %v8415
      %v8546 = vunpack.c.l.b16 %v8416
      %v8547 = vunpack.c.l.b16 %v8417
      %v8548 = vunpack.c.l.b16 %v8418
      %v8549 = vunpack.c.l.b16 %v8419
      %v8550 = vunpack.c.l.b16 %v8420
      %v8551 = vunpack.c.l.b16 %v8421
      %v8552 = vsel %vm2663, %v8489, %v8488
      %v8553 = vsel %vm2665, %v8490, %v8552
      %v8554 = vsel %vm2667, %v8491, %v8553
      %v8555 = vsel %vm2669, %v8492, %v8554
      %v8556 = vsel %vm2671, %v8493, %v8555
      %v8557 = vsel %vm2673, %v8494, %v8556
      %v8558 = vsel %vm2675, %v8495, %v8557
      %v8559 = vsel %vm2663, %v8497, %v8496
      %v8560 = vsel %vm2665, %v8498, %v8559
      %v8561 = vsel %vm2667, %v8499, %v8560
      %v8562 = vsel %vm2669, %v8500, %v8561
      %v8563 = vsel %vm2671, %v8501, %v8562
      %v8564 = vsel %vm2673, %v8502, %v8563
      %v8565 = vsel %vm2675, %v8503, %v8564
      %v8566 = vsel %vm2663, %v8505, %v8504
      %v8567 = vsel %vm2665, %v8506, %v8566
      %v8568 = vsel %vm2667, %v8507, %v8567
      %v8569 = vsel %vm2669, %v8508, %v8568
      %v8570 = vsel %vm2671, %v8509, %v8569
      %v8571 = vsel %vm2673, %v8510, %v8570
      %v8572 = vsel %vm2675, %v8511, %v8571
      %v8573 = vsel %vm2663, %v8513, %v8512
      %v8574 = vsel %vm2665, %v8514, %v8573
      %v8575 = vsel %vm2667, %v8515, %v8574
      %v8576 = vsel %vm2669, %v8516, %v8575
      %v8577 = vsel %vm2671, %v8517, %v8576
      %v8578 = vsel %vm2673, %v8518, %v8577
      %v8579 = vsel %vm2675, %v8519, %v8578
      %v8580 = vsel %vm2663, %v8521, %v8520
      %v8581 = vsel %vm2665, %v8522, %v8580
      %v8582 = vsel %vm2667, %v8523, %v8581
      %v8583 = vsel %vm2669, %v8524, %v8582
      %v8584 = vsel %vm2671, %v8525, %v8583
      %v8585 = vsel %vm2673, %v8526, %v8584
      %v8586 = vsel %vm2675, %v8527, %v8585
      %v8587 = vsel %vm2663, %v8529, %v8528
      %v8588 = vsel %vm2665, %v8530, %v8587
      %v8589 = vsel %vm2667, %v8531, %v8588
      %v8590 = vsel %vm2669, %v8532, %v8589
      %v8591 = vsel %vm2671, %v8533, %v8590
      %v8592 = vsel %vm2673, %v8534, %v8591
      %v8593 = vsel %vm2675, %v8535, %v8592
      %v8594 = vsel %vm2663, %v8537, %v8536
      %v8595 = vsel %vm2665, %v8538, %v8594
      %v8596 = vsel %vm2667, %v8539, %v8595
      %v8597 = vsel %vm2669, %v8540, %v8596
      %v8598 = vsel %vm2671, %v8541, %v8597
      %v8599 = vsel %vm2673, %v8542, %v8598
      %v8600 = vsel %vm2675, %v8543, %v8599
      %v8601 = vsel %vm2663, %v8545, %v8544
      %v8602 = vsel %vm2665, %v8546, %v8601
      %v8603 = vsel %vm2667, %v8547, %v8602
      %v8604 = vsel %vm2669, %v8548, %v8603
      %v8605 = vsel %vm2671, %v8549, %v8604
      %v8606 = vsel %vm2673, %v8550, %v8605
      %v8607 = vsel %vm2675, %v8551, %v8606
      %v8608 = vpack.c.b16 %v8565, %v8558
      %v8609 = vpack.c.b16 %v8579, %v8572
      %v8610 = vpack.c.b16 %v8593, %v8586
      %v8611 = vpack.c.b16 %v8607, %v8600
      %v8613 = vsel %vm2748, %v8608, 0
      %v8616 = vsel %vm2748, %v8609, 0
      %v8619 = vsel %vm2748, %v8610, 0
      %v8622 = vsel %vm2748, %v8611, 0
      %8624 = vmatprep.subr.bf16.mxu0 0
      %8625 = vmatpush1.bf16.msra.mxu0 %v8422
      %8626 = vmatprep.subr.bf16.mxu0 0
      %8627 = vmatpush1.bf16.msra.mxu0 %v8423
      %8628 = vmatprep.subr.bf16.mxu0 0
      %8629 = vmatpush1.bf16.msra.mxu0 0
      %8630 = vmatprep.subr.bf16.mxu0 0
      %8631 = vmatpush1.bf16.msra.mxu0 0
      %8632 = vmatprep.subr.bf16.mxu0 0
      %8633 = vmatpush1.bf16.msra.mxu0 0
      %8634 = vmatprep.subr.bf16.mxu0 0
      %8635 = vmatpush1.bf16.msra.mxu0 0
      %8636 = vmatprep.subr.bf16.mxu0 0
      %8637 = vmatpush1.bf16.msra.mxu0 0
      %8638 = vmatprep.subr.bf16.mxu0 0
      %8639 = vmatpush1.bf16.msra.mxu0 0
      %8640 = vmatprep.subr.bf16.mxu0 0
      %8641 = vmatpush1.bf16.msra.mxu0 0
      %8642 = vmatprep.subr.bf16.mxu0 0
      %8643 = vmatpush1.bf16.msra.mxu0 0
      %8644 = vmatprep.subr.bf16.mxu0 0
      %8645 = vmatpush1.bf16.msra.mxu0 0
      %8646 = vmatprep.subr.bf16.mxu0 0
      %8647 = vmatpush1.bf16.msra.mxu0 0
      %8648 = vmatprep.subr.bf16.mxu0 0
      %8649 = vmatpush1.bf16.msra.mxu0 0
      %8650 = vmatprep.subr.bf16.mxu0 0
      %8651 = vmatpush1.bf16.msra.mxu0 0
      %8652 = vmatprep.subr.bf16.mxu0 0
      %8653 = vmatpush1.bf16.msra.mxu0 0
      %8654 = vmatprep.subr.bf16.mxu0 0
      %8655 = vmatpush1.bf16.msra.mxu0 0
      %8656 = vmatprep.mubr.bf16.mxu0 0
      %8657 = vmatmul.mubr.bf16.gmra.mrb[0].mxu0 %v8613
      %v8658 = vpop.f32.mrb[0].mxu0
      %v8659 = vadd.f32 0.0, %v8658
      %v8660 = vpop.f32.mrb[0].mxu0
      %v8661 = vpop.f32.mrb[0].mxu0
      %v8662 = vadd.f32 0.0, %v8661
      %v8663 = vpop.f32.mrb[0].mxu0
      %8664 = vmatprep.mubr.bf16.mxu0 0
      %8665 = vmatmul.mubr.bf16.gmra.mrb[0].mxu0 %v8616
      %v8666 = vpop.f32.mrb[0].mxu0
      %v8667 = vadd.f32 0.0, %v8666
      %v8668 = vpop.f32.mrb[0].mxu0
      %v8669 = vpop.f32.mrb[0].mxu0
      %v8670 = vadd.f32 0.0, %v8669
      %v8671 = vpop.f32.mrb[0].mxu0
      %8672 = vmatprep.mubr.bf16.mxu0 0
      %8673 = vmatmul.mubr.bf16.gmra.mrb[0].mxu0 %v8619
      %v8674 = vpop.f32.mrb[0].mxu0
      %v8675 = vadd.f32 0.0, %v8674
      %v8676 = vpop.f32.mrb[0].mxu0
      %v8677 = vpop.f32.mrb[0].mxu0
      %v8678 = vadd.f32 0.0, %v8677
      %v8679 = vpop.f32.mrb[0].mxu0
      %8680 = vmatprep.mubr.bf16.mxu0 0
      %8681 = vmatmul.mubr.bf16.gmra.mrb[0].mxu0 %v8622
      %v8682 = vpop.f32.mrb[0].mxu0
      %v8683 = vadd.f32 0.0, %v8682
      %v8684 = vpop.f32.mrb[0].mxu0
      %v8685 = vpop.f32.mrb[0].mxu0
      %v8686 = vadd.f32 0.0, %v8685
      %v8687 = vpop.f32.mrb[0].mxu0
      %8688 = vdwg.mxu0
      %v8697 = vcombine.high %v8659, %v8659
      %v8699 = vunpack.c.l.s4 1966171168
      %v8700 = vunpack.c.0.s8 %v8699
      %v8701 = vlaneseq
      %v8702 = vshrl.u32 %v8701, 7
      %v8703 = vsub.s32 %v8700, %v8702
      %v8704 = vrot.slane %v8659, %v8703
      %v8706 = vunpack.c.l.s4 1966171168
      %v8707 = vunpack.c.0.s8 %v8706
      %v8708 = vlaneseq
      %v8709 = vshrl.u32 %v8708, 7
      %v8710 = vsub.s32 %v8707, %v8709
      %v8711 = vrot.slane %v8697, %v8710
      %v8712 = vcombine.high %v8704, %v8704
      %v8713 = vcombine.high %v8711, %v8711
      %v8715 = vunpack.c.l.s4 1966171168
      %v8716 = vunpack.c.0.s8 %v8715
      %v8717 = vlaneseq
      %v8718 = vshrl.u32 %v8717, 7
      %v8719 = vsub.s32 %v8716, %v8718
      %v8720 = vrot.slane %v8704, %v8719
      %v8722 = vunpack.c.l.s4 1966171168
      %v8723 = vunpack.c.0.s8 %v8722
      %v8724 = vlaneseq
      %v8725 = vshrl.u32 %v8724, 7
      %v8726 = vsub.s32 %v8723, %v8725
      %v8727 = vrot.slane %v8711, %v8726
      %v8729 = vunpack.c.l.s4 1966171168
      %v8730 = vunpack.c.0.s8 %v8729
      %v8731 = vlaneseq
      %v8732 = vshrl.u32 %v8731, 7
      %v8733 = vsub.s32 %v8730, %v8732
      %v8734 = vrot.slane %v8712, %v8733
      %v8736 = vunpack.c.l.s4 1966171168
      %v8737 = vunpack.c.0.s8 %v8736
      %v8738 = vlaneseq
      %v8739 = vshrl.u32 %v8738, 7
      %v8740 = vsub.s32 %v8737, %v8739
      %v8741 = vrot.slane %v8713, %v8740
      %v8742 = vcombine.high %v8720, %v8720
      %v8743 = vcombine.high %v8727, %v8727
      %v8744 = vcombine.high %v8734, %v8734
      %v8745 = vcombine.high %v8741, %v8741
      %v8746 = vcombine.high %v8662, %v8662
      %v8748 = vunpack.c.l.s4 1966171168
      %v8749 = vunpack.c.0.s8 %v8748
      %v8750 = vlaneseq
      %v8751 = vshrl.u32 %v8750, 7
      %v8752 = vsub.s32 %v8749, %v8751
      %v8753 = vrot.slane %v8662, %v8752
      %v8755 = vunpack.c.l.s4 1966171168
      %v8756 = vunpack.c.0.s8 %v8755
      %v8757 = vlaneseq
      %v8758 = vshrl.u32 %v8757, 7
      %v8759 = vsub.s32 %v8756, %v8758
      %v8760 = vrot.slane %v8746, %v8759
      %v8761 = vcombine.high %v8753, %v8753
      %v8762 = vcombine.high %v8760, %v8760
      %v8764 = vunpack.c.l.s4 1966171168
      %v8765 = vunpack.c.0.s8 %v8764
      %v8766 = vlaneseq
      %v8767 = vshrl.u32 %v8766, 7
      %v8768 = vsub.s32 %v8765, %v8767
      %v8769 = vrot.slane %v8753, %v8768
      %v8771 = vunpack.c.l.s4 1966171168
      %v8772 = vunpack.c.0.s8 %v8771
      %v8773 = vlaneseq
      %v8774 = vshrl.u32 %v8773, 7
      %v8775 = vsub.s32 %v8772, %v8774
      %v8776 = vrot.slane %v8760, %v8775
      %v8778 = vunpack.c.l.s4 1966171168
      %v8779 = vunpack.c.0.s8 %v8778
      %v8780 = vlaneseq
      %v8781 = vshrl.u32 %v8780, 7
      %v8782 = vsub.s32 %v8779, %v8781
      %v8783 = vrot.slane %v8761, %v8782
      %v8785 = vunpack.c.l.s4 1966171168
      %v8786 = vunpack.c.0.s8 %v8785
      %v8787 = vlaneseq
      %v8788 = vshrl.u32 %v8787, 7
      %v8789 = vsub.s32 %v8786, %v8788
      %v8790 = vrot.slane %v8762, %v8789
      %v8791 = vcombine.high %v8769, %v8769
      %v8792 = vcombine.high %v8776, %v8776
      %v8793 = vcombine.high %v8783, %v8783
      %v8794 = vcombine.high %v8790, %v8790
      %v8795 = vcombine.high %v8667, %v8667
      %v8797 = vunpack.c.l.s4 1966171168
      %v8798 = vunpack.c.0.s8 %v8797
      %v8799 = vlaneseq
      %v8800 = vshrl.u32 %v8799, 7
      %v8801 = vsub.s32 %v8798, %v8800
      %v8802 = vrot.slane %v8667, %v8801
      %v8804 = vunpack.c.l.s4 1966171168
      %v8805 = vunpack.c.0.s8 %v8804
      %v8806 = vlaneseq
      %v8807 = vshrl.u32 %v8806, 7
      %v8808 = vsub.s32 %v8805, %v8807
      %v8809 = vrot.slane %v8795, %v8808
      %v8810 = vcombine.high %v8802, %v8802
      %v8811 = vcombine.high %v8809, %v8809
      %v8813 = vunpack.c.l.s4 1966171168
      %v8814 = vunpack.c.0.s8 %v8813
      %v8815 = vlaneseq
      %v8816 = vshrl.u32 %v8815, 7
      %v8817 = vsub.s32 %v8814, %v8816
      %v8818 = vrot.slane %v8802, %v8817
      %v8820 = vunpack.c.l.s4 1966171168
      %v8821 = vunpack.c.0.s8 %v8820
      %v8822 = vlaneseq
      %v8823 = vshrl.u32 %v8822, 7
      %v8824 = vsub.s32 %v8821, %v8823
      %v8825 = vrot.slane %v8809, %v8824
      %v8827 = vunpack.c.l.s4 1966171168
      %v8828 = vunpack.c.0.s8 %v8827
      %v8829 = vlaneseq
      %v8830 = vshrl.u32 %v8829, 7
      %v8831 = vsub.s32 %v8828, %v8830
      %v8832 = vrot.slane %v8810, %v8831
      %v8834 = vunpack.c.l.s4 1966171168
      %v8835 = vunpack.c.0.s8 %v8834
      %v8836 = vlaneseq
      %v8837 = vshrl.u32 %v8836, 7
      %v8838 = vsub.s32 %v8835, %v8837
      %v8839 = vrot.slane %v8811, %v8838
      %v8840 = vcombine.high %v8818, %v8818
      %v8841 = vcombine.high %v8825, %v8825
      %v8842 = vcombine.high %v8832, %v8832
      %v8843 = vcombine.high %v8839, %v8839
      %v8844 = vcombine.high %v8670, %v8670
      %v8846 = vunpack.c.l.s4 1966171168
      %v8847 = vunpack.c.0.s8 %v8846
      %v8848 = vlaneseq
      %v8849 = vshrl.u32 %v8848, 7
      %v8850 = vsub.s32 %v8847, %v8849
      %v8851 = vrot.slane %v8670, %v8850
      %v8853 = vunpack.c.l.s4 1966171168
      %v8854 = vunpack.c.0.s8 %v8853
      %v8855 = vlaneseq
      %v8856 = vshrl.u32 %v8855, 7
      %v8857 = vsub.s32 %v8854, %v8856
      %v8858 = vrot.slane %v8844, %v8857
      %v8859 = vcombine.high %v8851, %v8851
      %v8860 = vcombine.high %v8858, %v8858
      %v8862 = vunpack.c.l.s4 1966171168
      %v8863 = vunpack.c.0.s8 %v8862
      %v8864 = vlaneseq
      %v8865 = vshrl.u32 %v8864, 7
      %v8866 = vsub.s32 %v8863, %v8865
      %v8867 = vrot.slane %v8851, %v8866
      %v8869 = vunpack.c.l.s4 1966171168
      %v8870 = vunpack.c.0.s8 %v8869
      %v8871 = vlaneseq
      %v8872 = vshrl.u32 %v8871, 7
      %v8873 = vsub.s32 %v8870, %v8872
      %v8874 = vrot.slane %v8858, %v8873
      %v8876 = vunpack.c.l.s4 1966171168
      %v8877 = vunpack.c.0.s8 %v8876
      %v8878 = vlaneseq
      %v8879 = vshrl.u32 %v8878, 7
      %v8880 = vsub.s32 %v8877, %v8879
      %v8881 = vrot.slane %v8859, %v8880
      %v8883 = vunpack.c.l.s4 1966171168
      %v8884 = vunpack.c.0.s8 %v8883
      %v8885 = vlaneseq
      %v8886 = vshrl.u32 %v8885, 7
      %v8887 = vsub.s32 %v8884, %v8886
      %v8888 = vrot.slane %v8860, %v8887
      %v8889 = vcombine.high %v8867, %v8867
      %v8890 = vcombine.high %v8874, %v8874
      %v8891 = vcombine.high %v8881, %v8881
      %v8892 = vcombine.high %v8888, %v8888
      %v8893 = vcombine.high %v8675, %v8675
      %v8895 = vunpack.c.l.s4 1966171168
      %v8896 = vunpack.c.0.s8 %v8895
      %v8897 = vlaneseq
      %v8898 = vshrl.u32 %v8897, 7
      %v8899 = vsub.s32 %v8896, %v8898
      %v8900 = vrot.slane %v8675, %v8899
      %v8902 = vunpack.c.l.s4 1966171168
      %v8903 = vunpack.c.0.s8 %v8902
      %v8904 = vlaneseq
      %v8905 = vshrl.u32 %v8904, 7
      %v8906 = vsub.s32 %v8903, %v8905
      %v8907 = vrot.slane %v8893, %v8906
      %v8908 = vcombine.high %v8900, %v8900
      %v8909 = vcombine.high %v8907, %v8907
      %v8911 = vunpack.c.l.s4 1966171168
      %v8912 = vunpack.c.0.s8 %v8911
      %v8913 = vlaneseq
      %v8914 = vshrl.u32 %v8913, 7
      %v8915 = vsub.s32 %v8912, %v8914
      %v8916 = vrot.slane %v8900, %v8915
      %v8918 = vunpack.c.l.s4 1966171168
      %v8919 = vunpack.c.0.s8 %v8918
      %v8920 = vlaneseq
      %v8921 = vshrl.u32 %v8920, 7
      %v8922 = vsub.s32 %v8919, %v8921
      %v8923 = vrot.slane %v8907, %v8922
      %v8925 = vunpack.c.l.s4 1966171168
      %v8926 = vunpack.c.0.s8 %v8925
      %v8927 = vlaneseq
      %v8928 = vshrl.u32 %v8927, 7
      %v8929 = vsub.s32 %v8926, %v8928
      %v8930 = vrot.slane %v8908, %v8929
      %v8932 = vunpack.c.l.s4 1966171168
      %v8933 = vunpack.c.0.s8 %v8932
      %v8934 = vlaneseq
      %v8935 = vshrl.u32 %v8934, 7
      %v8936 = vsub.s32 %v8933, %v8935
      %v8937 = vrot.slane %v8909, %v8936
      %v8938 = vcombine.high %v8916, %v8916
      %v8939 = vcombine.high %v8923, %v8923
      %v8940 = vcombine.high %v8930, %v8930
      %v8941 = vcombine.high %v8937, %v8937
      %v8942 = vcombine.high %v8678, %v8678
      %v8944 = vunpack.c.l.s4 1966171168
      %v8945 = vunpack.c.0.s8 %v8944
      %v8946 = vlaneseq
      %v8947 = vshrl.u32 %v8946, 7
      %v8948 = vsub.s32 %v8945, %v8947
      %v8949 = vrot.slane %v8678, %v8948
      %v8951 = vunpack.c.l.s4 1966171168
      %v8952 = vunpack.c.0.s8 %v8951
      %v8953 = vlaneseq
      %v8954 = vshrl.u32 %v8953, 7
      %v8955 = vsub.s32 %v8952, %v8954
      %v8956 = vrot.slane %v8942, %v8955
      %v8957 = vcombine.high %v8949, %v8949
      %v8958 = vcombine.high %v8956, %v8956
      %v8960 = vunpack.c.l.s4 1966171168
      %v8961 = vunpack.c.0.s8 %v8960
      %v8962 = vlaneseq
      %v8963 = vshrl.u32 %v8962, 7
      %v8964 = vsub.s32 %v8961, %v8963
      %v8965 = vrot.slane %v8949, %v8964
      %v8967 = vunpack.c.l.s4 1966171168
      %v8968 = vunpack.c.0.s8 %v8967
      %v8969 = vlaneseq
      %v8970 = vshrl.u32 %v8969, 7
      %v8971 = vsub.s32 %v8968, %v8970
      %v8972 = vrot.slane %v8956, %v8971
      %v8974 = vunpack.c.l.s4 1966171168
      %v8975 = vunpack.c.0.s8 %v8974
      %v8976 = vlaneseq
      %v8977 = vshrl.u32 %v8976, 7
      %v8978 = vsub.s32 %v8975, %v8977
      %v8979 = vrot.slane %v8957, %v8978
      %v8981 = vunpack.c.l.s4 1966171168
      %v8982 = vunpack.c.0.s8 %v8981
      %v8983 = vlaneseq
      %v8984 = vshrl.u32 %v8983, 7
      %v8985 = vsub.s32 %v8982, %v8984
      %v8986 = vrot.slane %v8958, %v8985
      %v8987 = vcombine.high %v8965, %v8965
      %v8988 = vcombine.high %v8972, %v8972
      %v8989 = vcombine.high %v8979, %v8979
      %v8990 = vcombine.high %v8986, %v8986
      %v8991 = vcombine.high %v8683, %v8683
      %v8993 = vunpack.c.l.s4 1966171168
      %v8994 = vunpack.c.0.s8 %v8993
      %v8995 = vlaneseq
      %v8996 = vshrl.u32 %v8995, 7
      %v8997 = vsub.s32 %v8994, %v8996
      %v8998 = vrot.slane %v8683, %v8997
      %v9000 = vunpack.c.l.s4 1966171168
      %v9001 = vunpack.c.0.s8 %v9000
      %v9002 = vlaneseq
      %v9003 = vshrl.u32 %v9002, 7
      %v9004 = vsub.s32 %v9001, %v9003
      %v9005 = vrot.slane %v8991, %v9004
      %v9006 = vcombine.high %v8998, %v8998
      %v9007 = vcombine.high %v9005, %v9005
      %v9009 = vunpack.c.l.s4 1966171168
      %v9010 = vunpack.c.0.s8 %v9009
      %v9011 = vlaneseq
      %v9012 = vshrl.u32 %v9011, 7
      %v9013 = vsub.s32 %v9010, %v9012
      %v9014 = vrot.slane %v8998, %v9013
      %v9016 = vunpack.c.l.s4 1966171168
      %v9017 = vunpack.c.0.s8 %v9016
      %v9018 = vlaneseq
      %v9019 = vshrl.u32 %v9018, 7
      %v9020 = vsub.s32 %v9017, %v9019
      %v9021 = vrot.slane %v9005, %v9020
      %v9023 = vunpack.c.l.s4 1966171168
      %v9024 = vunpack.c.0.s8 %v9023
      %v9025 = vlaneseq
      %v9026 = vshrl.u32 %v9025, 7
      %v9027 = vsub.s32 %v9024, %v9026
      %v9028 = vrot.slane %v9006, %v9027
      %v9030 = vunpack.c.l.s4 1966171168
      %v9031 = vunpack.c.0.s8 %v9030
      %v9032 = vlaneseq
      %v9033 = vshrl.u32 %v9032, 7
      %v9034 = vsub.s32 %v9031, %v9033
      %v9035 = vrot.slane %v9007, %v9034
      %v9036 = vcombine.high %v9014, %v9014
      %v9037 = vcombine.high %v9021, %v9021
      %v9038 = vcombine.high %v9028, %v9028
      %v9039 = vcombine.high %v9035, %v9035
      %v9040 = vcombine.high %v8686, %v8686
      %v9042 = vunpack.c.l.s4 1966171168
      %v9043 = vunpack.c.0.s8 %v9042
      %v9044 = vlaneseq
      %v9045 = vshrl.u32 %v9044, 7
      %v9046 = vsub.s32 %v9043, %v9045
      %v9047 = vrot.slane %v8686, %v9046
      %v9049 = vunpack.c.l.s4 1966171168
      %v9050 = vunpack.c.0.s8 %v9049
      %v9051 = vlaneseq
      %v9052 = vshrl.u32 %v9051, 7
      %v9053 = vsub.s32 %v9050, %v9052
      %v9054 = vrot.slane %v9040, %v9053
      %v9055 = vcombine.high %v9047, %v9047
      %v9056 = vcombine.high %v9054, %v9054
      %v9058 = vunpack.c.l.s4 1966171168
      %v9059 = vunpack.c.0.s8 %v9058
      %v9060 = vlaneseq
      %v9061 = vshrl.u32 %v9060, 7
      %v9062 = vsub.s32 %v9059, %v9061
      %v9063 = vrot.slane %v9047, %v9062
      %v9065 = vunpack.c.l.s4 1966171168
      %v9066 = vunpack.c.0.s8 %v9065
      %v9067 = vlaneseq
      %v9068 = vshrl.u32 %v9067, 7
      %v9069 = vsub.s32 %v9066, %v9068
      %v9070 = vrot.slane %v9054, %v9069
      %v9072 = vunpack.c.l.s4 1966171168
      %v9073 = vunpack.c.0.s8 %v9072
      %v9074 = vlaneseq
      %v9075 = vshrl.u32 %v9074, 7
      %v9076 = vsub.s32 %v9073, %v9075
      %v9077 = vrot.slane %v9055, %v9076
      %v9079 = vunpack.c.l.s4 1966171168
      %v9080 = vunpack.c.0.s8 %v9079
      %v9081 = vlaneseq
      %v9082 = vshrl.u32 %v9081, 7
      %v9083 = vsub.s32 %v9080, %v9082
      %v9084 = vrot.slane %v9056, %v9083
      %v9085 = vcombine.high %v9063, %v9063
      %v9086 = vcombine.high %v9070, %v9070
      %v9087 = vcombine.high %v9077, %v9077
      %v9088 = vcombine.high %v9084, %v9084
      %v9089 = vlaneseq
      %v9090 = vshrl.u32 %v9089, 7
      %v9091 = vsub.s32 0, %v9090
      %v9092 = vrot.slane %v8720, %v9091
      %v9093 = vlaneseq
      %v9094 = vshrl.u32 %v9093, 7
      %v9095 = vsub.s32 0, %v9094
      %v9096 = vrot.slane %v8734, %v9095
      %v9097 = vlaneseq
      %v9098 = vshrl.u32 %v9097, 7
      %v9099 = vsub.s32 0, %v9098
      %v9100 = vrot.slane %v8742, %v9099
      %v9101 = vlaneseq
      %v9102 = vshrl.u32 %v9101, 7
      %v9103 = vsub.s32 0, %v9102
      %v9104 = vrot.slane %v8744, %v9103
      %v9105 = vlaneseq
      %v9106 = vshrl.u32 %v9105, 7
      %v9107 = vsub.s32 0, %v9106
      %v9108 = vrot.slane %v8727, %v9107
      %v9109 = vlaneseq
      %v9110 = vshrl.u32 %v9109, 7
      %v9111 = vsub.s32 0, %v9110
      %v9112 = vrot.slane %v8741, %v9111
      %v9113 = vlaneseq
      %v9114 = vshrl.u32 %v9113, 7
      %v9115 = vsub.s32 0, %v9114
      %v9116 = vrot.slane %v8743, %v9115
      %v9117 = vlaneseq
      %v9118 = vshrl.u32 %v9117, 7
      %v9119 = vsub.s32 0, %v9118
      %v9120 = vrot.slane %v8745, %v9119
      %v9121 = vlaneseq
      %v9122 = vshrl.u32 %v9121, 7
      %v9123 = vsub.s32 0, %v9122
      %v9124 = vrot.slane %v8769, %v9123
      %v9125 = vlaneseq
      %v9126 = vshrl.u32 %v9125, 7
      %v9127 = vsub.s32 0, %v9126
      %v9128 = vrot.slane %v8783, %v9127
      %v9129 = vlaneseq
      %v9130 = vshrl.u32 %v9129, 7
      %v9131 = vsub.s32 0, %v9130
      %v9132 = vrot.slane %v8791, %v9131
      %v9133 = vlaneseq
      %v9134 = vshrl.u32 %v9133, 7
      %v9135 = vsub.s32 0, %v9134
      %v9136 = vrot.slane %v8793, %v9135
      %v9137 = vlaneseq
      %v9138 = vshrl.u32 %v9137, 7
      %v9139 = vsub.s32 0, %v9138
      %v9140 = vrot.slane %v8776, %v9139
      %v9141 = vlaneseq
      %v9142 = vshrl.u32 %v9141, 7
      %v9143 = vsub.s32 0, %v9142
      %v9144 = vrot.slane %v8790, %v9143
      %v9145 = vlaneseq
      %v9146 = vshrl.u32 %v9145, 7
      %v9147 = vsub.s32 0, %v9146
      %v9148 = vrot.slane %v8792, %v9147
      %v9149 = vlaneseq
      %v9150 = vshrl.u32 %v9149, 7
      %v9151 = vsub.s32 0, %v9150
      %v9152 = vrot.slane %v8794, %v9151
      %v9153 = vlaneseq
      %v9154 = vshrl.u32 %v9153, 7
      %v9155 = vsub.s32 0, %v9154
      %v9156 = vrot.slane %v8818, %v9155
      %v9157 = vlaneseq
      %v9158 = vshrl.u32 %v9157, 7
      %v9159 = vsub.s32 0, %v9158
      %v9160 = vrot.slane %v8832, %v9159
      %v9161 = vlaneseq
      %v9162 = vshrl.u32 %v9161, 7
      %v9163 = vsub.s32 0, %v9162
      %v9164 = vrot.slane %v8840, %v9163
      %v9165 = vlaneseq
      %v9166 = vshrl.u32 %v9165, 7
      %v9167 = vsub.s32 0, %v9166
      %v9168 = vrot.slane %v8842, %v9167
      %v9169 = vlaneseq
      %v9170 = vshrl.u32 %v9169, 7
      %v9171 = vsub.s32 0, %v9170
      %v9172 = vrot.slane %v8825, %v9171
      %v9173 = vlaneseq
      %v9174 = vshrl.u32 %v9173, 7
      %v9175 = vsub.s32 0, %v9174
      %v9176 = vrot.slane %v8839, %v9175
      %v9177 = vlaneseq
      %v9178 = vshrl.u32 %v9177, 7
      %v9179 = vsub.s32 0, %v9178
      %v9180 = vrot.slane %v8841, %v9179
      %v9181 = vlaneseq
      %v9182 = vshrl.u32 %v9181, 7
      %v9183 = vsub.s32 0, %v9182
      %v9184 = vrot.slane %v8843, %v9183
      %v9185 = vlaneseq
      %v9186 = vshrl.u32 %v9185, 7
      %v9187 = vsub.s32 0, %v9186
      %v9188 = vrot.slane %v8867, %v9187
      %v9189 = vlaneseq
      %v9190 = vshrl.u32 %v9189, 7
      %v9191 = vsub.s32 0, %v9190
      %v9192 = vrot.slane %v8881, %v9191
      %v9193 = vlaneseq
      %v9194 = vshrl.u32 %v9193, 7
      %v9195 = vsub.s32 0, %v9194
      %v9196 = vrot.slane %v8889, %v9195
      %v9197 = vlaneseq
      %v9198 = vshrl.u32 %v9197, 7
      %v9199 = vsub.s32 0, %v9198
      %v9200 = vrot.slane %v8891, %v9199
      %v9201 = vlaneseq
      %v9202 = vshrl.u32 %v9201, 7
      %v9203 = vsub.s32 0, %v9202
      %v9204 = vrot.slane %v8874, %v9203
      %v9205 = vlaneseq
      %v9206 = vshrl.u32 %v9205, 7
      %v9207 = vsub.s32 0, %v9206
      %v9208 = vrot.slane %v8888, %v9207
      %v9209 = vlaneseq
      %v9210 = vshrl.u32 %v9209, 7
      %v9211 = vsub.s32 0, %v9210
      %v9212 = vrot.slane %v8890, %v9211
      %v9213 = vlaneseq
      %v9214 = vshrl.u32 %v9213, 7
      %v9215 = vsub.s32 0, %v9214
      %v9216 = vrot.slane %v8892, %v9215
      %v9217 = vlaneseq
      %v9218 = vshrl.u32 %v9217, 7
      %v9219 = vsub.s32 0, %v9218
      %v9220 = vrot.slane %v8916, %v9219
      %v9221 = vlaneseq
      %v9222 = vshrl.u32 %v9221, 7
      %v9223 = vsub.s32 0, %v9222
      %v9224 = vrot.slane %v8930, %v9223
      %v9225 = vlaneseq
      %v9226 = vshrl.u32 %v9225, 7
      %v9227 = vsub.s32 0, %v9226
      %v9228 = vrot.slane %v8938, %v9227
      %v9229 = vlaneseq
      %v9230 = vshrl.u32 %v9229, 7
      %v9231 = vsub.s32 0, %v9230
      %v9232 = vrot.slane %v8940, %v9231
      %v9233 = vlaneseq
      %v9234 = vshrl.u32 %v9233, 7
      %v9235 = vsub.s32 0, %v9234
      %v9236 = vrot.slane %v8923, %v9235
      %v9237 = vlaneseq
      %v9238 = vshrl.u32 %v9237, 7
      %v9239 = vsub.s32 0, %v9238
      %v9240 = vrot.slane %v8937, %v9239
      %v9241 = vlaneseq
      %v9242 = vshrl.u32 %v9241, 7
      %v9243 = vsub.s32 0, %v9242
      %v9244 = vrot.slane %v8939, %v9243
      %v9245 = vlaneseq
      %v9246 = vshrl.u32 %v9245, 7
      %v9247 = vsub.s32 0, %v9246
      %v9248 = vrot.slane %v8941, %v9247
      %v9249 = vlaneseq
      %v9250 = vshrl.u32 %v9249, 7
      %v9251 = vsub.s32 0, %v9250
      %v9252 = vrot.slane %v8965, %v9251
      %v9253 = vlaneseq
      %v9254 = vshrl.u32 %v9253, 7
      %v9255 = vsub.s32 0, %v9254
      %v9256 = vrot.slane %v8979, %v9255
      %v9257 = vlaneseq
      %v9258 = vshrl.u32 %v9257, 7
      %v9259 = vsub.s32 0, %v9258
      %v9260 = vrot.slane %v8987, %v9259
      %v9261 = vlaneseq
      %v9262 = vshrl.u32 %v9261, 7
      %v9263 = vsub.s32 0, %v9262
      %v9264 = vrot.slane %v8989, %v9263
      %v9265 = vlaneseq
      %v9266 = vshrl.u32 %v9265, 7
      %v9267 = vsub.s32 0, %v9266
      %v9268 = vrot.slane %v8972, %v9267
      %v9269 = vlaneseq
      %v9270 = vshrl.u32 %v9269, 7
      %v9271 = vsub.s32 0, %v9270
      %v9272 = vrot.slane %v8986, %v9271
      %v9273 = vlaneseq
      %v9274 = vshrl.u32 %v9273, 7
      %v9275 = vsub.s32 0, %v9274
      %v9276 = vrot.slane %v8988, %v9275
      %v9277 = vlaneseq
      %v9278 = vshrl.u32 %v9277, 7
      %v9279 = vsub.s32 0, %v9278
      %v9280 = vrot.slane %v8990, %v9279
      %v9281 = vlaneseq
      %v9282 = vshrl.u32 %v9281, 7
      %v9283 = vsub.s32 0, %v9282
      %v9284 = vrot.slane %v9014, %v9283
      %v9285 = vlaneseq
      %v9286 = vshrl.u32 %v9285, 7
      %v9287 = vsub.s32 0, %v9286
      %v9288 = vrot.slane %v9028, %v9287
      %v9289 = vlaneseq
      %v9290 = vshrl.u32 %v9289, 7
      %v9291 = vsub.s32 0, %v9290
      %v9292 = vrot.slane %v9036, %v9291
      %v9293 = vlaneseq
      %v9294 = vshrl.u32 %v9293, 7
      %v9295 = vsub.s32 0, %v9294
      %v9296 = vrot.slane %v9038, %v9295
      %v9297 = vlaneseq
      %v9298 = vshrl.u32 %v9297, 7
      %v9299 = vsub.s32 0, %v9298
      %v9300 = vrot.slane %v9021, %v9299
      %v9301 = vlaneseq
      %v9302 = vshrl.u32 %v9301, 7
      %v9303 = vsub.s32 0, %v9302
      %v9304 = vrot.slane %v9035, %v9303
      %v9305 = vlaneseq
      %v9306 = vshrl.u32 %v9305, 7
      %v9307 = vsub.s32 0, %v9306
      %v9308 = vrot.slane %v9037, %v9307
      %v9309 = vlaneseq
      %v9310 = vshrl.u32 %v9309, 7
      %v9311 = vsub.s32 0, %v9310
      %v9312 = vrot.slane %v9039, %v9311
      %v9313 = vlaneseq
      %v9314 = vshrl.u32 %v9313, 7
      %v9315 = vsub.s32 0, %v9314
      %v9316 = vrot.slane %v9063, %v9315
      %v9317 = vlaneseq
      %v9318 = vshrl.u32 %v9317, 7
      %v9319 = vsub.s32 0, %v9318
      %v9320 = vrot.slane %v9077, %v9319
      %v9321 = vlaneseq
      %v9322 = vshrl.u32 %v9321, 7
      %v9323 = vsub.s32 0, %v9322
      %v9324 = vrot.slane %v9085, %v9323
      %v9325 = vlaneseq
      %v9326 = vshrl.u32 %v9325, 7
      %v9327 = vsub.s32 0, %v9326
      %v9328 = vrot.slane %v9087, %v9327
      %v9329 = vlaneseq
      %v9330 = vshrl.u32 %v9329, 7
      %v9331 = vsub.s32 0, %v9330
      %v9332 = vrot.slane %v9070, %v9331
      %v9333 = vlaneseq
      %v9334 = vshrl.u32 %v9333, 7
      %v9335 = vsub.s32 0, %v9334
      %v9336 = vrot.slane %v9084, %v9335
      %v9337 = vlaneseq
      %v9338 = vshrl.u32 %v9337, 7
      %v9339 = vsub.s32 0, %v9338
      %v9340 = vrot.slane %v9086, %v9339
      %v9341 = vlaneseq
      %v9342 = vshrl.u32 %v9341, 7
      %v9343 = vsub.s32 0, %v9342
      %v9344 = vrot.slane %v9088, %v9343
      %v9409 = vadd.f32 %v8294, %v9092
      %v9410 = vadd.f32 %v8295, %v9096
      %v9411 = vadd.f32 %v8296, %v9100
      %v9412 = vadd.f32 %v8297, %v9104
      %v9413 = vadd.f32 %v8298, %v9108
      %v9414 = vadd.f32 %v8299, %v9112
      %v9415 = vadd.f32 %v8300, %v9116
      %v9416 = vadd.f32 %v8301, %v9120
      %v9417 = vadd.f32 %v8302, %v9124
      %v9418 = vadd.f32 %v8303, %v9128
      %v9419 = vadd.f32 %v8304, %v9132
      %v9420 = vadd.f32 %v8305, %v9136
      %v9421 = vadd.f32 %v8306, %v9140
      %v9422 = vadd.f32 %v8307, %v9144
      %v9423 = vadd.f32 %v8308, %v9148
      %v9424 = vadd.f32 %v8309, %v9152
      %v9425 = vadd.f32 %v8310, %v9156
      %v9426 = vadd.f32 %v8311, %v9160
      %v9427 = vadd.f32 %v8312, %v9164
      %v9428 = vadd.f32 %v8313, %v9168
      %v9429 = vadd.f32 %v8314, %v9172
      %v9430 = vadd.f32 %v8315, %v9176
      %v9431 = vadd.f32 %v8316, %v9180
      %v9432 = vadd.f32 %v8317, %v9184
      %v9433 = vadd.f32 %v8318, %v9188
      %v9434 = vadd.f32 %v8319, %v9192
      %v9435 = vadd.f32 %v8320, %v9196
      %v9436 = vadd.f32 %v8321, %v9200
      %v9437 = vadd.f32 %v8322, %v9204
      %v9438 = vadd.f32 %v8323, %v9208
      %v9439 = vadd.f32 %v8324, %v9212
      %v9440 = vadd.f32 %v8325, %v9216
      %v9441 = vadd.f32 %v8326, %v9220
      %v9442 = vadd.f32 %v8327, %v9224
      %v9443 = vadd.f32 %v8328, %v9228
      %v9444 = vadd.f32 %v8329, %v9232
      %v9445 = vadd.f32 %v8330, %v9236
      %v9446 = vadd.f32 %v8331, %v9240
      %v9447 = vadd.f32 %v8332, %v9244
      %v9448 = vadd.f32 %v8333, %v9248
      %v9449 = vadd.f32 %v8334, %v9252
      %v9450 = vadd.f32 %v8335, %v9256
      %v9451 = vadd.f32 %v8336, %v9260
      %v9452 = vadd.f32 %v8337, %v9264
      %v9453 = vadd.f32 %v8338, %v9268
      %v9454 = vadd.f32 %v8339, %v9272
      %v9455 = vadd.f32 %v8340, %v9276
      %v9456 = vadd.f32 %v8341, %v9280
      %v9457 = vadd.f32 %v8342, %v9284
      %v9458 = vadd.f32 %v8343, %v9288
      %v9459 = vadd.f32 %v8344, %v9292
      %v9460 = vadd.f32 %v8345, %v9296
      %v9461 = vadd.f32 %v8346, %v9300
      %v9462 = vadd.f32 %v8347, %v9304
      %v9463 = vadd.f32 %v8348, %v9308
      %v9464 = vadd.f32 %v8349, %v9312
      %v9465 = vadd.f32 %v8350, %v9316
      %v9466 = vadd.f32 %v8351, %v9320
      %v9467 = vadd.f32 %v8352, %v9324
      %v9468 = vadd.f32 %v8353, %v9328
      %v9469 = vadd.f32 %v8354, %v9332
      %v9470 = vadd.f32 %v8355, %v9336
      %v9471 = vadd.f32 %v8356, %v9340
      %v9472 = vadd.f32 %v8357, %v9344
      %v9473 = vpack.c.bf16 %v7516, %v7516
      %v9474 = vpack.c.bf16 %v6846, %v6845
      %v9475 = vpack.c.bf16 %v6848, %v6847
      %v9477 = vsel %vm2748, %v9473, 0
      %9479 = vmatprep.subr.bf16.mxu0 0
      %9480 = vmatpush1.bf16.msra.mxu0 %v9474
      %9481 = vmatprep.subr.bf16.mxu0 0
      %9482 = vmatpush1.bf16.msra.mxu0 %v9475
      %9483 = vmatprep.subr.bf16.mxu0 0
      %9484 = vmatpush1.bf16.msra.mxu0 0
      %9485 = vmatprep.subr.bf16.mxu0 0
      %9486 = vmatpush1.bf16.msra.mxu0 0
      %9487 = vmatprep.subr.bf16.mxu0 0
      %9488 = vmatpush1.bf16.msra.mxu0 0
      %9489 = vmatprep.subr.bf16.mxu0 0
      %9490 = vmatpush1.bf16.msra.mxu0 0
      %9491 = vmatprep.subr.bf16.mxu0 0
      %9492 = vmatpush1.bf16.msra.mxu0 0
      %9493 = vmatprep.subr.bf16.mxu0 0
      %9494 = vmatpush1.bf16.msra.mxu0 0
      %9495 = vmatprep.subr.bf16.mxu0 0
      %9496 = vmatpush1.bf16.msra.mxu0 0
      %9497 = vmatprep.subr.bf16.mxu0 0
      %9498 = vmatpush1.bf16.msra.mxu0 0
      %9499 = vmatprep.subr.bf16.mxu0 0
      %9500 = vmatpush1.bf16.msra.mxu0 0
      %9501 = vmatprep.subr.bf16.mxu0 0
      %9502 = vmatpush1.bf16.msra.mxu0 0
      %9503 = vmatprep.subr.bf16.mxu0 0
      %9504 = vmatpush1.bf16.msra.mxu0 0
      %9505 = vmatprep.subr.bf16.mxu0 0
      %9506 = vmatpush1.bf16.msra.mxu0 0
      %9507 = vmatprep.subr.bf16.mxu0 0
      %9508 = vmatpush1.bf16.msra.mxu0 0
      %9509 = vmatprep.subr.bf16.mxu0 0
      %9510 = vmatpush1.bf16.msra.mxu0 0
      %9511 = vmatprep.mubr.bf16.mxu0 0
      %9512 = vmatmul.mubr.bf16.gmra.mrb[0].mxu0 %v9477
      %v9513 = vpop.f32.mrb[0].mxu0
      %v9514 = vadd.f32 0.0, %v9513
      %v9515 = vpop.f32.mrb[0].mxu0
      %v9516 = vpop.f32.mrb[0].mxu0
      %v9517 = vpop.f32.mrb[0].mxu0
      %9518 = vdwg.mxu0
      %v9519 = vadd.f32 %v9409, %v9514
      %v9520 = vadd.f32 %v9410, %v9514
      %v9521 = vadd.f32 %v9411, %v9514
      %v9522 = vadd.f32 %v9412, %v9514
      %v9523 = vadd.f32 %v9413, %v9514
      %v9524 = vadd.f32 %v9414, %v9514
      %v9525 = vadd.f32 %v9415, %v9514
      %v9526 = vadd.f32 %v9416, %v9514
      %v9527 = vadd.f32 %v9417, %v9514
      %v9528 = vadd.f32 %v9418, %v9514
      %v9529 = vadd.f32 %v9419, %v9514
      %v9530 = vadd.f32 %v9420, %v9514
      %v9531 = vadd.f32 %v9421, %v9514
      %v9532 = vadd.f32 %v9422, %v9514
      %v9533 = vadd.f32 %v9423, %v9514
      %v9534 = vadd.f32 %v9424, %v9514
      %v9535 = vadd.f32 %v9425, %v9514
      %v9536 = vadd.f32 %v9426, %v9514
      %v9537 = vadd.f32 %v9427, %v9514
      %v9538 = vadd.f32 %v9428, %v9514
      %v9539 = vadd.f32 %v9429, %v9514
      %v9540 = vadd.f32 %v9430, %v9514
      %v9541 = vadd.f32 %v9431, %v9514
      %v9542 = vadd.f32 %v9432, %v9514
      %v9543 = vadd.f32 %v9433, %v9514
      %v9544 = vadd.f32 %v9434, %v9514
      %v9545 = vadd.f32 %v9435, %v9514
      %v9546 = vadd.f32 %v9436, %v9514
      %v9547 = vadd.f32 %v9437, %v9514
      %v9548 = vadd.f32 %v9438, %v9514
      %v9549 = vadd.f32 %v9439, %v9514
      %v9550 = vadd.f32 %v9440, %v9514
      %v9551 = vadd.f32 %v9441, %v9514
      %v9552 = vadd.f32 %v9442, %v9514
      %v9553 = vadd.f32 %v9443, %v9514
      %v9554 = vadd.f32 %v9444, %v9514
      %v9555 = vadd.f32 %v9445, %v9514
      %v9556 = vadd.f32 %v9446, %v9514
      %v9557 = vadd.f32 %v9447, %v9514
      %v9558 = vadd.f32 %v9448, %v9514
      %v9559 = vadd.f32 %v9449, %v9514
      %v9560 = vadd.f32 %v9450, %v9514
      %v9561 = vadd.f32 %v9451, %v9514
      %v9562 = vadd.f32 %v9452, %v9514
      %v9563 = vadd.f32 %v9453, %v9514
      %v9564 = vadd.f32 %v9454, %v9514
      %v9565 = vadd.f32 %v9455, %v9514
      %v9566 = vadd.f32 %v9456, %v9514
      %v9567 = vadd.f32 %v9457, %v9514
      %v9568 = vadd.f32 %v9458, %v9514
      %v9569 = vadd.f32 %v9459, %v9514
      %v9570 = vadd.f32 %v9460, %v9514
      %v9571 = vadd.f32 %v9461, %v9514
      %v9572 = vadd.f32 %v9462, %v9514
      %v9573 = vadd.f32 %v9463, %v9514
      %v9574 = vadd.f32 %v9464, %v9514
      %v9575 = vadd.f32 %v9465, %v9514
      %v9576 = vadd.f32 %v9466, %v9514
      %v9577 = vadd.f32 %v9467, %v9514
      %v9578 = vadd.f32 %v9468, %v9514
      %v9579 = vadd.f32 %v9469, %v9514
      %v9580 = vadd.f32 %v9470, %v9514
      %v9581 = vadd.f32 %v9471, %v9514
      %v9582 = vadd.f32 %v9472, %v9514
      %v9583 = vpack.c.bf16 %v7565, %v7565
      %v9584 = vpack.c.bf16 %v7566, %v7566
      %v9585 = vpack.c.bf16 %v7567, %v7567
      %v9586 = vpack.c.bf16 %v7568, %v7568
      %v9587 = vpack.c.bf16 %v7569, %v7569
      %v9588 = vpack.c.bf16 %v7570, %v7570
      %v9589 = vpack.c.bf16 %v7571, %v7571
      %v9590 = vpack.c.bf16 %v7572, %v7572
      %v9591 = vpack.c.bf16 %v6850, %v6849
      %v9592 = vpack.c.bf16 %v6852, %v6851
      %v9601 = vunpack.c.l.b16 %v9583
      %v9602 = vunpack.c.l.b16 %v9584
      %v9603 = vunpack.c.l.b16 %v9585
      %v9604 = vunpack.c.l.b16 %v9586
      %v9605 = vunpack.c.l.b16 %v9587
      %v9606 = vunpack.c.l.b16 %v9588
      %v9607 = vunpack.c.l.b16 %v9589
      %v9608 = vunpack.c.l.b16 %v9590
      %v9609 = vsel %vm2663, %v9602, %v9601
      %v9610 = vsel %vm2665, %v9603, %v9609
      %v9611 = vsel %vm2667, %v9604, %v9610
      %v9612 = vsel %vm2669, %v9605, %v9611
      %v9613 = vsel %vm2671, %v9606, %v9612
      %v9614 = vsel %vm2673, %v9607, %v9613
      %v9615 = vsel %vm2675, %v9608, %v9614
      %v9616 = vpack.c.b16 %v9615, %v9615
      %v9618 = vsel %vm2748, %v9616, 0
      %9620 = vmatprep.subr.bf16.mxu0 0
      %9621 = vmatpush1.bf16.msra.mxu0 %v9591
      %9622 = vmatprep.subr.bf16.mxu0 0
      %9623 = vmatpush1.bf16.msra.mxu0 %v9592
      %9624 = vmatprep.subr.bf16.mxu0 0
      %9625 = vmatpush1.bf16.msra.mxu0 0
      %9626 = vmatprep.subr.bf16.mxu0 0
      %9627 = vmatpush1.bf16.msra.mxu0 0
      %9628 = vmatprep.subr.bf16.mxu0 0
      %9629 = vmatpush1.bf16.msra.mxu0 0
      %9630 = vmatprep.subr.bf16.mxu0 0
      %9631 = vmatpush1.bf16.msra.mxu0 0
      %9632 = vmatprep.subr.bf16.mxu0 0
      %9633 = vmatpush1.bf16.msra.mxu0 0
      %9634 = vmatprep.subr.bf16.mxu0 0
      %9635 = vmatpush1.bf16.msra.mxu0 0
      %9636 = vmatprep.subr.bf16.mxu0 0
      %9637 = vmatpush1.bf16.msra.mxu0 0
      %9638 = vmatprep.subr.bf16.mxu0 0
      %9639 = vmatpush1.bf16.msra.mxu0 0
      %9640 = vmatprep.subr.bf16.mxu0 0
      %9641 = vmatpush1.bf16.msra.mxu0 0
      %9642 = vmatprep.subr.bf16.mxu0 0
      %9643 = vmatpush1.bf16.msra.mxu0 0
      %9644 = vmatprep.subr.bf16.mxu0 0
      %9645 = vmatpush1.bf16.msra.mxu0 0
      %9646 = vmatprep.subr.bf16.mxu0 0
      %9647 = vmatpush1.bf16.msra.mxu0 0
      %9648 = vmatprep.subr.bf16.mxu0 0
      %9649 = vmatpush1.bf16.msra.mxu0 0
      %9650 = vmatprep.subr.bf16.mxu0 0
      %9651 = vmatpush1.bf16.msra.mxu0 0
      %9652 = vmatprep.mubr.bf16.mxu0 0
      %9653 = vmatmul.mubr.bf16.gmra.mrb[0].mxu0 %v9618
      %v9654 = vpop.f32.mrb[0].mxu0
      %v9655 = vadd.f32 0.0, %v9654
      %v9656 = vpop.f32.mrb[0].mxu0
      %v9657 = vpop.f32.mrb[0].mxu0
      %v9658 = vpop.f32.mrb[0].mxu0
      %9659 = vdwg.mxu0
      %v9661 = vcombine.high %v9655, %v9655
      %v9663 = vunpack.c.l.s4 1966171168
      %v9664 = vunpack.c.0.s8 %v9663
      %v9665 = vlaneseq
      %v9666 = vshrl.u32 %v9665, 7
      %v9667 = vsub.s32 %v9664, %v9666
      %v9668 = vrot.slane %v9655, %v9667
      %v9670 = vunpack.c.l.s4 1966171168
      %v9671 = vunpack.c.0.s8 %v9670
      %v9672 = vlaneseq
      %v9673 = vshrl.u32 %v9672, 7
      %v9674 = vsub.s32 %v9671, %v9673
      %v9675 = vrot.slane %v9661, %v9674
      %v9676 = vcombine.high %v9668, %v9668
      %v9677 = vcombine.high %v9675, %v9675
      %v9679 = vunpack.c.l.s4 1966171168
      %v9680 = vunpack.c.0.s8 %v9679
      %v9681 = vlaneseq
      %v9682 = vshrl.u32 %v9681, 7
      %v9683 = vsub.s32 %v9680, %v9682
      %v9684 = vrot.slane %v9668, %v9683
      %v9686 = vunpack.c.l.s4 1966171168
      %v9687 = vunpack.c.0.s8 %v9686
      %v9688 = vlaneseq
      %v9689 = vshrl.u32 %v9688, 7
      %v9690 = vsub.s32 %v9687, %v9689
      %v9691 = vrot.slane %v9675, %v9690
      %v9693 = vunpack.c.l.s4 1966171168
      %v9694 = vunpack.c.0.s8 %v9693
      %v9695 = vlaneseq
      %v9696 = vshrl.u32 %v9695, 7
      %v9697 = vsub.s32 %v9694, %v9696
      %v9698 = vrot.slane %v9676, %v9697
      %v9700 = vunpack.c.l.s4 1966171168
      %v9701 = vunpack.c.0.s8 %v9700
      %v9702 = vlaneseq
      %v9703 = vshrl.u32 %v9702, 7
      %v9704 = vsub.s32 %v9701, %v9703
      %v9705 = vrot.slane %v9677, %v9704
      %v9706 = vcombine.high %v9684, %v9684
      %v9707 = vcombine.high %v9691, %v9691
      %v9708 = vcombine.high %v9698, %v9698
      %v9709 = vcombine.high %v9705, %v9705
      %v9710 = vlaneseq
      %v9711 = vshrl.u32 %v9710, 7
      %v9712 = vsub.s32 0, %v9711
      %v9713 = vrot.slane %v9684, %v9712
      %v9714 = vlaneseq
      %v9715 = vshrl.u32 %v9714, 7
      %v9716 = vsub.s32 0, %v9715
      %v9717 = vrot.slane %v9698, %v9716
      %v9718 = vlaneseq
      %v9719 = vshrl.u32 %v9718, 7
      %v9720 = vsub.s32 0, %v9719
      %v9721 = vrot.slane %v9706, %v9720
      %v9722 = vlaneseq
      %v9723 = vshrl.u32 %v9722, 7
      %v9724 = vsub.s32 0, %v9723
      %v9725 = vrot.slane %v9708, %v9724
      %v9726 = vlaneseq
      %v9727 = vshrl.u32 %v9726, 7
      %v9728 = vsub.s32 0, %v9727
      %v9729 = vrot.slane %v9691, %v9728
      %v9730 = vlaneseq
      %v9731 = vshrl.u32 %v9730, 7
      %v9732 = vsub.s32 0, %v9731
      %v9733 = vrot.slane %v9705, %v9732
      %v9734 = vlaneseq
      %v9735 = vshrl.u32 %v9734, 7
      %v9736 = vsub.s32 0, %v9735
      %v9737 = vrot.slane %v9707, %v9736
      %v9738 = vlaneseq
      %v9739 = vshrl.u32 %v9738, 7
      %v9740 = vsub.s32 0, %v9739
      %v9741 = vrot.slane %v9709, %v9740
      %v9750 = vadd.f32 %v9519, %v9713
      %v9751 = vadd.f32 %v9520, %v9717
      %v9752 = vadd.f32 %v9521, %v9721
      %v9753 = vadd.f32 %v9522, %v9725
      %v9754 = vadd.f32 %v9523, %v9729
      %v9755 = vadd.f32 %v9524, %v9733
      %v9756 = vadd.f32 %v9525, %v9737
      %v9757 = vadd.f32 %v9526, %v9741
      %v9758 = vadd.f32 %v9527, %v9713
      %v9759 = vadd.f32 %v9528, %v9717
      %v9760 = vadd.f32 %v9529, %v9721
      %v9761 = vadd.f32 %v9530, %v9725
      %v9762 = vadd.f32 %v9531, %v9729
      %v9763 = vadd.f32 %v9532, %v9733
      %v9764 = vadd.f32 %v9533, %v9737
      %v9765 = vadd.f32 %v9534, %v9741
      %v9766 = vadd.f32 %v9535, %v9713
      %v9767 = vadd.f32 %v9536, %v9717
      %v9768 = vadd.f32 %v9537, %v9721
      %v9769 = vadd.f32 %v9538, %v9725
      %v9770 = vadd.f32 %v9539, %v9729
      %v9771 = vadd.f32 %v9540, %v9733
      %v9772 = vadd.f32 %v9541, %v9737
      %v9773 = vadd.f32 %v9542, %v9741
      %v9774 = vadd.f32 %v9543, %v9713
      %v9775 = vadd.f32 %v9544, %v9717
      %v9776 = vadd.f32 %v9545, %v9721
      %v9777 = vadd.f32 %v9546, %v9725
      %v9778 = vadd.f32 %v9547, %v9729
      %v9779 = vadd.f32 %v9548, %v9733
      %v9780 = vadd.f32 %v9549, %v9737
      %v9781 = vadd.f32 %v9550, %v9741
      %v9782 = vadd.f32 %v9551, %v9713
      %v9783 = vadd.f32 %v9552, %v9717
      %v9784 = vadd.f32 %v9553, %v9721
      %v9785 = vadd.f32 %v9554, %v9725
      %v9786 = vadd.f32 %v9555, %v9729
      %v9787 = vadd.f32 %v9556, %v9733
      %v9788 = vadd.f32 %v9557, %v9737
      %v9789 = vadd.f32 %v9558, %v9741
      %v9790 = vadd.f32 %v9559, %v9713
      %v9791 = vadd.f32 %v9560, %v9717
      %v9792 = vadd.f32 %v9561, %v9721
      %v9793 = vadd.f32 %v9562, %v9725
      %v9794 = vadd.f32 %v9563, %v9729
      %v9795 = vadd.f32 %v9564, %v9733
      %v9796 = vadd.f32 %v9565, %v9737
      %v9797 = vadd.f32 %v9566, %v9741
      %v9798 = vadd.f32 %v9567, %v9713
      %v9799 = vadd.f32 %v9568, %v9717
      %v9800 = vadd.f32 %v9569, %v9721
      %v9801 = vadd.f32 %v9570, %v9725
      %v9802 = vadd.f32 %v9571, %v9729
      %v9803 = vadd.f32 %v9572, %v9733
      %v9804 = vadd.f32 %v9573, %v9737
      %v9805 = vadd.f32 %v9574, %v9741
      %v9806 = vadd.f32 %v9575, %v9713
      %v9807 = vadd.f32 %v9576, %v9717
      %v9808 = vadd.f32 %v9577, %v9721
      %v9809 = vadd.f32 %v9578, %v9725
      %v9810 = vadd.f32 %v9579, %v9729
      %v9811 = vadd.f32 %v9580, %v9733
      %v9812 = vadd.f32 %v9581, %v9737
      %v9813 = vadd.f32 %v9582, %v9741
      %v9814 = vpack.c.bf16 %v7629, %v7629
      %v9815 = vpack.c.bf16 %v7630, %v7630
      %v9816 = vpack.c.bf16 %v7631, %v7631
      %v9817 = vpack.c.bf16 %v7632, %v7632
      %v9818 = vpack.c.bf16 %v7633, %v7633
      %v9819 = vpack.c.bf16 %v7634, %v7634
      %v9820 = vpack.c.bf16 %v7635, %v7635
      %v9821 = vpack.c.bf16 %v7636, %v7636
      %v9822 = vpack.c.bf16 %v6854, %v6853
      %v9823 = vpack.c.bf16 %v6856, %v6855
      %v9832 = vunpack.c.l.b16 %v9814
      %v9833 = vunpack.c.l.b16 %v9815
      %v9834 = vunpack.c.l.b16 %v9816
      %v9835 = vunpack.c.l.b16 %v9817
      %v9836 = vunpack.c.l.b16 %v9818
      %v9837 = vunpack.c.l.b16 %v9819
      %v9838 = vunpack.c.l.b16 %v9820
      %v9839 = vunpack.c.l.b16 %v9821
      %v9840 = vsel %vm2663, %v9833, %v9832
      %v9841 = vsel %vm2665, %v9834, %v9840
      %v9842 = vsel %vm2667, %v9835, %v9841
      %v9843 = vsel %vm2669, %v9836, %v9842
      %v9844 = vsel %vm2671, %v9837, %v9843
      %v9845 = vsel %vm2673, %v9838, %v9844
      %v9846 = vsel %vm2675, %v9839, %v9845
      %v9847 = vpack.c.b16 %v9846, %v9846
      %v9849 = vsel %vm2748, %v9847, 0
      %9851 = vmatprep.subr.bf16.mxu0 0
      %9852 = vmatpush1.bf16.msra.mxu0 %v9822
      %9853 = vmatprep.subr.bf16.mxu0 0
      %9854 = vmatpush1.bf16.msra.mxu0 %v9823
      %9855 = vmatprep.subr.bf16.mxu0 0
      %9856 = vmatpush1.bf16.msra.mxu0 0
      %9857 = vmatprep.subr.bf16.mxu0 0
      %9858 = vmatpush1.bf16.msra.mxu0 0
      %9859 = vmatprep.subr.bf16.mxu0 0
      %9860 = vmatpush1.bf16.msra.mxu0 0
      %9861 = vmatprep.subr.bf16.mxu0 0
      %9862 = vmatpush1.bf16.msra.mxu0 0
      %9863 = vmatprep.subr.bf16.mxu0 0
      %9864 = vmatpush1.bf16.msra.mxu0 0
      %9865 = vmatprep.subr.bf16.mxu0 0
      %9866 = vmatpush1.bf16.msra.mxu0 0
      %9867 = vmatprep.subr.bf16.mxu0 0
      %9868 = vmatpush1.bf16.msra.mxu0 0
      %9869 = vmatprep.subr.bf16.mxu0 0
      %9870 = vmatpush1.bf16.msra.mxu0 0
      %9871 = vmatprep.subr.bf16.mxu0 0
      %9872 = vmatpush1.bf16.msra.mxu0 0
      %9873 = vmatprep.subr.bf16.mxu0 0
      %9874 = vmatpush1.bf16.msra.mxu0 0
      %9875 = vmatprep.subr.bf16.mxu0 0
      %9876 = vmatpush1.bf16.msra.mxu0 0
      %9877 = vmatprep.subr.bf16.mxu0 0
      %9878 = vmatpush1.bf16.msra.mxu0 0
      %9879 = vmatprep.subr.bf16.mxu0 0
      %9880 = vmatpush1.bf16.msra.mxu0 0
      %9881 = vmatprep.subr.bf16.mxu0 0
      %9882 = vmatpush1.bf16.msra.mxu0 0
      %9883 = vmatprep.mubr.bf16.mxu0 0
      %9884 = vmatmul.mubr.bf16.gmra.mrb[0].mxu0 %v9849
      %v9885 = vpop.f32.mrb[0].mxu0
      %v9886 = vadd.f32 0.0, %v9885
      %v9887 = vpop.f32.mrb[0].mxu0
      %v9888 = vpop.f32.mrb[0].mxu0
      %v9889 = vpop.f32.mrb[0].mxu0
      %9890 = vdwg.mxu0
      %v9892 = vcombine.high %v9886, %v9886
      %v9894 = vunpack.c.l.s4 1966171168
      %v9895 = vunpack.c.0.s8 %v9894
      %v9896 = vlaneseq
      %v9897 = vshrl.u32 %v9896, 7
      %v9898 = vsub.s32 %v9895, %v9897
      %v9899 = vrot.slane %v9886, %v9898
      %v9901 = vunpack.c.l.s4 1966171168
      %v9902 = vunpack.c.0.s8 %v9901
      %v9903 = vlaneseq
      %v9904 = vshrl.u32 %v9903, 7
      %v9905 = vsub.s32 %v9902, %v9904
      %v9906 = vrot.slane %v9892, %v9905
      %v9907 = vcombine.high %v9899, %v9899
      %v9908 = vcombine.high %v9906, %v9906
      %v9910 = vunpack.c.l.s4 1966171168
      %v9911 = vunpack.c.0.s8 %v9910
      %v9912 = vlaneseq
      %v9913 = vshrl.u32 %v9912, 7
      %v9914 = vsub.s32 %v9911, %v9913
      %v9915 = vrot.slane %v9899, %v9914
      %v9917 = vunpack.c.l.s4 1966171168
      %v9918 = vunpack.c.0.s8 %v9917
      %v9919 = vlaneseq
      %v9920 = vshrl.u32 %v9919, 7
      %v9921 = vsub.s32 %v9918, %v9920
      %v9922 = vrot.slane %v9906, %v9921
      %v9924 = vunpack.c.l.s4 1966171168
      %v9925 = vunpack.c.0.s8 %v9924
      %v9926 = vlaneseq
      %v9927 = vshrl.u32 %v9926, 7
      %v9928 = vsub.s32 %v9925, %v9927
      %v9929 = vrot.slane %v9907, %v9928
      %v9931 = vunpack.c.l.s4 1966171168
      %v9932 = vunpack.c.0.s8 %v9931
      %v9933 = vlaneseq
      %v9934 = vshrl.u32 %v9933, 7
      %v9935 = vsub.s32 %v9932, %v9934
      %v9936 = vrot.slane %v9908, %v9935
      %v9937 = vcombine.high %v9915, %v9915
      %v9938 = vcombine.high %v9922, %v9922
      %v9939 = vcombine.high %v9929, %v9929
      %v9940 = vcombine.high %v9936, %v9936
      %v9941 = vlaneseq
      %v9942 = vshrl.u32 %v9941, 7
      %v9943 = vsub.s32 0, %v9942
      %v9944 = vrot.slane %v9915, %v9943
      %v9945 = vlaneseq
      %v9946 = vshrl.u32 %v9945, 7
      %v9947 = vsub.s32 0, %v9946
      %v9948 = vrot.slane %v9929, %v9947
      %v9949 = vlaneseq
      %v9950 = vshrl.u32 %v9949, 7
      %v9951 = vsub.s32 0, %v9950
      %v9952 = vrot.slane %v9937, %v9951
      %v9953 = vlaneseq
      %v9954 = vshrl.u32 %v9953, 7
      %v9955 = vsub.s32 0, %v9954
      %v9956 = vrot.slane %v9939, %v9955
      %v9957 = vlaneseq
      %v9958 = vshrl.u32 %v9957, 7
      %v9959 = vsub.s32 0, %v9958
      %v9960 = vrot.slane %v9922, %v9959
      %v9961 = vlaneseq
      %v9962 = vshrl.u32 %v9961, 7
      %v9963 = vsub.s32 0, %v9962
      %v9964 = vrot.slane %v9936, %v9963
      %v9965 = vlaneseq
      %v9966 = vshrl.u32 %v9965, 7
      %v9967 = vsub.s32 0, %v9966
      %v9968 = vrot.slane %v9938, %v9967
      %v9969 = vlaneseq
      %v9970 = vshrl.u32 %v9969, 7
      %v9971 = vsub.s32 0, %v9970
      %v9972 = vrot.slane %v9940, %v9971
      %v9981 = vadd.f32 %v9750, %v9944
      %v9982 = vadd.f32 %v9751, %v9944
      %v9983 = vadd.f32 %v9752, %v9944
      %v9984 = vadd.f32 %v9753, %v9944
      %v9985 = vadd.f32 %v9754, %v9944
      %v9986 = vadd.f32 %v9755, %v9944
      %v9987 = vadd.f32 %v9756, %v9944
      %v9988 = vadd.f32 %v9757, %v9944
      %v9989 = vadd.f32 %v9758, %v9948
      %v9990 = vadd.f32 %v9759, %v9948
      %v9991 = vadd.f32 %v9760, %v9948
      %v9992 = vadd.f32 %v9761, %v9948
      %v9993 = vadd.f32 %v9762, %v9948
      %v9994 = vadd.f32 %v9763, %v9948
      %v9995 = vadd.f32 %v9764, %v9948
      %v9996 = vadd.f32 %v9765, %v9948
      %v9997 = vadd.f32 %v9766, %v9952
      %v9998 = vadd.f32 %v9767, %v9952
      %v9999 = vadd.f32 %v9768, %v9952
      %v10000 = vadd.f32 %v9769, %v9952
      %v10001 = vadd.f32 %v9770, %v9952
      %v10002 = vadd.f32 %v9771, %v9952
      %v10003 = vadd.f32 %v9772, %v9952
      %v10004 = vadd.f32 %v9773, %v9952
      %v10005 = vadd.f32 %v9774, %v9956
      %v10006 = vadd.f32 %v9775, %v9956
      %v10007 = vadd.f32 %v9776, %v9956
      %v10008 = vadd.f32 %v9777, %v9956
      %v10009 = vadd.f32 %v9778, %v9956
      %v10010 = vadd.f32 %v9779, %v9956
      %v10011 = vadd.f32 %v9780, %v9956
      %v10012 = vadd.f32 %v9781, %v9956
      %v10013 = vadd.f32 %v9782, %v9960
      %v10014 = vadd.f32 %v9783, %v9960
      %v10015 = vadd.f32 %v9784, %v9960
      %v10016 = vadd.f32 %v9785, %v9960
      %v10017 = vadd.f32 %v9786, %v9960
      %v10018 = vadd.f32 %v9787, %v9960
      %v10019 = vadd.f32 %v9788, %v9960
      %v10020 = vadd.f32 %v9789, %v9960
      %v10021 = vadd.f32 %v9790, %v9964
      %v10022 = vadd.f32 %v9791, %v9964
      %v10023 = vadd.f32 %v9792, %v9964
      %v10024 = vadd.f32 %v9793, %v9964
      %v10025 = vadd.f32 %v9794, %v9964
      %v10026 = vadd.f32 %v9795, %v9964
      %v10027 = vadd.f32 %v9796, %v9964
      %v10028 = vadd.f32 %v9797, %v9964
      %v10029 = vadd.f32 %v9798, %v9968
      %v10030 = vadd.f32 %v9799, %v9968
      %v10031 = vadd.f32 %v9800, %v9968
      %v10032 = vadd.f32 %v9801, %v9968
      %v10033 = vadd.f32 %v9802, %v9968
      %v10034 = vadd.f32 %v9803, %v9968
      %v10035 = vadd.f32 %v9804, %v9968
      %v10036 = vadd.f32 %v9805, %v9968
      %v10037 = vadd.f32 %v9806, %v9972
      %v10038 = vadd.f32 %v9807, %v9972
      %v10039 = vadd.f32 %v9808, %v9972
      %v10040 = vadd.f32 %v9809, %v9972
      %v10041 = vadd.f32 %v9810, %v9972
      %v10042 = vadd.f32 %v9811, %v9972
      %v10043 = vadd.f32 %v9812, %v9972
      %v10044 = vadd.f32 %v9813, %v9972
      %v10045 = vpack.c.bf16 %v7644, %v7644
      %v10046 = vpack.c.bf16 %v6858, %v6857
      %v10047 = vpack.c.bf16 %v6860, %v6859
      %v10049 = vsel %vm2748, %v10045, 0
      %10051 = vmatprep.subr.bf16.mxu0 0
      %10052 = vmatpush1.bf16.msra.mxu0 %v10046
      %10053 = vmatprep.subr.bf16.mxu0 0
      %10054 = vmatpush1.bf16.msra.mxu0 %v10047
      %10055 = vmatprep.subr.bf16.mxu0 0
      %10056 = vmatpush1.bf16.msra.mxu0 0
      %10057 = vmatprep.subr.bf16.mxu0 0
      %10058 = vmatpush1.bf16.msra.mxu0 0
      %10059 = vmatprep.subr.bf16.mxu0 0
      %10060 = vmatpush1.bf16.msra.mxu0 0
      %10061 = vmatprep.subr.bf16.mxu0 0
      %10062 = vmatpush1.bf16.msra.mxu0 0
      %10063 = vmatprep.subr.bf16.mxu0 0
      %10064 = vmatpush1.bf16.msra.mxu0 0
      %10065 = vmatprep.subr.bf16.mxu0 0
      %10066 = vmatpush1.bf16.msra.mxu0 0
      %10067 = vmatprep.subr.bf16.mxu0 0
      %10068 = vmatpush1.bf16.msra.mxu0 0
      %10069 = vmatprep.subr.bf16.mxu0 0
      %10070 = vmatpush1.bf16.msra.mxu0 0
      %10071 = vmatprep.subr.bf16.mxu0 0
      %10072 = vmatpush1.bf16.msra.mxu0 0
      %10073 = vmatprep.subr.bf16.mxu0 0
      %10074 = vmatpush1.bf16.msra.mxu0 0
      %10075 = vmatprep.subr.bf16.mxu0 0
      %10076 = vmatpush1.bf16.msra.mxu0 0
      %10077 = vmatprep.subr.bf16.mxu0 0
      %10078 = vmatpush1.bf16.msra.mxu0 0
      %10079 = vmatprep.subr.bf16.mxu0 0
      %10080 = vmatpush1.bf16.msra.mxu0 0
      %10081 = vmatprep.subr.bf16.mxu0 0
      %10082 = vmatpush1.bf16.msra.mxu0 0
      %10083 = vmatprep.mubr.bf16.mxu0 0
      %10084 = vmatmul.mubr.bf16.gmra.mrb[0].mxu0 %v10049
      %v10085 = vpop.f32.mrb[0].mxu0
      %v10086 = vadd.f32 0.0, %v10085
      %v10087 = vpop.f32.mrb[0].mxu0
      %v10088 = vpop.f32.mrb[0].mxu0
      %v10089 = vpop.f32.mrb[0].mxu0
      %10090 = vdwg.mxu0
      %v10091 = vlaneseq
      %v10092 = vshrl.u32 %v10091, 7
      %v10093 = vsub.s32 0, %v10092
      %v10094 = vrot.slane %v10086, %v10093
      %v10095 = vadd.f32 %v9981, %v10094
      %v10096 = vadd.f32 %v9982, %v10094
      %v10097 = vadd.f32 %v9983, %v10094
      %v10098 = vadd.f32 %v9984, %v10094
      %v10099 = vadd.f32 %v9985, %v10094
      %v10100 = vadd.f32 %v9986, %v10094
      %v10101 = vadd.f32 %v9987, %v10094
      %v10102 = vadd.f32 %v9988, %v10094
      %v10103 = vadd.f32 %v9989, %v10094
      %v10104 = vadd.f32 %v9990, %v10094
      %v10105 = vadd.f32 %v9991, %v10094
      %v10106 = vadd.f32 %v9992, %v10094
      %v10107 = vadd.f32 %v9993, %v10094
      %v10108 = vadd.f32 %v9994, %v10094
      %v10109 = vadd.f32 %v9995, %v10094
      %v10110 = vadd.f32 %v9996, %v10094
      %v10111 = vadd.f32 %v9997, %v10094
      %v10112 = vadd.f32 %v9998, %v10094
      %v10113 = vadd.f32 %v9999, %v10094
      %v10114 = vadd.f32 %v10000, %v10094
      %v10115 = vadd.f32 %v10001, %v10094
      %v10116 = vadd.f32 %v10002, %v10094
      %v10117 = vadd.f32 %v10003, %v10094
      %v10118 = vadd.f32 %v10004, %v10094
      %v10119 = vadd.f32 %v10005, %v10094
      %v10120 = vadd.f32 %v10006, %v10094
      %v10121 = vadd.f32 %v10007, %v10094
      %v10122 = vadd.f32 %v10008, %v10094
      %v10123 = vadd.f32 %v10009, %v10094
      %v10124 = vadd.f32 %v10010, %v10094
      %v10125 = vadd.f32 %v10011, %v10094
      %v10126 = vadd.f32 %v10012, %v10094
      %v10127 = vadd.f32 %v10013, %v10094
      %v10128 = vadd.f32 %v10014, %v10094
      %v10129 = vadd.f32 %v10015, %v10094
      %v10130 = vadd.f32 %v10016, %v10094
      %v10131 = vadd.f32 %v10017, %v10094
      %v10132 = vadd.f32 %v10018, %v10094
      %v10133 = vadd.f32 %v10019, %v10094
      %v10134 = vadd.f32 %v10020, %v10094
      %v10135 = vadd.f32 %v10021, %v10094
      %v10136 = vadd.f32 %v10022, %v10094
      %v10137 = vadd.f32 %v10023, %v10094
      %v10138 = vadd.f32 %v10024, %v10094
      %v10139 = vadd.f32 %v10025, %v10094
      %v10140 = vadd.f32 %v10026, %v10094
      %v10141 = vadd.f32 %v10027, %v10094
      %v10142 = vadd.f32 %v10028, %v10094
      %v10143 = vadd.f32 %v10029, %v10094
      %v10144 = vadd.f32 %v10030, %v10094
      %v10145 = vadd.f32 %v10031, %v10094
      %v10146 = vadd.f32 %v10032, %v10094
      %v10147 = vadd.f32 %v10033, %v10094
      %v10148 = vadd.f32 %v10034, %v10094
      %v10149 = vadd.f32 %v10035, %v10094
      %v10150 = vadd.f32 %v10036, %v10094
      %v10151 = vadd.f32 %v10037, %v10094
      %v10152 = vadd.f32 %v10038, %v10094
      %v10153 = vadd.f32 %v10039, %v10094
      %v10154 = vadd.f32 %v10040, %v10094
      %v10155 = vadd.f32 %v10041, %v10094
      %v10156 = vadd.f32 %v10042, %v10094
      %v10157 = vadd.f32 %v10043, %v10094
      %v10158 = vadd.f32 %v10044, %v10094
      %v10159 = vld [vmem:[%s8] sm:$0x1]
      %v10161 = vlaneseq
      %v10162 = vshrl.u32 %v10161, 7
      %v10163 = vsub.s32 0, %v10162
      %v10164 = vrot.slane %v10159, %v10163
      %v10166 = vadd.f32 %v10095, %v10164
      %v10167 = vadd.f32 %v10096, %v10164
      %v10168 = vadd.f32 %v10097, %v10164
      %v10169 = vadd.f32 %v10098, %v10164
      %v10170 = vadd.f32 %v10099, %v10164
      %v10171 = vadd.f32 %v10100, %v10164
      %v10172 = vadd.f32 %v10101, %v10164
      %v10173 = vadd.f32 %v10102, %v10164
      %v10174 = vadd.f32 %v10103, %v10164
      %v10175 = vadd.f32 %v10104, %v10164
      %v10176 = vadd.f32 %v10105, %v10164
      %v10177 = vadd.f32 %v10106, %v10164
      %v10178 = vadd.f32 %v10107, %v10164
      %v10179 = vadd.f32 %v10108, %v10164
      %v10180 = vadd.f32 %v10109, %v10164
      %v10181 = vadd.f32 %v10110, %v10164
      %v10182 = vadd.f32 %v10111, %v10164
      %v10183 = vadd.f32 %v10112, %v10164
      %v10184 = vadd.f32 %v10113, %v10164
      %v10185 = vadd.f32 %v10114, %v10164
      %v10186 = vadd.f32 %v10115, %v10164
      %v10187 = vadd.f32 %v10116, %v10164
      %v10188 = vadd.f32 %v10117, %v10164
      %v10189 = vadd.f32 %v10118, %v10164
      %v10190 = vadd.f32 %v10119, %v10164
      %v10191 = vadd.f32 %v10120, %v10164
      %v10192 = vadd.f32 %v10121, %v10164
      %v10193 = vadd.f32 %v10122, %v10164
      %v10194 = vadd.f32 %v10123, %v10164
      %v10195 = vadd.f32 %v10124, %v10164
      %v10196 = vadd.f32 %v10125, %v10164
      %v10197 = vadd.f32 %v10126, %v10164
      %v10198 = vadd.f32 %v10127, %v10164
      %v10199 = vadd.f32 %v10128, %v10164
      %v10200 = vadd.f32 %v10129, %v10164
      %v10201 = vadd.f32 %v10130, %v10164
      %v10202 = vadd.f32 %v10131, %v10164
      %v10203 = vadd.f32 %v10132, %v10164
      %v10204 = vadd.f32 %v10133, %v10164
      %v10205 = vadd.f32 %v10134, %v10164
      %v10206 = vadd.f32 %v10135, %v10164
      %v10207 = vadd.f32 %v10136, %v10164
      %v10208 = vadd.f32 %v10137, %v10164
      %v10209 = vadd.f32 %v10138, %v10164
      %v10210 = vadd.f32 %v10139, %v10164
      %v10211 = vadd.f32 %v10140, %v10164
      %v10212 = vadd.f32 %v10141, %v10164
      %v10213 = vadd.f32 %v10142, %v10164
      %v10214 = vadd.f32 %v10143, %v10164
      %v10215 = vadd.f32 %v10144, %v10164
      %v10216 = vadd.f32 %v10145, %v10164
      %v10217 = vadd.f32 %v10146, %v10164
      %v10218 = vadd.f32 %v10147, %v10164
      %v10219 = vadd.f32 %v10148, %v10164
      %v10220 = vadd.f32 %v10149, %v10164
      %v10221 = vadd.f32 %v10150, %v10164
      %v10222 = vadd.f32 %v10151, %v10164
      %v10223 = vadd.f32 %v10152, %v10164
      %v10224 = vadd.f32 %v10153, %v10164
      %v10225 = vadd.f32 %v10154, %v10164
      %v10226 = vadd.f32 %v10155, %v10164
      %v10227 = vadd.f32 %v10156, %v10164
      %v10228 = vadd.f32 %v10157, %v10164
      %v10229 = vadd.f32 %v10158, %v10164
      %v10230 = vmax.f32 %v10166, 0.0
      %v10231 = vmax.f32 %v10167, 0.0
      %v10232 = vmax.f32 %v10168, 0.0
      %v10233 = vmax.f32 %v10169, 0.0
      %v10234 = vmax.f32 %v10170, 0.0
      %v10235 = vmax.f32 %v10171, 0.0
      %v10236 = vmax.f32 %v10172, 0.0
      %v10237 = vmax.f32 %v10173, 0.0
      %v10238 = vmax.f32 %v10174, 0.0
      %v10239 = vmax.f32 %v10175, 0.0
      %v10240 = vmax.f32 %v10176, 0.0
      %v10241 = vmax.f32 %v10177, 0.0
      %v10242 = vmax.f32 %v10178, 0.0
      %v10243 = vmax.f32 %v10179, 0.0
      %v10244 = vmax.f32 %v10180, 0.0
      %v10245 = vmax.f32 %v10181, 0.0
      %v10246 = vmax.f32 %v10182, 0.0
      %v10247 = vmax.f32 %v10183, 0.0
      %v10248 = vmax.f32 %v10184, 0.0
      %v10249 = vmax.f32 %v10185, 0.0
      %v10250 = vmax.f32 %v10186, 0.0
      %v10251 = vmax.f32 %v10187, 0.0
      %v10252 = vmax.f32 %v10188, 0.0
      %v10253 = vmax.f32 %v10189, 0.0
      %v10254 = vmax.f32 %v10190, 0.0
      %v10255 = vmax.f32 %v10191, 0.0
      %v10256 = vmax.f32 %v10192, 0.0
      %v10257 = vmax.f32 %v10193, 0.0
      %v10258 = vmax.f32 %v10194, 0.0
      %v10259 = vmax.f32 %v10195, 0.0
      %v10260 = vmax.f32 %v10196, 0.0
      %v10261 = vmax.f32 %v10197, 0.0
      %v10262 = vmax.f32 %v10198, 0.0
      %v10263 = vmax.f32 %v10199, 0.0
      %v10264 = vmax.f32 %v10200, 0.0
      %v10265 = vmax.f32 %v10201, 0.0
      %v10266 = vmax.f32 %v10202, 0.0
      %v10267 = vmax.f32 %v10203, 0.0
      %v10268 = vmax.f32 %v10204, 0.0
      %v10269 = vmax.f32 %v10205, 0.0
      %v10270 = vmax.f32 %v10206, 0.0
      %v10271 = vmax.f32 %v10207, 0.0
      %v10272 = vmax.f32 %v10208, 0.0
      %v10273 = vmax.f32 %v10209, 0.0
      %v10274 = vmax.f32 %v10210, 0.0
      %v10275 = vmax.f32 %v10211, 0.0
      %v10276 = vmax.f32 %v10212, 0.0
      %v10277 = vmax.f32 %v10213, 0.0
      %v10278 = vmax.f32 %v10214, 0.0
      %v10279 = vmax.f32 %v10215, 0.0
      %v10280 = vmax.f32 %v10216, 0.0
      %v10281 = vmax.f32 %v10217, 0.0
      %v10282 = vmax.f32 %v10218, 0.0
      %v10283 = vmax.f32 %v10219, 0.0
      %v10284 = vmax.f32 %v10220, 0.0
      %v10285 = vmax.f32 %v10221, 0.0
      %v10286 = vmax.f32 %v10222, 0.0
      %v10287 = vmax.f32 %v10223, 0.0
      %v10288 = vmax.f32 %v10224, 0.0
      %v10289 = vmax.f32 %v10225, 0.0
      %v10290 = vmax.f32 %v10226, 0.0
      %v10291 = vmax.f32 %v10227, 0.0
      %v10292 = vmax.f32 %v10228, 0.0
      %v10293 = vmax.f32 %v10229, 0.0
      %vm10294 = vcmask 130048
      %v10295 = vsel %vm10294, %v10230, 0.0
      %v10296 = vsel %vm10294, %v10231, 0.0
      %v10297 = vadd.f32 %v10295, %v10296
      %v10298 = vsel %vm10294, %v10232, 0.0
      %v10299 = vadd.f32 %v10297, %v10298
      %v10300 = vsel %vm10294, %v10233, 0.0
      %v10301 = vadd.f32 %v10299, %v10300
      %v10302 = vsel %vm10294, %v10234, 0.0
      %v10303 = vadd.f32 %v10301, %v10302
      %v10304 = vsel %vm10294, %v10235, 0.0
      %v10305 = vadd.f32 %v10303, %v10304
      %v10306 = vsel %vm10294, %v10236, 0.0
      %v10307 = vadd.f32 %v10305, %v10306
      %v10308 = vsel %vm10294, %v10237, 0.0
      %v10309 = vadd.f32 %v10307, %v10308
      %v10310 = vsel %vm10294, %v10238, 0.0
      %v10311 = vadd.f32 %v10309, %v10310
      %v10312 = vsel %vm10294, %v10239, 0.0
      %v10313 = vadd.f32 %v10311, %v10312
      %v10314 = vsel %vm10294, %v10240, 0.0
      %v10315 = vadd.f32 %v10313, %v10314
      %v10316 = vsel %vm10294, %v10241, 0.0
      %v10317 = vadd.f32 %v10315, %v10316
      %v10318 = vsel %vm10294, %v10242, 0.0
      %v10319 = vadd.f32 %v10317, %v10318
      %v10320 = vsel %vm10294, %v10243, 0.0
      %v10321 = vadd.f32 %v10319, %v10320
      %v10322 = vsel %vm10294, %v10244, 0.0
      %v10323 = vadd.f32 %v10321, %v10322
      %v10324 = vsel %vm10294, %v10245, 0.0
      %v10325 = vadd.f32 %v10323, %v10324
      %v10326 = vsel %vm10294, %v10246, 0.0
      %v10327 = vadd.f32 %v10325, %v10326
      %v10328 = vsel %vm10294, %v10247, 0.0
      %v10329 = vadd.f32 %v10327, %v10328
      %v10330 = vsel %vm10294, %v10248, 0.0
      %v10331 = vadd.f32 %v10329, %v10330
      %v10332 = vsel %vm10294, %v10249, 0.0
      %v10333 = vadd.f32 %v10331, %v10332
      %v10334 = vsel %vm10294, %v10250, 0.0
      %v10335 = vadd.f32 %v10333, %v10334
      %v10336 = vsel %vm10294, %v10251, 0.0
      %v10337 = vadd.f32 %v10335, %v10336
      %v10338 = vsel %vm10294, %v10252, 0.0
      %v10339 = vadd.f32 %v10337, %v10338
      %v10340 = vsel %vm10294, %v10253, 0.0
      %v10341 = vadd.f32 %v10339, %v10340
      %v10342 = vsel %vm10294, %v10254, 0.0
      %v10343 = vadd.f32 %v10341, %v10342
      %v10344 = vsel %vm10294, %v10255, 0.0
      %v10345 = vadd.f32 %v10343, %v10344
      %v10346 = vsel %vm10294, %v10256, 0.0
      %v10347 = vadd.f32 %v10345, %v10346
      %v10348 = vsel %vm10294, %v10257, 0.0
      %v10349 = vadd.f32 %v10347, %v10348
      %v10350 = vsel %vm10294, %v10258, 0.0
      %v10351 = vadd.f32 %v10349, %v10350
      %v10352 = vsel %vm10294, %v10259, 0.0
      %v10353 = vadd.f32 %v10351, %v10352
      %v10354 = vsel %vm10294, %v10260, 0.0
      %v10355 = vadd.f32 %v10353, %v10354
      %v10356 = vsel %vm10294, %v10261, 0.0
      %v10357 = vadd.f32 %v10355, %v10356
      %v10358 = vsel %vm10294, %v10262, 0.0
      %v10359 = vadd.f32 %v10357, %v10358
      %v10360 = vsel %vm10294, %v10263, 0.0
      %v10361 = vadd.f32 %v10359, %v10360
      %v10362 = vsel %vm10294, %v10264, 0.0
      %v10363 = vadd.f32 %v10361, %v10362
      %v10364 = vsel %vm10294, %v10265, 0.0
      %v10365 = vadd.f32 %v10363, %v10364
      %v10366 = vsel %vm10294, %v10266, 0.0
      %v10367 = vadd.f32 %v10365, %v10366
      %v10368 = vsel %vm10294, %v10267, 0.0
      %v10369 = vadd.f32 %v10367, %v10368
      %v10370 = vsel %vm10294, %v10268, 0.0
      %v10371 = vadd.f32 %v10369, %v10370
      %v10372 = vsel %vm10294, %v10269, 0.0
      %v10373 = vadd.f32 %v10371, %v10372
      %v10374 = vsel %vm10294, %v10270, 0.0
      %v10375 = vadd.f32 %v10373, %v10374
      %v10376 = vsel %vm10294, %v10271, 0.0
      %v10377 = vadd.f32 %v10375, %v10376
      %v10378 = vsel %vm10294, %v10272, 0.0
      %v10379 = vadd.f32 %v10377, %v10378
      %v10380 = vsel %vm10294, %v10273, 0.0
      %v10381 = vadd.f32 %v10379, %v10380
      %v10382 = vsel %vm10294, %v10274, 0.0
      %v10383 = vadd.f32 %v10381, %v10382
      %v10384 = vsel %vm10294, %v10275, 0.0
      %v10385 = vadd.f32 %v10383, %v10384
      %v10386 = vsel %vm10294, %v10276, 0.0
      %v10387 = vadd.f32 %v10385, %v10386
      %v10388 = vsel %vm10294, %v10277, 0.0
      %v10389 = vadd.f32 %v10387, %v10388
      %v10390 = vsel %vm10294, %v10278, 0.0
      %v10391 = vadd.f32 %v10389, %v10390
      %v10392 = vsel %vm10294, %v10279, 0.0
      %v10393 = vadd.f32 %v10391, %v10392
      %v10394 = vsel %vm10294, %v10280, 0.0
      %v10395 = vadd.f32 %v10393, %v10394
      %v10396 = vsel %vm10294, %v10281, 0.0
      %v10397 = vadd.f32 %v10395, %v10396
      %v10398 = vsel %vm10294, %v10282, 0.0
      %v10399 = vadd.f32 %v10397, %v10398
      %v10400 = vsel %vm10294, %v10283, 0.0
      %v10401 = vadd.f32 %v10399, %v10400
      %v10402 = vsel %vm10294, %v10284, 0.0
      %v10403 = vadd.f32 %v10401, %v10402
      %v10404 = vsel %vm10294, %v10285, 0.0
      %v10405 = vadd.f32 %v10403, %v10404
      %v10406 = vsel %vm10294, %v10286, 0.0
      %v10407 = vadd.f32 %v10405, %v10406
      %v10408 = vsel %vm10294, %v10287, 0.0
      %v10409 = vadd.f32 %v10407, %v10408
      %v10410 = vsel %vm10294, %v10288, 0.0
      %v10411 = vadd.f32 %v10409, %v10410
      %v10412 = vsel %vm10294, %v10289, 0.0
      %v10413 = vadd.f32 %v10411, %v10412
      %v10414 = vsel %vm10294, %v10290, 0.0
      %v10415 = vadd.f32 %v10413, %v10414
      %v10416 = vsel %vm10294, %v10291, 0.0
      %v10417 = vadd.f32 %v10415, %v10416
      %v10418 = vsel %vm10294, %v10292, 0.0
      %v10419 = vadd.f32 %v10417, %v10418
      %v10420 = vsel %vm10294, %v10293, 0.0
      %v10421 = vadd.f32 %v10419, %v10420
      %v10422 = vrot.slane %v10421, 4
      %v10423 = vadd.f32 %v10421, %v10422
      %v10424 = vrot.slane %v10423, 2
      %v10425 = vadd.f32 %v10423, %v10424
      %v10426 = vrot.slane %v10425, 1
      %v10427 = vadd.f32 %v10425, %v10426
      %v10428 = vrcp.pop 512.0
      %v10429 = vmul.f32 %v10427, %v10428
      %v10430 = vld [vmem:[%s9] sm:$0x1]
      %v10431 = vmul.f32 %v10429, %v10430
      %vm10432 = vcmask 122880
      %v10433 = vsel %vm10432, %v10431, 0.0
      %10434 = vadd.xlane.f32.xlu0 %v10433
      %v10435 = vpop.xlane.xlu0 %10434
      %v10436 = vld [vmem:[#allocation2] sm:$0x1]
      %v10437 = vadd.f32 %v10435, %v10436
      %vm10438 = vcmask 0
      %10439 = vst.msk [vmem:[%s384] sm:$0x1] %vm10438, %v10437
      %p10440 = scmp.lt.s32.totalorder %s24, 1
      %s10441 = scalar_select %p10440, %s24, 1
      %s10442 = scalar_lea.vmem %s11, %s10441
      // Predicated region
      $region65: #{unique_eq3_net_forward.1} parent=63 // pred_check
        %p10443 = pneg %p278
      $region66: #{unique_eq3_net_forward.1} parent=63 // pred_check_branch
        %10445 = sbr.rel (%p10443) target = $region68
      $region67: #{unique_eq3_net_forward.1} parent=63 // pred_region
        _
      $region68: #{unique_eq3_net_forward.1} parent=63 // pred_fallthru
        _
    $region64: #{unique_eq3_net_forward.1} parent=5 // pred_fallthru
      _
    %p10446 = scmp.le.s32.totalorder 2, %s19
    // Predicated region
    $region69: #{unique_eq3_net_forward.1} parent=5 // pred_check
      %p10447 = pneg %p10446
    $region70: #{unique_eq3_net_forward.1} parent=5 // pred_check_branch
      %10449 = sbr.rel (%p10447) target = $region72
    $region71: #{unique_eq3_net_forward.1} parent=5 // pred_region
      %s10450 = ssub.s32 %s19, 2
      // Predicated region
      $region73: #{unique_eq3_net_forward.1} parent=71 // pred_check
        %p10451 = pneg %p284
      $region74: #{unique_eq3_net_forward.1} parent=71 // pred_check_branch
        %10453 = sbr.rel (%p10451) target = $region76
      $region75: #{unique_eq3_net_forward.1} parent=71 // pred_region
        %p10454 = scmp.lt.s32.totalorder %s25, 1
        %s10455 = scalar_select %p10454, %s25, 1
        %s10456 = scalar_lea.vmem %s11, %s10455
      $region76: #{unique_eq3_net_forward.1} parent=71 // pred_fallthru
        _
    $region72: #{unique_eq3_net_forward.1} parent=5 // pred_fallthru
      _
  $region6: #{unique_eq3_net_forward.1} parent=0 // loop_footer
    %s23 = sadd.s32 1, %s19
  $region7: #{unique_eq3_net_forward.1} parent=0 // loop_footer_branch
    %18 = sbr.rel target = $region3
  $region8: #{unique_eq3_net_forward.1} parent=0 // loop_exit
    _

</llo_original>
